<compile_context>
chip_gen: v7x
topology: tpu7x:2x2x1
jax: 0.10.0
libtpu: 0.0.40
codegen_flags: <defaults>
</compile_context>

<pallas_src>
import functools

import jax
import jax.numpy as jnp
from jax.experimental import pallas as pl
from jax.experimental.pallas import tpu as pltpu

_K = 17                       # kernel_size of every conv in the module
_OFF = 128                    # lane-aligned placement of the stride-1 conv input
_SQRT_HALF = 0.7071067811865476


def _gelu(x):
    # erf-based GELU (A&S 7.1.26 polynomial, |erf err| ~ 1e-7); exact division
    # (not the approx EUP reciprocal) so the poly accuracy is preserved.
    a1, a2, a3, a4, a5 = (0.254829592, -0.284496736, 1.421413741,
                          -1.453152027, 1.061405429)
    pco = 0.3275911
    u = x * _SQRT_HALF
    sgn = jnp.where(u >= 0.0, 1.0, -1.0)
    au = jnp.abs(u)
    t = 1.0 / (1.0 + pco * au)
    poly = ((((a5 * t + a4) * t + a3) * t + a2) * t + a1) * t
    erf = sgn * (1.0 - poly * jnp.exp(-au * au))
    return 0.5 * x * (1.0 + erf)


# ---------------------------------------------------------------------------
# Fused kernel: conv/LN stack + (last) transformer layer + output projection.
# One sample per grid step.
# ---------------------------------------------------------------------------
def _adapter_kernel(x_ref, c1w_ref, c1b_ref, c2w_ref, c2b_ref,
                    ln1g_ref, ln1b_ref, c3w_ref, c3b_ref,
                    ln2g_ref, ln2b_ref, ctw_ref, ctb_ref,
                    ln3g_ref, ln3b_ref, c4w_ref, c4b_ref,
                    sup_ref, sdown_ref, wqkv_ref, hm_ref, rep_ref, fold_ref,
                    w1_ref, b1_ref, w2_ref, b2_ref, wout_ref, bout_ref,
                    o_ref, ws_ref, z_ref,
                    *, dim_head, n_tok, L, inner):
    f32 = jnp.float32
    L3 = 3 * L
    WSW = ws_ref.shape[1]

    def conv17(wp_ref, b_ref, off, lout):
        # Shifted-slice stack Z: row-block t holds ws[:, off+t : off+t+lout];
        # the conv is then ONE (n_tok, K*n_tok) @ (K*n_tok, lout) matmul with
        # K = 17*n_tok = 136 (fills the MXU pipe; no serial accumulate chain).
        for t in range(_K):
            z_ref[t * n_tok:(t + 1) * n_tok, :lout] = \
                ws_ref[:, off + t: off + t + lout]
        return (jnp.dot(wp_ref[...], z_ref[:, :lout],
                        preferred_element_type=f32) + b_ref[...])

    def layer_norm(x, g_ref, b_ref):
        # torch LayerNorm over the whole (n_tok, length) slab, biased variance.
        inv_n = 1.0 / float(x.shape[0] * x.shape[1])
        s1 = jnp.sum(jnp.sum(x, axis=1, keepdims=True), axis=0, keepdims=True)
        s2 = jnp.sum(jnp.sum(x * x, axis=1, keepdims=True), axis=0,
                     keepdims=True)
        mean = s1 * inv_n
        var = s2 * inv_n - mean * mean
        return (x - mean) * jax.lax.rsqrt(var + 1e-5) * g_ref[...] + b_ref[...]

    # ---- audio_emb_projection ----------------------------------------------
    ws_ref[...] = jnp.zeros((n_tok, WSW), f32)   # establishes all zero margins

    # Conv1d(p=8) -> GELU, Conv1d(p=8) -> GELU, LN, Conv1d(p=8) -> GELU, LN.
    # The activation sits at lane-aligned cols [_OFF, _OFF+L); the 8-wide pad
    # margins around it are never written, so they stay zero.
    ws_ref[:, _OFF:_OFF + L] = x_ref[0]
    x = _gelu(conv17(c1w_ref, c1b_ref, _OFF - 8, L))
    ws_ref[:, _OFF:_OFF + L] = x
    x = _gelu(conv17(c2w_ref, c2b_ref, _OFF - 8, L))
    x = layer_norm(x, ln1g_ref, ln1b_ref)
    ws_ref[:, _OFF:_OFF + L] = x
    x = _gelu(conv17(c3w_ref, c3b_ref, _OFF - 8, L))
    x = layer_norm(x, ln2g_ref, ln2b_ref)

    # ConvTranspose1d(stride=3, pad=7) == zero-insert (col 9+3i) + pad-9 +
    # stride-1 conv with flipped channel-transposed taps.  The zero-insert is
    # one matmul with the precomputed s_up; it rewrites the WHOLE workspace
    # row, explicitly re-establishing the zero margins used by the next convs.
    ws_ref[...] = jnp.dot(x, sup_ref[...], preferred_element_type=f32)
    x = _gelu(conv17(ctw_ref, ctb_ref, 0, L3))
    x = _gelu(layer_norm(x, ln3g_ref, ln3b_ref))

    # Conv1d(stride=4, pad=7): stride-1 conv, then the precomputed ::4 column
    # selection (which also pads context_dim 96 -> 128 lanes).  Dropout(0)==id.
    ws_ref[:, 7:7 + L3] = x                      # cols [0,7) & [391,WSW) stay 0
    full = conv17(c4w_ref, c4b_ref, 0, L3)
    ap = jnp.dot(full, sdown_ref[...], preferred_element_type=f32)  # (n_tok, DP)

    # ---- transformer: only the LAST layer reaches the output (the PyTorch
    # loop recomputes `out` from the unchanged audio_proj every iteration, so
    # earlier layers are dead compute).  Heads folded into the sublane axis.
    scale = float(dim_head) ** -0.5
    qkv = jnp.dot(ap, wqkv_ref[...], preferred_element_type=f32)
    q = qkv[:, 0:inner]
    k = qkv[:, inner:2 * inner]
    v = qkv[:, 2 * inner:3 * inner]
    qs = jnp.dot(rep_ref[...], q, preferred_element_type=f32)  # (h*n_tok, inner)
    qs = qs * hm_ref[...] * scale                              # per-head lanes
    s = jax.lax.dot_general(qs, k, (((1,), (1,)), ((), ())),
                            preferred_element_type=f32)        # (h*n_tok, n_tok)
    s = s - jnp.max(s, axis=-1, keepdims=True)
    p = jnp.exp(s)
    attn = p * (1.0 / jnp.sum(p, axis=-1, keepdims=True))
    o_stack = jnp.dot(attn, v, preferred_element_type=f32) * hm_ref[...]
    out_att = jnp.dot(fold_ref[...], o_stack, preferred_element_type=f32)
    hid = _gelu(jnp.dot(out_att, w1_ref[...], preferred_element_type=f32)
                + b1_ref[...])
    mo = jnp.dot(hid, w2_ref[...], preferred_element_type=f32) + b2_ref[...]
    res = mo + ap                                              # residual
    o_ref[0] = (jnp.dot(res, wout_ref[...], preferred_element_type=f32)
                + bout_ref[...])


# ---------------------------------------------------------------------------
# Wrapper: trace-time weight/selection-matrix prep + one pallas_call.
# ---------------------------------------------------------------------------
def adapter_forward(audio_context, params, *, h, dim_head):
    f32 = jnp.float32
    B, Cin, L = audio_context.shape
    n_tok = params["conv1_w"].shape[0]
    Dc = params["out_w"].shape[0]
    inner = h * dim_head
    L3 = 3 * L
    DP = ((Dc + 127) // 128) * 128            # lane-dense context dim
    WSW = ((L3 + 16 + 127) // 128) * 128      # padded conv workspace width

    def taps(w):
        # (Cout, Cin, K) -> (Cout, K*Cin): column index = t*Cin + c_in, which
        # matches the Z-stack row order built in the kernel.
        return jnp.transpose(w, (0, 2, 1)).reshape(w.shape[0], -1).astype(f32)

    # conv1: pad Cin -> n_tok with zero channels so every conv is uniform.
    c1w_full = jnp.zeros((n_tok, n_tok, _K), f32).at[:, :Cin, :].set(
        params["conv1_w"])
    c1w = taps(c1w_full)
    c2w = taps(params["conv2_w"])
    c3w = taps(params["conv3_w"])
    # ConvTranspose1d weight (Cin, Cout, K) -> equivalent forward-conv weight.
    ctw = taps(jnp.flip(jnp.transpose(params["convt_w"], (1, 0, 2)), axis=2))
    c4w = taps(params["conv4_w"])
    cb = lambda b: b.reshape(-1, 1).astype(f32)

    # Precomputed selection / replication matrices (never built in-kernel).
    ii = jnp.arange(L)
    s_up = jnp.zeros((L, WSW), f32).at[ii, 9 + 3 * ii].set(1.0)
    jj = jnp.arange(Dc)
    s_down = jnp.zeros((L3, DP), f32).at[4 * jj, jj].set(1.0)
    rr = jnp.arange(h * n_tok)
    cc = jnp.arange(inner)
    hm = ((rr[:, None] // n_tok) == (cc[None, :] // dim_head)).astype(f32)
    fold = (jnp.arange(n_tok)[:, None] == (rr[None, :] % n_tok)).astype(f32)
    rep = jnp.transpose(fold)                                  # (h*n_tok, n_tok)

    lp = params["layers"][-1]   # only the last layer affects the module output
    wqkv = jnp.zeros((DP, 3 * inner), f32).at[:Dc, :].set(
        jnp.concatenate([lp["wq"], lp["wk"], lp["wv"]], axis=1))
    w1 = lp["w1"].astype(f32)
    b1 = lp["b1"].reshape(1, -1).astype(f32)
    w2 = jnp.zeros((inner, DP), f32).at[:, :Dc].set(lp["w2"])
    b2 = jnp.zeros((1, DP), f32).at[0, :Dc].set(lp["b2"])
    wout = jnp.zeros((DP, DP), f32).at[:Dc, :Dc].set(params["out_w"])
    bout = jnp.zeros((1, DP), f32).at[0, :Dc].set(params["out_b"])

    # Pad input channels up to n_tok so conv1 uses the same Z machinery.
    x = jnp.pad(audio_context.astype(f32),
                ((0, 0), (0, n_tok - Cin), (0, 0)))            # (B, n_tok, L)

    g = lambda a: a.astype(f32)
    args = (x,
            c1w, cb(params["conv1_b"]), c2w, cb(params["conv2_b"]),
            g(params["ln1_g"]), g(params["ln1_b"]),
            c3w, cb(params["conv3_b"]),
            g(params["ln2_g"]), g(params["ln2_b"]),
            ctw, cb(params["convt_b"]),
            g(params["ln3_g"]), g(params["ln3_b"]),
            c4w, cb(params["conv4_b"]),
            s_up, s_down, wqkv, hm, rep, fold,
            w1, b1, w2, b2, wout, bout)

    def fixed_spec(a):
        nd = a.ndim
        return pl.BlockSpec(a.shape, lambda b, _nd=nd: (0,) * _nd)

    in_specs = ([pl.BlockSpec((1, n_tok, L), lambda b: (b, 0, 0))]
                + [fixed_spec(a) for a in args[1:]])

    kernel = functools.partial(_adapter_kernel, dim_head=dim_head,
                               n_tok=n_tok, L=L, inner=inner)

    out = pl.pallas_call(
        kernel,
        out_shape=jax.ShapeDtypeStruct((B, n_tok, DP), f32),
        grid=(B,),
        in_specs=in_specs,
        out_specs=pl.BlockSpec((1, n_tok, DP), lambda b: (b, 0, 0)),
        scratch_shapes=[pltpu.VMEM((n_tok, WSW), f32),      # padded workspace
                        pltpu.VMEM((_K * n_tok, L3), f32)],  # conv tap stack Z
        compiler_params=pltpu.CompilerParams(
            dimension_semantics=("parallel",)),
        cost_estimate=pl.CostEstimate(flops=12_000_000,
                                      transcendentals=25_000,
                                      bytes_accessed=800_000),
    )(*args)
    # Lane-dense (.., 128) result; drop the zero padding columns here.
    return out[:, :, :Dc]


# ---------------------------------------------------------------------------
# Parameter init (deterministic; shapes follow Adapter.__init__)
# ---------------------------------------------------------------------------
def init_params(key, *, audio_dim, context_dim, h, dim_head, n_tok, cin,
                n_layers, k=_K):
    inner = h * dim_head
    keys = iter(jax.random.split(key, 64))

    def nrm(shape, scale=0.1):
        return scale * jax.random.normal(next(keys), shape, jnp.float32)

    p = dict(
        conv1_w=nrm((n_tok, cin, k)), conv1_b=nrm((n_tok,)),
        conv2_w=nrm((n_tok, n_tok, k)), conv2_b=nrm((n_tok,)),
        ln1_g=1.0 + nrm((n_tok, audio_dim)), ln1_b=nrm((n_tok, audio_dim)),
        conv3_w=nrm((n_tok, n_tok, k)), conv3_b=nrm((n_tok,)),
        ln2_g=1.0 + nrm((n_tok, audio_dim)), ln2_b=nrm((n_tok, audio_dim)),
        convt_w=nrm((n_tok, n_tok, k)), convt_b=nrm((n_tok,)),  # (Cin, Cout, K)
        ln3_g=1.0 + nrm((n_tok, 3 * audio_dim)), ln3_b=nrm((n_tok, 3 * audio_dim)),
        conv4_w=nrm((n_tok, n_tok, k)), conv4_b=nrm((n_tok,)),
        out_w=nrm((context_dim, context_dim)), out_b=nrm((context_dim,)),
    )
    p["layers"] = [
        dict(wq=nrm((context_dim, inner)), wk=nrm((context_dim, inner)),
             wv=nrm((context_dim, inner)),
             w1=nrm((inner, inner)), b1=nrm((inner,)),
             w2=nrm((inner, context_dim)), b2=nrm((context_dim,)))
        for _ in range(n_layers)
    ]
    return p


if __name__ == "__main__":
    B = 2
    AUDIO_DIM = 128          # 1-D audio embedding length (audio_dim)
    CONTEXT_DIM = 96         # = (3*AUDIO_DIM + 2*7 - 17)//4 + 1
    H, DIM_HEAD = 4, 8       # inner_dim = 32
    N_TOK = 8                # audio_token_count
    CIN = 1                  # initial_channel_dim
    N_LAYERS = 2             # transformer_layer_count
    assert CONTEXT_DIM == (3 * AUDIO_DIM + 2 * 7 - _K) // 4 + 1

    key = jax.random.PRNGKey(0)
    kx, kp = jax.random.split(key)
    audio_context = jax.random.normal(kx, (B, CIN, AUDIO_DIM), jnp.float32)
    params = init_params(kp, audio_dim=AUDIO_DIM, context_dim=CONTEXT_DIM,
                         h=H, dim_head=DIM_HEAD, n_tok=N_TOK, cin=CIN,
                         n_layers=N_LAYERS)

    fwd = jax.jit(functools.partial(adapter_forward, h=H, dim_head=DIM_HEAD))
    out = fwd(audio_context, params)
    out = jax.block_until_ready(out)
    assert out.shape == (B, N_TOK, CONTEXT_DIM), out.shape
    assert bool(jnp.all(jnp.isfinite(out)))
    print("KERNEL_OK")
</pallas_src>

<mosaic_0001>
module attributes {stable_mosaic.version = 11 : i64} {
  func.func @_adapter_kernel(%arg0: i32, %arg1: memref<1x8x128xf32, #tpu.memory_space<vmem>>, %arg2: memref<8x136xf32, #tpu.memory_space<vmem>>, %arg3: memref<8x1xf32, #tpu.memory_space<vmem>>, %arg4: memref<8x136xf32, #tpu.memory_space<vmem>>, %arg5: memref<8x1xf32, #tpu.memory_space<vmem>>, %arg6: memref<8x128xf32, #tpu.memory_space<vmem>>, %arg7: memref<8x128xf32, #tpu.memory_space<vmem>>, %arg8: memref<8x136xf32, #tpu.memory_space<vmem>>, %arg9: memref<8x1xf32, #tpu.memory_space<vmem>>, %arg10: memref<8x128xf32, #tpu.memory_space<vmem>>, %arg11: memref<8x128xf32, #tpu.memory_space<vmem>>, %arg12: memref<8x136xf32, #tpu.memory_space<vmem>>, %arg13: memref<8x1xf32, #tpu.memory_space<vmem>>, %arg14: memref<8x384xf32, #tpu.memory_space<vmem>>, %arg15: memref<8x384xf32, #tpu.memory_space<vmem>>, %arg16: memref<8x136xf32, #tpu.memory_space<vmem>>, %arg17: memref<8x1xf32, #tpu.memory_space<vmem>>, %arg18: memref<128x512xf32, #tpu.memory_space<vmem>>, %arg19: memref<384x128xf32, #tpu.memory_space<vmem>>, %arg20: memref<128x96xf32, #tpu.memory_space<vmem>>, %arg21: memref<32x32xf32, #tpu.memory_space<vmem>>, %arg22: memref<32x8xf32, #tpu.memory_space<vmem>>, %arg23: memref<8x32xf32, #tpu.memory_space<vmem>>, %arg24: memref<32x32xf32, #tpu.memory_space<vmem>>, %arg25: memref<1x32xf32, #tpu.memory_space<vmem>>, %arg26: memref<32x128xf32, #tpu.memory_space<vmem>>, %arg27: memref<1x128xf32, #tpu.memory_space<vmem>>, %arg28: memref<128x128xf32, #tpu.memory_space<vmem>>, %arg29: memref<1x128xf32, #tpu.memory_space<vmem>>, %arg30: memref<1x8x128xf32, #tpu.memory_space<vmem>>, %arg31: memref<8x512xf32, #tpu.memory_space<vmem>>, %arg32: memref<136x384xf32, #tpu.memory_space<vmem>>) attributes {dimension_semantics = [#tpu.dimension_semantics<parallel>], iteration_bounds = array<i64: 2>, scalar_prefetch = 0 : i64, scratch_operands = 2 : i64, tpu.core_type = #tpu.core_type<tc>, window_params = [{transform_indices = @transform_0, window_bounds = array<i64: 1, 8, 128>}, {pipeline_mode = #tpu.pipeline_mode<synchronous>, transform_indices = @transform_1, window_bounds = array<i64: 8, 136>}, {pipeline_mode = #tpu.pipeline_mode<synchronous>, transform_indices = @transform_2, window_bounds = array<i64: 8, 1>}, {pipeline_mode = #tpu.pipeline_mode<synchronous>, transform_indices = @transform_3, window_bounds = array<i64: 8, 136>}, {pipeline_mode = #tpu.pipeline_mode<synchronous>, transform_indices = @transform_4, window_bounds = array<i64: 8, 1>}, {pipeline_mode = #tpu.pipeline_mode<synchronous>, transform_indices = @transform_5, window_bounds = array<i64: 8, 128>}, {pipeline_mode = #tpu.pipeline_mode<synchronous>, transform_indices = @transform_6, window_bounds = array<i64: 8, 128>}, {pipeline_mode = #tpu.pipeline_mode<synchronous>, transform_indices = @transform_7, window_bounds = array<i64: 8, 136>}, {pipeline_mode = #tpu.pipeline_mode<synchronous>, transform_indices = @transform_8, window_bounds = array<i64: 8, 1>}, {pipeline_mode = #tpu.pipeline_mode<synchronous>, transform_indices = @transform_9, window_bounds = array<i64: 8, 128>}, {pipeline_mode = #tpu.pipeline_mode<synchronous>, transform_indices = @transform_10, window_bounds = array<i64: 8, 128>}, {pipeline_mode = #tpu.pipeline_mode<synchronous>, transform_indices = @transform_11, window_bounds = array<i64: 8, 136>}, {pipeline_mode = #tpu.pipeline_mode<synchronous>, transform_indices = @transform_12, window_bounds = array<i64: 8, 1>}, {pipeline_mode = #tpu.pipeline_mode<synchronous>, transform_indices = @transform_13, window_bounds = array<i64: 8, 384>}, {pipeline_mode = #tpu.pipeline_mode<synchronous>, transform_indices = @transform_14, window_bounds = array<i64: 8, 384>}, {pipeline_mode = #tpu.pipeline_mode<synchronous>, transform_indices = @transform_15, window_bounds = array<i64: 8, 136>}, {pipeline_mode = #tpu.pipeline_mode<synchronous>, transform_indices = @transform_16, window_bounds = array<i64: 8, 1>}, {pipeline_mode = #tpu.pipeline_mode<synchronous>, transform_indices = @transform_17, window_bounds = array<i64: 128, 512>}, {pipeline_mode = #tpu.pipeline_mode<synchronous>, transform_indices = @transform_18, window_bounds = array<i64: 384, 128>}, {pipeline_mode = #tpu.pipeline_mode<synchronous>, transform_indices = @transform_19, window_bounds = array<i64: 128, 96>}, {pipeline_mode = #tpu.pipeline_mode<synchronous>, transform_indices = @transform_20, window_bounds = array<i64: 32, 32>}, {pipeline_mode = #tpu.pipeline_mode<synchronous>, transform_indices = @transform_21, window_bounds = array<i64: 32, 8>}, {pipeline_mode = #tpu.pipeline_mode<synchronous>, transform_indices = @transform_22, window_bounds = array<i64: 8, 32>}, {pipeline_mode = #tpu.pipeline_mode<synchronous>, transform_indices = @transform_23, window_bounds = array<i64: 32, 32>}, {pipeline_mode = #tpu.pipeline_mode<synchronous>, transform_indices = @transform_24, window_bounds = array<i64: 1, 32>}, {pipeline_mode = #tpu.pipeline_mode<synchronous>, transform_indices = @transform_25, window_bounds = array<i64: 32, 128>}, {pipeline_mode = #tpu.pipeline_mode<synchronous>, transform_indices = @transform_26, window_bounds = array<i64: 1, 128>}, {pipeline_mode = #tpu.pipeline_mode<synchronous>, transform_indices = @transform_27, window_bounds = array<i64: 128, 128>}, {pipeline_mode = #tpu.pipeline_mode<synchronous>, transform_indices = @transform_28, window_bounds = array<i64: 1, 128>}, {transform_indices = @transform_29, window_bounds = array<i64: 1, 8, 128>}]} {
    %cst = arith.constant 0.000000e+00 : f32
    %0 = vector.broadcast %cst : f32 to vector<8x512xf32>
    %c0 = arith.constant 0 : index
    %c0_0 = arith.constant 0 : index
    %1 = vector.load %arg31[%c0, %c0_0] : memref<8x512xf32, #tpu.memory_space<vmem>>, vector<8x512xf32>
    tpu.vector_store %arg31[%c0, %c0_0], %0 {strides = array<i32>} : memref<8x512xf32, #tpu.memory_space<vmem>>, vector<8x512xf32>,
    %c0_1 = arith.constant 0 : index
    %c0_2 = arith.constant 0 : index
    %c0_3 = arith.constant 0 : index
    %2 = vector.load %arg1[%c0_1, %c0_2, %c0_3] : memref<1x8x128xf32, #tpu.memory_space<vmem>>, vector<1x8x128xf32>
    %3 = vector.shape_cast %2 : vector<1x8x128xf32> to vector<8x128xf32>
    %c0_4 = arith.constant 0 : index
    %c128 = arith.constant 128 : index
    %4 = vector.load %arg31[%c0_4, %c128] : memref<8x512xf32, #tpu.memory_space<vmem>>, vector<8x128xf32>
    tpu.vector_store %arg31[%c0_4, %c128], %3 {strides = array<i32>} : memref<8x512xf32, #tpu.memory_space<vmem>>, vector<8x128xf32>,
    %c0_5 = arith.constant 0 : index
    %c120 = arith.constant 120 : index
    %5 = vector.load %arg31[%c0_5, %c120] : memref<8x512xf32, #tpu.memory_space<vmem>>, vector<8x128xf32>
    %c0_6 = arith.constant 0 : index
    %c0_7 = arith.constant 0 : index
    %6 = vector.load %arg32[%c0_6, %c0_7] : memref<136x384xf32, #tpu.memory_space<vmem>>, vector<8x128xf32>
    tpu.vector_store %arg32[%c0_6, %c0_7], %5 {strides = array<i32>} : memref<136x384xf32, #tpu.memory_space<vmem>>, vector<8x128xf32>,
    %c0_8 = arith.constant 0 : index
    %c121 = arith.constant 121 : index
    %7 = vector.load %arg31[%c0_8, %c121] : memref<8x512xf32, #tpu.memory_space<vmem>>, vector<8x128xf32>
    %c8 = arith.constant 8 : index
    %c0_9 = arith.constant 0 : index
    %8 = vector.load %arg32[%c8, %c0_9] : memref<136x384xf32, #tpu.memory_space<vmem>>, vector<8x128xf32>
    tpu.vector_store %arg32[%c8, %c0_9], %7 {strides = array<i32>} : memref<136x384xf32, #tpu.memory_space<vmem>>, vector<8x128xf32>,
    %c0_10 = arith.constant 0 : index
    %c122 = arith.constant 122 : index
    %9 = vector.load %arg31[%c0_10, %c122] : memref<8x512xf32, #tpu.memory_space<vmem>>, vector<8x128xf32>
    %c16 = arith.constant 16 : index
    %c0_11 = arith.constant 0 : index
    %10 = vector.load %arg32[%c16, %c0_11] : memref<136x384xf32, #tpu.memory_space<vmem>>, vector<8x128xf32>
    tpu.vector_store %arg32[%c16, %c0_11], %9 {strides = array<i32>} : memref<136x384xf32, #tpu.memory_space<vmem>>, vector<8x128xf32>,
    %c0_12 = arith.constant 0 : index
    %c123 = arith.constant 123 : index
    %11 = vector.load %arg31[%c0_12, %c123] : memref<8x512xf32, #tpu.memory_space<vmem>>, vector<8x128xf32>
    %c24 = arith.constant 24 : index
    %c0_13 = arith.constant 0 : index
    %12 = vector.load %arg32[%c24, %c0_13] : memref<136x384xf32, #tpu.memory_space<vmem>>, vector<8x128xf32>
    tpu.vector_store %arg32[%c24, %c0_13], %11 {strides = array<i32>} : memref<136x384xf32, #tpu.memory_space<vmem>>, vector<8x128xf32>,
    %c0_14 = arith.constant 0 : index
    %c124 = arith.constant 124 : index
    %13 = vector.load %arg31[%c0_14, %c124] : memref<8x512xf32, #tpu.memory_space<vmem>>, vector<8x128xf32>
    %c32 = arith.constant 32 : index
    %c0_15 = arith.constant 0 : index
    %14 = vector.load %arg32[%c32, %c0_15] : memref<136x384xf32, #tpu.memory_space<vmem>>, vector<8x128xf32>
    tpu.vector_store %arg32[%c32, %c0_15], %13 {strides = array<i32>} : memref<136x384xf32, #tpu.memory_space<vmem>>, vector<8x128xf32>,
    %c0_16 = arith.constant 0 : index
    %c125 = arith.constant 125 : index
    %15 = vector.load %arg31[%c0_16, %c125] : memref<8x512xf32, #tpu.memory_space<vmem>>, vector<8x128xf32>
    %c40 = arith.constant 40 : index
    %c0_17 = arith.constant 0 : index
    %16 = vector.load %arg32[%c40, %c0_17] : memref<136x384xf32, #tpu.memory_space<vmem>>, vector<8x128xf32>
    tpu.vector_store %arg32[%c40, %c0_17], %15 {strides = array<i32>} : memref<136x384xf32, #tpu.memory_space<vmem>>, vector<8x128xf32>,
    %c0_18 = arith.constant 0 : index
    %c126 = arith.constant 126 : index
    %17 = vector.load %arg31[%c0_18, %c126] : memref<8x512xf32, #tpu.memory_space<vmem>>, vector<8x128xf32>
    %c48 = arith.constant 48 : index
    %c0_19 = arith.constant 0 : index
    %18 = vector.load %arg32[%c48, %c0_19] : memref<136x384xf32, #tpu.memory_space<vmem>>, vector<8x128xf32>
    tpu.vector_store %arg32[%c48, %c0_19], %17 {strides = array<i32>} : memref<136x384xf32, #tpu.memory_space<vmem>>, vector<8x128xf32>,
    %c0_20 = arith.constant 0 : index
    %c127 = arith.constant 127 : index
    %19 = vector.load %arg31[%c0_20, %c127] : memref<8x512xf32, #tpu.memory_space<vmem>>, vector<8x128xf32>
    %c56 = arith.constant 56 : index
    %c0_21 = arith.constant 0 : index
    %20 = vector.load %arg32[%c56, %c0_21] : memref<136x384xf32, #tpu.memory_space<vmem>>, vector<8x128xf32>
    tpu.vector_store %arg32[%c56, %c0_21], %19 {strides = array<i32>} : memref<136x384xf32, #tpu.memory_space<vmem>>, vector<8x128xf32>,
    %c0_22 = arith.constant 0 : index
    %c128_23 = arith.constant 128 : index
    %21 = vector.load %arg31[%c0_22, %c128_23] : memref<8x512xf32, #tpu.memory_space<vmem>>, vector<8x128xf32>
    %c64 = arith.constant 64 : index
    %c0_24 = arith.constant 0 : index
    %22 = vector.load %arg32[%c64, %c0_24] : memref<136x384xf32, #tpu.memory_space<vmem>>, vector<8x128xf32>
    tpu.vector_store %arg32[%c64, %c0_24], %21 {strides = array<i32>} : memref<136x384xf32, #tpu.memory_space<vmem>>, vector<8x128xf32>,
    %c0_25 = arith.constant 0 : index
    %c129 = arith.constant 129 : index
    %23 = vector.load %arg31[%c0_25, %c129] : memref<8x512xf32, #tpu.memory_space<vmem>>, vector<8x128xf32>
    %c72 = arith.constant 72 : index
    %c0_26 = arith.constant 0 : index
    %24 = vector.load %arg32[%c72, %c0_26] : memref<136x384xf32, #tpu.memory_space<vmem>>, vector<8x128xf32>
    tpu.vector_store %arg32[%c72, %c0_26], %23 {strides = array<i32>} : memref<136x384xf32, #tpu.memory_space<vmem>>, vector<8x128xf32>,
    %c0_27 = arith.constant 0 : index
    %c130 = arith.constant 130 : index
    %25 = vector.load %arg31[%c0_27, %c130] : memref<8x512xf32, #tpu.memory_space<vmem>>, vector<8x128xf32>
    %c80 = arith.constant 80 : index
    %c0_28 = arith.constant 0 : index
    %26 = vector.load %arg32[%c80, %c0_28] : memref<136x384xf32, #tpu.memory_space<vmem>>, vector<8x128xf32>
    tpu.vector_store %arg32[%c80, %c0_28], %25 {strides = array<i32>} : memref<136x384xf32, #tpu.memory_space<vmem>>, vector<8x128xf32>,
    %c0_29 = arith.constant 0 : index
    %c131 = arith.constant 131 : index
    %27 = vector.load %arg31[%c0_29, %c131] : memref<8x512xf32, #tpu.memory_space<vmem>>, vector<8x128xf32>
    %c88 = arith.constant 88 : index
    %c0_30 = arith.constant 0 : index
    %28 = vector.load %arg32[%c88, %c0_30] : memref<136x384xf32, #tpu.memory_space<vmem>>, vector<8x128xf32>
    tpu.vector_store %arg32[%c88, %c0_30], %27 {strides = array<i32>} : memref<136x384xf32, #tpu.memory_space<vmem>>, vector<8x128xf32>,
    %c0_31 = arith.constant 0 : index
    %c132 = arith.constant 132 : index
    %29 = vector.load %arg31[%c0_31, %c132] : memref<8x512xf32, #tpu.memory_space<vmem>>, vector<8x128xf32>
    %c96 = arith.constant 96 : index
    %c0_32 = arith.constant 0 : index
    %30 = vector.load %arg32[%c96, %c0_32] : memref<136x384xf32, #tpu.memory_space<vmem>>, vector<8x128xf32>
    tpu.vector_store %arg32[%c96, %c0_32], %29 {strides = array<i32>} : memref<136x384xf32, #tpu.memory_space<vmem>>, vector<8x128xf32>,
    %c0_33 = arith.constant 0 : index
    %c133 = arith.constant 133 : index
    %31 = vector.load %arg31[%c0_33, %c133] : memref<8x512xf32, #tpu.memory_space<vmem>>, vector<8x128xf32>
    %c104 = arith.constant 104 : index
    %c0_34 = arith.constant 0 : index
    %32 = vector.load %arg32[%c104, %c0_34] : memref<136x384xf32, #tpu.memory_space<vmem>>, vector<8x128xf32>
    tpu.vector_store %arg32[%c104, %c0_34], %31 {strides = array<i32>} : memref<136x384xf32, #tpu.memory_space<vmem>>, vector<8x128xf32>,
    %c0_35 = arith.constant 0 : index
    %c134 = arith.constant 134 : index
    %33 = vector.load %arg31[%c0_35, %c134] : memref<8x512xf32, #tpu.memory_space<vmem>>, vector<8x128xf32>
    %c112 = arith.constant 112 : index
    %c0_36 = arith.constant 0 : index
    %34 = vector.load %arg32[%c112, %c0_36] : memref<136x384xf32, #tpu.memory_space<vmem>>, vector<8x128xf32>
    tpu.vector_store %arg32[%c112, %c0_36], %33 {strides = array<i32>} : memref<136x384xf32, #tpu.memory_space<vmem>>, vector<8x128xf32>,
    %c0_37 = arith.constant 0 : index
    %c135 = arith.constant 135 : index
    %35 = vector.load %arg31[%c0_37, %c135] : memref<8x512xf32, #tpu.memory_space<vmem>>, vector<8x128xf32>
    %c120_38 = arith.constant 120 : index
    %c0_39 = arith.constant 0 : index
    %36 = vector.load %arg32[%c120_38, %c0_39] : memref<136x384xf32, #tpu.memory_space<vmem>>, vector<8x128xf32>
    tpu.vector_store %arg32[%c120_38, %c0_39], %35 {strides = array<i32>} : memref<136x384xf32, #tpu.memory_space<vmem>>, vector<8x128xf32>,
    %c0_40 = arith.constant 0 : index
    %c136 = arith.constant 136 : index
    %37 = vector.load %arg31[%c0_40, %c136] : memref<8x512xf32, #tpu.memory_space<vmem>>, vector<8x128xf32>
    %c128_41 = arith.constant 128 : index
    %c0_42 = arith.constant 0 : index
    %38 = vector.load %arg32[%c128_41, %c0_42] : memref<136x384xf32, #tpu.memory_space<vmem>>, vector<8x128xf32>
    tpu.vector_store %arg32[%c128_41, %c0_42], %37 {strides = array<i32>} : memref<136x384xf32, #tpu.memory_space<vmem>>, vector<8x128xf32>,
    %c0_43 = arith.constant 0 : index
    %c0_44 = arith.constant 0 : index
    %39 = vector.load %arg2[%c0_43, %c0_44] : memref<8x136xf32, #tpu.memory_space<vmem>>, vector<8x136xf32>
    %c0_45 = arith.constant 0 : index
    %c0_46 = arith.constant 0 : index
    %40 = vector.load %arg32[%c0_45, %c0_46] : memref<136x384xf32, #tpu.memory_space<vmem>>, vector<136x128xf32>
    %cst_47 = arith.constant dense<0.000000e+00> : vector<8x128xf32>
    %41 = tpu.matmul %39, %40, %cst_47 {dimension_numbers = #tpu.dot_dimension_numbers<[1], [0], [0], [1], [0, 0, 1, 1], [], []>} : vector<8x136xf32>, vector<136x128xf32>, vector<8x128xf32> -> vector<8x128xf32>
    %c0_48 = arith.constant 0 : index
    %c0_49 = arith.constant 0 : index
    %42 = vector.load %arg3[%c0_48, %c0_49] : memref<8x1xf32, #tpu.memory_space<vmem>>, vector<8x1xf32>
    %43 = vector.broadcast %42 : vector<8x1xf32> to vector<8x128xf32>
    %44 = arith.addf %41, %43 : vector<8x128xf32>
    %cst_50 = arith.constant 0.707106769 : f32
    %45 = vector.broadcast %cst_50 : f32 to vector<8x128xf32>
    %46 = arith.mulf %44, %45 : vector<8x128xf32>
    %cst_51 = arith.constant 0.000000e+00 : f32
    %47 = vector.broadcast %cst_51 : f32 to vector<8x128xf32>
    %48 = arith.cmpf oge, %46, %47 : vector<8x128xf32>
    %cst_52 = arith.constant 1.000000e+00 : f32
    %cst_53 = arith.constant -1.000000e+00 : f32
    %49 = vector.broadcast %cst_52 : f32 to vector<8x128xf32>
    %50 = vector.broadcast %cst_53 : f32 to vector<8x128xf32>
    %51 = arith.select %48, %49, %50 : vector<8x128xi1>, vector<8x128xf32>
    %52 = math.absf %46 : vector<8x128xf32>
    %cst_54 = arith.constant 0.327591091 : f32
    %53 = vector.broadcast %cst_54 : f32 to vector<8x128xf32>
    %54 = arith.mulf %53, %52 : vector<8x128xf32>
    %cst_55 = arith.constant 1.000000e+00 : f32
    %55 = vector.broadcast %cst_55 : f32 to vector<8x128xf32>
    %56 = arith.addf %55, %54 : vector<8x128xf32>
    %cst_56 = arith.constant 1.000000e+00 : f32
    %57 = vector.broadcast %cst_56 : f32 to vector<8x128xf32>
    %58 = arith.divf %57, %56 : vector<8x128xf32>
    %cst_57 = arith.constant 1.06140542 : f32
    %59 = vector.broadcast %cst_57 : f32 to vector<8x128xf32>
    %60 = arith.mulf %59, %58 : vector<8x128xf32>
    %cst_58 = arith.constant -1.45315206 : f32
    %61 = vector.broadcast %cst_58 : f32 to vector<8x128xf32>
    %62 = arith.addf %60, %61 : vector<8x128xf32>
    %63 = arith.mulf %62, %58 : vector<8x128xf32>
    %cst_59 = arith.constant 1.42141378 : f32
    %64 = vector.broadcast %cst_59 : f32 to vector<8x128xf32>
    %65 = arith.addf %63, %64 : vector<8x128xf32>
    %66 = arith.mulf %65, %58 : vector<8x128xf32>
    %cst_60 = arith.constant -0.284496725 : f32
    %67 = vector.broadcast %cst_60 : f32 to vector<8x128xf32>
    %68 = arith.addf %66, %67 : vector<8x128xf32>
    %69 = arith.mulf %68, %58 : vector<8x128xf32>
    %cst_61 = arith.constant 0.254829586 : f32
    %70 = vector.broadcast %cst_61 : f32 to vector<8x128xf32>
    %71 = arith.addf %69, %70 : vector<8x128xf32>
    %72 = arith.mulf %71, %58 : vector<8x128xf32>
    %cst_62 = arith.constant 0.000000e+00 : f32
    %73 = vector.broadcast %cst_62 : f32 to vector<8x128xf32>
    %74 = arith.subf %73, %52 : vector<8x128xf32>
    %75 = arith.mulf %74, %52 : vector<8x128xf32>
    %76 = math.exp %75 : vector<8x128xf32>
    %77 = arith.mulf %72, %76 : vector<8x128xf32>
    %cst_63 = arith.constant 1.000000e+00 : f32
    %78 = vector.broadcast %cst_63 : f32 to vector<8x128xf32>
    %79 = arith.subf %78, %77 : vector<8x128xf32>
    %80 = arith.mulf %51, %79 : vector<8x128xf32>
    %cst_64 = arith.constant 5.000000e-01 : f32
    %81 = vector.broadcast %cst_64 : f32 to vector<8x128xf32>
    %82 = arith.mulf %81, %44 : vector<8x128xf32>
    %cst_65 = arith.constant 1.000000e+00 : f32
    %83 = vector.broadcast %cst_65 : f32 to vector<8x128xf32>
    %84 = arith.addf %83, %80 : vector<8x128xf32>
    %85 = arith.mulf %82, %84 : vector<8x128xf32>
    %c0_66 = arith.constant 0 : index
    %c128_67 = arith.constant 128 : index
    %86 = vector.load %arg31[%c0_66, %c128_67] : memref<8x512xf32, #tpu.memory_space<vmem>>, vector<8x128xf32>
    tpu.vector_store %arg31[%c0_66, %c128_67], %85 {strides = array<i32>} : memref<8x512xf32, #tpu.memory_space<vmem>>, vector<8x128xf32>,
    %c0_68 = arith.constant 0 : index
    %c120_69 = arith.constant 120 : index
    %87 = vector.load %arg31[%c0_68, %c120_69] : memref<8x512xf32, #tpu.memory_space<vmem>>, vector<8x128xf32>
    %c0_70 = arith.constant 0 : index
    %c0_71 = arith.constant 0 : index
    %88 = vector.load %arg32[%c0_70, %c0_71] : memref<136x384xf32, #tpu.memory_space<vmem>>, vector<8x128xf32>
    tpu.vector_store %arg32[%c0_70, %c0_71], %87 {strides = array<i32>} : memref<136x384xf32, #tpu.memory_space<vmem>>, vector<8x128xf32>,
    %c0_72 = arith.constant 0 : index
    %c121_73 = arith.constant 121 : index
    %89 = vector.load %arg31[%c0_72, %c121_73] : memref<8x512xf32, #tpu.memory_space<vmem>>, vector<8x128xf32>
    %c8_74 = arith.constant 8 : index
    %c0_75 = arith.constant 0 : index
    %90 = vector.load %arg32[%c8_74, %c0_75] : memref<136x384xf32, #tpu.memory_space<vmem>>, vector<8x128xf32>
    tpu.vector_store %arg32[%c8_74, %c0_75], %89 {strides = array<i32>} : memref<136x384xf32, #tpu.memory_space<vmem>>, vector<8x128xf32>,
    %c0_76 = arith.constant 0 : index
    %c122_77 = arith.constant 122 : index
    %91 = vector.load %arg31[%c0_76, %c122_77] : memref<8x512xf32, #tpu.memory_space<vmem>>, vector<8x128xf32>
    %c16_78 = arith.constant 16 : index
    %c0_79 = arith.constant 0 : index
    %92 = vector.load %arg32[%c16_78, %c0_79] : memref<136x384xf32, #tpu.memory_space<vmem>>, vector<8x128xf32>
    tpu.vector_store %arg32[%c16_78, %c0_79], %91 {strides = array<i32>} : memref<136x384xf32, #tpu.memory_space<vmem>>, vector<8x128xf32>,
    %c0_80 = arith.constant 0 : index
    %c123_81 = arith.constant 123 : index
    %93 = vector.load %arg31[%c0_80, %c123_81] : memref<8x512xf32, #tpu.memory_space<vmem>>, vector<8x128xf32>
    %c24_82 = arith.constant 24 : index
    %c0_83 = arith.constant 0 : index
    %94 = vector.load %arg32[%c24_82, %c0_83] : memref<136x384xf32, #tpu.memory_space<vmem>>, vector<8x128xf32>
    tpu.vector_store %arg32[%c24_82, %c0_83], %93 {strides = array<i32>} : memref<136x384xf32, #tpu.memory_space<vmem>>, vector<8x128xf32>,
    %c0_84 = arith.constant 0 : index
    %c124_85 = arith.constant 124 : index
    %95 = vector.load %arg31[%c0_84, %c124_85] : memref<8x512xf32, #tpu.memory_space<vmem>>, vector<8x128xf32>
    %c32_86 = arith.constant 32 : index
    %c0_87 = arith.constant 0 : index
    %96 = vector.load %arg32[%c32_86, %c0_87] : memref<136x384xf32, #tpu.memory_space<vmem>>, vector<8x128xf32>
    tpu.vector_store %arg32[%c32_86, %c0_87], %95 {strides = array<i32>} : memref<136x384xf32, #tpu.memory_space<vmem>>, vector<8x128xf32>,
    %c0_88 = arith.constant 0 : index
    %c125_89 = arith.constant 125 : index
    %97 = vector.load %arg31[%c0_88, %c125_89] : memref<8x512xf32, #tpu.memory_space<vmem>>, vector<8x128xf32>
    %c40_90 = arith.constant 40 : index
    %c0_91 = arith.constant 0 : index
    %98 = vector.load %arg32[%c40_90, %c0_91] : memref<136x384xf32, #tpu.memory_space<vmem>>, vector<8x128xf32>
    tpu.vector_store %arg32[%c40_90, %c0_91], %97 {strides = array<i32>} : memref<136x384xf32, #tpu.memory_space<vmem>>, vector<8x128xf32>,
    %c0_92 = arith.constant 0 : index
    %c126_93 = arith.constant 126 : index
    %99 = vector.load %arg31[%c0_92, %c126_93] : memref<8x512xf32, #tpu.memory_space<vmem>>, vector<8x128xf32>
    %c48_94 = arith.constant 48 : index
    %c0_95 = arith.constant 0 : index
    %100 = vector.load %arg32[%c48_94, %c0_95] : memref<136x384xf32, #tpu.memory_space<vmem>>, vector<8x128xf32>
    tpu.vector_store %arg32[%c48_94, %c0_95], %99 {strides = array<i32>} : memref<136x384xf32, #tpu.memory_space<vmem>>, vector<8x128xf32>,
    %c0_96 = arith.constant 0 : index
    %c127_97 = arith.constant 127 : index
    %101 = vector.load %arg31[%c0_96, %c127_97] : memref<8x512xf32, #tpu.memory_space<vmem>>, vector<8x128xf32>
    %c56_98 = arith.constant 56 : index
    %c0_99 = arith.constant 0 : index
    %102 = vector.load %arg32[%c56_98, %c0_99] : memref<136x384xf32, #tpu.memory_space<vmem>>, vector<8x128xf32>
    tpu.vector_store %arg32[%c56_98, %c0_99], %101 {strides = array<i32>} : memref<136x384xf32, #tpu.memory_space<vmem>>, vector<8x128xf32>,
    %c0_100 = arith.constant 0 : index
    %c128_101 = arith.constant 128 : index
    %103 = vector.load %arg31[%c0_100, %c128_101] : memref<8x512xf32, #tpu.memory_space<vmem>>, vector<8x128xf32>
    %c64_102 = arith.constant 64 : index
    %c0_103 = arith.constant 0 : index
    %104 = vector.load %arg32[%c64_102, %c0_103] : memref<136x384xf32, #tpu.memory_space<vmem>>, vector<8x128xf32>
    tpu.vector_store %arg32[%c64_102, %c0_103], %103 {strides = array<i32>} : memref<136x384xf32, #tpu.memory_space<vmem>>, vector<8x128xf32>,
    %c0_104 = arith.constant 0 : index
    %c129_105 = arith.constant 129 : index
    %105 = vector.load %arg31[%c0_104, %c129_105] : memref<8x512xf32, #tpu.memory_space<vmem>>, vector<8x128xf32>
    %c72_106 = arith.constant 72 : index
    %c0_107 = arith.constant 0 : index
    %106 = vector.load %arg32[%c72_106, %c0_107] : memref<136x384xf32, #tpu.memory_space<vmem>>, vector<8x128xf32>
    tpu.vector_store %arg32[%c72_106, %c0_107], %105 {strides = array<i32>} : memref<136x384xf32, #tpu.memory_space<vmem>>, vector<8x128xf32>,
    %c0_108 = arith.constant 0 : index
    %c130_109 = arith.constant 130 : index
    %107 = vector.load %arg31[%c0_108, %c130_109] : memref<8x512xf32, #tpu.memory_space<vmem>>, vector<8x128xf32>
    %c80_110 = arith.constant 80 : index
    %c0_111 = arith.constant 0 : index
    %108 = vector.load %arg32[%c80_110, %c0_111] : memref<136x384xf32, #tpu.memory_space<vmem>>, vector<8x128xf32>
    tpu.vector_store %arg32[%c80_110, %c0_111], %107 {strides = array<i32>} : memref<136x384xf32, #tpu.memory_space<vmem>>, vector<8x128xf32>,
    %c0_112 = arith.constant 0 : index
    %c131_113 = arith.constant 131 : index
    %109 = vector.load %arg31[%c0_112, %c131_113] : memref<8x512xf32, #tpu.memory_space<vmem>>, vector<8x128xf32>
    %c88_114 = arith.constant 88 : index
    %c0_115 = arith.constant 0 : index
    %110 = vector.load %arg32[%c88_114, %c0_115] : memref<136x384xf32, #tpu.memory_space<vmem>>, vector<8x128xf32>
    tpu.vector_store %arg32[%c88_114, %c0_115], %109 {strides = array<i32>} : memref<136x384xf32, #tpu.memory_space<vmem>>, vector<8x128xf32>,
    %c0_116 = arith.constant 0 : index
    %c132_117 = arith.constant 132 : index
    %111 = vector.load %arg31[%c0_116, %c132_117] : memref<8x512xf32, #tpu.memory_space<vmem>>, vector<8x128xf32>
    %c96_118 = arith.constant 96 : index
    %c0_119 = arith.constant 0 : index
    %112 = vector.load %arg32[%c96_118, %c0_119] : memref<136x384xf32, #tpu.memory_space<vmem>>, vector<8x128xf32>
    tpu.vector_store %arg32[%c96_118, %c0_119], %111 {strides = array<i32>} : memref<136x384xf32, #tpu.memory_space<vmem>>, vector<8x128xf32>,
    %c0_120 = arith.constant 0 : index
    %c133_121 = arith.constant 133 : index
    %113 = vector.load %arg31[%c0_120, %c133_121] : memref<8x512xf32, #tpu.memory_space<vmem>>, vector<8x128xf32>
    %c104_122 = arith.constant 104 : index
    %c0_123 = arith.constant 0 : index
    %114 = vector.load %arg32[%c104_122, %c0_123] : memref<136x384xf32, #tpu.memory_space<vmem>>, vector<8x128xf32>
    tpu.vector_store %arg32[%c104_122, %c0_123], %113 {strides = array<i32>} : memref<136x384xf32, #tpu.memory_space<vmem>>, vector<8x128xf32>,
    %c0_124 = arith.constant 0 : index
    %c134_125 = arith.constant 134 : index
    %115 = vector.load %arg31[%c0_124, %c134_125] : memref<8x512xf32, #tpu.memory_space<vmem>>, vector<8x128xf32>
    %c112_126 = arith.constant 112 : index
    %c0_127 = arith.constant 0 : index
    %116 = vector.load %arg32[%c112_126, %c0_127] : memref<136x384xf32, #tpu.memory_space<vmem>>, vector<8x128xf32>
    tpu.vector_store %arg32[%c112_126, %c0_127], %115 {strides = array<i32>} : memref<136x384xf32, #tpu.memory_space<vmem>>, vector<8x128xf32>,
    %c0_128 = arith.constant 0 : index
    %c135_129 = arith.constant 135 : index
    %117 = vector.load %arg31[%c0_128, %c135_129] : memref<8x512xf32, #tpu.memory_space<vmem>>, vector<8x128xf32>
    %c120_130 = arith.constant 120 : index
    %c0_131 = arith.constant 0 : index
    %118 = vector.load %arg32[%c120_130, %c0_131] : memref<136x384xf32, #tpu.memory_space<vmem>>, vector<8x128xf32>
    tpu.vector_store %arg32[%c120_130, %c0_131], %117 {strides = array<i32>} : memref<136x384xf32, #tpu.memory_space<vmem>>, vector<8x128xf32>,
    %c0_132 = arith.constant 0 : index
    %c136_133 = arith.constant 136 : index
    %119 = vector.load %arg31[%c0_132, %c136_133] : memref<8x512xf32, #tpu.memory_space<vmem>>, vector<8x128xf32>
    %c128_134 = arith.constant 128 : index
    %c0_135 = arith.constant 0 : index
    %120 = vector.load %arg32[%c128_134, %c0_135] : memref<136x384xf32, #tpu.memory_space<vmem>>, vector<8x128xf32>
    tpu.vector_store %arg32[%c128_134, %c0_135], %119 {strides = array<i32>} : memref<136x384xf32, #tpu.memory_space<vmem>>, vector<8x128xf32>,
    %c0_136 = arith.constant 0 : index
    %c0_137 = arith.constant 0 : index
    %121 = vector.load %arg4[%c0_136, %c0_137] : memref<8x136xf32, #tpu.memory_space<vmem>>, vector<8x136xf32>
    %c0_138 = arith.constant 0 : index
    %c0_139 = arith.constant 0 : index
    %122 = vector.load %arg32[%c0_138, %c0_139] : memref<136x384xf32, #tpu.memory_space<vmem>>, vector<136x128xf32>
    %cst_140 = arith.constant dense<0.000000e+00> : vector<8x128xf32>
    %123 = tpu.matmul %121, %122, %cst_140 {dimension_numbers = #tpu.dot_dimension_numbers<[1], [0], [0], [1], [0, 0, 1, 1], [], []>} : vector<8x136xf32>, vector<136x128xf32>, vector<8x128xf32> -> vector<8x128xf32>
    %c0_141 = arith.constant 0 : index
    %c0_142 = arith.constant 0 : index
    %124 = vector.load %arg5[%c0_141, %c0_142] : memref<8x1xf32, #tpu.memory_space<vmem>>, vector<8x1xf32>
    %125 = vector.broadcast %124 : vector<8x1xf32> to vector<8x128xf32>
    %126 = arith.addf %123, %125 : vector<8x128xf32>
    %cst_143 = arith.constant 0.707106769 : f32
    %127 = vector.broadcast %cst_143 : f32 to vector<8x128xf32>
    %128 = arith.mulf %126, %127 : vector<8x128xf32>
    %cst_144 = arith.constant 0.000000e+00 : f32
    %129 = vector.broadcast %cst_144 : f32 to vector<8x128xf32>
    %130 = arith.cmpf oge, %128, %129 : vector<8x128xf32>
    %cst_145 = arith.constant 1.000000e+00 : f32
    %cst_146 = arith.constant -1.000000e+00 : f32
    %131 = vector.broadcast %cst_145 : f32 to vector<8x128xf32>
    %132 = vector.broadcast %cst_146 : f32 to vector<8x128xf32>
    %133 = arith.select %130, %131, %132 : vector<8x128xi1>, vector<8x128xf32>
    %134 = math.absf %128 : vector<8x128xf32>
    %cst_147 = arith.constant 0.327591091 : f32
    %135 = vector.broadcast %cst_147 : f32 to vector<8x128xf32>
    %136 = arith.mulf %135, %134 : vector<8x128xf32>
    %cst_148 = arith.constant 1.000000e+00 : f32
    %137 = vector.broadcast %cst_148 : f32 to vector<8x128xf32>
    %138 = arith.addf %137, %136 : vector<8x128xf32>
    %cst_149 = arith.constant 1.000000e+00 : f32
    %139 = vector.broadcast %cst_149 : f32 to vector<8x128xf32>
    %140 = arith.divf %139, %138 : vector<8x128xf32>
    %cst_150 = arith.constant 1.06140542 : f32
    %141 = vector.broadcast %cst_150 : f32 to vector<8x128xf32>
    %142 = arith.mulf %141, %140 : vector<8x128xf32>
    %cst_151 = arith.constant -1.45315206 : f32
    %143 = vector.broadcast %cst_151 : f32 to vector<8x128xf32>
    %144 = arith.addf %142, %143 : vector<8x128xf32>
    %145 = arith.mulf %144, %140 : vector<8x128xf32>
    %cst_152 = arith.constant 1.42141378 : f32
    %146 = vector.broadcast %cst_152 : f32 to vector<8x128xf32>
    %147 = arith.addf %145, %146 : vector<8x128xf32>
    %148 = arith.mulf %147, %140 : vector<8x128xf32>
    %cst_153 = arith.constant -0.284496725 : f32
    %149 = vector.broadcast %cst_153 : f32 to vector<8x128xf32>
    %150 = arith.addf %148, %149 : vector<8x128xf32>
    %151 = arith.mulf %150, %140 : vector<8x128xf32>
    %cst_154 = arith.constant 0.254829586 : f32
    %152 = vector.broadcast %cst_154 : f32 to vector<8x128xf32>
    %153 = arith.addf %151, %152 : vector<8x128xf32>
    %154 = arith.mulf %153, %140 : vector<8x128xf32>
    %cst_155 = arith.constant 0.000000e+00 : f32
    %155 = vector.broadcast %cst_155 : f32 to vector<8x128xf32>
    %156 = arith.subf %155, %134 : vector<8x128xf32>
    %157 = arith.mulf %156, %134 : vector<8x128xf32>
    %158 = math.exp %157 : vector<8x128xf32>
    %159 = arith.mulf %154, %158 : vector<8x128xf32>
    %cst_156 = arith.constant 1.000000e+00 : f32
    %160 = vector.broadcast %cst_156 : f32 to vector<8x128xf32>
    %161 = arith.subf %160, %159 : vector<8x128xf32>
    %162 = arith.mulf %133, %161 : vector<8x128xf32>
    %cst_157 = arith.constant 5.000000e-01 : f32
    %163 = vector.broadcast %cst_157 : f32 to vector<8x128xf32>
    %164 = arith.mulf %163, %126 : vector<8x128xf32>
    %cst_158 = arith.constant 1.000000e+00 : f32
    %165 = vector.broadcast %cst_158 : f32 to vector<8x128xf32>
    %166 = arith.addf %165, %162 : vector<8x128xf32>
    %167 = arith.mulf %164, %166 : vector<8x128xf32>
    %cst_159 = arith.constant dense<0.000000e+00> : vector<8xf32>
    %168 = vector.multi_reduction <add>, %167, %cst_159 [1] : vector<8x128xf32> to vector<8xf32>
    %169 = vector.shape_cast %168 : vector<8xf32> to vector<8x1xf32>
    %cst_160 = arith.constant dense<0.000000e+00> : vector<1xf32>
    %170 = vector.multi_reduction <add>, %169, %cst_160 [0] : vector<8x1xf32> to vector<1xf32>
    %171 = vector.shape_cast %170 : vector<1xf32> to vector<1x1xf32>
    %172 = arith.mulf %167, %167 : vector<8x128xf32>
    %cst_161 = arith.constant dense<0.000000e+00> : vector<8xf32>
    %173 = vector.multi_reduction <add>, %172, %cst_161 [1] : vector<8x128xf32> to vector<8xf32>
    %174 = vector.shape_cast %173 : vector<8xf32> to vector<8x1xf32>
    %cst_162 = arith.constant dense<0.000000e+00> : vector<1xf32>
    %175 = vector.multi_reduction <add>, %174, %cst_162 [0] : vector<8x1xf32> to vector<1xf32>
    %176 = vector.shape_cast %175 : vector<1xf32> to vector<1x1xf32>
    %cst_163 = arith.constant 9.765625E-4 : f32
    %177 = vector.broadcast %cst_163 : f32 to vector<1x1xf32>
    %178 = arith.mulf %171, %177 : vector<1x1xf32>
    %cst_164 = arith.constant 9.765625E-4 : f32
    %179 = vector.broadcast %cst_164 : f32 to vector<1x1xf32>
    %180 = arith.mulf %176, %179 : vector<1x1xf32>
    %181 = arith.mulf %178, %178 : vector<1x1xf32>
    %182 = arith.subf %180, %181 : vector<1x1xf32>
    %183 = vector.broadcast %178 : vector<1x1xf32> to vector<8x128xf32>
    %184 = arith.subf %167, %183 : vector<8x128xf32>
    %cst_165 = arith.constant 9.99999974E-6 : f32
    %185 = vector.broadcast %cst_165 : f32 to vector<1x1xf32>
    %186 = arith.addf %182, %185 : vector<1x1xf32>
    %187 = math.rsqrt %186 : vector<1x1xf32>
    %188 = vector.broadcast %187 : vector<1x1xf32> to vector<8x128xf32>
    %189 = arith.mulf %184, %188 : vector<8x128xf32>
    %c0_166 = arith.constant 0 : index
    %c0_167 = arith.constant 0 : index
    %190 = vector.load %arg6[%c0_166, %c0_167] : memref<8x128xf32, #tpu.memory_space<vmem>>, vector<8x128xf32>
    %191 = arith.mulf %189, %190 : vector<8x128xf32>
    %c0_168 = arith.constant 0 : index
    %c0_169 = arith.constant 0 : index
    %192 = vector.load %arg7[%c0_168, %c0_169] : memref<8x128xf32, #tpu.memory_space<vmem>>, vector<8x128xf32>
    %193 = arith.addf %191, %192 : vector<8x128xf32>
    %c0_170 = arith.constant 0 : index
    %c128_171 = arith.constant 128 : index
    %194 = vector.load %arg31[%c0_170, %c128_171] : memref<8x512xf32, #tpu.memory_space<vmem>>, vector<8x128xf32>
    tpu.vector_store %arg31[%c0_170, %c128_171], %193 {strides = array<i32>} : memref<8x512xf32, #tpu.memory_space<vmem>>, vector<8x128xf32>,
    %c0_172 = arith.constant 0 : index
    %c120_173 = arith.constant 120 : index
    %195 = vector.load %arg31[%c0_172, %c120_173] : memref<8x512xf32, #tpu.memory_space<vmem>>, vector<8x128xf32>
    %c0_174 = arith.constant 0 : index
    %c0_175 = arith.constant 0 : index
    %196 = vector.load %arg32[%c0_174, %c0_175] : memref<136x384xf32, #tpu.memory_space<vmem>>, vector<8x128xf32>
    tpu.vector_store %arg32[%c0_174, %c0_175], %195 {strides = array<i32>} : memref<136x384xf32, #tpu.memory_space<vmem>>, vector<8x128xf32>,
    %c0_176 = arith.constant 0 : index
    %c121_177 = arith.constant 121 : index
    %197 = vector.load %arg31[%c0_176, %c121_177] : memref<8x512xf32, #tpu.memory_space<vmem>>, vector<8x128xf32>
    %c8_178 = arith.constant 8 : index
    %c0_179 = arith.constant 0 : index
    %198 = vector.load %arg32[%c8_178, %c0_179] : memref<136x384xf32, #tpu.memory_space<vmem>>, vector<8x128xf32>
    tpu.vector_store %arg32[%c8_178, %c0_179], %197 {strides = array<i32>} : memref<136x384xf32, #tpu.memory_space<vmem>>, vector<8x128xf32>,
    %c0_180 = arith.constant 0 : index
    %c122_181 = arith.constant 122 : index
    %199 = vector.load %arg31[%c0_180, %c122_181] : memref<8x512xf32, #tpu.memory_space<vmem>>, vector<8x128xf32>
    %c16_182 = arith.constant 16 : index
    %c0_183 = arith.constant 0 : index
    %200 = vector.load %arg32[%c16_182, %c0_183] : memref<136x384xf32, #tpu.memory_space<vmem>>, vector<8x128xf32>
    tpu.vector_store %arg32[%c16_182, %c0_183], %199 {strides = array<i32>} : memref<136x384xf32, #tpu.memory_space<vmem>>, vector<8x128xf32>,
    %c0_184 = arith.constant 0 : index
    %c123_185 = arith.constant 123 : index
    %201 = vector.load %arg31[%c0_184, %c123_185] : memref<8x512xf32, #tpu.memory_space<vmem>>, vector<8x128xf32>
    %c24_186 = arith.constant 24 : index
    %c0_187 = arith.constant 0 : index
    %202 = vector.load %arg32[%c24_186, %c0_187] : memref<136x384xf32, #tpu.memory_space<vmem>>, vector<8x128xf32>
    tpu.vector_store %arg32[%c24_186, %c0_187], %201 {strides = array<i32>} : memref<136x384xf32, #tpu.memory_space<vmem>>, vector<8x128xf32>,
    %c0_188 = arith.constant 0 : index
    %c124_189 = arith.constant 124 : index
    %203 = vector.load %arg31[%c0_188, %c124_189] : memref<8x512xf32, #tpu.memory_space<vmem>>, vector<8x128xf32>
    %c32_190 = arith.constant 32 : index
    %c0_191 = arith.constant 0 : index
    %204 = vector.load %arg32[%c32_190, %c0_191] : memref<136x384xf32, #tpu.memory_space<vmem>>, vector<8x128xf32>
    tpu.vector_store %arg32[%c32_190, %c0_191], %203 {strides = array<i32>} : memref<136x384xf32, #tpu.memory_space<vmem>>, vector<8x128xf32>,
    %c0_192 = arith.constant 0 : index
    %c125_193 = arith.constant 125 : index
    %205 = vector.load %arg31[%c0_192, %c125_193] : memref<8x512xf32, #tpu.memory_space<vmem>>, vector<8x128xf32>
    %c40_194 = arith.constant 40 : index
    %c0_195 = arith.constant 0 : index
    %206 = vector.load %arg32[%c40_194, %c0_195] : memref<136x384xf32, #tpu.memory_space<vmem>>, vector<8x128xf32>
    tpu.vector_store %arg32[%c40_194, %c0_195], %205 {strides = array<i32>} : memref<136x384xf32, #tpu.memory_space<vmem>>, vector<8x128xf32>,
    %c0_196 = arith.constant 0 : index
    %c126_197 = arith.constant 126 : index
    %207 = vector.load %arg31[%c0_196, %c126_197] : memref<8x512xf32, #tpu.memory_space<vmem>>, vector<8x128xf32>
    %c48_198 = arith.constant 48 : index
    %c0_199 = arith.constant 0 : index
    %208 = vector.load %arg32[%c48_198, %c0_199] : memref<136x384xf32, #tpu.memory_space<vmem>>, vector<8x128xf32>
    tpu.vector_store %arg32[%c48_198, %c0_199], %207 {strides = array<i32>} : memref<136x384xf32, #tpu.memory_space<vmem>>, vector<8x128xf32>,
    %c0_200 = arith.constant 0 : index
    %c127_201 = arith.constant 127 : index
    %209 = vector.load %arg31[%c0_200, %c127_201] : memref<8x512xf32, #tpu.memory_space<vmem>>, vector<8x128xf32>
    %c56_202 = arith.constant 56 : index
    %c0_203 = arith.constant 0 : index
    %210 = vector.load %arg32[%c56_202, %c0_203] : memref<136x384xf32, #tpu.memory_space<vmem>>, vector<8x128xf32>
    tpu.vector_store %arg32[%c56_202, %c0_203], %209 {strides = array<i32>} : memref<136x384xf32, #tpu.memory_space<vmem>>, vector<8x128xf32>,
    %c0_204 = arith.constant 0 : index
    %c128_205 = arith.constant 128 : index
    %211 = vector.load %arg31[%c0_204, %c128_205] : memref<8x512xf32, #tpu.memory_space<vmem>>, vector<8x128xf32>
    %c64_206 = arith.constant 64 : index
    %c0_207 = arith.constant 0 : index
    %212 = vector.load %arg32[%c64_206, %c0_207] : memref<136x384xf32, #tpu.memory_space<vmem>>, vector<8x128xf32>
    tpu.vector_store %arg32[%c64_206, %c0_207], %211 {strides = array<i32>} : memref<136x384xf32, #tpu.memory_space<vmem>>, vector<8x128xf32>,
    %c0_208 = arith.constant 0 : index
    %c129_209 = arith.constant 129 : index
    %213 = vector.load %arg31[%c0_208, %c129_209] : memref<8x512xf32, #tpu.memory_space<vmem>>, vector<8x128xf32>
    %c72_210 = arith.constant 72 : index
    %c0_211 = arith.constant 0 : index
    %214 = vector.load %arg32[%c72_210, %c0_211] : memref<136x384xf32, #tpu.memory_space<vmem>>, vector<8x128xf32>
    tpu.vector_store %arg32[%c72_210, %c0_211], %213 {strides = array<i32>} : memref<136x384xf32, #tpu.memory_space<vmem>>, vector<8x128xf32>,
    %c0_212 = arith.constant 0 : index
    %c130_213 = arith.constant 130 : index
    %215 = vector.load %arg31[%c0_212, %c130_213] : memref<8x512xf32, #tpu.memory_space<vmem>>, vector<8x128xf32>
    %c80_214 = arith.constant 80 : index
    %c0_215 = arith.constant 0 : index
    %216 = vector.load %arg32[%c80_214, %c0_215] : memref<136x384xf32, #tpu.memory_space<vmem>>, vector<8x128xf32>
    tpu.vector_store %arg32[%c80_214, %c0_215], %215 {strides = array<i32>} : memref<136x384xf32, #tpu.memory_space<vmem>>, vector<8x128xf32>,
    %c0_216 = arith.constant 0 : index
    %c131_217 = arith.constant 131 : index
    %217 = vector.load %arg31[%c0_216, %c131_217] : memref<8x512xf32, #tpu.memory_space<vmem>>, vector<8x128xf32>
    %c88_218 = arith.constant 88 : index
    %c0_219 = arith.constant 0 : index
    %218 = vector.load %arg32[%c88_218, %c0_219] : memref<136x384xf32, #tpu.memory_space<vmem>>, vector<8x128xf32>
    tpu.vector_store %arg32[%c88_218, %c0_219], %217 {strides = array<i32>} : memref<136x384xf32, #tpu.memory_space<vmem>>, vector<8x128xf32>,
    %c0_220 = arith.constant 0 : index
    %c132_221 = arith.constant 132 : index
    %219 = vector.load %arg31[%c0_220, %c132_221] : memref<8x512xf32, #tpu.memory_space<vmem>>, vector<8x128xf32>
    %c96_222 = arith.constant 96 : index
    %c0_223 = arith.constant 0 : index
    %220 = vector.load %arg32[%c96_222, %c0_223] : memref<136x384xf32, #tpu.memory_space<vmem>>, vector<8x128xf32>
    tpu.vector_store %arg32[%c96_222, %c0_223], %219 {strides = array<i32>} : memref<136x384xf32, #tpu.memory_space<vmem>>, vector<8x128xf32>,
    %c0_224 = arith.constant 0 : index
    %c133_225 = arith.constant 133 : index
    %221 = vector.load %arg31[%c0_224, %c133_225] : memref<8x512xf32, #tpu.memory_space<vmem>>, vector<8x128xf32>
    %c104_226 = arith.constant 104 : index
    %c0_227 = arith.constant 0 : index
    %222 = vector.load %arg32[%c104_226, %c0_227] : memref<136x384xf32, #tpu.memory_space<vmem>>, vector<8x128xf32>
    tpu.vector_store %arg32[%c104_226, %c0_227], %221 {strides = array<i32>} : memref<136x384xf32, #tpu.memory_space<vmem>>, vector<8x128xf32>,
    %c0_228 = arith.constant 0 : index
    %c134_229 = arith.constant 134 : index
    %223 = vector.load %arg31[%c0_228, %c134_229] : memref<8x512xf32, #tpu.memory_space<vmem>>, vector<8x128xf32>
    %c112_230 = arith.constant 112 : index
    %c0_231 = arith.constant 0 : index
    %224 = vector.load %arg32[%c112_230, %c0_231] : memref<136x384xf32, #tpu.memory_space<vmem>>, vector<8x128xf32>
    tpu.vector_store %arg32[%c112_230, %c0_231], %223 {strides = array<i32>} : memref<136x384xf32, #tpu.memory_space<vmem>>, vector<8x128xf32>,
    %c0_232 = arith.constant 0 : index
    %c135_233 = arith.constant 135 : index
    %225 = vector.load %arg31[%c0_232, %c135_233] : memref<8x512xf32, #tpu.memory_space<vmem>>, vector<8x128xf32>
    %c120_234 = arith.constant 120 : index
    %c0_235 = arith.constant 0 : index
    %226 = vector.load %arg32[%c120_234, %c0_235] : memref<136x384xf32, #tpu.memory_space<vmem>>, vector<8x128xf32>
    tpu.vector_store %arg32[%c120_234, %c0_235], %225 {strides = array<i32>} : memref<136x384xf32, #tpu.memory_space<vmem>>, vector<8x128xf32>,
    %c0_236 = arith.constant 0 : index
    %c136_237 = arith.constant 136 : index
    %227 = vector.load %arg31[%c0_236, %c136_237] : memref<8x512xf32, #tpu.memory_space<vmem>>, vector<8x128xf32>
    %c128_238 = arith.constant 128 : index
    %c0_239 = arith.constant 0 : index
    %228 = vector.load %arg32[%c128_238, %c0_239] : memref<136x384xf32, #tpu.memory_space<vmem>>, vector<8x128xf32>
    tpu.vector_store %arg32[%c128_238, %c0_239], %227 {strides = array<i32>} : memref<136x384xf32, #tpu.memory_space<vmem>>, vector<8x128xf32>,
    %c0_240 = arith.constant 0 : index
    %c0_241 = arith.constant 0 : index
    %229 = vector.load %arg8[%c0_240, %c0_241] : memref<8x136xf32, #tpu.memory_space<vmem>>, vector<8x136xf32>
    %c0_242 = arith.constant 0 : index
    %c0_243 = arith.constant 0 : index
    %230 = vector.load %arg32[%c0_242, %c0_243] : memref<136x384xf32, #tpu.memory_space<vmem>>, vector<136x128xf32>
    %cst_244 = arith.constant dense<0.000000e+00> : vector<8x128xf32>
    %231 = tpu.matmul %229, %230, %cst_244 {dimension_numbers = #tpu.dot_dimension_numbers<[1], [0], [0], [1], [0, 0, 1, 1], [], []>} : vector<8x136xf32>, vector<136x128xf32>, vector<8x128xf32> -> vector<8x128xf32>
    %c0_245 = arith.constant 0 : index
    %c0_246 = arith.constant 0 : index
    %232 = vector.load %arg9[%c0_245, %c0_246] : memref<8x1xf32, #tpu.memory_space<vmem>>, vector<8x1xf32>
    %233 = vector.broadcast %232 : vector<8x1xf32> to vector<8x128xf32>
    %234 = arith.addf %231, %233 : vector<8x128xf32>
    %cst_247 = arith.constant 0.707106769 : f32
    %235 = vector.broadcast %cst_247 : f32 to vector<8x128xf32>
    %236 = arith.mulf %234, %235 : vector<8x128xf32>
    %cst_248 = arith.constant 0.000000e+00 : f32
    %237 = vector.broadcast %cst_248 : f32 to vector<8x128xf32>
    %238 = arith.cmpf oge, %236, %237 : vector<8x128xf32>
    %cst_249 = arith.constant 1.000000e+00 : f32
    %cst_250 = arith.constant -1.000000e+00 : f32
    %239 = vector.broadcast %cst_249 : f32 to vector<8x128xf32>
    %240 = vector.broadcast %cst_250 : f32 to vector<8x128xf32>
    %241 = arith.select %238, %239, %240 : vector<8x128xi1>, vector<8x128xf32>
    %242 = math.absf %236 : vector<8x128xf32>
    %cst_251 = arith.constant 0.327591091 : f32
    %243 = vector.broadcast %cst_251 : f32 to vector<8x128xf32>
    %244 = arith.mulf %243, %242 : vector<8x128xf32>
    %cst_252 = arith.constant 1.000000e+00 : f32
    %245 = vector.broadcast %cst_252 : f32 to vector<8x128xf32>
    %246 = arith.addf %245, %244 : vector<8x128xf32>
    %cst_253 = arith.constant 1.000000e+00 : f32
    %247 = vector.broadcast %cst_253 : f32 to vector<8x128xf32>
    %248 = arith.divf %247, %246 : vector<8x128xf32>
    %cst_254 = arith.constant 1.06140542 : f32
    %249 = vector.broadcast %cst_254 : f32 to vector<8x128xf32>
    %250 = arith.mulf %249, %248 : vector<8x128xf32>
    %cst_255 = arith.constant -1.45315206 : f32
    %251 = vector.broadcast %cst_255 : f32 to vector<8x128xf32>
    %252 = arith.addf %250, %251 : vector<8x128xf32>
    %253 = arith.mulf %252, %248 : vector<8x128xf32>
    %cst_256 = arith.constant 1.42141378 : f32
    %254 = vector.broadcast %cst_256 : f32 to vector<8x128xf32>
    %255 = arith.addf %253, %254 : vector<8x128xf32>
    %256 = arith.mulf %255, %248 : vector<8x128xf32>
    %cst_257 = arith.constant -0.284496725 : f32
    %257 = vector.broadcast %cst_257 : f32 to vector<8x128xf32>
    %258 = arith.addf %256, %257 : vector<8x128xf32>
    %259 = arith.mulf %258, %248 : vector<8x128xf32>
    %cst_258 = arith.constant 0.254829586 : f32
    %260 = vector.broadcast %cst_258 : f32 to vector<8x128xf32>
    %261 = arith.addf %259, %260 : vector<8x128xf32>
    %262 = arith.mulf %261, %248 : vector<8x128xf32>
    %cst_259 = arith.constant 0.000000e+00 : f32
    %263 = vector.broadcast %cst_259 : f32 to vector<8x128xf32>
    %264 = arith.subf %263, %242 : vector<8x128xf32>
    %265 = arith.mulf %264, %242 : vector<8x128xf32>
    %266 = math.exp %265 : vector<8x128xf32>
    %267 = arith.mulf %262, %266 : vector<8x128xf32>
    %cst_260 = arith.constant 1.000000e+00 : f32
    %268 = vector.broadcast %cst_260 : f32 to vector<8x128xf32>
    %269 = arith.subf %268, %267 : vector<8x128xf32>
    %270 = arith.mulf %241, %269 : vector<8x128xf32>
    %cst_261 = arith.constant 5.000000e-01 : f32
    %271 = vector.broadcast %cst_261 : f32 to vector<8x128xf32>
    %272 = arith.mulf %271, %234 : vector<8x128xf32>
    %cst_262 = arith.constant 1.000000e+00 : f32
    %273 = vector.broadcast %cst_262 : f32 to vector<8x128xf32>
    %274 = arith.addf %273, %270 : vector<8x128xf32>
    %275 = arith.mulf %272, %274 : vector<8x128xf32>
    %cst_263 = arith.constant dense<0.000000e+00> : vector<8xf32>
    %276 = vector.multi_reduction <add>, %275, %cst_263 [1] : vector<8x128xf32> to vector<8xf32>
    %277 = vector.shape_cast %276 : vector<8xf32> to vector<8x1xf32>
    %cst_264 = arith.constant dense<0.000000e+00> : vector<1xf32>
    %278 = vector.multi_reduction <add>, %277, %cst_264 [0] : vector<8x1xf32> to vector<1xf32>
    %279 = vector.shape_cast %278 : vector<1xf32> to vector<1x1xf32>
    %280 = arith.mulf %275, %275 : vector<8x128xf32>
    %cst_265 = arith.constant dense<0.000000e+00> : vector<8xf32>
    %281 = vector.multi_reduction <add>, %280, %cst_265 [1] : vector<8x128xf32> to vector<8xf32>
    %282 = vector.shape_cast %281 : vector<8xf32> to vector<8x1xf32>
    %cst_266 = arith.constant dense<0.000000e+00> : vector<1xf32>
    %283 = vector.multi_reduction <add>, %282, %cst_266 [0] : vector<8x1xf32> to vector<1xf32>
    %284 = vector.shape_cast %283 : vector<1xf32> to vector<1x1xf32>
    %cst_267 = arith.constant 9.765625E-4 : f32
    %285 = vector.broadcast %cst_267 : f32 to vector<1x1xf32>
    %286 = arith.mulf %279, %285 : vector<1x1xf32>
    %cst_268 = arith.constant 9.765625E-4 : f32
    %287 = vector.broadcast %cst_268 : f32 to vector<1x1xf32>
    %288 = arith.mulf %284, %287 : vector<1x1xf32>
    %289 = arith.mulf %286, %286 : vector<1x1xf32>
    %290 = arith.subf %288, %289 : vector<1x1xf32>
    %291 = vector.broadcast %286 : vector<1x1xf32> to vector<8x128xf32>
    %292 = arith.subf %275, %291 : vector<8x128xf32>
    %cst_269 = arith.constant 9.99999974E-6 : f32
    %293 = vector.broadcast %cst_269 : f32 to vector<1x1xf32>
    %294 = arith.addf %290, %293 : vector<1x1xf32>
    %295 = math.rsqrt %294 : vector<1x1xf32>
    %296 = vector.broadcast %295 : vector<1x1xf32> to vector<8x128xf32>
    %297 = arith.mulf %292, %296 : vector<8x128xf32>
    %c0_270 = arith.constant 0 : index
    %c0_271 = arith.constant 0 : index
    %298 = vector.load %arg10[%c0_270, %c0_271] : memref<8x128xf32, #tpu.memory_space<vmem>>, vector<8x128xf32>
    %299 = arith.mulf %297, %298 : vector<8x128xf32>
    %c0_272 = arith.constant 0 : index
    %c0_273 = arith.constant 0 : index
    %300 = vector.load %arg11[%c0_272, %c0_273] : memref<8x128xf32, #tpu.memory_space<vmem>>, vector<8x128xf32>
    %301 = arith.addf %299, %300 : vector<8x128xf32>
    %c0_274 = arith.constant 0 : index
    %c0_275 = arith.constant 0 : index
    %302 = vector.load %arg18[%c0_274, %c0_275] : memref<128x512xf32, #tpu.memory_space<vmem>>, vector<128x512xf32>
    %cst_276 = arith.constant dense<0.000000e+00> : vector<8x512xf32>
    %303 = tpu.matmul %301, %302, %cst_276 {dimension_numbers = #tpu.dot_dimension_numbers<[1], [0], [0], [1], [0, 0, 1, 1], [], []>} : vector<8x128xf32>, vector<128x512xf32>, vector<8x512xf32> -> vector<8x512xf32>
    %c0_277 = arith.constant 0 : index
    %c0_278 = arith.constant 0 : index
    %304 = vector.load %arg31[%c0_277, %c0_278] : memref<8x512xf32, #tpu.memory_space<vmem>>, vector<8x512xf32>
    tpu.vector_store %arg31[%c0_277, %c0_278], %303 {strides = array<i32>} : memref<8x512xf32, #tpu.memory_space<vmem>>, vector<8x512xf32>,
    %c0_279 = arith.constant 0 : index
    %c0_280 = arith.constant 0 : index
    %305 = vector.load %arg31[%c0_279, %c0_280] : memref<8x512xf32, #tpu.memory_space<vmem>>, vector<8x384xf32>
    %c0_281 = arith.constant 0 : index
    %c0_282 = arith.constant 0 : index
    %306 = vector.load %arg32[%c0_281, %c0_282] : memref<136x384xf32, #tpu.memory_space<vmem>>, vector<8x384xf32>
    tpu.vector_store %arg32[%c0_281, %c0_282], %305 {strides = array<i32>} : memref<136x384xf32, #tpu.memory_space<vmem>>, vector<8x384xf32>,
    %c0_283 = arith.constant 0 : index
    %c1 = arith.constant 1 : index
    %307 = vector.load %arg31[%c0_283, %c1] : memref<8x512xf32, #tpu.memory_space<vmem>>, vector<8x384xf32>
    %c8_284 = arith.constant 8 : index
    %c0_285 = arith.constant 0 : index
    %308 = vector.load %arg32[%c8_284, %c0_285] : memref<136x384xf32, #tpu.memory_space<vmem>>, vector<8x384xf32>
    tpu.vector_store %arg32[%c8_284, %c0_285], %307 {strides = array<i32>} : memref<136x384xf32, #tpu.memory_space<vmem>>, vector<8x384xf32>,
    %c0_286 = arith.constant 0 : index
    %c2 = arith.constant 2 : index
    %309 = vector.load %arg31[%c0_286, %c2] : memref<8x512xf32, #tpu.memory_space<vmem>>, vector<8x384xf32>
    %c16_287 = arith.constant 16 : index
    %c0_288 = arith.constant 0 : index
    %310 = vector.load %arg32[%c16_287, %c0_288] : memref<136x384xf32, #tpu.memory_space<vmem>>, vector<8x384xf32>
    tpu.vector_store %arg32[%c16_287, %c0_288], %309 {strides = array<i32>} : memref<136x384xf32, #tpu.memory_space<vmem>>, vector<8x384xf32>,
    %c0_289 = arith.constant 0 : index
    %c3 = arith.constant 3 : index
    %311 = vector.load %arg31[%c0_289, %c3] : memref<8x512xf32, #tpu.memory_space<vmem>>, vector<8x384xf32>
    %c24_290 = arith.constant 24 : index
    %c0_291 = arith.constant 0 : index
    %312 = vector.load %arg32[%c24_290, %c0_291] : memref<136x384xf32, #tpu.memory_space<vmem>>, vector<8x384xf32>
    tpu.vector_store %arg32[%c24_290, %c0_291], %311 {strides = array<i32>} : memref<136x384xf32, #tpu.memory_space<vmem>>, vector<8x384xf32>,
    %c0_292 = arith.constant 0 : index
    %c4 = arith.constant 4 : index
    %313 = vector.load %arg31[%c0_292, %c4] : memref<8x512xf32, #tpu.memory_space<vmem>>, vector<8x384xf32>
    %c32_293 = arith.constant 32 : index
    %c0_294 = arith.constant 0 : index
    %314 = vector.load %arg32[%c32_293, %c0_294] : memref<136x384xf32, #tpu.memory_space<vmem>>, vector<8x384xf32>
    tpu.vector_store %arg32[%c32_293, %c0_294], %313 {strides = array<i32>} : memref<136x384xf32, #tpu.memory_space<vmem>>, vector<8x384xf32>,
    %c0_295 = arith.constant 0 : index
    %c5 = arith.constant 5 : index
    %315 = vector.load %arg31[%c0_295, %c5] : memref<8x512xf32, #tpu.memory_space<vmem>>, vector<8x384xf32>
    %c40_296 = arith.constant 40 : index
    %c0_297 = arith.constant 0 : index
    %316 = vector.load %arg32[%c40_296, %c0_297] : memref<136x384xf32, #tpu.memory_space<vmem>>, vector<8x384xf32>
    tpu.vector_store %arg32[%c40_296, %c0_297], %315 {strides = array<i32>} : memref<136x384xf32, #tpu.memory_space<vmem>>, vector<8x384xf32>,
    %c0_298 = arith.constant 0 : index
    %c6 = arith.constant 6 : index
    %317 = vector.load %arg31[%c0_298, %c6] : memref<8x512xf32, #tpu.memory_space<vmem>>, vector<8x384xf32>
    %c48_299 = arith.constant 48 : index
    %c0_300 = arith.constant 0 : index
    %318 = vector.load %arg32[%c48_299, %c0_300] : memref<136x384xf32, #tpu.memory_space<vmem>>, vector<8x384xf32>
    tpu.vector_store %arg32[%c48_299, %c0_300], %317 {strides = array<i32>} : memref<136x384xf32, #tpu.memory_space<vmem>>, vector<8x384xf32>,
    %c0_301 = arith.constant 0 : index
    %c7 = arith.constant 7 : index
    %319 = vector.load %arg31[%c0_301, %c7] : memref<8x512xf32, #tpu.memory_space<vmem>>, vector<8x384xf32>
    %c56_302 = arith.constant 56 : index
    %c0_303 = arith.constant 0 : index
    %320 = vector.load %arg32[%c56_302, %c0_303] : memref<136x384xf32, #tpu.memory_space<vmem>>, vector<8x384xf32>
    tpu.vector_store %arg32[%c56_302, %c0_303], %319 {strides = array<i32>} : memref<136x384xf32, #tpu.memory_space<vmem>>, vector<8x384xf32>,
    %c0_304 = arith.constant 0 : index
    %c8_305 = arith.constant 8 : index
    %321 = vector.load %arg31[%c0_304, %c8_305] : memref<8x512xf32, #tpu.memory_space<vmem>>, vector<8x384xf32>
    %c64_306 = arith.constant 64 : index
    %c0_307 = arith.constant 0 : index
    %322 = vector.load %arg32[%c64_306, %c0_307] : memref<136x384xf32, #tpu.memory_space<vmem>>, vector<8x384xf32>
    tpu.vector_store %arg32[%c64_306, %c0_307], %321 {strides = array<i32>} : memref<136x384xf32, #tpu.memory_space<vmem>>, vector<8x384xf32>,
    %c0_308 = arith.constant 0 : index
    %c9 = arith.constant 9 : index
    %323 = vector.load %arg31[%c0_308, %c9] : memref<8x512xf32, #tpu.memory_space<vmem>>, vector<8x384xf32>
    %c72_309 = arith.constant 72 : index
    %c0_310 = arith.constant 0 : index
    %324 = vector.load %arg32[%c72_309, %c0_310] : memref<136x384xf32, #tpu.memory_space<vmem>>, vector<8x384xf32>
    tpu.vector_store %arg32[%c72_309, %c0_310], %323 {strides = array<i32>} : memref<136x384xf32, #tpu.memory_space<vmem>>, vector<8x384xf32>,
    %c0_311 = arith.constant 0 : index
    %c10 = arith.constant 10 : index
    %325 = vector.load %arg31[%c0_311, %c10] : memref<8x512xf32, #tpu.memory_space<vmem>>, vector<8x384xf32>
    %c80_312 = arith.constant 80 : index
    %c0_313 = arith.constant 0 : index
    %326 = vector.load %arg32[%c80_312, %c0_313] : memref<136x384xf32, #tpu.memory_space<vmem>>, vector<8x384xf32>
    tpu.vector_store %arg32[%c80_312, %c0_313], %325 {strides = array<i32>} : memref<136x384xf32, #tpu.memory_space<vmem>>, vector<8x384xf32>,
    %c0_314 = arith.constant 0 : index
    %c11 = arith.constant 11 : index
    %327 = vector.load %arg31[%c0_314, %c11] : memref<8x512xf32, #tpu.memory_space<vmem>>, vector<8x384xf32>
    %c88_315 = arith.constant 88 : index
    %c0_316 = arith.constant 0 : index
    %328 = vector.load %arg32[%c88_315, %c0_316] : memref<136x384xf32, #tpu.memory_space<vmem>>, vector<8x384xf32>
    tpu.vector_store %arg32[%c88_315, %c0_316], %327 {strides = array<i32>} : memref<136x384xf32, #tpu.memory_space<vmem>>, vector<8x384xf32>,
    %c0_317 = arith.constant 0 : index
    %c12 = arith.constant 12 : index
    %329 = vector.load %arg31[%c0_317, %c12] : memref<8x512xf32, #tpu.memory_space<vmem>>, vector<8x384xf32>
    %c96_318 = arith.constant 96 : index
    %c0_319 = arith.constant 0 : index
    %330 = vector.load %arg32[%c96_318, %c0_319] : memref<136x384xf32, #tpu.memory_space<vmem>>, vector<8x384xf32>
    tpu.vector_store %arg32[%c96_318, %c0_319], %329 {strides = array<i32>} : memref<136x384xf32, #tpu.memory_space<vmem>>, vector<8x384xf32>,
    %c0_320 = arith.constant 0 : index
    %c13 = arith.constant 13 : index
    %331 = vector.load %arg31[%c0_320, %c13] : memref<8x512xf32, #tpu.memory_space<vmem>>, vector<8x384xf32>
    %c104_321 = arith.constant 104 : index
    %c0_322 = arith.constant 0 : index
    %332 = vector.load %arg32[%c104_321, %c0_322] : memref<136x384xf32, #tpu.memory_space<vmem>>, vector<8x384xf32>
    tpu.vector_store %arg32[%c104_321, %c0_322], %331 {strides = array<i32>} : memref<136x384xf32, #tpu.memory_space<vmem>>, vector<8x384xf32>,
    %c0_323 = arith.constant 0 : index
    %c14 = arith.constant 14 : index
    %333 = vector.load %arg31[%c0_323, %c14] : memref<8x512xf32, #tpu.memory_space<vmem>>, vector<8x384xf32>
    %c112_324 = arith.constant 112 : index
    %c0_325 = arith.constant 0 : index
    %334 = vector.load %arg32[%c112_324, %c0_325] : memref<136x384xf32, #tpu.memory_space<vmem>>, vector<8x384xf32>
    tpu.vector_store %arg32[%c112_324, %c0_325], %333 {strides = array<i32>} : memref<136x384xf32, #tpu.memory_space<vmem>>, vector<8x384xf32>,
    %c0_326 = arith.constant 0 : index
    %c15 = arith.constant 15 : index
    %335 = vector.load %arg31[%c0_326, %c15] : memref<8x512xf32, #tpu.memory_space<vmem>>, vector<8x384xf32>
    %c120_327 = arith.constant 120 : index
    %c0_328 = arith.constant 0 : index
    %336 = vector.load %arg32[%c120_327, %c0_328] : memref<136x384xf32, #tpu.memory_space<vmem>>, vector<8x384xf32>
    tpu.vector_store %arg32[%c120_327, %c0_328], %335 {strides = array<i32>} : memref<136x384xf32, #tpu.memory_space<vmem>>, vector<8x384xf32>,
    %c0_329 = arith.constant 0 : index
    %c16_330 = arith.constant 16 : index
    %337 = vector.load %arg31[%c0_329, %c16_330] : memref<8x512xf32, #tpu.memory_space<vmem>>, vector<8x384xf32>
    %c128_331 = arith.constant 128 : index
    %c0_332 = arith.constant 0 : index
    %338 = vector.load %arg32[%c128_331, %c0_332] : memref<136x384xf32, #tpu.memory_space<vmem>>, vector<8x384xf32>
    tpu.vector_store %arg32[%c128_331, %c0_332], %337 {strides = array<i32>} : memref<136x384xf32, #tpu.memory_space<vmem>>, vector<8x384xf32>,
    %c0_333 = arith.constant 0 : index
    %c0_334 = arith.constant 0 : index
    %339 = vector.load %arg12[%c0_333, %c0_334] : memref<8x136xf32, #tpu.memory_space<vmem>>, vector<8x136xf32>
    %c0_335 = arith.constant 0 : index
    %c0_336 = arith.constant 0 : index
    %340 = vector.load %arg32[%c0_335, %c0_336] : memref<136x384xf32, #tpu.memory_space<vmem>>, vector<136x384xf32>
    %cst_337 = arith.constant dense<0.000000e+00> : vector<8x384xf32>
    %341 = tpu.matmul %339, %340, %cst_337 {dimension_numbers = #tpu.dot_dimension_numbers<[1], [0], [0], [1], [0, 0, 1, 1], [], []>} : vector<8x136xf32>, vector<136x384xf32>, vector<8x384xf32> -> vector<8x384xf32>
    %c0_338 = arith.constant 0 : index
    %c0_339 = arith.constant 0 : index
    %342 = vector.load %arg13[%c0_338, %c0_339] : memref<8x1xf32, #tpu.memory_space<vmem>>, vector<8x1xf32>
    %343 = vector.broadcast %342 : vector<8x1xf32> to vector<8x384xf32>
    %344 = arith.addf %341, %343 : vector<8x384xf32>
    %cst_340 = arith.constant 0.707106769 : f32
    %345 = vector.broadcast %cst_340 : f32 to vector<8x384xf32>
    %346 = arith.mulf %344, %345 : vector<8x384xf32>
    %cst_341 = arith.constant 0.000000e+00 : f32
    %347 = vector.broadcast %cst_341 : f32 to vector<8x384xf32>
    %348 = arith.cmpf oge, %346, %347 : vector<8x384xf32>
    %cst_342 = arith.constant 1.000000e+00 : f32
    %cst_343 = arith.constant -1.000000e+00 : f32
    %349 = vector.broadcast %cst_342 : f32 to vector<8x384xf32>
    %350 = vector.broadcast %cst_343 : f32 to vector<8x384xf32>
    %351 = arith.select %348, %349, %350 : vector<8x384xi1>, vector<8x384xf32>
    %352 = math.absf %346 : vector<8x384xf32>
    %cst_344 = arith.constant 0.327591091 : f32
    %353 = vector.broadcast %cst_344 : f32 to vector<8x384xf32>
    %354 = arith.mulf %353, %352 : vector<8x384xf32>
    %cst_345 = arith.constant 1.000000e+00 : f32
    %355 = vector.broadcast %cst_345 : f32 to vector<8x384xf32>
    %356 = arith.addf %355, %354 : vector<8x384xf32>
    %cst_346 = arith.constant 1.000000e+00 : f32
    %357 = vector.broadcast %cst_346 : f32 to vector<8x384xf32>
    %358 = arith.divf %357, %356 : vector<8x384xf32>
    %cst_347 = arith.constant 1.06140542 : f32
    %359 = vector.broadcast %cst_347 : f32 to vector<8x384xf32>
    %360 = arith.mulf %359, %358 : vector<8x384xf32>
    %cst_348 = arith.constant -1.45315206 : f32
    %361 = vector.broadcast %cst_348 : f32 to vector<8x384xf32>
    %362 = arith.addf %360, %361 : vector<8x384xf32>
    %363 = arith.mulf %362, %358 : vector<8x384xf32>
    %cst_349 = arith.constant 1.42141378 : f32
    %364 = vector.broadcast %cst_349 : f32 to vector<8x384xf32>
    %365 = arith.addf %363, %364 : vector<8x384xf32>
    %366 = arith.mulf %365, %358 : vector<8x384xf32>
    %cst_350 = arith.constant -0.284496725 : f32
    %367 = vector.broadcast %cst_350 : f32 to vector<8x384xf32>
    %368 = arith.addf %366, %367 : vector<8x384xf32>
    %369 = arith.mulf %368, %358 : vector<8x384xf32>
    %cst_351 = arith.constant 0.254829586 : f32
    %370 = vector.broadcast %cst_351 : f32 to vector<8x384xf32>
    %371 = arith.addf %369, %370 : vector<8x384xf32>
    %372 = arith.mulf %371, %358 : vector<8x384xf32>
    %cst_352 = arith.constant 0.000000e+00 : f32
    %373 = vector.broadcast %cst_352 : f32 to vector<8x384xf32>
    %374 = arith.subf %373, %352 : vector<8x384xf32>
    %375 = arith.mulf %374, %352 : vector<8x384xf32>
    %376 = math.exp %375 : vector<8x384xf32>
    %377 = arith.mulf %372, %376 : vector<8x384xf32>
    %cst_353 = arith.constant 1.000000e+00 : f32
    %378 = vector.broadcast %cst_353 : f32 to vector<8x384xf32>
    %379 = arith.subf %378, %377 : vector<8x384xf32>
    %380 = arith.mulf %351, %379 : vector<8x384xf32>
    %cst_354 = arith.constant 5.000000e-01 : f32
    %381 = vector.broadcast %cst_354 : f32 to vector<8x384xf32>
    %382 = arith.mulf %381, %344 : vector<8x384xf32>
    %cst_355 = arith.constant 1.000000e+00 : f32
    %383 = vector.broadcast %cst_355 : f32 to vector<8x384xf32>
    %384 = arith.addf %383, %380 : vector<8x384xf32>
    %385 = arith.mulf %382, %384 : vector<8x384xf32>
    %cst_356 = arith.constant dense<0.000000e+00> : vector<8xf32>
    %386 = vector.multi_reduction <add>, %385, %cst_356 [1] : vector<8x384xf32> to vector<8xf32>
    %387 = vector.shape_cast %386 : vector<8xf32> to vector<8x1xf32>
    %cst_357 = arith.constant dense<0.000000e+00> : vector<1xf32>
    %388 = vector.multi_reduction <add>, %387, %cst_357 [0] : vector<8x1xf32> to vector<1xf32>
    %389 = vector.shape_cast %388 : vector<1xf32> to vector<1x1xf32>
    %390 = arith.mulf %385, %385 : vector<8x384xf32>
    %cst_358 = arith.constant dense<0.000000e+00> : vector<8xf32>
    %391 = vector.multi_reduction <add>, %390, %cst_358 [1] : vector<8x384xf32> to vector<8xf32>
    %392 = vector.shape_cast %391 : vector<8xf32> to vector<8x1xf32>
    %cst_359 = arith.constant dense<0.000000e+00> : vector<1xf32>
    %393 = vector.multi_reduction <add>, %392, %cst_359 [0] : vector<8x1xf32> to vector<1xf32>
    %394 = vector.shape_cast %393 : vector<1xf32> to vector<1x1xf32>
    %cst_360 = arith.constant 3.25520843E-4 : f32
    %395 = vector.broadcast %cst_360 : f32 to vector<1x1xf32>
    %396 = arith.mulf %389, %395 : vector<1x1xf32>
    %cst_361 = arith.constant 3.25520843E-4 : f32
    %397 = vector.broadcast %cst_361 : f32 to vector<1x1xf32>
    %398 = arith.mulf %394, %397 : vector<1x1xf32>
    %399 = arith.mulf %396, %396 : vector<1x1xf32>
    %400 = arith.subf %398, %399 : vector<1x1xf32>
    %401 = vector.broadcast %396 : vector<1x1xf32> to vector<8x384xf32>
    %402 = arith.subf %385, %401 : vector<8x384xf32>
    %cst_362 = arith.constant 9.99999974E-6 : f32
    %403 = vector.broadcast %cst_362 : f32 to vector<1x1xf32>
    %404 = arith.addf %400, %403 : vector<1x1xf32>
    %405 = math.rsqrt %404 : vector<1x1xf32>
    %406 = vector.broadcast %405 : vector<1x1xf32> to vector<8x384xf32>
    %407 = arith.mulf %402, %406 : vector<8x384xf32>
    %c0_363 = arith.constant 0 : index
    %c0_364 = arith.constant 0 : index
    %408 = vector.load %arg14[%c0_363, %c0_364] : memref<8x384xf32, #tpu.memory_space<vmem>>, vector<8x384xf32>
    %409 = arith.mulf %407, %408 : vector<8x384xf32>
    %c0_365 = arith.constant 0 : index
    %c0_366 = arith.constant 0 : index
    %410 = vector.load %arg15[%c0_365, %c0_366] : memref<8x384xf32, #tpu.memory_space<vmem>>, vector<8x384xf32>
    %411 = arith.addf %409, %410 : vector<8x384xf32>
    %cst_367 = arith.constant 0.707106769 : f32
    %412 = vector.broadcast %cst_367 : f32 to vector<8x384xf32>
    %413 = arith.mulf %411, %412 : vector<8x384xf32>
    %cst_368 = arith.constant 0.000000e+00 : f32
    %414 = vector.broadcast %cst_368 : f32 to vector<8x384xf32>
    %415 = arith.cmpf oge, %413, %414 : vector<8x384xf32>
    %cst_369 = arith.constant 1.000000e+00 : f32
    %cst_370 = arith.constant -1.000000e+00 : f32
    %416 = vector.broadcast %cst_369 : f32 to vector<8x384xf32>
    %417 = vector.broadcast %cst_370 : f32 to vector<8x384xf32>
    %418 = arith.select %415, %416, %417 : vector<8x384xi1>, vector<8x384xf32>
    %419 = math.absf %413 : vector<8x384xf32>
    %cst_371 = arith.constant 0.327591091 : f32
    %420 = vector.broadcast %cst_371 : f32 to vector<8x384xf32>
    %421 = arith.mulf %420, %419 : vector<8x384xf32>
    %cst_372 = arith.constant 1.000000e+00 : f32
    %422 = vector.broadcast %cst_372 : f32 to vector<8x384xf32>
    %423 = arith.addf %422, %421 : vector<8x384xf32>
    %cst_373 = arith.constant 1.000000e+00 : f32
    %424 = vector.broadcast %cst_373 : f32 to vector<8x384xf32>
    %425 = arith.divf %424, %423 : vector<8x384xf32>
    %cst_374 = arith.constant 1.06140542 : f32
    %426 = vector.broadcast %cst_374 : f32 to vector<8x384xf32>
    %427 = arith.mulf %426, %425 : vector<8x384xf32>
    %cst_375 = arith.constant -1.45315206 : f32
    %428 = vector.broadcast %cst_375 : f32 to vector<8x384xf32>
    %429 = arith.addf %427, %428 : vector<8x384xf32>
    %430 = arith.mulf %429, %425 : vector<8x384xf32>
    %cst_376 = arith.constant 1.42141378 : f32
    %431 = vector.broadcast %cst_376 : f32 to vector<8x384xf32>
    %432 = arith.addf %430, %431 : vector<8x384xf32>
    %433 = arith.mulf %432, %425 : vector<8x384xf32>
    %cst_377 = arith.constant -0.284496725 : f32
    %434 = vector.broadcast %cst_377 : f32 to vector<8x384xf32>
    %435 = arith.addf %433, %434 : vector<8x384xf32>
    %436 = arith.mulf %435, %425 : vector<8x384xf32>
    %cst_378 = arith.constant 0.254829586 : f32
    %437 = vector.broadcast %cst_378 : f32 to vector<8x384xf32>
    %438 = arith.addf %436, %437 : vector<8x384xf32>
    %439 = arith.mulf %438, %425 : vector<8x384xf32>
    %cst_379 = arith.constant 0.000000e+00 : f32
    %440 = vector.broadcast %cst_379 : f32 to vector<8x384xf32>
    %441 = arith.subf %440, %419 : vector<8x384xf32>
    %442 = arith.mulf %441, %419 : vector<8x384xf32>
    %443 = math.exp %442 : vector<8x384xf32>
    %444 = arith.mulf %439, %443 : vector<8x384xf32>
    %cst_380 = arith.constant 1.000000e+00 : f32
    %445 = vector.broadcast %cst_380 : f32 to vector<8x384xf32>
    %446 = arith.subf %445, %444 : vector<8x384xf32>
    %447 = arith.mulf %418, %446 : vector<8x384xf32>
    %cst_381 = arith.constant 5.000000e-01 : f32
    %448 = vector.broadcast %cst_381 : f32 to vector<8x384xf32>
    %449 = arith.mulf %448, %411 : vector<8x384xf32>
    %cst_382 = arith.constant 1.000000e+00 : f32
    %450 = vector.broadcast %cst_382 : f32 to vector<8x384xf32>
    %451 = arith.addf %450, %447 : vector<8x384xf32>
    %452 = arith.mulf %449, %451 : vector<8x384xf32>
    %c0_383 = arith.constant 0 : index
    %c7_384 = arith.constant 7 : index
    %453 = vector.load %arg31[%c0_383, %c7_384] : memref<8x512xf32, #tpu.memory_space<vmem>>, vector<8x384xf32>
    tpu.vector_store %arg31[%c0_383, %c7_384], %452 {strides = array<i32>} : memref<8x512xf32, #tpu.memory_space<vmem>>, vector<8x384xf32>,
    %c0_385 = arith.constant 0 : index
    %c0_386 = arith.constant 0 : index
    %454 = vector.load %arg31[%c0_385, %c0_386] : memref<8x512xf32, #tpu.memory_space<vmem>>, vector<8x384xf32>
    %c0_387 = arith.constant 0 : index
    %c0_388 = arith.constant 0 : index
    %455 = vector.load %arg32[%c0_387, %c0_388] : memref<136x384xf32, #tpu.memory_space<vmem>>, vector<8x384xf32>
    tpu.vector_store %arg32[%c0_387, %c0_388], %454 {strides = array<i32>} : memref<136x384xf32, #tpu.memory_space<vmem>>, vector<8x384xf32>,
    %c0_389 = arith.constant 0 : index
    %c1_390 = arith.constant 1 : index
    %456 = vector.load %arg31[%c0_389, %c1_390] : memref<8x512xf32, #tpu.memory_space<vmem>>, vector<8x384xf32>
    %c8_391 = arith.constant 8 : index
    %c0_392 = arith.constant 0 : index
    %457 = vector.load %arg32[%c8_391, %c0_392] : memref<136x384xf32, #tpu.memory_space<vmem>>, vector<8x384xf32>
    tpu.vector_store %arg32[%c8_391, %c0_392], %456 {strides = array<i32>} : memref<136x384xf32, #tpu.memory_space<vmem>>, vector<8x384xf32>,
    %c0_393 = arith.constant 0 : index
    %c2_394 = arith.constant 2 : index
    %458 = vector.load %arg31[%c0_393, %c2_394] : memref<8x512xf32, #tpu.memory_space<vmem>>, vector<8x384xf32>
    %c16_395 = arith.constant 16 : index
    %c0_396 = arith.constant 0 : index
    %459 = vector.load %arg32[%c16_395, %c0_396] : memref<136x384xf32, #tpu.memory_space<vmem>>, vector<8x384xf32>
    tpu.vector_store %arg32[%c16_395, %c0_396], %458 {strides = array<i32>} : memref<136x384xf32, #tpu.memory_space<vmem>>, vector<8x384xf32>,
    %c0_397 = arith.constant 0 : index
    %c3_398 = arith.constant 3 : index
    %460 = vector.load %arg31[%c0_397, %c3_398] : memref<8x512xf32, #tpu.memory_space<vmem>>, vector<8x384xf32>
    %c24_399 = arith.constant 24 : index
    %c0_400 = arith.constant 0 : index
    %461 = vector.load %arg32[%c24_399, %c0_400] : memref<136x384xf32, #tpu.memory_space<vmem>>, vector<8x384xf32>
    tpu.vector_store %arg32[%c24_399, %c0_400], %460 {strides = array<i32>} : memref<136x384xf32, #tpu.memory_space<vmem>>, vector<8x384xf32>,
    %c0_401 = arith.constant 0 : index
    %c4_402 = arith.constant 4 : index
    %462 = vector.load %arg31[%c0_401, %c4_402] : memref<8x512xf32, #tpu.memory_space<vmem>>, vector<8x384xf32>
    %c32_403 = arith.constant 32 : index
    %c0_404 = arith.constant 0 : index
    %463 = vector.load %arg32[%c32_403, %c0_404] : memref<136x384xf32, #tpu.memory_space<vmem>>, vector<8x384xf32>
    tpu.vector_store %arg32[%c32_403, %c0_404], %462 {strides = array<i32>} : memref<136x384xf32, #tpu.memory_space<vmem>>, vector<8x384xf32>,
    %c0_405 = arith.constant 0 : index
    %c5_406 = arith.constant 5 : index
    %464 = vector.load %arg31[%c0_405, %c5_406] : memref<8x512xf32, #tpu.memory_space<vmem>>, vector<8x384xf32>
    %c40_407 = arith.constant 40 : index
    %c0_408 = arith.constant 0 : index
    %465 = vector.load %arg32[%c40_407, %c0_408] : memref<136x384xf32, #tpu.memory_space<vmem>>, vector<8x384xf32>
    tpu.vector_store %arg32[%c40_407, %c0_408], %464 {strides = array<i32>} : memref<136x384xf32, #tpu.memory_space<vmem>>, vector<8x384xf32>,
    %c0_409 = arith.constant 0 : index
    %c6_410 = arith.constant 6 : index
    %466 = vector.load %arg31[%c0_409, %c6_410] : memref<8x512xf32, #tpu.memory_space<vmem>>, vector<8x384xf32>
    %c48_411 = arith.constant 48 : index
    %c0_412 = arith.constant 0 : index
    %467 = vector.load %arg32[%c48_411, %c0_412] : memref<136x384xf32, #tpu.memory_space<vmem>>, vector<8x384xf32>
    tpu.vector_store %arg32[%c48_411, %c0_412], %466 {strides = array<i32>} : memref<136x384xf32, #tpu.memory_space<vmem>>, vector<8x384xf32>,
    %c0_413 = arith.constant 0 : index
    %c7_414 = arith.constant 7 : index
    %468 = vector.load %arg31[%c0_413, %c7_414] : memref<8x512xf32, #tpu.memory_space<vmem>>, vector<8x384xf32>
    %c56_415 = arith.constant 56 : index
    %c0_416 = arith.constant 0 : index
    %469 = vector.load %arg32[%c56_415, %c0_416] : memref<136x384xf32, #tpu.memory_space<vmem>>, vector<8x384xf32>
    tpu.vector_store %arg32[%c56_415, %c0_416], %468 {strides = array<i32>} : memref<136x384xf32, #tpu.memory_space<vmem>>, vector<8x384xf32>,
    %c0_417 = arith.constant 0 : index
    %c8_418 = arith.constant 8 : index
    %470 = vector.load %arg31[%c0_417, %c8_418] : memref<8x512xf32, #tpu.memory_space<vmem>>, vector<8x384xf32>
    %c64_419 = arith.constant 64 : index
    %c0_420 = arith.constant 0 : index
    %471 = vector.load %arg32[%c64_419, %c0_420] : memref<136x384xf32, #tpu.memory_space<vmem>>, vector<8x384xf32>
    tpu.vector_store %arg32[%c64_419, %c0_420], %470 {strides = array<i32>} : memref<136x384xf32, #tpu.memory_space<vmem>>, vector<8x384xf32>,
    %c0_421 = arith.constant 0 : index
    %c9_422 = arith.constant 9 : index
    %472 = vector.load %arg31[%c0_421, %c9_422] : memref<8x512xf32, #tpu.memory_space<vmem>>, vector<8x384xf32>
    %c72_423 = arith.constant 72 : index
    %c0_424 = arith.constant 0 : index
    %473 = vector.load %arg32[%c72_423, %c0_424] : memref<136x384xf32, #tpu.memory_space<vmem>>, vector<8x384xf32>
    tpu.vector_store %arg32[%c72_423, %c0_424], %472 {strides = array<i32>} : memref<136x384xf32, #tpu.memory_space<vmem>>, vector<8x384xf32>,
    %c0_425 = arith.constant 0 : index
    %c10_426 = arith.constant 10 : index
    %474 = vector.load %arg31[%c0_425, %c10_426] : memref<8x512xf32, #tpu.memory_space<vmem>>, vector<8x384xf32>
    %c80_427 = arith.constant 80 : index
    %c0_428 = arith.constant 0 : index
    %475 = vector.load %arg32[%c80_427, %c0_428] : memref<136x384xf32, #tpu.memory_space<vmem>>, vector<8x384xf32>
    tpu.vector_store %arg32[%c80_427, %c0_428], %474 {strides = array<i32>} : memref<136x384xf32, #tpu.memory_space<vmem>>, vector<8x384xf32>,
    %c0_429 = arith.constant 0 : index
    %c11_430 = arith.constant 11 : index
    %476 = vector.load %arg31[%c0_429, %c11_430] : memref<8x512xf32, #tpu.memory_space<vmem>>, vector<8x384xf32>
    %c88_431 = arith.constant 88 : index
    %c0_432 = arith.constant 0 : index
    %477 = vector.load %arg32[%c88_431, %c0_432] : memref<136x384xf32, #tpu.memory_space<vmem>>, vector<8x384xf32>
    tpu.vector_store %arg32[%c88_431, %c0_432], %476 {strides = array<i32>} : memref<136x384xf32, #tpu.memory_space<vmem>>, vector<8x384xf32>,
    %c0_433 = arith.constant 0 : index
    %c12_434 = arith.constant 12 : index
    %478 = vector.load %arg31[%c0_433, %c12_434] : memref<8x512xf32, #tpu.memory_space<vmem>>, vector<8x384xf32>
    %c96_435 = arith.constant 96 : index
    %c0_436 = arith.constant 0 : index
    %479 = vector.load %arg32[%c96_435, %c0_436] : memref<136x384xf32, #tpu.memory_space<vmem>>, vector<8x384xf32>
    tpu.vector_store %arg32[%c96_435, %c0_436], %478 {strides = array<i32>} : memref<136x384xf32, #tpu.memory_space<vmem>>, vector<8x384xf32>,
    %c0_437 = arith.constant 0 : index
    %c13_438 = arith.constant 13 : index
    %480 = vector.load %arg31[%c0_437, %c13_438] : memref<8x512xf32, #tpu.memory_space<vmem>>, vector<8x384xf32>
    %c104_439 = arith.constant 104 : index
    %c0_440 = arith.constant 0 : index
    %481 = vector.load %arg32[%c104_439, %c0_440] : memref<136x384xf32, #tpu.memory_space<vmem>>, vector<8x384xf32>
    tpu.vector_store %arg32[%c104_439, %c0_440], %480 {strides = array<i32>} : memref<136x384xf32, #tpu.memory_space<vmem>>, vector<8x384xf32>,
    %c0_441 = arith.constant 0 : index
    %c14_442 = arith.constant 14 : index
    %482 = vector.load %arg31[%c0_441, %c14_442] : memref<8x512xf32, #tpu.memory_space<vmem>>, vector<8x384xf32>
    %c112_443 = arith.constant 112 : index
    %c0_444 = arith.constant 0 : index
    %483 = vector.load %arg32[%c112_443, %c0_444] : memref<136x384xf32, #tpu.memory_space<vmem>>, vector<8x384xf32>
    tpu.vector_store %arg32[%c112_443, %c0_444], %482 {strides = array<i32>} : memref<136x384xf32, #tpu.memory_space<vmem>>, vector<8x384xf32>,
    %c0_445 = arith.constant 0 : index
    %c15_446 = arith.constant 15 : index
    %484 = vector.load %arg31[%c0_445, %c15_446] : memref<8x512xf32, #tpu.memory_space<vmem>>, vector<8x384xf32>
    %c120_447 = arith.constant 120 : index
    %c0_448 = arith.constant 0 : index
    %485 = vector.load %arg32[%c120_447, %c0_448] : memref<136x384xf32, #tpu.memory_space<vmem>>, vector<8x384xf32>
    tpu.vector_store %arg32[%c120_447, %c0_448], %484 {strides = array<i32>} : memref<136x384xf32, #tpu.memory_space<vmem>>, vector<8x384xf32>,
    %c0_449 = arith.constant 0 : index
    %c16_450 = arith.constant 16 : index
    %486 = vector.load %arg31[%c0_449, %c16_450] : memref<8x512xf32, #tpu.memory_space<vmem>>, vector<8x384xf32>
    %c128_451 = arith.constant 128 : index
    %c0_452 = arith.constant 0 : index
    %487 = vector.load %arg32[%c128_451, %c0_452] : memref<136x384xf32, #tpu.memory_space<vmem>>, vector<8x384xf32>
    tpu.vector_store %arg32[%c128_451, %c0_452], %486 {strides = array<i32>} : memref<136x384xf32, #tpu.memory_space<vmem>>, vector<8x384xf32>,
    %c0_453 = arith.constant 0 : index
    %c0_454 = arith.constant 0 : index
    %488 = vector.load %arg16[%c0_453, %c0_454] : memref<8x136xf32, #tpu.memory_space<vmem>>, vector<8x136xf32>
    %c0_455 = arith.constant 0 : index
    %c0_456 = arith.constant 0 : index
    %489 = vector.load %arg32[%c0_455, %c0_456] : memref<136x384xf32, #tpu.memory_space<vmem>>, vector<136x384xf32>
    %cst_457 = arith.constant dense<0.000000e+00> : vector<8x384xf32>
    %490 = tpu.matmul %488, %489, %cst_457 {dimension_numbers = #tpu.dot_dimension_numbers<[1], [0], [0], [1], [0, 0, 1, 1], [], []>} : vector<8x136xf32>, vector<136x384xf32>, vector<8x384xf32> -> vector<8x384xf32>
    %c0_458 = arith.constant 0 : index
    %c0_459 = arith.constant 0 : index
    %491 = vector.load %arg17[%c0_458, %c0_459] : memref<8x1xf32, #tpu.memory_space<vmem>>, vector<8x1xf32>
    %492 = vector.broadcast %491 : vector<8x1xf32> to vector<8x384xf32>
    %493 = arith.addf %490, %492 : vector<8x384xf32>
    %c0_460 = arith.constant 0 : index
    %c0_461 = arith.constant 0 : index
    %494 = vector.load %arg19[%c0_460, %c0_461] : memref<384x128xf32, #tpu.memory_space<vmem>>, vector<384x128xf32>
    %cst_462 = arith.constant dense<0.000000e+00> : vector<8x128xf32>
    %495 = tpu.matmul %493, %494, %cst_462 {dimension_numbers = #tpu.dot_dimension_numbers<[1], [0], [0], [1], [0, 0, 1, 1], [], []>} : vector<8x384xf32>, vector<384x128xf32>, vector<8x128xf32> -> vector<8x128xf32>
    %c0_463 = arith.constant 0 : index
    %c0_464 = arith.constant 0 : index
    %496 = vector.load %arg20[%c0_463, %c0_464] : memref<128x96xf32, #tpu.memory_space<vmem>>, vector<128x96xf32>
    %cst_465 = arith.constant dense<0.000000e+00> : vector<8x96xf32>
    %497 = tpu.matmul %495, %496, %cst_465 {dimension_numbers = #tpu.dot_dimension_numbers<[1], [0], [0], [1], [0, 0, 1, 1], [], []>} : vector<8x128xf32>, vector<128x96xf32>, vector<8x96xf32> -> vector<8x96xf32>
    %498 = vector.extract_strided_slice %497 {offsets = [0, 0], sizes = [8, 32], strides = [1, 1]} : vector<8x96xf32> to vector<8x32xf32>
    %499 = vector.extract_strided_slice %497 {offsets = [0, 32], sizes = [8, 32], strides = [1, 1]} : vector<8x96xf32> to vector<8x32xf32>
    %500 = vector.extract_strided_slice %497 {offsets = [0, 64], sizes = [8, 32], strides = [1, 1]} : vector<8x96xf32> to vector<8x32xf32>
    %c0_466 = arith.constant 0 : index
    %c0_467 = arith.constant 0 : index
    %501 = vector.load %arg22[%c0_466, %c0_467] : memref<32x8xf32, #tpu.memory_space<vmem>>, vector<32x8xf32>
    %cst_468 = arith.constant dense<0.000000e+00> : vector<32x32xf32>
    %502 = tpu.matmul %501, %498, %cst_468 {dimension_numbers = #tpu.dot_dimension_numbers<[1], [0], [0], [1], [0, 0, 1, 1], [], []>} : vector<32x8xf32>, vector<8x32xf32>, vector<32x32xf32> -> vector<32x32xf32>
    %c0_469 = arith.constant 0 : index
    %c0_470 = arith.constant 0 : index
    %503 = vector.load %arg21[%c0_469, %c0_470] : memref<32x32xf32, #tpu.memory_space<vmem>>, vector<32x32xf32>
    %504 = arith.mulf %502, %503 : vector<32x32xf32>
    %cst_471 = arith.constant 0.353553385 : f32
    %505 = vector.broadcast %cst_471 : f32 to vector<32x32xf32>
    %506 = arith.mulf %504, %505 : vector<32x32xf32>
    %cst_472 = arith.constant dense<0.000000e+00> : vector<32x8xf32>
    %507 = tpu.matmul %506, %499, %cst_472 {dimension_numbers = #tpu.dot_dimension_numbers<[1], [1], [0], [0], [0, 0, 1, 0], [], []>} : vector<32x32xf32>, vector<8x32xf32>, vector<32x8xf32> -> vector<32x8xf32>
    %cst_473 = arith.constant dense<0xFF800000> : vector<32xf32>
    %508 = vector.multi_reduction <maximumf>, %507, %cst_473 [1] : vector<32x8xf32> to vector<32xf32>
    %509 = vector.shape_cast %508 : vector<32xf32> to vector<32x1xf32>
    %510 = vector.broadcast %509 : vector<32x1xf32> to vector<32x8xf32>
    %511 = arith.subf %507, %510 : vector<32x8xf32>
    %512 = math.exp %511 : vector<32x8xf32>
    %cst_474 = arith.constant dense<0.000000e+00> : vector<32xf32>
    %513 = vector.multi_reduction <add>, %512, %cst_474 [1] : vector<32x8xf32> to vector<32xf32>
    %514 = vector.shape_cast %513 : vector<32xf32> to vector<32x1xf32>
    %cst_475 = arith.constant 1.000000e+00 : f32
    %515 = vector.broadcast %cst_475 : f32 to vector<32x1xf32>
    %516 = arith.divf %515, %514 : vector<32x1xf32>
    %517 = vector.broadcast %516 : vector<32x1xf32> to vector<32x8xf32>
    %518 = arith.mulf %512, %517 : vector<32x8xf32>
    %cst_476 = arith.constant dense<0.000000e+00> : vector<32x32xf32>
    %519 = tpu.matmul %518, %500, %cst_476 {dimension_numbers = #tpu.dot_dimension_numbers<[1], [0], [0], [1], [0, 0, 1, 1], [], []>} : vector<32x8xf32>, vector<8x32xf32>, vector<32x32xf32> -> vector<32x32xf32>
    %c0_477 = arith.constant 0 : index
    %c0_478 = arith.constant 0 : index
    %520 = vector.load %arg21[%c0_477, %c0_478] : memref<32x32xf32, #tpu.memory_space<vmem>>, vector<32x32xf32>
    %521 = arith.mulf %519, %520 : vector<32x32xf32>
    %c0_479 = arith.constant 0 : index
    %c0_480 = arith.constant 0 : index
    %522 = vector.load %arg23[%c0_479, %c0_480] : memref<8x32xf32, #tpu.memory_space<vmem>>, vector<8x32xf32>
    %cst_481 = arith.constant dense<0.000000e+00> : vector<8x32xf32>
    %523 = tpu.matmul %522, %521, %cst_481 {dimension_numbers = #tpu.dot_dimension_numbers<[1], [0], [0], [1], [0, 0, 1, 1], [], []>} : vector<8x32xf32>, vector<32x32xf32>, vector<8x32xf32> -> vector<8x32xf32>
    %c0_482 = arith.constant 0 : index
    %c0_483 = arith.constant 0 : index
    %524 = vector.load %arg24[%c0_482, %c0_483] : memref<32x32xf32, #tpu.memory_space<vmem>>, vector<32x32xf32>
    %cst_484 = arith.constant dense<0.000000e+00> : vector<8x32xf32>
    %525 = tpu.matmul %523, %524, %cst_484 {dimension_numbers = #tpu.dot_dimension_numbers<[1], [0], [0], [1], [0, 0, 1, 1], [], []>} : vector<8x32xf32>, vector<32x32xf32>, vector<8x32xf32> -> vector<8x32xf32>
    %c0_485 = arith.constant 0 : index
    %c0_486 = arith.constant 0 : index
    %526 = vector.load %arg25[%c0_485, %c0_486] : memref<1x32xf32, #tpu.memory_space<vmem>>, vector<1x32xf32>
    %527 = vector.broadcast %526 : vector<1x32xf32> to vector<8x32xf32>
    %528 = arith.addf %525, %527 : vector<8x32xf32>
    %cst_487 = arith.constant 0.707106769 : f32
    %529 = vector.broadcast %cst_487 : f32 to vector<8x32xf32>
    %530 = arith.mulf %528, %529 : vector<8x32xf32>
    %cst_488 = arith.constant 0.000000e+00 : f32
    %531 = vector.broadcast %cst_488 : f32 to vector<8x32xf32>
    %532 = arith.cmpf oge, %530, %531 : vector<8x32xf32>
    %cst_489 = arith.constant 1.000000e+00 : f32
    %cst_490 = arith.constant -1.000000e+00 : f32
    %533 = vector.broadcast %cst_489 : f32 to vector<8x32xf32>
    %534 = vector.broadcast %cst_490 : f32 to vector<8x32xf32>
    %535 = arith.select %532, %533, %534 : vector<8x32xi1>, vector<8x32xf32>
    %536 = math.absf %530 : vector<8x32xf32>
    %cst_491 = arith.constant 0.327591091 : f32
    %537 = vector.broadcast %cst_491 : f32 to vector<8x32xf32>
    %538 = arith.mulf %537, %536 : vector<8x32xf32>
    %cst_492 = arith.constant 1.000000e+00 : f32
    %539 = vector.broadcast %cst_492 : f32 to vector<8x32xf32>
    %540 = arith.addf %539, %538 : vector<8x32xf32>
    %cst_493 = arith.constant 1.000000e+00 : f32
    %541 = vector.broadcast %cst_493 : f32 to vector<8x32xf32>
    %542 = arith.divf %541, %540 : vector<8x32xf32>
    %cst_494 = arith.constant 1.06140542 : f32
    %543 = vector.broadcast %cst_494 : f32 to vector<8x32xf32>
    %544 = arith.mulf %543, %542 : vector<8x32xf32>
    %cst_495 = arith.constant -1.45315206 : f32
    %545 = vector.broadcast %cst_495 : f32 to vector<8x32xf32>
    %546 = arith.addf %544, %545 : vector<8x32xf32>
    %547 = arith.mulf %546, %542 : vector<8x32xf32>
    %cst_496 = arith.constant 1.42141378 : f32
    %548 = vector.broadcast %cst_496 : f32 to vector<8x32xf32>
    %549 = arith.addf %547, %548 : vector<8x32xf32>
    %550 = arith.mulf %549, %542 : vector<8x32xf32>
    %cst_497 = arith.constant -0.284496725 : f32
    %551 = vector.broadcast %cst_497 : f32 to vector<8x32xf32>
    %552 = arith.addf %550, %551 : vector<8x32xf32>
    %553 = arith.mulf %552, %542 : vector<8x32xf32>
    %cst_498 = arith.constant 0.254829586 : f32
    %554 = vector.broadcast %cst_498 : f32 to vector<8x32xf32>
    %555 = arith.addf %553, %554 : vector<8x32xf32>
    %556 = arith.mulf %555, %542 : vector<8x32xf32>
    %cst_499 = arith.constant 0.000000e+00 : f32
    %557 = vector.broadcast %cst_499 : f32 to vector<8x32xf32>
    %558 = arith.subf %557, %536 : vector<8x32xf32>
    %559 = arith.mulf %558, %536 : vector<8x32xf32>
    %560 = math.exp %559 : vector<8x32xf32>
    %561 = arith.mulf %556, %560 : vector<8x32xf32>
    %cst_500 = arith.constant 1.000000e+00 : f32
    %562 = vector.broadcast %cst_500 : f32 to vector<8x32xf32>
    %563 = arith.subf %562, %561 : vector<8x32xf32>
    %564 = arith.mulf %535, %563 : vector<8x32xf32>
    %cst_501 = arith.constant 5.000000e-01 : f32
    %565 = vector.broadcast %cst_501 : f32 to vector<8x32xf32>
    %566 = arith.mulf %565, %528 : vector<8x32xf32>
    %cst_502 = arith.constant 1.000000e+00 : f32
    %567 = vector.broadcast %cst_502 : f32 to vector<8x32xf32>
    %568 = arith.addf %567, %564 : vector<8x32xf32>
    %569 = arith.mulf %566, %568 : vector<8x32xf32>
    %c0_503 = arith.constant 0 : index
    %c0_504 = arith.constant 0 : index
    %570 = vector.load %arg26[%c0_503, %c0_504] : memref<32x128xf32, #tpu.memory_space<vmem>>, vector<32x128xf32>
    %cst_505 = arith.constant dense<0.000000e+00> : vector<8x128xf32>
    %571 = tpu.matmul %569, %570, %cst_505 {dimension_numbers = #tpu.dot_dimension_numbers<[1], [0], [0], [1], [0, 0, 1, 1], [], []>} : vector<8x32xf32>, vector<32x128xf32>, vector<8x128xf32> -> vector<8x128xf32>
    %c0_506 = arith.constant 0 : index
    %c0_507 = arith.constant 0 : index
    %572 = vector.load %arg27[%c0_506, %c0_507] : memref<1x128xf32, #tpu.memory_space<vmem>>, vector<1x128xf32>
    %573 = vector.broadcast %572 : vector<1x128xf32> to vector<8x128xf32>
    %574 = arith.addf %571, %573 : vector<8x128xf32>
    %575 = arith.addf %574, %495 : vector<8x128xf32>
    %c0_508 = arith.constant 0 : index
    %c0_509 = arith.constant 0 : index
    %576 = vector.load %arg28[%c0_508, %c0_509] : memref<128x128xf32, #tpu.memory_space<vmem>>, vector<128x128xf32>
    %cst_510 = arith.constant dense<0.000000e+00> : vector<8x128xf32>
    %577 = tpu.matmul %575, %576, %cst_510 {dimension_numbers = #tpu.dot_dimension_numbers<[1], [0], [0], [1], [0, 0, 1, 1], [], []>} : vector<8x128xf32>, vector<128x128xf32>, vector<8x128xf32> -> vector<8x128xf32>
    %c0_511 = arith.constant 0 : index
    %c0_512 = arith.constant 0 : index
    %578 = vector.load %arg29[%c0_511, %c0_512] : memref<1x128xf32, #tpu.memory_space<vmem>>, vector<1x128xf32>
    %579 = vector.broadcast %578 : vector<1x128xf32> to vector<8x128xf32>
    %580 = arith.addf %577, %579 : vector<8x128xf32>
    %c0_513 = arith.constant 0 : index
    %c0_514 = arith.constant 0 : index
    %c0_515 = arith.constant 0 : index
    %581 = vector.load %arg30[%c0_513, %c0_514, %c0_515] : memref<1x8x128xf32, #tpu.memory_space<vmem>>, vector<1x8x128xf32>
    %582 = vector.shape_cast %581 : vector<1x8x128xf32> to vector<8x128xf32>
    %583 = vector.shape_cast %580 : vector<8x128xf32> to vector<1x8x128xf32>
    tpu.vector_store %arg30[%c0_513, %c0_514, %c0_515], %583 {strides = array<i32>} : memref<1x8x128xf32, #tpu.memory_space<vmem>>, vector<1x8x128xf32>,
    return
  }
  func.func @transform_0(%arg0: i32) -> (i32, i32, i32) {
    %c0_i32 = arith.constant 0 : i32
    %c0_i32_0 = arith.constant 0 : i32
    %c0_i32_1 = arith.constant 0 : i32
    return %arg0, %c0_i32, %c0_i32_0 : i32, i32, i32
  }
  func.func @transform_1(%arg0: i32) -> (i32, i32) {
    %c0_i32 = arith.constant 0 : i32
    %c0_i32_0 = arith.constant 0 : i32
    %c0_i32_1 = arith.constant 0 : i32
    return %c0_i32, %c0_i32_0 : i32, i32
  }
  func.func @transform_2(%arg0: i32) -> (i32, i32) {
    %c0_i32 = arith.constant 0 : i32
    %c0_i32_0 = arith.constant 0 : i32
    %c0_i32_1 = arith.constant 0 : i32
    return %c0_i32, %c0_i32_0 : i32, i32
  }
  func.func @transform_3(%arg0: i32) -> (i32, i32) {
    %c0_i32 = arith.constant 0 : i32
    %c0_i32_0 = arith.constant 0 : i32
    %c0_i32_1 = arith.constant 0 : i32
    return %c0_i32, %c0_i32_0 : i32, i32
  }
  func.func @transform_4(%arg0: i32) -> (i32, i32) {
    %c0_i32 = arith.constant 0 : i32
    %c0_i32_0 = arith.constant 0 : i32
    %c0_i32_1 = arith.constant 0 : i32
    return %c0_i32, %c0_i32_0 : i32, i32
  }
  func.func @transform_5(%arg0: i32) -> (i32, i32) {
    %c0_i32 = arith.constant 0 : i32
    %c0_i32_0 = arith.constant 0 : i32
    %c0_i32_1 = arith.constant 0 : i32
    return %c0_i32, %c0_i32_0 : i32, i32
  }
  func.func @transform_6(%arg0: i32) -> (i32, i32) {
    %c0_i32 = arith.constant 0 : i32
    %c0_i32_0 = arith.constant 0 : i32
    %c0_i32_1 = arith.constant 0 : i32
    return %c0_i32, %c0_i32_0 : i32, i32
  }
  func.func @transform_7(%arg0: i32) -> (i32, i32) {
    %c0_i32 = arith.constant 0 : i32
    %c0_i32_0 = arith.constant 0 : i32
    %c0_i32_1 = arith.constant 0 : i32
    return %c0_i32, %c0_i32_0 : i32, i32
  }
  func.func @transform_8(%arg0: i32) -> (i32, i32) {
    %c0_i32 = arith.constant 0 : i32
    %c0_i32_0 = arith.constant 0 : i32
    %c0_i32_1 = arith.constant 0 : i32
    return %c0_i32, %c0_i32_0 : i32, i32
  }
  func.func @transform_9(%arg0: i32) -> (i32, i32) {
    %c0_i32 = arith.constant 0 : i32
    %c0_i32_0 = arith.constant 0 : i32
    %c0_i32_1 = arith.constant 0 : i32
    return %c0_i32, %c0_i32_0 : i32, i32
  }
  func.func @transform_10(%arg0: i32) -> (i32, i32) {
    %c0_i32 = arith.constant 0 : i32
    %c0_i32_0 = arith.constant 0 : i32
    %c0_i32_1 = arith.constant 0 : i32
    return %c0_i32, %c0_i32_0 : i32, i32
  }
  func.func @transform_11(%arg0: i32) -> (i32, i32) {
    %c0_i32 = arith.constant 0 : i32
    %c0_i32_0 = arith.constant 0 : i32
    %c0_i32_1 = arith.constant 0 : i32
    return %c0_i32, %c0_i32_0 : i32, i32
  }
  func.func @transform_12(%arg0: i32) -> (i32, i32) {
    %c0_i32 = arith.constant 0 : i32
    %c0_i32_0 = arith.constant 0 : i32
    %c0_i32_1 = arith.constant 0 : i32
    return %c0_i32, %c0_i32_0 : i32, i32
  }
  func.func @transform_13(%arg0: i32) -> (i32, i32) {
    %c0_i32 = arith.constant 0 : i32
    %c0_i32_0 = arith.constant 0 : i32
    %c0_i32_1 = arith.constant 0 : i32
    return %c0_i32, %c0_i32_0 : i32, i32
  }
  func.func @transform_14(%arg0: i32) -> (i32, i32) {
    %c0_i32 = arith.constant 0 : i32
    %c0_i32_0 = arith.constant 0 : i32
    %c0_i32_1 = arith.constant 0 : i32
    return %c0_i32, %c0_i32_0 : i32, i32
  }
  func.func @transform_15(%arg0: i32) -> (i32, i32) {
    %c0_i32 = arith.constant 0 : i32
    %c0_i32_0 = arith.constant 0 : i32
    %c0_i32_1 = arith.constant 0 : i32
    return %c0_i32, %c0_i32_0 : i32, i32
  }
  func.func @transform_16(%arg0: i32) -> (i32, i32) {
    %c0_i32 = arith.constant 0 : i32
    %c0_i32_0 = arith.constant 0 : i32
    %c0_i32_1 = arith.constant 0 : i32
    return %c0_i32, %c0_i32_0 : i32, i32
  }
  func.func @transform_17(%arg0: i32) -> (i32, i32) {
    %c0_i32 = arith.constant 0 : i32
    %c0_i32_0 = arith.constant 0 : i32
    %c0_i32_1 = arith.constant 0 : i32
    return %c0_i32, %c0_i32_0 : i32, i32
  }
  func.func @transform_18(%arg0: i32) -> (i32, i32) {
    %c0_i32 = arith.constant 0 : i32
    %c0_i32_0 = arith.constant 0 : i32
    %c0_i32_1 = arith.constant 0 : i32
    return %c0_i32, %c0_i32_0 : i32, i32
  }
  func.func @transform_19(%arg0: i32) -> (i32, i32) {
    %c0_i32 = arith.constant 0 : i32
    %c0_i32_0 = arith.constant 0 : i32
    %c0_i32_1 = arith.constant 0 : i32
    return %c0_i32, %c0_i32_0 : i32, i32
  }
  func.func @transform_20(%arg0: i32) -> (i32, i32) {
    %c0_i32 = arith.constant 0 : i32
    %c0_i32_0 = arith.constant 0 : i32
    %c0_i32_1 = arith.constant 0 : i32
    return %c0_i32, %c0_i32_0 : i32, i32
  }
  func.func @transform_21(%arg0: i32) -> (i32, i32) {
    %c0_i32 = arith.constant 0 : i32
    %c0_i32_0 = arith.constant 0 : i32
    %c0_i32_1 = arith.constant 0 : i32
    return %c0_i32, %c0_i32_0 : i32, i32
  }
  func.func @transform_22(%arg0: i32) -> (i32, i32) {
    %c0_i32 = arith.constant 0 : i32
    %c0_i32_0 = arith.constant 0 : i32
    %c0_i32_1 = arith.constant 0 : i32
    return %c0_i32, %c0_i32_0 : i32, i32
  }
  func.func @transform_23(%arg0: i32) -> (i32, i32) {
    %c0_i32 = arith.constant 0 : i32
    %c0_i32_0 = arith.constant 0 : i32
    %c0_i32_1 = arith.constant 0 : i32
    return %c0_i32, %c0_i32_0 : i32, i32
  }
  func.func @transform_24(%arg0: i32) -> (i32, i32) {
    %c0_i32 = arith.constant 0 : i32
    %c0_i32_0 = arith.constant 0 : i32
    %c0_i32_1 = arith.constant 0 : i32
    return %c0_i32, %c0_i32_0 : i32, i32
  }
  func.func @transform_25(%arg0: i32) -> (i32, i32) {
    %c0_i32 = arith.constant 0 : i32
    %c0_i32_0 = arith.constant 0 : i32
    %c0_i32_1 = arith.constant 0 : i32
    return %c0_i32, %c0_i32_0 : i32, i32
  }
  func.func @transform_26(%arg0: i32) -> (i32, i32) {
    %c0_i32 = arith.constant 0 : i32
    %c0_i32_0 = arith.constant 0 : i32
    %c0_i32_1 = arith.constant 0 : i32
    return %c0_i32, %c0_i32_0 : i32, i32
  }
  func.func @transform_27(%arg0: i32) -> (i32, i32) {
    %c0_i32 = arith.constant 0 : i32
    %c0_i32_0 = arith.constant 0 : i32
    %c0_i32_1 = arith.constant 0 : i32
    return %c0_i32, %c0_i32_0 : i32, i32
  }
  func.func @transform_28(%arg0: i32) -> (i32, i32) {
    %c0_i32 = arith.constant 0 : i32
    %c0_i32_0 = arith.constant 0 : i32
    %c0_i32_1 = arith.constant 0 : i32
    return %c0_i32, %c0_i32_0 : i32, i32
  }
  func.func @transform_29(%arg0: i32) -> (i32, i32, i32) {
    %c0_i32 = arith.constant 0 : i32
    %c0_i32_0 = arith.constant 0 : i32
    %c0_i32_1 = arith.constant 0 : i32
    return %arg0, %c0_i32, %c0_i32_0 : i32, i32, i32
  }
}

</mosaic_0001>

<llo_original>
// kernel: adapter_forward.1
$region0: #{adapter_forward.1}
  #allocation0 [shape = 'u32[]', space=smem, size = 0x4, offset = 0x4, fixed_abs, tag = 'smem constant byte address 0x4 - core index']
  #allocation1 [shape = 'u32[144,128]{1,0:T(1,128)}', space=vmem, size = 0x12000, scoped, tag = 'internal scratch']
  #allocation2 [shape = 'f32[8,512]{1,0:T(8,128)}', space=vmem, size = 0x4000, scoped, tag = 'scratch operand']
  #allocation3 [shape = 'f32[136,384]{1,0:T(8,128)}', space=vmem, size = 0x33000, scoped, tag = 'scratch operand']
  %s0 = inlined_call_operand.smem [shape: u32[30], index: -1, kind: input, shape index: {}]
  %s1 = sld [smem:[%s0]]
  %s2 = scalar_lea.smem %s0, 1
  %s3 = sld [smem:[%s2]]
  %s4 = scalar_lea.smem %s0, 2
  %s5 = sld [smem:[%s4]]
  %s6 = scalar_lea.smem %s0, 3
  %s7 = sld [smem:[%s6]]
  %s8 = scalar_lea.smem %s0, 4
  %s9 = sld [smem:[%s8]]
  %s10 = scalar_lea.smem %s0, 5
  %s11 = sld [smem:[%s10]]
  %s12 = scalar_lea.smem %s0, 6
  %s13 = sld [smem:[%s12]]
  %s14 = scalar_lea.smem %s0, 7
  %s15 = sld [smem:[%s14]]
  %s16 = scalar_lea.smem %s0, 8
  %s17 = sld [smem:[%s16]]
  %s18 = scalar_lea.smem %s0, 9
  %s19 = sld [smem:[%s18]]
  %s20 = scalar_lea.smem %s0, 10
  %s21 = sld [smem:[%s20]]
  %s22 = scalar_lea.smem %s0, 11
  %s23 = sld [smem:[%s22]]
  %s24 = scalar_lea.smem %s0, 12
  %s25 = sld [smem:[%s24]]
  %s26 = scalar_lea.smem %s0, 13
  %s27 = sld [smem:[%s26]]
  %s28 = scalar_lea.smem %s0, 14
  %s29 = sld [smem:[%s28]]
  %s30 = scalar_lea.smem %s0, 15
  %s31 = sld [smem:[%s30]]
  %s32 = scalar_lea.smem %s0, 16
  %s33 = sld [smem:[%s32]]
  %s34 = scalar_lea.smem %s0, 17
  %s35 = sld [smem:[%s34]]
  %s36 = scalar_lea.smem %s0, 18
  %s37 = sld [smem:[%s36]]
  %s38 = scalar_lea.smem %s0, 19
  %s39 = sld [smem:[%s38]]
  %s40 = scalar_lea.smem %s0, 20
  %s41 = sld [smem:[%s40]]
  %s42 = scalar_lea.smem %s0, 21
  %s43 = sld [smem:[%s42]]
  %s44 = scalar_lea.smem %s0, 22
  %s45 = sld [smem:[%s44]]
  %s46 = scalar_lea.smem %s0, 23
  %s47 = sld [smem:[%s46]]
  %s48 = scalar_lea.smem %s0, 24
  %s49 = sld [smem:[%s48]]
  %s50 = scalar_lea.smem %s0, 25
  %s51 = sld [smem:[%s50]]
  %s52 = scalar_lea.smem %s0, 26
  %s53 = sld [smem:[%s52]]
  %s54 = scalar_lea.smem %s0, 27
  %s55 = sld [smem:[%s54]]
  %s56 = scalar_lea.smem %s0, 28
  %s57 = sld [smem:[%s56]]
  %s58 = scalar_lea.smem %s0, 29
  %s59 = sld [smem:[%s58]]
  %s60 = sld [smem:[#allocation0]]
  $region149: #{adapter_forward.1} parent=0
    _
  %s62 = ssub.s32 1, %s60
  %s63 = scalar_select 0, %s62, %s60
  $region1: #{adapter_forward.1} parent=0
    #allocation4 [shape = 'u8[8192]{0}', space=vmem, size = 0x2000, scoped, tag = 'output window, operand 0']
    #allocation5 [shape = 's32[2]{0}', space=sflag, size = 0x8, scoped, tag = 'scoped memory for adapter_forward.1']
    %64 = vsyncpa [#allocation5], 0
    %s65 = scalar_lea.sflag [#allocation5], 1
    %66 = vsyncpa %s65, 0
    loop: start=0, step=1, limit=4
    $region2: #{adapter_forward.1} parent=1 // loop_pre_header
      _
    $region3: #{adapter_forward.1} parent=1 // loop_header
      %s68 = sphi 0, %s72
      %p69 = scmp.ge.s32.totalorder %s68, 4
      %s78 = sphi 0, %s80
      %s81 = sphi 0, %s78
      %s82 = sphi 0, %s81
      %s98 = sphi 0, %s82
      %s102 = sphi 0, %s102
      %s104 = sphi 0, %s102
      %s105 = sphi 0, %s104
      %s119 = sphi 0, %s105
      %s123 = sphi 0, %s123
      %s125 = sphi 0, %s123
      %s126 = sphi 0, %s125
      %s140 = sphi 0, %s126
      %s144 = sphi 0, %s144
      %s146 = sphi 0, %s144
      %s147 = sphi 0, %s146
      %s161 = sphi 0, %s147
      %s165 = sphi 0, %s165
      %s167 = sphi 0, %s165
      %s168 = sphi 0, %s167
      %s182 = sphi 0, %s168
      %s186 = sphi 0, %s186
      %s188 = sphi 0, %s186
      %s189 = sphi 0, %s188
      %s203 = sphi 0, %s189
      %s207 = sphi 0, %s207
      %s209 = sphi 0, %s207
      %s210 = sphi 0, %s209
      %s224 = sphi 0, %s210
      %s228 = sphi 0, %s228
      %s230 = sphi 0, %s228
      %s231 = sphi 0, %s230
      %s245 = sphi 0, %s231
      %s249 = sphi 0, %s249
      %s251 = sphi 0, %s249
      %s252 = sphi 0, %s251
      %s266 = sphi 0, %s252
      %s270 = sphi 0, %s270
      %s272 = sphi 0, %s270
      %s273 = sphi 0, %s272
      %s287 = sphi 0, %s273
      %s291 = sphi 0, %s291
      %s293 = sphi 0, %s291
      %s294 = sphi 0, %s293
      %s308 = sphi 0, %s294
      %s312 = sphi 0, %s312
      %s314 = sphi 0, %s312
      %s315 = sphi 0, %s314
      %s329 = sphi 0, %s315
      %s333 = sphi 0, %s333
      %s335 = sphi 0, %s333
      %s336 = sphi 0, %s335
      %s350 = sphi 0, %s336
      %s354 = sphi 0, %s354
      %s356 = sphi 0, %s354
      %s357 = sphi 0, %s356
      %s371 = sphi 0, %s357
      %s375 = sphi 0, %s375
      %s377 = sphi 0, %s375
      %s378 = sphi 0, %s377
      %s392 = sphi 0, %s378
      %s396 = sphi 0, %s396
      %s398 = sphi 0, %s396
      %s399 = sphi 0, %s398
      %s413 = sphi 0, %s399
      %s417 = sphi 0, %s417
      %s419 = sphi 0, %s417
      %s420 = sphi 0, %s419
      %s434 = sphi 0, %s420
      %s438 = sphi 0, %s438
      %s440 = sphi 0, %s438
      %s441 = sphi 0, %s440
      %s455 = sphi 0, %s441
      %s459 = sphi 0, %s459
      %s461 = sphi 0, %s459
      %s462 = sphi 0, %s461
      %s476 = sphi 0, %s462
      %s480 = sphi 0, %s480
      %s482 = sphi 0, %s480
      %s483 = sphi 0, %s482
      %s497 = sphi 0, %s483
      %s501 = sphi 0, %s501
      %s503 = sphi 0, %s501
      %s504 = sphi 0, %s503
      %s518 = sphi 0, %s504
      %s522 = sphi 0, %s522
      %s524 = sphi 0, %s522
      %s525 = sphi 0, %s524
      %s539 = sphi 0, %s525
      %s543 = sphi 0, %s543
      %s545 = sphi 0, %s543
      %s546 = sphi 0, %s545
      %s560 = sphi 0, %s546
      %s564 = sphi 0, %s564
      %s566 = sphi 0, %s564
      %s567 = sphi 0, %s566
      %s581 = sphi 0, %s567
      %s585 = sphi 0, %s585
      %s587 = sphi 0, %s585
      %s588 = sphi 0, %s587
      %s602 = sphi 0, %s588
      %s606 = sphi 0, %s606
      %s608 = sphi 0, %s606
      %s609 = sphi 0, %s608
      %s623 = sphi 0, %s609
      %s627 = sphi 0, %s627
      %s629 = sphi 0, %s627
      %s630 = sphi 0, %s629
      %s644 = sphi 0, %s630
      %s648 = sphi 0, %s648
      %s650 = sphi 0, %s648
      %s651 = sphi 0, %s650
      %s665 = sphi 0, %s651
      %s669 = sphi 0, %s669
      %s671 = sphi 0, %s669
      %s672 = sphi 0, %s671
      %s686 = sphi 0, %s672
      %s692 = sphi 0, %s694
      %s695 = sphi 0, %s692
      %s696 = sphi 0, %s695
      %s712 = sphi 0, %s696
    $region4: #{adapter_forward.1} parent=1 // loop_header_branch
      %71 = sbr.rel (%p69) target = $region8
    $region5: #{adapter_forward.1} parent=1 // loop_body
      %s73 = ssub.s32 %s68, 1
      %s74 = ssub.s32 %s68, 2
      %s75 = sadd.s32 %s68, 1
      %s76 = ssub.s32 %s68, %s75
      %p77 = scmp.eq.s32.totalorder %s76, 0
      %s79 = sadd.s32 %s78, 1
      %s80 = scalar_select %p77, %s78, %s79
      %p83 = pneg %p77
      %p84 = scmp.eq.s32.totalorder %s68, 1
      %p85 = por %p83, %p84
      %p86 = scmp.ne.s32.totalorder %s78, %s81
      %p87 = scmp.eq.s32.totalorder %s68, 0
      %p88 = por %p86, %p87
      %p89 = scmp.ne.s32.totalorder %s78, %s81
      %p90 = scmp.eq.s32.totalorder %s73, 1
      %p91 = por %p89, %p90
      %p92 = scmp.ne.s32.totalorder %s81, %s82
      %p93 = scmp.eq.s32.totalorder %s73, 0
      %p94 = por %p92, %p93
      %p95 = scmp.ne.s32.totalorder %s81, %s82
      %p96 = scmp.eq.s32.totalorder %s74, 1
      %p97 = por %p95, %p96
      %p99 = scmp.ne.s32.totalorder %s82, %s98
      %p100 = scmp.eq.s32.totalorder %s74, 0
      %p101 = por %p99, %p100
      %s103 = sadd.s32 %s102, 1
      %p106 = scmp.eq.s32.totalorder %s68, 1
      %p107 = scmp.ne.s32.totalorder %s102, %s104
      %p108 = scmp.eq.s32.totalorder %s68, 0
      %p109 = por %p107, %p108
      %p110 = scmp.ne.s32.totalorder %s102, %s104
      %p111 = scmp.eq.s32.totalorder %s73, 1
      %p112 = por %p110, %p111
      %p113 = scmp.ne.s32.totalorder %s104, %s105
      %p114 = scmp.eq.s32.totalorder %s73, 0
      %p115 = por %p113, %p114
      %p116 = scmp.ne.s32.totalorder %s104, %s105
      %p117 = scmp.eq.s32.totalorder %s74, 1
      %p118 = por %p116, %p117
      %p120 = scmp.ne.s32.totalorder %s105, %s119
      %p121 = scmp.eq.s32.totalorder %s74, 0
      %p122 = por %p120, %p121
      %s124 = sadd.s32 %s123, 1
      %p127 = scmp.eq.s32.totalorder %s68, 1
      %p128 = scmp.ne.s32.totalorder %s123, %s125
      %p129 = scmp.eq.s32.totalorder %s68, 0
      %p130 = por %p128, %p129
      %p131 = scmp.ne.s32.totalorder %s123, %s125
      %p132 = scmp.eq.s32.totalorder %s73, 1
      %p133 = por %p131, %p132
      %p134 = scmp.ne.s32.totalorder %s125, %s126
      %p135 = scmp.eq.s32.totalorder %s73, 0
      %p136 = por %p134, %p135
      %p137 = scmp.ne.s32.totalorder %s125, %s126
      %p138 = scmp.eq.s32.totalorder %s74, 1
      %p139 = por %p137, %p138
      %p141 = scmp.ne.s32.totalorder %s126, %s140
      %p142 = scmp.eq.s32.totalorder %s74, 0
      %p143 = por %p141, %p142
      %s145 = sadd.s32 %s144, 1
      %p148 = scmp.eq.s32.totalorder %s68, 1
      %p149 = scmp.ne.s32.totalorder %s144, %s146
      %p150 = scmp.eq.s32.totalorder %s68, 0
      %p151 = por %p149, %p150
      %p152 = scmp.ne.s32.totalorder %s144, %s146
      %p153 = scmp.eq.s32.totalorder %s73, 1
      %p154 = por %p152, %p153
      %p155 = scmp.ne.s32.totalorder %s146, %s147
      %p156 = scmp.eq.s32.totalorder %s73, 0
      %p157 = por %p155, %p156
      %p158 = scmp.ne.s32.totalorder %s146, %s147
      %p159 = scmp.eq.s32.totalorder %s74, 1
      %p160 = por %p158, %p159
      %p162 = scmp.ne.s32.totalorder %s147, %s161
      %p163 = scmp.eq.s32.totalorder %s74, 0
      %p164 = por %p162, %p163
      %s166 = sadd.s32 %s165, 1
      %p169 = scmp.eq.s32.totalorder %s68, 1
      %p170 = scmp.ne.s32.totalorder %s165, %s167
      %p171 = scmp.eq.s32.totalorder %s68, 0
      %p172 = por %p170, %p171
      %p173 = scmp.ne.s32.totalorder %s165, %s167
      %p174 = scmp.eq.s32.totalorder %s73, 1
      %p175 = por %p173, %p174
      %p176 = scmp.ne.s32.totalorder %s167, %s168
      %p177 = scmp.eq.s32.totalorder %s73, 0
      %p178 = por %p176, %p177
      %p179 = scmp.ne.s32.totalorder %s167, %s168
      %p180 = scmp.eq.s32.totalorder %s74, 1
      %p181 = por %p179, %p180
      %p183 = scmp.ne.s32.totalorder %s168, %s182
      %p184 = scmp.eq.s32.totalorder %s74, 0
      %p185 = por %p183, %p184
      %s187 = sadd.s32 %s186, 1
      %p190 = scmp.eq.s32.totalorder %s68, 1
      %p191 = scmp.ne.s32.totalorder %s186, %s188
      %p192 = scmp.eq.s32.totalorder %s68, 0
      %p193 = por %p191, %p192
      %p194 = scmp.ne.s32.totalorder %s186, %s188
      %p195 = scmp.eq.s32.totalorder %s73, 1
      %p196 = por %p194, %p195
      %p197 = scmp.ne.s32.totalorder %s188, %s189
      %p198 = scmp.eq.s32.totalorder %s73, 0
      %p199 = por %p197, %p198
      %p200 = scmp.ne.s32.totalorder %s188, %s189
      %p201 = scmp.eq.s32.totalorder %s74, 1
      %p202 = por %p200, %p201
      %p204 = scmp.ne.s32.totalorder %s189, %s203
      %p205 = scmp.eq.s32.totalorder %s74, 0
      %p206 = por %p204, %p205
      %s208 = sadd.s32 %s207, 1
      %p211 = scmp.eq.s32.totalorder %s68, 1
      %p212 = scmp.ne.s32.totalorder %s207, %s209
      %p213 = scmp.eq.s32.totalorder %s68, 0
      %p214 = por %p212, %p213
      %p215 = scmp.ne.s32.totalorder %s207, %s209
      %p216 = scmp.eq.s32.totalorder %s73, 1
      %p217 = por %p215, %p216
      %p218 = scmp.ne.s32.totalorder %s209, %s210
      %p219 = scmp.eq.s32.totalorder %s73, 0
      %p220 = por %p218, %p219
      %p221 = scmp.ne.s32.totalorder %s209, %s210
      %p222 = scmp.eq.s32.totalorder %s74, 1
      %p223 = por %p221, %p222
      %p225 = scmp.ne.s32.totalorder %s210, %s224
      %p226 = scmp.eq.s32.totalorder %s74, 0
      %p227 = por %p225, %p226
      %s229 = sadd.s32 %s228, 1
      %p232 = scmp.eq.s32.totalorder %s68, 1
      %p233 = scmp.ne.s32.totalorder %s228, %s230
      %p234 = scmp.eq.s32.totalorder %s68, 0
      %p235 = por %p233, %p234
      %p236 = scmp.ne.s32.totalorder %s228, %s230
      %p237 = scmp.eq.s32.totalorder %s73, 1
      %p238 = por %p236, %p237
      %p239 = scmp.ne.s32.totalorder %s230, %s231
      %p240 = scmp.eq.s32.totalorder %s73, 0
      %p241 = por %p239, %p240
      %p242 = scmp.ne.s32.totalorder %s230, %s231
      %p243 = scmp.eq.s32.totalorder %s74, 1
      %p244 = por %p242, %p243
      %p246 = scmp.ne.s32.totalorder %s231, %s245
      %p247 = scmp.eq.s32.totalorder %s74, 0
      %p248 = por %p246, %p247
      %s250 = sadd.s32 %s249, 1
      %p253 = scmp.eq.s32.totalorder %s68, 1
      %p254 = scmp.ne.s32.totalorder %s249, %s251
      %p255 = scmp.eq.s32.totalorder %s68, 0
      %p256 = por %p254, %p255
      %p257 = scmp.ne.s32.totalorder %s249, %s251
      %p258 = scmp.eq.s32.totalorder %s73, 1
      %p259 = por %p257, %p258
      %p260 = scmp.ne.s32.totalorder %s251, %s252
      %p261 = scmp.eq.s32.totalorder %s73, 0
      %p262 = por %p260, %p261
      %p263 = scmp.ne.s32.totalorder %s251, %s252
      %p264 = scmp.eq.s32.totalorder %s74, 1
      %p265 = por %p263, %p264
      %p267 = scmp.ne.s32.totalorder %s252, %s266
      %p268 = scmp.eq.s32.totalorder %s74, 0
      %p269 = por %p267, %p268
      %s271 = sadd.s32 %s270, 1
      %p274 = scmp.eq.s32.totalorder %s68, 1
      %p275 = scmp.ne.s32.totalorder %s270, %s272
      %p276 = scmp.eq.s32.totalorder %s68, 0
      %p277 = por %p275, %p276
      %p278 = scmp.ne.s32.totalorder %s270, %s272
      %p279 = scmp.eq.s32.totalorder %s73, 1
      %p280 = por %p278, %p279
      %p281 = scmp.ne.s32.totalorder %s272, %s273
      %p282 = scmp.eq.s32.totalorder %s73, 0
      %p283 = por %p281, %p282
      %p284 = scmp.ne.s32.totalorder %s272, %s273
      %p285 = scmp.eq.s32.totalorder %s74, 1
      %p286 = por %p284, %p285
      %p288 = scmp.ne.s32.totalorder %s273, %s287
      %p289 = scmp.eq.s32.totalorder %s74, 0
      %p290 = por %p288, %p289
      %s292 = sadd.s32 %s291, 1
      %p295 = scmp.eq.s32.totalorder %s68, 1
      %p296 = scmp.ne.s32.totalorder %s291, %s293
      %p297 = scmp.eq.s32.totalorder %s68, 0
      %p298 = por %p296, %p297
      %p299 = scmp.ne.s32.totalorder %s291, %s293
      %p300 = scmp.eq.s32.totalorder %s73, 1
      %p301 = por %p299, %p300
      %p302 = scmp.ne.s32.totalorder %s293, %s294
      %p303 = scmp.eq.s32.totalorder %s73, 0
      %p304 = por %p302, %p303
      %p305 = scmp.ne.s32.totalorder %s293, %s294
      %p306 = scmp.eq.s32.totalorder %s74, 1
      %p307 = por %p305, %p306
      %p309 = scmp.ne.s32.totalorder %s294, %s308
      %p310 = scmp.eq.s32.totalorder %s74, 0
      %p311 = por %p309, %p310
      %s313 = sadd.s32 %s312, 1
      %p316 = scmp.eq.s32.totalorder %s68, 1
      %p317 = scmp.ne.s32.totalorder %s312, %s314
      %p318 = scmp.eq.s32.totalorder %s68, 0
      %p319 = por %p317, %p318
      %p320 = scmp.ne.s32.totalorder %s312, %s314
      %p321 = scmp.eq.s32.totalorder %s73, 1
      %p322 = por %p320, %p321
      %p323 = scmp.ne.s32.totalorder %s314, %s315
      %p324 = scmp.eq.s32.totalorder %s73, 0
      %p325 = por %p323, %p324
      %p326 = scmp.ne.s32.totalorder %s314, %s315
      %p327 = scmp.eq.s32.totalorder %s74, 1
      %p328 = por %p326, %p327
      %p330 = scmp.ne.s32.totalorder %s315, %s329
      %p331 = scmp.eq.s32.totalorder %s74, 0
      %p332 = por %p330, %p331
      %s334 = sadd.s32 %s333, 1
      %p337 = scmp.eq.s32.totalorder %s68, 1
      %p338 = scmp.ne.s32.totalorder %s333, %s335
      %p339 = scmp.eq.s32.totalorder %s68, 0
      %p340 = por %p338, %p339
      %p341 = scmp.ne.s32.totalorder %s333, %s335
      %p342 = scmp.eq.s32.totalorder %s73, 1
      %p343 = por %p341, %p342
      %p344 = scmp.ne.s32.totalorder %s335, %s336
      %p345 = scmp.eq.s32.totalorder %s73, 0
      %p346 = por %p344, %p345
      %p347 = scmp.ne.s32.totalorder %s335, %s336
      %p348 = scmp.eq.s32.totalorder %s74, 1
      %p349 = por %p347, %p348
      %p351 = scmp.ne.s32.totalorder %s336, %s350
      %p352 = scmp.eq.s32.totalorder %s74, 0
      %p353 = por %p351, %p352
      %s355 = sadd.s32 %s354, 1
      %p358 = scmp.eq.s32.totalorder %s68, 1
      %p359 = scmp.ne.s32.totalorder %s354, %s356
      %p360 = scmp.eq.s32.totalorder %s68, 0
      %p361 = por %p359, %p360
      %p362 = scmp.ne.s32.totalorder %s354, %s356
      %p363 = scmp.eq.s32.totalorder %s73, 1
      %p364 = por %p362, %p363
      %p365 = scmp.ne.s32.totalorder %s356, %s357
      %p366 = scmp.eq.s32.totalorder %s73, 0
      %p367 = por %p365, %p366
      %p368 = scmp.ne.s32.totalorder %s356, %s357
      %p369 = scmp.eq.s32.totalorder %s74, 1
      %p370 = por %p368, %p369
      %p372 = scmp.ne.s32.totalorder %s357, %s371
      %p373 = scmp.eq.s32.totalorder %s74, 0
      %p374 = por %p372, %p373
      %s376 = sadd.s32 %s375, 1
      %p379 = scmp.eq.s32.totalorder %s68, 1
      %p380 = scmp.ne.s32.totalorder %s375, %s377
      %p381 = scmp.eq.s32.totalorder %s68, 0
      %p382 = por %p380, %p381
      %p383 = scmp.ne.s32.totalorder %s375, %s377
      %p384 = scmp.eq.s32.totalorder %s73, 1
      %p385 = por %p383, %p384
      %p386 = scmp.ne.s32.totalorder %s377, %s378
      %p387 = scmp.eq.s32.totalorder %s73, 0
      %p388 = por %p386, %p387
      %p389 = scmp.ne.s32.totalorder %s377, %s378
      %p390 = scmp.eq.s32.totalorder %s74, 1
      %p391 = por %p389, %p390
      %p393 = scmp.ne.s32.totalorder %s378, %s392
      %p394 = scmp.eq.s32.totalorder %s74, 0
      %p395 = por %p393, %p394
      %s397 = sadd.s32 %s396, 1
      %p400 = scmp.eq.s32.totalorder %s68, 1
      %p401 = scmp.ne.s32.totalorder %s396, %s398
      %p402 = scmp.eq.s32.totalorder %s68, 0
      %p403 = por %p401, %p402
      %p404 = scmp.ne.s32.totalorder %s396, %s398
      %p405 = scmp.eq.s32.totalorder %s73, 1
      %p406 = por %p404, %p405
      %p407 = scmp.ne.s32.totalorder %s398, %s399
      %p408 = scmp.eq.s32.totalorder %s73, 0
      %p409 = por %p407, %p408
      %p410 = scmp.ne.s32.totalorder %s398, %s399
      %p411 = scmp.eq.s32.totalorder %s74, 1
      %p412 = por %p410, %p411
      %p414 = scmp.ne.s32.totalorder %s399, %s413
      %p415 = scmp.eq.s32.totalorder %s74, 0
      %p416 = por %p414, %p415
      %s418 = sadd.s32 %s417, 1
      %p421 = scmp.eq.s32.totalorder %s68, 1
      %p422 = scmp.ne.s32.totalorder %s417, %s419
      %p423 = scmp.eq.s32.totalorder %s68, 0
      %p424 = por %p422, %p423
      %p425 = scmp.ne.s32.totalorder %s417, %s419
      %p426 = scmp.eq.s32.totalorder %s73, 1
      %p427 = por %p425, %p426
      %p428 = scmp.ne.s32.totalorder %s419, %s420
      %p429 = scmp.eq.s32.totalorder %s73, 0
      %p430 = por %p428, %p429
      %p431 = scmp.ne.s32.totalorder %s419, %s420
      %p432 = scmp.eq.s32.totalorder %s74, 1
      %p433 = por %p431, %p432
      %p435 = scmp.ne.s32.totalorder %s420, %s434
      %p436 = scmp.eq.s32.totalorder %s74, 0
      %p437 = por %p435, %p436
      %s439 = sadd.s32 %s438, 1
      %p442 = scmp.eq.s32.totalorder %s68, 1
      %p443 = scmp.ne.s32.totalorder %s438, %s440
      %p444 = scmp.eq.s32.totalorder %s68, 0
      %p445 = por %p443, %p444
      %p446 = scmp.ne.s32.totalorder %s438, %s440
      %p447 = scmp.eq.s32.totalorder %s73, 1
      %p448 = por %p446, %p447
      %p449 = scmp.ne.s32.totalorder %s440, %s441
      %p450 = scmp.eq.s32.totalorder %s73, 0
      %p451 = por %p449, %p450
      %p452 = scmp.ne.s32.totalorder %s440, %s441
      %p453 = scmp.eq.s32.totalorder %s74, 1
      %p454 = por %p452, %p453
      %p456 = scmp.ne.s32.totalorder %s441, %s455
      %p457 = scmp.eq.s32.totalorder %s74, 0
      %p458 = por %p456, %p457
      %s460 = sadd.s32 %s459, 1
      %p463 = scmp.eq.s32.totalorder %s68, 1
      %p464 = scmp.ne.s32.totalorder %s459, %s461
      %p465 = scmp.eq.s32.totalorder %s68, 0
      %p466 = por %p464, %p465
      %p467 = scmp.ne.s32.totalorder %s459, %s461
      %p468 = scmp.eq.s32.totalorder %s73, 1
      %p469 = por %p467, %p468
      %p470 = scmp.ne.s32.totalorder %s461, %s462
      %p471 = scmp.eq.s32.totalorder %s73, 0
      %p472 = por %p470, %p471
      %p473 = scmp.ne.s32.totalorder %s461, %s462
      %p474 = scmp.eq.s32.totalorder %s74, 1
      %p475 = por %p473, %p474
      %p477 = scmp.ne.s32.totalorder %s462, %s476
      %p478 = scmp.eq.s32.totalorder %s74, 0
      %p479 = por %p477, %p478
      %s481 = sadd.s32 %s480, 1
      %p484 = scmp.eq.s32.totalorder %s68, 1
      %p485 = scmp.ne.s32.totalorder %s480, %s482
      %p486 = scmp.eq.s32.totalorder %s68, 0
      %p487 = por %p485, %p486
      %p488 = scmp.ne.s32.totalorder %s480, %s482
      %p489 = scmp.eq.s32.totalorder %s73, 1
      %p490 = por %p488, %p489
      %p491 = scmp.ne.s32.totalorder %s482, %s483
      %p492 = scmp.eq.s32.totalorder %s73, 0
      %p493 = por %p491, %p492
      %p494 = scmp.ne.s32.totalorder %s482, %s483
      %p495 = scmp.eq.s32.totalorder %s74, 1
      %p496 = por %p494, %p495
      %p498 = scmp.ne.s32.totalorder %s483, %s497
      %p499 = scmp.eq.s32.totalorder %s74, 0
      %p500 = por %p498, %p499
      %s502 = sadd.s32 %s501, 1
      %p505 = scmp.eq.s32.totalorder %s68, 1
      %p506 = scmp.ne.s32.totalorder %s501, %s503
      %p507 = scmp.eq.s32.totalorder %s68, 0
      %p508 = por %p506, %p507
      %p509 = scmp.ne.s32.totalorder %s501, %s503
      %p510 = scmp.eq.s32.totalorder %s73, 1
      %p511 = por %p509, %p510
      %p512 = scmp.ne.s32.totalorder %s503, %s504
      %p513 = scmp.eq.s32.totalorder %s73, 0
      %p514 = por %p512, %p513
      %p515 = scmp.ne.s32.totalorder %s503, %s504
      %p516 = scmp.eq.s32.totalorder %s74, 1
      %p517 = por %p515, %p516
      %p519 = scmp.ne.s32.totalorder %s504, %s518
      %p520 = scmp.eq.s32.totalorder %s74, 0
      %p521 = por %p519, %p520
      %s523 = sadd.s32 %s522, 1
      %p526 = scmp.eq.s32.totalorder %s68, 1
      %p527 = scmp.ne.s32.totalorder %s522, %s524
      %p528 = scmp.eq.s32.totalorder %s68, 0
      %p529 = por %p527, %p528
      %p530 = scmp.ne.s32.totalorder %s522, %s524
      %p531 = scmp.eq.s32.totalorder %s73, 1
      %p532 = por %p530, %p531
      %p533 = scmp.ne.s32.totalorder %s524, %s525
      %p534 = scmp.eq.s32.totalorder %s73, 0
      %p535 = por %p533, %p534
      %p536 = scmp.ne.s32.totalorder %s524, %s525
      %p537 = scmp.eq.s32.totalorder %s74, 1
      %p538 = por %p536, %p537
      %p540 = scmp.ne.s32.totalorder %s525, %s539
      %p541 = scmp.eq.s32.totalorder %s74, 0
      %p542 = por %p540, %p541
      %s544 = sadd.s32 %s543, 1
      %p547 = scmp.eq.s32.totalorder %s68, 1
      %p548 = scmp.ne.s32.totalorder %s543, %s545
      %p549 = scmp.eq.s32.totalorder %s68, 0
      %p550 = por %p548, %p549
      %p551 = scmp.ne.s32.totalorder %s543, %s545
      %p552 = scmp.eq.s32.totalorder %s73, 1
      %p553 = por %p551, %p552
      %p554 = scmp.ne.s32.totalorder %s545, %s546
      %p555 = scmp.eq.s32.totalorder %s73, 0
      %p556 = por %p554, %p555
      %p557 = scmp.ne.s32.totalorder %s545, %s546
      %p558 = scmp.eq.s32.totalorder %s74, 1
      %p559 = por %p557, %p558
      %p561 = scmp.ne.s32.totalorder %s546, %s560
      %p562 = scmp.eq.s32.totalorder %s74, 0
      %p563 = por %p561, %p562
      %s565 = sadd.s32 %s564, 1
      %p568 = scmp.eq.s32.totalorder %s68, 1
      %p569 = scmp.ne.s32.totalorder %s564, %s566
      %p570 = scmp.eq.s32.totalorder %s68, 0
      %p571 = por %p569, %p570
      %p572 = scmp.ne.s32.totalorder %s564, %s566
      %p573 = scmp.eq.s32.totalorder %s73, 1
      %p574 = por %p572, %p573
      %p575 = scmp.ne.s32.totalorder %s566, %s567
      %p576 = scmp.eq.s32.totalorder %s73, 0
      %p577 = por %p575, %p576
      %p578 = scmp.ne.s32.totalorder %s566, %s567
      %p579 = scmp.eq.s32.totalorder %s74, 1
      %p580 = por %p578, %p579
      %p582 = scmp.ne.s32.totalorder %s567, %s581
      %p583 = scmp.eq.s32.totalorder %s74, 0
      %p584 = por %p582, %p583
      %s586 = sadd.s32 %s585, 1
      %p589 = scmp.eq.s32.totalorder %s68, 1
      %p590 = scmp.ne.s32.totalorder %s585, %s587
      %p591 = scmp.eq.s32.totalorder %s68, 0
      %p592 = por %p590, %p591
      %p593 = scmp.ne.s32.totalorder %s585, %s587
      %p594 = scmp.eq.s32.totalorder %s73, 1
      %p595 = por %p593, %p594
      %p596 = scmp.ne.s32.totalorder %s587, %s588
      %p597 = scmp.eq.s32.totalorder %s73, 0
      %p598 = por %p596, %p597
      %p599 = scmp.ne.s32.totalorder %s587, %s588
      %p600 = scmp.eq.s32.totalorder %s74, 1
      %p601 = por %p599, %p600
      %p603 = scmp.ne.s32.totalorder %s588, %s602
      %p604 = scmp.eq.s32.totalorder %s74, 0
      %p605 = por %p603, %p604
      %s607 = sadd.s32 %s606, 1
      %p610 = scmp.eq.s32.totalorder %s68, 1
      %p611 = scmp.ne.s32.totalorder %s606, %s608
      %p612 = scmp.eq.s32.totalorder %s68, 0
      %p613 = por %p611, %p612
      %p614 = scmp.ne.s32.totalorder %s606, %s608
      %p615 = scmp.eq.s32.totalorder %s73, 1
      %p616 = por %p614, %p615
      %p617 = scmp.ne.s32.totalorder %s608, %s609
      %p618 = scmp.eq.s32.totalorder %s73, 0
      %p619 = por %p617, %p618
      %p620 = scmp.ne.s32.totalorder %s608, %s609
      %p621 = scmp.eq.s32.totalorder %s74, 1
      %p622 = por %p620, %p621
      %p624 = scmp.ne.s32.totalorder %s609, %s623
      %p625 = scmp.eq.s32.totalorder %s74, 0
      %p626 = por %p624, %p625
      %s628 = sadd.s32 %s627, 1
      %p631 = scmp.eq.s32.totalorder %s68, 1
      %p632 = scmp.ne.s32.totalorder %s627, %s629
      %p633 = scmp.eq.s32.totalorder %s68, 0
      %p634 = por %p632, %p633
      %p635 = scmp.ne.s32.totalorder %s627, %s629
      %p636 = scmp.eq.s32.totalorder %s73, 1
      %p637 = por %p635, %p636
      %p638 = scmp.ne.s32.totalorder %s629, %s630
      %p639 = scmp.eq.s32.totalorder %s73, 0
      %p640 = por %p638, %p639
      %p641 = scmp.ne.s32.totalorder %s629, %s630
      %p642 = scmp.eq.s32.totalorder %s74, 1
      %p643 = por %p641, %p642
      %p645 = scmp.ne.s32.totalorder %s630, %s644
      %p646 = scmp.eq.s32.totalorder %s74, 0
      %p647 = por %p645, %p646
      %s649 = sadd.s32 %s648, 1
      %p652 = scmp.eq.s32.totalorder %s68, 1
      %p653 = scmp.ne.s32.totalorder %s648, %s650
      %p654 = scmp.eq.s32.totalorder %s68, 0
      %p655 = por %p653, %p654
      %p656 = scmp.ne.s32.totalorder %s648, %s650
      %p657 = scmp.eq.s32.totalorder %s73, 1
      %p658 = por %p656, %p657
      %p659 = scmp.ne.s32.totalorder %s650, %s651
      %p660 = scmp.eq.s32.totalorder %s73, 0
      %p661 = por %p659, %p660
      %p662 = scmp.ne.s32.totalorder %s650, %s651
      %p663 = scmp.eq.s32.totalorder %s74, 1
      %p664 = por %p662, %p663
      %p666 = scmp.ne.s32.totalorder %s651, %s665
      %p667 = scmp.eq.s32.totalorder %s74, 0
      %p668 = por %p666, %p667
      %s670 = sadd.s32 %s669, 1
      %p673 = scmp.eq.s32.totalorder %s68, 1
      %p674 = scmp.ne.s32.totalorder %s669, %s671
      %p675 = scmp.eq.s32.totalorder %s68, 0
      %p676 = por %p674, %p675
      %p677 = scmp.ne.s32.totalorder %s669, %s671
      %p678 = scmp.eq.s32.totalorder %s73, 1
      %p679 = por %p677, %p678
      %p680 = scmp.ne.s32.totalorder %s671, %s672
      %p681 = scmp.eq.s32.totalorder %s73, 0
      %p682 = por %p680, %p681
      %p683 = scmp.ne.s32.totalorder %s671, %s672
      %p684 = scmp.eq.s32.totalorder %s74, 1
      %p685 = por %p683, %p684
      %p687 = scmp.ne.s32.totalorder %s672, %s686
      %p688 = scmp.eq.s32.totalorder %s74, 0
      %p689 = por %p687, %p688
      %s690 = ssub.s32 %s68, %s75
      %p691 = scmp.eq.s32.totalorder %s690, 0
      %s693 = sadd.s32 %s692, 1
      %s694 = scalar_select %p691, %s692, %s693
      %p697 = pneg %p691
      %p698 = scmp.eq.s32.totalorder %s68, 1
      %p699 = por %p697, %p698
      %p700 = scmp.ne.s32.totalorder %s692, %s695
      %p701 = scmp.eq.s32.totalorder %s68, 0
      %p702 = por %p700, %p701
      %p703 = scmp.ne.s32.totalorder %s692, %s695
      %p704 = scmp.eq.s32.totalorder %s73, 1
      %p705 = por %p703, %p704
      %p706 = scmp.ne.s32.totalorder %s695, %s696
      %p707 = scmp.eq.s32.totalorder %s73, 0
      %p708 = por %p706, %p707
      %p709 = scmp.ne.s32.totalorder %s695, %s696
      %p710 = scmp.eq.s32.totalorder %s74, 1
      %p711 = por %p709, %p710
      %p713 = scmp.ne.s32.totalorder %s696, %s712
      %p714 = scmp.eq.s32.totalorder %s74, 0
      %p715 = por %p713, %p714
      %p716 = scmp.le.s32.totalorder 1, %s68
      %p717 = scmp.lt.s32.totalorder %s68, 3
      %p718 = pnand %p716, %p717
      %p719 = pneg %p718
      // Predicated region
      $region9: #{adapter_forward.1} parent=5 // pred_check
        _
      $region10: #{adapter_forward.1} parent=5 // pred_check_branch
        %721 = sbr.rel (%p718) target = $region12
      $region11: #{adapter_forward.1} parent=5 // pred_region
        %s722 = ssub.s32 %s68, 1
        // Predicated region
        $region13: #{adapter_forward.1} parent=11 // pred_check
          %p723 = pneg %p115
        $region14: #{adapter_forward.1} parent=11 // pred_check_branch
          %725 = sbr.rel (%p723) target = $region16
        $region15: #{adapter_forward.1} parent=11 // pred_region
          _
        $region16: #{adapter_forward.1} parent=11 // pred_fallthru
          _
        // Predicated region
        $region17: #{adapter_forward.1} parent=11 // pred_check
          %p726 = pneg %p136
        $region18: #{adapter_forward.1} parent=11 // pred_check_branch
          %728 = sbr.rel (%p726) target = $region20
        $region19: #{adapter_forward.1} parent=11 // pred_region
          _
        $region20: #{adapter_forward.1} parent=11 // pred_fallthru
          _
        // Predicated region
        $region21: #{adapter_forward.1} parent=11 // pred_check
          %p729 = pneg %p157
        $region22: #{adapter_forward.1} parent=11 // pred_check_branch
          %731 = sbr.rel (%p729) target = $region24
        $region23: #{adapter_forward.1} parent=11 // pred_region
          _
        $region24: #{adapter_forward.1} parent=11 // pred_fallthru
          _
        // Predicated region
        $region25: #{adapter_forward.1} parent=11 // pred_check
          %p732 = pneg %p178
        $region26: #{adapter_forward.1} parent=11 // pred_check_branch
          %734 = sbr.rel (%p732) target = $region28
        $region27: #{adapter_forward.1} parent=11 // pred_region
          _
        $region28: #{adapter_forward.1} parent=11 // pred_fallthru
          _
        // Predicated region
        $region29: #{adapter_forward.1} parent=11 // pred_check
          %p735 = pneg %p199
        $region30: #{adapter_forward.1} parent=11 // pred_check_branch
          %737 = sbr.rel (%p735) target = $region32
        $region31: #{adapter_forward.1} parent=11 // pred_region
          _
        $region32: #{adapter_forward.1} parent=11 // pred_fallthru
          _
        // Predicated region
        $region33: #{adapter_forward.1} parent=11 // pred_check
          %p738 = pneg %p220
        $region34: #{adapter_forward.1} parent=11 // pred_check_branch
          %740 = sbr.rel (%p738) target = $region36
        $region35: #{adapter_forward.1} parent=11 // pred_region
          _
        $region36: #{adapter_forward.1} parent=11 // pred_fallthru
          _
        // Predicated region
        $region37: #{adapter_forward.1} parent=11 // pred_check
          %p741 = pneg %p241
        $region38: #{adapter_forward.1} parent=11 // pred_check_branch
          %743 = sbr.rel (%p741) target = $region40
        $region39: #{adapter_forward.1} parent=11 // pred_region
          _
        $region40: #{adapter_forward.1} parent=11 // pred_fallthru
          _
        // Predicated region
        $region41: #{adapter_forward.1} parent=11 // pred_check
          %p744 = pneg %p262
        $region42: #{adapter_forward.1} parent=11 // pred_check_branch
          %746 = sbr.rel (%p744) target = $region44
        $region43: #{adapter_forward.1} parent=11 // pred_region
          _
        $region44: #{adapter_forward.1} parent=11 // pred_fallthru
          _
        // Predicated region
        $region45: #{adapter_forward.1} parent=11 // pred_check
          %p747 = pneg %p283
        $region46: #{adapter_forward.1} parent=11 // pred_check_branch
          %749 = sbr.rel (%p747) target = $region48
        $region47: #{adapter_forward.1} parent=11 // pred_region
          _
        $region48: #{adapter_forward.1} parent=11 // pred_fallthru
          _
        // Predicated region
        $region49: #{adapter_forward.1} parent=11 // pred_check
          %p750 = pneg %p304
        $region50: #{adapter_forward.1} parent=11 // pred_check_branch
          %752 = sbr.rel (%p750) target = $region52
        $region51: #{adapter_forward.1} parent=11 // pred_region
          _
        $region52: #{adapter_forward.1} parent=11 // pred_fallthru
          _
        // Predicated region
        $region53: #{adapter_forward.1} parent=11 // pred_check
          %p753 = pneg %p325
        $region54: #{adapter_forward.1} parent=11 // pred_check_branch
          %755 = sbr.rel (%p753) target = $region56
        $region55: #{adapter_forward.1} parent=11 // pred_region
          _
        $region56: #{adapter_forward.1} parent=11 // pred_fallthru
          _
        // Predicated region
        $region57: #{adapter_forward.1} parent=11 // pred_check
          %p756 = pneg %p346
        $region58: #{adapter_forward.1} parent=11 // pred_check_branch
          %758 = sbr.rel (%p756) target = $region60
        $region59: #{adapter_forward.1} parent=11 // pred_region
          _
        $region60: #{adapter_forward.1} parent=11 // pred_fallthru
          _
        // Predicated region
        $region61: #{adapter_forward.1} parent=11 // pred_check
          %p759 = pneg %p367
        $region62: #{adapter_forward.1} parent=11 // pred_check_branch
          %761 = sbr.rel (%p759) target = $region64
        $region63: #{adapter_forward.1} parent=11 // pred_region
          _
        $region64: #{adapter_forward.1} parent=11 // pred_fallthru
          _
        // Predicated region
        $region65: #{adapter_forward.1} parent=11 // pred_check
          %p762 = pneg %p388
        $region66: #{adapter_forward.1} parent=11 // pred_check_branch
          %764 = sbr.rel (%p762) target = $region68
        $region67: #{adapter_forward.1} parent=11 // pred_region
          _
        $region68: #{adapter_forward.1} parent=11 // pred_fallthru
          _
        // Predicated region
        $region69: #{adapter_forward.1} parent=11 // pred_check
          %p765 = pneg %p409
        $region70: #{adapter_forward.1} parent=11 // pred_check_branch
          %767 = sbr.rel (%p765) target = $region72
        $region71: #{adapter_forward.1} parent=11 // pred_region
          _
        $region72: #{adapter_forward.1} parent=11 // pred_fallthru
          _
        // Predicated region
        $region73: #{adapter_forward.1} parent=11 // pred_check
          %p768 = pneg %p430
        $region74: #{adapter_forward.1} parent=11 // pred_check_branch
          %770 = sbr.rel (%p768) target = $region76
        $region75: #{adapter_forward.1} parent=11 // pred_region
          _
        $region76: #{adapter_forward.1} parent=11 // pred_fallthru
          _
        // Predicated region
        $region77: #{adapter_forward.1} parent=11 // pred_check
          %p771 = pneg %p451
        $region78: #{adapter_forward.1} parent=11 // pred_check_branch
          %773 = sbr.rel (%p771) target = $region80
        $region79: #{adapter_forward.1} parent=11 // pred_region
          _
        $region80: #{adapter_forward.1} parent=11 // pred_fallthru
          _
        // Predicated region
        $region81: #{adapter_forward.1} parent=11 // pred_check
          %p774 = pneg %p472
        $region82: #{adapter_forward.1} parent=11 // pred_check_branch
          %776 = sbr.rel (%p774) target = $region84
        $region83: #{adapter_forward.1} parent=11 // pred_region
          _
        $region84: #{adapter_forward.1} parent=11 // pred_fallthru
          _
        // Predicated region
        $region85: #{adapter_forward.1} parent=11 // pred_check
          %p777 = pneg %p493
        $region86: #{adapter_forward.1} parent=11 // pred_check_branch
          %779 = sbr.rel (%p777) target = $region88
        $region87: #{adapter_forward.1} parent=11 // pred_region
          _
        $region88: #{adapter_forward.1} parent=11 // pred_fallthru
          _
        // Predicated region
        $region89: #{adapter_forward.1} parent=11 // pred_check
          %p780 = pneg %p514
        $region90: #{adapter_forward.1} parent=11 // pred_check_branch
          %782 = sbr.rel (%p780) target = $region92
        $region91: #{adapter_forward.1} parent=11 // pred_region
          _
        $region92: #{adapter_forward.1} parent=11 // pred_fallthru
          _
        // Predicated region
        $region93: #{adapter_forward.1} parent=11 // pred_check
          %p783 = pneg %p535
        $region94: #{adapter_forward.1} parent=11 // pred_check_branch
          %785 = sbr.rel (%p783) target = $region96
        $region95: #{adapter_forward.1} parent=11 // pred_region
          _
        $region96: #{adapter_forward.1} parent=11 // pred_fallthru
          _
        // Predicated region
        $region97: #{adapter_forward.1} parent=11 // pred_check
          %p786 = pneg %p556
        $region98: #{adapter_forward.1} parent=11 // pred_check_branch
          %788 = sbr.rel (%p786) target = $region100
        $region99: #{adapter_forward.1} parent=11 // pred_region
          _
        $region100: #{adapter_forward.1} parent=11 // pred_fallthru
          _
        // Predicated region
        $region101: #{adapter_forward.1} parent=11 // pred_check
          %p789 = pneg %p577
        $region102: #{adapter_forward.1} parent=11 // pred_check_branch
          %791 = sbr.rel (%p789) target = $region104
        $region103: #{adapter_forward.1} parent=11 // pred_region
          _
        $region104: #{adapter_forward.1} parent=11 // pred_fallthru
          _
        // Predicated region
        $region105: #{adapter_forward.1} parent=11 // pred_check
          %p792 = pneg %p598
        $region106: #{adapter_forward.1} parent=11 // pred_check_branch
          %794 = sbr.rel (%p792) target = $region108
        $region107: #{adapter_forward.1} parent=11 // pred_region
          _
        $region108: #{adapter_forward.1} parent=11 // pred_fallthru
          _
        // Predicated region
        $region109: #{adapter_forward.1} parent=11 // pred_check
          %p795 = pneg %p619
        $region110: #{adapter_forward.1} parent=11 // pred_check_branch
          %797 = sbr.rel (%p795) target = $region112
        $region111: #{adapter_forward.1} parent=11 // pred_region
          _
        $region112: #{adapter_forward.1} parent=11 // pred_fallthru
          _
        // Predicated region
        $region113: #{adapter_forward.1} parent=11 // pred_check
          %p798 = pneg %p640
        $region114: #{adapter_forward.1} parent=11 // pred_check_branch
          %800 = sbr.rel (%p798) target = $region116
        $region115: #{adapter_forward.1} parent=11 // pred_region
          _
        $region116: #{adapter_forward.1} parent=11 // pred_fallthru
          _
        // Predicated region
        $region117: #{adapter_forward.1} parent=11 // pred_check
          %p801 = pneg %p661
        $region118: #{adapter_forward.1} parent=11 // pred_check_branch
          %803 = sbr.rel (%p801) target = $region120
        $region119: #{adapter_forward.1} parent=11 // pred_region
          _
        $region120: #{adapter_forward.1} parent=11 // pred_fallthru
          _
        // Predicated region
        $region121: #{adapter_forward.1} parent=11 // pred_check
          %p804 = pneg %p682
        $region122: #{adapter_forward.1} parent=11 // pred_check_branch
          %806 = sbr.rel (%p804) target = $region124
        $region123: #{adapter_forward.1} parent=11 // pred_region
          _
        $region124: #{adapter_forward.1} parent=11 // pred_fallthru
          _
      $region12: #{adapter_forward.1} parent=5 // pred_fallthru
        _
      %p807 = scmp.lt.s32.totalorder %s68, 2
      // Predicated region
      $region125: #{adapter_forward.1} parent=5 // pred_check
        %p808 = pneg %p807
      $region126: #{adapter_forward.1} parent=5 // pred_check_branch
        %810 = sbr.rel (%p808) target = $region128
      $region127: #{adapter_forward.1} parent=5 // pred_region
        // Predicated region
        $region129: #{adapter_forward.1} parent=127 // pred_check
          %p811 = pneg %p88
        $region130: #{adapter_forward.1} parent=127 // pred_check_branch
          %813 = sbr.rel (%p811) target = $region132
        $region131: #{adapter_forward.1} parent=127 // pred_region
          %p814 = scmp.lt.s32.totalorder %s68, 1
          %s815 = scalar_select %p814, %s68, 1
          %s816 = smul.addr %s815, 8
          %s817 = scalar_lea.vmem %s1, %s816
        $region132: #{adapter_forward.1} parent=127 // pred_fallthru
          _
      $region128: #{adapter_forward.1} parent=5 // pred_fallthru
        _
      %p818 = scmp.le.s32.totalorder 1, %s68
      %p819 = scmp.lt.s32.totalorder %s68, 3
      %p820 = pnand %p818, %p819
      %p821 = pneg %p820
      // Predicated region
      $region133: #{adapter_forward.1} parent=5 // pred_check
        _
      $region134: #{adapter_forward.1} parent=5 // pred_check_branch
        %823 = sbr.rel (%p820) target = $region136
      $region135: #{adapter_forward.1} parent=5 // pred_region
        %s824 = ssub.s32 %s68, 1
        %p825 = scmp.lt.s32.totalorder %s73, 1
        %s826 = scalar_select %p825, %s73, 1
        %s827 = smul.addr %s826, 8
        %s828 = scalar_lea.vmem %s1, %s827
        %p829 = pneg %p94
        %p830 = pneg %p91
        %p831 = pneg %p115
        %p832 = pneg %p112
        %p833 = pneg %p136
        %p834 = pneg %p133
        %p835 = pneg %p157
        %p836 = pneg %p154
        %p837 = pneg %p178
        %p838 = pneg %p175
        %p839 = pneg %p199
        %p840 = pneg %p196
        %p841 = pneg %p220
        %p842 = pneg %p217
        %p843 = pneg %p241
        %p844 = pneg %p238
        %p845 = pneg %p262
        %p846 = pneg %p259
        %p847 = pneg %p283
        %p848 = pneg %p280
        %p849 = pneg %p304
        %p850 = pneg %p301
        %p851 = pneg %p325
        %p852 = pneg %p322
        %p853 = pneg %p346
        %p854 = pneg %p343
        %p855 = pneg %p367
        %p856 = pneg %p364
        %p857 = pneg %p388
        %p858 = pneg %p385
        %p859 = pneg %p409
        %p860 = pneg %p406
        %p861 = pneg %p430
        %p862 = pneg %p427
        %p863 = pneg %p451
        %p864 = pneg %p448
        %p865 = pneg %p472
        %p866 = pneg %p469
        %p867 = pneg %p493
        %p868 = pneg %p490
        %p869 = pneg %p514
        %p870 = pneg %p511
        %p871 = pneg %p535
        %p872 = pneg %p532
        %p873 = pneg %p556
        %p874 = pneg %p553
        %p875 = pneg %p577
        %p876 = pneg %p574
        %p877 = pneg %p598
        %p878 = pneg %p595
        %p879 = pneg %p619
        %p880 = pneg %p616
        %p881 = pneg %p640
        %p882 = pneg %p637
        %p883 = pneg %p661
        %p884 = pneg %p658
        %p885 = pneg %p682
        %p886 = pneg %p679
        %p887 = pneg %p708
        %p888 = pneg %p705
        %s889 = sand.u32 %s695, 1
        %s890 = scalar_lea.sflag [#allocation5], %s889
        %s891 = sand.u32 %s695, 1
        %s892 = smul.addr %s891, 8
        %s893 = scalar_lea.vmem [#allocation4], %s892
        %p894 = scmp.lt.s32.totalorder %s73, 1
        %s895 = scalar_select %p894, %s73, 1
        %s896 = smul.addr %s895, 8
        %s897 = scalar_lea.vmem %s1, %s896
        %898 = vst [vmem:[#allocation2] sm:$0xff] 0.0
        %899 = vst [vmem:[#allocation2 + $0x8] sm:$0xff] 0.0
        %900 = vst [vmem:[#allocation2 + $0x10] sm:$0xff] 0.0
        %901 = vst [vmem:[#allocation2 + $0x18] sm:$0xff] 0.0
        %v902 = vld [vmem:[%s897] sm:$0xff]
        %903 = vst [vmem:[#allocation2 + $0x8] sm:$0xff] %v902
        %v904 = vld [vmem:[#allocation2] sm:$0xff]
        %v905 = vld [vmem:[#allocation2 + $0x8] sm:$0xff]
        %908 = vrot.lane.b32.xlu0 %v904, 8
        %v909 = vpop.permute.xlu0 %908
        %910 = vrot.lane.b32.xlu0 %v905, 8
        %v911 = vpop.permute.xlu0 %910
        %vm912 = vcmask 64512
        %v913 = vsel %vm912, %v909, %v911
        %915 = vst [vmem:[#allocation3] sm:$0xff] %v913
        %v916 = vld [vmem:[#allocation2] sm:$0xff]
        %v917 = vld [vmem:[#allocation2 + $0x8] sm:$0xff]
        %920 = vrot.lane.b32.xlu0 %v916, 7
        %v921 = vpop.permute.xlu0 %920
        %922 = vrot.lane.b32.xlu0 %v917, 7
        %v923 = vpop.permute.xlu0 %922
        %vm924 = vcmask 56320
        %v925 = vsel %vm924, %v921, %v923
        %927 = vst [vmem:[#allocation3 + $0x18] sm:$0xff] %v925
        %v928 = vld [vmem:[#allocation2] sm:$0xff]
        %v929 = vld [vmem:[#allocation2 + $0x8] sm:$0xff]
        %932 = vrot.lane.b32.xlu0 %v928, 6
        %v933 = vpop.permute.xlu0 %932
        %934 = vrot.lane.b32.xlu0 %v929, 6
        %v935 = vpop.permute.xlu0 %934
        %vm936 = vcmask 48128
        %v937 = vsel %vm936, %v933, %v935
        %939 = vst [vmem:[#allocation3 + $0x30] sm:$0xff] %v937
        %v940 = vld [vmem:[#allocation2] sm:$0xff]
        %v941 = vld [vmem:[#allocation2 + $0x8] sm:$0xff]
        %944 = vrot.lane.b32.xlu0 %v940, 5
        %v945 = vpop.permute.xlu0 %944
        %946 = vrot.lane.b32.xlu0 %v941, 5
        %v947 = vpop.permute.xlu0 %946
        %vm948 = vcmask 39936
        %v949 = vsel %vm948, %v945, %v947
        %951 = vst [vmem:[#allocation3 + $0x48] sm:$0xff] %v949
        %v952 = vld [vmem:[#allocation2] sm:$0xff]
        %v953 = vld [vmem:[#allocation2 + $0x8] sm:$0xff]
        %956 = vrot.lane.b32.xlu0 %v952, 4
        %v957 = vpop.permute.xlu0 %956
        %958 = vrot.lane.b32.xlu0 %v953, 4
        %v959 = vpop.permute.xlu0 %958
        %vm960 = vcmask 31744
        %v961 = vsel %vm960, %v957, %v959
        %963 = vst [vmem:[#allocation3 + $0x60] sm:$0xff] %v961
        %v964 = vld [vmem:[#allocation2] sm:$0xff]
        %v965 = vld [vmem:[#allocation2 + $0x8] sm:$0xff]
        %968 = vrot.lane.b32.xlu0 %v964, 3
        %v969 = vpop.permute.xlu0 %968
        %970 = vrot.lane.b32.xlu0 %v965, 3
        %v971 = vpop.permute.xlu0 %970
        %vm972 = vcmask 23552
        %v973 = vsel %vm972, %v969, %v971
        %975 = vst [vmem:[#allocation3 + $0x78] sm:$0xff] %v973
        %v976 = vld [vmem:[#allocation2] sm:$0xff]
        %v977 = vld [vmem:[#allocation2 + $0x8] sm:$0xff]
        %980 = vrot.lane.b32.xlu0 %v976, 2
        %v981 = vpop.permute.xlu0 %980
        %982 = vrot.lane.b32.xlu0 %v977, 2
        %v983 = vpop.permute.xlu0 %982
        %vm984 = vcmask 15360
        %v985 = vsel %vm984, %v981, %v983
        %987 = vst [vmem:[#allocation3 + $0x90] sm:$0xff] %v985
        %v988 = vld [vmem:[#allocation2] sm:$0xff]
        %v989 = vld [vmem:[#allocation2 + $0x8] sm:$0xff]
        %992 = vrot.lane.b32.xlu0 %v988, 1
        %v993 = vpop.permute.xlu0 %992
        %994 = vrot.lane.b32.xlu0 %v989, 1
        %v995 = vpop.permute.xlu0 %994
        %vm996 = vcmask 7168
        %v997 = vsel %vm996, %v993, %v995
        %999 = vst [vmem:[#allocation3 + $0xa8] sm:$0xff] %v997
        %v1000 = vld [vmem:[#allocation2 + $0x8] sm:$0xff]
        %1001 = vst [vmem:[#allocation3 + $0xc0] sm:$0xff] %v1000
        %v1002 = vld [vmem:[#allocation2 + $0x8] sm:$0xff]
        %v1003 = vld [vmem:[#allocation2 + $0x10] sm:$0xff]
        %1006 = vrot.lane.b32.xlu0 %v1002, 127
        %v1007 = vpop.permute.xlu0 %1006
        %1008 = vrot.lane.b32.xlu0 %v1003, 127
        %v1009 = vpop.permute.xlu0 %1008
        %vm1010 = vcmask 1039360
        %v1011 = vsel %vm1010, %v1007, %v1009
        %1013 = vst [vmem:[#allocation3 + $0xd8] sm:$0xff] %v1011
        %v1014 = vld [vmem:[#allocation2 + $0x8] sm:$0xff]
        %v1015 = vld [vmem:[#allocation2 + $0x10] sm:$0xff]
        %1018 = vrot.lane.b32.xlu0 %v1014, 126
        %v1019 = vpop.permute.xlu0 %1018
        %1020 = vrot.lane.b32.xlu0 %v1015, 126
        %v1021 = vpop.permute.xlu0 %1020
        %vm1022 = vcmask 1031168
        %v1023 = vsel %vm1022, %v1019, %v1021
        %1025 = vst [vmem:[#allocation3 + $0xf0] sm:$0xff] %v1023
        %v1026 = vld [vmem:[#allocation2 + $0x8] sm:$0xff]
        %v1027 = vld [vmem:[#allocation2 + $0x10] sm:$0xff]
        %1030 = vrot.lane.b32.xlu0 %v1026, 125
        %v1031 = vpop.permute.xlu0 %1030
        %1032 = vrot.lane.b32.xlu0 %v1027, 125
        %v1033 = vpop.permute.xlu0 %1032
        %vm1034 = vcmask 1022976
        %v1035 = vsel %vm1034, %v1031, %v1033
        %1037 = vst [vmem:[#allocation3 + $0x108] sm:$0xff] %v1035
        %v1038 = vld [vmem:[#allocation2 + $0x8] sm:$0xff]
        %v1039 = vld [vmem:[#allocation2 + $0x10] sm:$0xff]
        %1042 = vrot.lane.b32.xlu0 %v1038, 124
        %v1043 = vpop.permute.xlu0 %1042
        %1044 = vrot.lane.b32.xlu0 %v1039, 124
        %v1045 = vpop.permute.xlu0 %1044
        %vm1046 = vcmask 1014784
        %v1047 = vsel %vm1046, %v1043, %v1045
        %1049 = vst [vmem:[#allocation3 + $0x120] sm:$0xff] %v1047
        %v1050 = vld [vmem:[#allocation2 + $0x8] sm:$0xff]
        %v1051 = vld [vmem:[#allocation2 + $0x10] sm:$0xff]
        %1054 = vrot.lane.b32.xlu0 %v1050, 123
        %v1055 = vpop.permute.xlu0 %1054
        %1056 = vrot.lane.b32.xlu0 %v1051, 123
        %v1057 = vpop.permute.xlu0 %1056
        %vm1058 = vcmask 1006592
        %v1059 = vsel %vm1058, %v1055, %v1057
        %1061 = vst [vmem:[#allocation3 + $0x138] sm:$0xff] %v1059
        %v1062 = vld [vmem:[#allocation2 + $0x8] sm:$0xff]
        %v1063 = vld [vmem:[#allocation2 + $0x10] sm:$0xff]
        %1066 = vrot.lane.b32.xlu0 %v1062, 122
        %v1067 = vpop.permute.xlu0 %1066
        %1068 = vrot.lane.b32.xlu0 %v1063, 122
        %v1069 = vpop.permute.xlu0 %1068
        %vm1070 = vcmask 998400
        %v1071 = vsel %vm1070, %v1067, %v1069
        %1073 = vst [vmem:[#allocation3 + $0x150] sm:$0xff] %v1071
        %v1074 = vld [vmem:[#allocation2 + $0x8] sm:$0xff]
        %v1075 = vld [vmem:[#allocation2 + $0x10] sm:$0xff]
        %1078 = vrot.lane.b32.xlu0 %v1074, 121
        %v1079 = vpop.permute.xlu0 %1078
        %1080 = vrot.lane.b32.xlu0 %v1075, 121
        %v1081 = vpop.permute.xlu0 %1080
        %vm1082 = vcmask 990208
        %v1083 = vsel %vm1082, %v1079, %v1081
        %1085 = vst [vmem:[#allocation3 + $0x168] sm:$0xff] %v1083
        %v1086 = vld [vmem:[#allocation2 + $0x8] sm:$0xff]
        %v1087 = vld [vmem:[#allocation2 + $0x10] sm:$0xff]
        %1090 = vrot.lane.b32.xlu0 %v1086, 120
        %v1091 = vpop.permute.xlu0 %1090
        %1092 = vrot.lane.b32.xlu0 %v1087, 120
        %v1093 = vpop.permute.xlu0 %1092
        %vm1094 = vcmask 982016
        %v1095 = vsel %vm1094, %v1091, %v1093
        %1097 = vst [vmem:[#allocation3 + $0x180] sm:$0xff] %v1095
        %v1098 = vld [vmem:[%s3] sm:$0xff]
        %v1099 = vld [vmem:[%s3 + $0x8] sm:$0xff]
        %v1100 = vld [vmem:[#allocation3] sm:$0xff]
        %v1101 = vld [vmem:[#allocation3 + $0x18] sm:$0xff]
        %v1102 = vld [vmem:[#allocation3 + $0x30] sm:$0xff]
        %v1103 = vld [vmem:[#allocation3 + $0x48] sm:$0xff]
        %v1104 = vld [vmem:[#allocation3 + $0x60] sm:$0xff]
        %v1105 = vld [vmem:[#allocation3 + $0x78] sm:$0xff]
        %v1106 = vld [vmem:[#allocation3 + $0x90] sm:$0xff]
        %v1107 = vld [vmem:[#allocation3 + $0xa8] sm:$0xff]
        %v1108 = vld [vmem:[#allocation3 + $0xc0] sm:$0xff]
        %v1109 = vld [vmem:[#allocation3 + $0xd8] sm:$0xff]
        %v1110 = vld [vmem:[#allocation3 + $0xf0] sm:$0xff]
        %v1111 = vld [vmem:[#allocation3 + $0x108] sm:$0xff]
        %v1112 = vld [vmem:[#allocation3 + $0x120] sm:$0xff]
        %v1113 = vld [vmem:[#allocation3 + $0x138] sm:$0xff]
        %v1114 = vld [vmem:[#allocation3 + $0x150] sm:$0xff]
        %v1115 = vld [vmem:[#allocation3 + $0x168] sm:$0xff]
        %v1116 = vld [vmem:[#allocation3 + $0x180] sm:$0xff]
        %v1117 = vld [vmem:[%s5] sm:$0xff]
        %1119 = vset.pattern.permute.xlu0 0
        %1120 = vperm.xlu0 %1119, %v1117
        %v1121 = vpop.permute.xlu0 %1120
        %v1124 = vsel %vm912, %v1099, 0
        %1126 = vmatprep.subr.mxu0 0.0
        %1127 = vmatpush1.msra.mxu0 %v1100
        %1128 = vmatprep.subr.mxu0 0.0
        %1129 = vmatpush1.msra.mxu0 %v1101
        %1130 = vmatprep.subr.mxu0 0.0
        %1131 = vmatpush1.msra.mxu0 %v1102
        %1132 = vmatprep.subr.mxu0 0.0
        %1133 = vmatpush1.msra.mxu0 %v1103
        %1134 = vmatprep.subr.mxu0 0.0
        %1135 = vmatpush1.msra.mxu0 %v1104
        %1136 = vmatprep.subr.mxu0 0.0
        %1137 = vmatpush1.msra.mxu0 %v1105
        %1138 = vmatprep.subr.mxu0 0.0
        %1139 = vmatpush1.msra.mxu0 %v1106
        %1140 = vmatprep.subr.mxu0 0.0
        %1141 = vmatpush1.msra.mxu0 %v1107
        %1142 = vmatprep.subr.mxu0 0.0
        %1143 = vmatpush1.msra.mxu0 %v1108
        %1144 = vmatprep.subr.mxu0 0.0
        %1145 = vmatpush1.msra.mxu0 %v1109
        %1146 = vmatprep.subr.mxu0 0.0
        %1147 = vmatpush1.msra.mxu0 %v1110
        %1148 = vmatprep.subr.mxu0 0.0
        %1149 = vmatpush1.msra.mxu0 %v1111
        %1150 = vmatprep.subr.mxu0 0.0
        %1151 = vmatpush1.msra.mxu0 %v1112
        %1152 = vmatprep.subr.mxu0 0.0
        %1153 = vmatpush1.msra.mxu0 %v1113
        %1154 = vmatprep.subr.mxu0 0.0
        %1155 = vmatpush1.msra.mxu0 %v1114
        %1156 = vmatprep.subr.mxu0 0.0
        %1157 = vmatpush1.msra.mxu0 %v1115
        %1158 = vmatprep.subr.mxu0 0.0
        %1159 = vmatpush1.msra.mxu0 %v1116
        %1160 = vmatprep.subr.mxu0 0.0
        %1161 = vmatpush1.msra.mxu0 0.0
        %1162 = vmatprep.subr.mxu0 0.0
        %1163 = vmatpush1.msra.mxu0 0.0
        %1164 = vmatprep.subr.mxu0 0.0
        %1165 = vmatpush1.msra.mxu0 0.0
        %1166 = vmatprep.subr.mxu0 0.0
        %1167 = vmatpush1.msra.mxu0 0.0
        %1168 = vmatprep.subr.mxu0 0.0
        %1169 = vmatpush1.msra.mxu0 0.0
        %1170 = vmatprep.subr.mxu0 0.0
        %1171 = vmatpush1.msra.mxu0 0.0
        %1172 = vmatprep.subr.mxu0 0.0
        %1173 = vmatpush1.msra.mxu0 0.0
        %1174 = vmatprep.subr.mxu0 0.0
        %1175 = vmatpush1.msra.mxu0 0.0
        %1176 = vmatprep.subr.mxu0 0.0
        %1177 = vmatpush1.msra.mxu0 0.0
        %1178 = vmatprep.subr.mxu0 0.0
        %1179 = vmatpush1.msra.mxu0 0.0
        %1180 = vmatprep.subr.mxu0 0.0
        %1181 = vmatpush1.msra.mxu0 0.0
        %1182 = vmatprep.subr.mxu0 0.0
        %1183 = vmatpush1.msra.mxu0 0.0
        %1184 = vmatprep.subr.mxu0 0.0
        %1185 = vmatpush1.msra.mxu0 0.0
        %1186 = vmatprep.subr.mxu0 0.0
        %1187 = vmatpush1.msra.mxu0 0.0
        %1188 = vmatprep.subr.mxu0 0.0
        %1189 = vmatpush1.msra.mxu0 0.0
        %1190 = vmatprep.mubr.f32.mxu0 %v1124
        %1191 = vmatmul.mubr.f32.gmra.mrb[0].mxu0 %v1098
        %v1192 = vpop.f32.mrb[0].mxu0
        %v1193 = vadd.f32 %v1121, %v1192
        %v1194 = vpop.f32.mrb[0].mxu0
        %1195 = vdwg.mxu0
        %v1196 = vmul.f32 %v1193, 0.70710677
        %vm1197 = vcmp.ge.f32.partialorder %v1196, 0.0
        %v1198 = vsel %vm1197, 1.0, -1.0
        %v1199 = vand.u32 2147483647, %v1196
        %v1200 = vmul.f32 %v1199, 0.3275911
        %v1201 = vadd.f32 %v1200, 1.0
        %v1202 = vrcp.pop %v1201
        %v1203 = vmul.f32 1.0, %v1202
        %v1204 = vmul.f32 %v1203, 1.0614054
        %v1205 = vadd.f32 %v1204, -1.4531521
        %v1206 = vmul.f32 %v1205, %v1203
        %v1207 = vadd.f32 %v1206, 1.4214138
        %v1208 = vmul.f32 %v1207, %v1203
        %v1209 = vadd.f32 %v1208, -0.28449672
        %v1210 = vmul.f32 %v1209, %v1203
        %v1211 = vadd.f32 %v1210, 0.2548296
        %v1212 = vmul.f32 %v1211, %v1203
        %v1213 = vsub.f32 0.0, %v1199
        %v1214 = vmul.f32 %v1213, %v1199
        %v1215 = vmul.f32 %v1214, 1.442695
        %v1216 = vpow.pop %v1215
        %v1217 = vmul.f32 %v1212, %v1216
        %v1218 = vsub.f32 1.0, %v1217
        %v1219 = vmul.f32 %v1198, %v1218
        %v1220 = vmul.f32 %v1193, 0.5
        %v1221 = vadd.f32 %v1219, 1.0
        %v1222 = vmul.f32 %v1220, %v1221
        %1223 = vst [vmem:[#allocation2 + $0x8] sm:$0xff] %v1222
        %v1224 = vld [vmem:[#allocation2] sm:$0xff]
        %v1225 = vld [vmem:[#allocation2 + $0x8] sm:$0xff]
        %1228 = vrot.lane.b32.xlu0 %v1224, 8
        %v1229 = vpop.permute.xlu0 %1228
        %1230 = vrot.lane.b32.xlu0 %v1225, 8
        %v1231 = vpop.permute.xlu0 %1230
        %v1232 = vsel %vm912, %v1229, %v1231
        %1234 = vst [vmem:[#allocation3] sm:$0xff] %v1232
        %v1235 = vld [vmem:[#allocation2] sm:$0xff]
        %v1236 = vld [vmem:[#allocation2 + $0x8] sm:$0xff]
        %1239 = vrot.lane.b32.xlu0 %v1235, 7
        %v1240 = vpop.permute.xlu0 %1239
        %1241 = vrot.lane.b32.xlu0 %v1236, 7
        %v1242 = vpop.permute.xlu0 %1241
        %v1243 = vsel %vm924, %v1240, %v1242
        %1245 = vst [vmem:[#allocation3 + $0x18] sm:$0xff] %v1243
        %v1246 = vld [vmem:[#allocation2] sm:$0xff]
        %v1247 = vld [vmem:[#allocation2 + $0x8] sm:$0xff]
        %1250 = vrot.lane.b32.xlu0 %v1246, 6
        %v1251 = vpop.permute.xlu0 %1250
        %1252 = vrot.lane.b32.xlu0 %v1247, 6
        %v1253 = vpop.permute.xlu0 %1252
        %v1254 = vsel %vm936, %v1251, %v1253
        %1256 = vst [vmem:[#allocation3 + $0x30] sm:$0xff] %v1254
        %v1257 = vld [vmem:[#allocation2] sm:$0xff]
        %v1258 = vld [vmem:[#allocation2 + $0x8] sm:$0xff]
        %1261 = vrot.lane.b32.xlu0 %v1257, 5
        %v1262 = vpop.permute.xlu0 %1261
        %1263 = vrot.lane.b32.xlu0 %v1258, 5
        %v1264 = vpop.permute.xlu0 %1263
        %v1265 = vsel %vm948, %v1262, %v1264
        %1267 = vst [vmem:[#allocation3 + $0x48] sm:$0xff] %v1265
        %v1268 = vld [vmem:[#allocation2] sm:$0xff]
        %v1269 = vld [vmem:[#allocation2 + $0x8] sm:$0xff]
        %1272 = vrot.lane.b32.xlu0 %v1268, 4
        %v1273 = vpop.permute.xlu0 %1272
        %1274 = vrot.lane.b32.xlu0 %v1269, 4
        %v1275 = vpop.permute.xlu0 %1274
        %v1276 = vsel %vm960, %v1273, %v1275
        %1278 = vst [vmem:[#allocation3 + $0x60] sm:$0xff] %v1276
        %v1279 = vld [vmem:[#allocation2] sm:$0xff]
        %v1280 = vld [vmem:[#allocation2 + $0x8] sm:$0xff]
        %1283 = vrot.lane.b32.xlu0 %v1279, 3
        %v1284 = vpop.permute.xlu0 %1283
        %1285 = vrot.lane.b32.xlu0 %v1280, 3
        %v1286 = vpop.permute.xlu0 %1285
        %v1287 = vsel %vm972, %v1284, %v1286
        %1289 = vst [vmem:[#allocation3 + $0x78] sm:$0xff] %v1287
        %v1290 = vld [vmem:[#allocation2] sm:$0xff]
        %v1291 = vld [vmem:[#allocation2 + $0x8] sm:$0xff]
        %1294 = vrot.lane.b32.xlu0 %v1290, 2
        %v1295 = vpop.permute.xlu0 %1294
        %1296 = vrot.lane.b32.xlu0 %v1291, 2
        %v1297 = vpop.permute.xlu0 %1296
        %v1298 = vsel %vm984, %v1295, %v1297
        %1300 = vst [vmem:[#allocation3 + $0x90] sm:$0xff] %v1298
        %v1301 = vld [vmem:[#allocation2] sm:$0xff]
        %v1302 = vld [vmem:[#allocation2 + $0x8] sm:$0xff]
        %1305 = vrot.lane.b32.xlu0 %v1301, 1
        %v1306 = vpop.permute.xlu0 %1305
        %1307 = vrot.lane.b32.xlu0 %v1302, 1
        %v1308 = vpop.permute.xlu0 %1307
        %v1309 = vsel %vm996, %v1306, %v1308
        %1311 = vst [vmem:[#allocation3 + $0xa8] sm:$0xff] %v1309
        %v1312 = vld [vmem:[#allocation2 + $0x8] sm:$0xff]
        %1313 = vst [vmem:[#allocation3 + $0xc0] sm:$0xff] %v1312
        %v1314 = vld [vmem:[#allocation2 + $0x8] sm:$0xff]
        %v1315 = vld [vmem:[#allocation2 + $0x10] sm:$0xff]
        %1318 = vrot.lane.b32.xlu0 %v1314, 127
        %v1319 = vpop.permute.xlu0 %1318
        %1320 = vrot.lane.b32.xlu0 %v1315, 127
        %v1321 = vpop.permute.xlu0 %1320
        %v1322 = vsel %vm1010, %v1319, %v1321
        %1324 = vst [vmem:[#allocation3 + $0xd8] sm:$0xff] %v1322
        %v1325 = vld [vmem:[#allocation2 + $0x8] sm:$0xff]
        %v1326 = vld [vmem:[#allocation2 + $0x10] sm:$0xff]
        %1329 = vrot.lane.b32.xlu0 %v1325, 126
        %v1330 = vpop.permute.xlu0 %1329
        %1331 = vrot.lane.b32.xlu0 %v1326, 126
        %v1332 = vpop.permute.xlu0 %1331
        %v1333 = vsel %vm1022, %v1330, %v1332
        %1335 = vst [vmem:[#allocation3 + $0xf0] sm:$0xff] %v1333
        %v1336 = vld [vmem:[#allocation2 + $0x8] sm:$0xff]
        %v1337 = vld [vmem:[#allocation2 + $0x10] sm:$0xff]
        %1340 = vrot.lane.b32.xlu0 %v1336, 125
        %v1341 = vpop.permute.xlu0 %1340
        %1342 = vrot.lane.b32.xlu0 %v1337, 125
        %v1343 = vpop.permute.xlu0 %1342
        %v1344 = vsel %vm1034, %v1341, %v1343
        %1346 = vst [vmem:[#allocation3 + $0x108] sm:$0xff] %v1344
        %v1347 = vld [vmem:[#allocation2 + $0x8] sm:$0xff]
        %v1348 = vld [vmem:[#allocation2 + $0x10] sm:$0xff]
        %1351 = vrot.lane.b32.xlu0 %v1347, 124
        %v1352 = vpop.permute.xlu0 %1351
        %1353 = vrot.lane.b32.xlu0 %v1348, 124
        %v1354 = vpop.permute.xlu0 %1353
        %v1355 = vsel %vm1046, %v1352, %v1354
        %1357 = vst [vmem:[#allocation3 + $0x120] sm:$0xff] %v1355
        %v1358 = vld [vmem:[#allocation2 + $0x8] sm:$0xff]
        %v1359 = vld [vmem:[#allocation2 + $0x10] sm:$0xff]
        %1362 = vrot.lane.b32.xlu0 %v1358, 123
        %v1363 = vpop.permute.xlu0 %1362
        %1364 = vrot.lane.b32.xlu0 %v1359, 123
        %v1365 = vpop.permute.xlu0 %1364
        %v1366 = vsel %vm1058, %v1363, %v1365
        %1368 = vst [vmem:[#allocation3 + $0x138] sm:$0xff] %v1366
        %v1369 = vld [vmem:[#allocation2 + $0x8] sm:$0xff]
        %v1370 = vld [vmem:[#allocation2 + $0x10] sm:$0xff]
        %1373 = vrot.lane.b32.xlu0 %v1369, 122
        %v1374 = vpop.permute.xlu0 %1373
        %1375 = vrot.lane.b32.xlu0 %v1370, 122
        %v1376 = vpop.permute.xlu0 %1375
        %v1377 = vsel %vm1070, %v1374, %v1376
        %1379 = vst [vmem:[#allocation3 + $0x150] sm:$0xff] %v1377
        %v1380 = vld [vmem:[#allocation2 + $0x8] sm:$0xff]
        %v1381 = vld [vmem:[#allocation2 + $0x10] sm:$0xff]
        %1384 = vrot.lane.b32.xlu0 %v1380, 121
        %v1385 = vpop.permute.xlu0 %1384
        %1386 = vrot.lane.b32.xlu0 %v1381, 121
        %v1387 = vpop.permute.xlu0 %1386
        %v1388 = vsel %vm1082, %v1385, %v1387
        %1390 = vst [vmem:[#allocation3 + $0x168] sm:$0xff] %v1388
        %v1391 = vld [vmem:[#allocation2 + $0x8] sm:$0xff]
        %v1392 = vld [vmem:[#allocation2 + $0x10] sm:$0xff]
        %1395 = vrot.lane.b32.xlu0 %v1391, 120
        %v1396 = vpop.permute.xlu0 %1395
        %1397 = vrot.lane.b32.xlu0 %v1392, 120
        %v1398 = vpop.permute.xlu0 %1397
        %v1399 = vsel %vm1094, %v1396, %v1398
        %1401 = vst [vmem:[#allocation3 + $0x180] sm:$0xff] %v1399
        %v1402 = vld [vmem:[%s7] sm:$0xff]
        %v1403 = vld [vmem:[%s7 + $0x8] sm:$0xff]
        %v1404 = vld [vmem:[#allocation3] sm:$0xff]
        %v1405 = vld [vmem:[#allocation3 + $0x18] sm:$0xff]
        %v1406 = vld [vmem:[#allocation3 + $0x30] sm:$0xff]
        %v1407 = vld [vmem:[#allocation3 + $0x48] sm:$0xff]
        %v1408 = vld [vmem:[#allocation3 + $0x60] sm:$0xff]
        %v1409 = vld [vmem:[#allocation3 + $0x78] sm:$0xff]
        %v1410 = vld [vmem:[#allocation3 + $0x90] sm:$0xff]
        %v1411 = vld [vmem:[#allocation3 + $0xa8] sm:$0xff]
        %v1412 = vld [vmem:[#allocation3 + $0xc0] sm:$0xff]
        %v1413 = vld [vmem:[#allocation3 + $0xd8] sm:$0xff]
        %v1414 = vld [vmem:[#allocation3 + $0xf0] sm:$0xff]
        %v1415 = vld [vmem:[#allocation3 + $0x108] sm:$0xff]
        %v1416 = vld [vmem:[#allocation3 + $0x120] sm:$0xff]
        %v1417 = vld [vmem:[#allocation3 + $0x138] sm:$0xff]
        %v1418 = vld [vmem:[#allocation3 + $0x150] sm:$0xff]
        %v1419 = vld [vmem:[#allocation3 + $0x168] sm:$0xff]
        %v1420 = vld [vmem:[#allocation3 + $0x180] sm:$0xff]
        %v1421 = vld [vmem:[%s9] sm:$0xff]
        %1423 = vset.pattern.permute.xlu0 0
        %1424 = vperm.xlu0 %1423, %v1421
        %v1425 = vpop.permute.xlu0 %1424
        %v1428 = vsel %vm912, %v1403, 0
        %1430 = vmatprep.subr.mxu0 0.0
        %1431 = vmatpush1.msra.mxu0 %v1404
        %1432 = vmatprep.subr.mxu0 0.0
        %1433 = vmatpush1.msra.mxu0 %v1405
        %1434 = vmatprep.subr.mxu0 0.0
        %1435 = vmatpush1.msra.mxu0 %v1406
        %1436 = vmatprep.subr.mxu0 0.0
        %1437 = vmatpush1.msra.mxu0 %v1407
        %1438 = vmatprep.subr.mxu0 0.0
        %1439 = vmatpush1.msra.mxu0 %v1408
        %1440 = vmatprep.subr.mxu0 0.0
        %1441 = vmatpush1.msra.mxu0 %v1409
        %1442 = vmatprep.subr.mxu0 0.0
        %1443 = vmatpush1.msra.mxu0 %v1410
        %1444 = vmatprep.subr.mxu0 0.0
        %1445 = vmatpush1.msra.mxu0 %v1411
        %1446 = vmatprep.subr.mxu0 0.0
        %1447 = vmatpush1.msra.mxu0 %v1412
        %1448 = vmatprep.subr.mxu0 0.0
        %1449 = vmatpush1.msra.mxu0 %v1413
        %1450 = vmatprep.subr.mxu0 0.0
        %1451 = vmatpush1.msra.mxu0 %v1414
        %1452 = vmatprep.subr.mxu0 0.0
        %1453 = vmatpush1.msra.mxu0 %v1415
        %1454 = vmatprep.subr.mxu0 0.0
        %1455 = vmatpush1.msra.mxu0 %v1416
        %1456 = vmatprep.subr.mxu0 0.0
        %1457 = vmatpush1.msra.mxu0 %v1417
        %1458 = vmatprep.subr.mxu0 0.0
        %1459 = vmatpush1.msra.mxu0 %v1418
        %1460 = vmatprep.subr.mxu0 0.0
        %1461 = vmatpush1.msra.mxu0 %v1419
        %1462 = vmatprep.subr.mxu0 0.0
        %1463 = vmatpush1.msra.mxu0 %v1420
        %1464 = vmatprep.subr.mxu0 0.0
        %1465 = vmatpush1.msra.mxu0 0.0
        %1466 = vmatprep.subr.mxu0 0.0
        %1467 = vmatpush1.msra.mxu0 0.0
        %1468 = vmatprep.subr.mxu0 0.0
        %1469 = vmatpush1.msra.mxu0 0.0
        %1470 = vmatprep.subr.mxu0 0.0
        %1471 = vmatpush1.msra.mxu0 0.0
        %1472 = vmatprep.subr.mxu0 0.0
        %1473 = vmatpush1.msra.mxu0 0.0
        %1474 = vmatprep.subr.mxu0 0.0
        %1475 = vmatpush1.msra.mxu0 0.0
        %1476 = vmatprep.subr.mxu0 0.0
        %1477 = vmatpush1.msra.mxu0 0.0
        %1478 = vmatprep.subr.mxu0 0.0
        %1479 = vmatpush1.msra.mxu0 0.0
        %1480 = vmatprep.subr.mxu0 0.0
        %1481 = vmatpush1.msra.mxu0 0.0
        %1482 = vmatprep.subr.mxu0 0.0
        %1483 = vmatpush1.msra.mxu0 0.0
        %1484 = vmatprep.subr.mxu0 0.0
        %1485 = vmatpush1.msra.mxu0 0.0
        %1486 = vmatprep.subr.mxu0 0.0
        %1487 = vmatpush1.msra.mxu0 0.0
        %1488 = vmatprep.subr.mxu0 0.0
        %1489 = vmatpush1.msra.mxu0 0.0
        %1490 = vmatprep.subr.mxu0 0.0
        %1491 = vmatpush1.msra.mxu0 0.0
        %1492 = vmatprep.subr.mxu0 0.0
        %1493 = vmatpush1.msra.mxu0 0.0
        %1494 = vmatprep.mubr.f32.mxu0 %v1428
        %1495 = vmatmul.mubr.f32.gmra.mrb[0].mxu0 %v1402
        %v1496 = vpop.f32.mrb[0].mxu0
        %v1497 = vadd.f32 %v1425, %v1496
        %v1498 = vpop.f32.mrb[0].mxu0
        %1499 = vdwg.mxu0
        %v1500 = vmul.f32 %v1497, 0.70710677
        %vm1501 = vcmp.ge.f32.partialorder %v1500, 0.0
        %v1502 = vsel %vm1501, 1.0, -1.0
        %v1503 = vand.u32 2147483647, %v1500
        %v1504 = vmul.f32 %v1503, 0.3275911
        %v1505 = vadd.f32 %v1504, 1.0
        %v1506 = vrcp.pop %v1505
        %v1507 = vmul.f32 1.0, %v1506
        %v1508 = vmul.f32 %v1507, 1.0614054
        %v1509 = vadd.f32 %v1508, -1.4531521
        %v1510 = vmul.f32 %v1509, %v1507
        %v1511 = vadd.f32 %v1510, 1.4214138
        %v1512 = vmul.f32 %v1511, %v1507
        %v1513 = vadd.f32 %v1512, -0.28449672
        %v1514 = vmul.f32 %v1513, %v1507
        %v1515 = vadd.f32 %v1514, 0.2548296
        %v1516 = vmul.f32 %v1515, %v1507
        %v1517 = vsub.f32 0.0, %v1503
        %v1518 = vmul.f32 %v1517, %v1503
        %v1519 = vmul.f32 %v1518, 1.442695
        %v1520 = vpow.pop %v1519
        %v1521 = vmul.f32 %v1516, %v1520
        %v1522 = vsub.f32 1.0, %v1521
        %v1523 = vmul.f32 %v1502, %v1522
        %v1524 = vmul.f32 %v1497, 0.5
        %v1525 = vadd.f32 %v1523, 1.0
        %v1526 = vmul.f32 %v1524, %v1525
        %1527 = vadd.xlane.f32.xlu0 %v1526
        %v1528 = vpop.xlane.xlu0 %1527
        %v1529 = vrot.slane %v1528, 4
        %v1530 = vadd.f32 %v1528, %v1529
        %v1531 = vrot.slane %v1530, 2
        %v1532 = vadd.f32 %v1530, %v1531
        %v1533 = vrot.slane %v1532, 1
        %v1534 = vadd.f32 %v1532, %v1533
        %v1535 = vmul.f32 %v1526, %v1526
        %1536 = vadd.xlane.f32.xlu0 %v1535
        %v1537 = vpop.xlane.xlu0 %1536
        %v1538 = vrot.slane %v1537, 4
        %v1539 = vadd.f32 %v1537, %v1538
        %v1540 = vrot.slane %v1539, 2
        %v1541 = vadd.f32 %v1539, %v1540
        %v1542 = vrot.slane %v1541, 1
        %v1543 = vadd.f32 %v1541, %v1542
        %v1544 = vmul.f32 %v1534, 0.0009765625
        %v1545 = vmul.f32 %v1543, 0.0009765625
        %v1546 = vmul.f32 %v1544, %v1544
        %v1547 = vsub.f32 %v1545, %v1546
        %v1548 = vsub.f32 %v1526, %v1544
        %v1549 = vadd.f32 %v1547, 1e-05
        %v1550 = vrsqrt.pop %v1549
        %v1551 = vmul.f32 %v1548, %v1550
        %v1552 = vld [vmem:[%s11] sm:$0xff]
        %v1553 = vmul.f32 %v1551, %v1552
        %v1554 = vld [vmem:[%s13] sm:$0xff]
        %v1555 = vadd.f32 %v1553, %v1554
        %1556 = vst [vmem:[#allocation2 + $0x8] sm:$0xff] %v1555
        %v1557 = vld [vmem:[#allocation2] sm:$0xff]
        %v1558 = vld [vmem:[#allocation2 + $0x8] sm:$0xff]
        %1561 = vrot.lane.b32.xlu0 %v1557, 8
        %v1562 = vpop.permute.xlu0 %1561
        %1563 = vrot.lane.b32.xlu0 %v1558, 8
        %v1564 = vpop.permute.xlu0 %1563
        %v1565 = vsel %vm912, %v1562, %v1564
        %1567 = vst [vmem:[#allocation3] sm:$0xff] %v1565
        %v1568 = vld [vmem:[#allocation2] sm:$0xff]
        %v1569 = vld [vmem:[#allocation2 + $0x8] sm:$0xff]
        %1572 = vrot.lane.b32.xlu0 %v1568, 7
        %v1573 = vpop.permute.xlu0 %1572
        %1574 = vrot.lane.b32.xlu0 %v1569, 7
        %v1575 = vpop.permute.xlu0 %1574
        %v1576 = vsel %vm924, %v1573, %v1575
        %1578 = vst [vmem:[#allocation3 + $0x18] sm:$0xff] %v1576
        %v1579 = vld [vmem:[#allocation2] sm:$0xff]
        %v1580 = vld [vmem:[#allocation2 + $0x8] sm:$0xff]
        %1583 = vrot.lane.b32.xlu0 %v1579, 6
        %v1584 = vpop.permute.xlu0 %1583
        %1585 = vrot.lane.b32.xlu0 %v1580, 6
        %v1586 = vpop.permute.xlu0 %1585
        %v1587 = vsel %vm936, %v1584, %v1586
        %1589 = vst [vmem:[#allocation3 + $0x30] sm:$0xff] %v1587
        %v1590 = vld [vmem:[#allocation2] sm:$0xff]
        %v1591 = vld [vmem:[#allocation2 + $0x8] sm:$0xff]
        %1594 = vrot.lane.b32.xlu0 %v1590, 5
        %v1595 = vpop.permute.xlu0 %1594
        %1596 = vrot.lane.b32.xlu0 %v1591, 5
        %v1597 = vpop.permute.xlu0 %1596
        %v1598 = vsel %vm948, %v1595, %v1597
        %1600 = vst [vmem:[#allocation3 + $0x48] sm:$0xff] %v1598
        %v1601 = vld [vmem:[#allocation2] sm:$0xff]
        %v1602 = vld [vmem:[#allocation2 + $0x8] sm:$0xff]
        %1605 = vrot.lane.b32.xlu0 %v1601, 4
        %v1606 = vpop.permute.xlu0 %1605
        %1607 = vrot.lane.b32.xlu0 %v1602, 4
        %v1608 = vpop.permute.xlu0 %1607
        %v1609 = vsel %vm960, %v1606, %v1608
        %1611 = vst [vmem:[#allocation3 + $0x60] sm:$0xff] %v1609
        %v1612 = vld [vmem:[#allocation2] sm:$0xff]
        %v1613 = vld [vmem:[#allocation2 + $0x8] sm:$0xff]
        %1616 = vrot.lane.b32.xlu0 %v1612, 3
        %v1617 = vpop.permute.xlu0 %1616
        %1618 = vrot.lane.b32.xlu0 %v1613, 3
        %v1619 = vpop.permute.xlu0 %1618
        %v1620 = vsel %vm972, %v1617, %v1619
        %1622 = vst [vmem:[#allocation3 + $0x78] sm:$0xff] %v1620
        %v1623 = vld [vmem:[#allocation2] sm:$0xff]
        %v1624 = vld [vmem:[#allocation2 + $0x8] sm:$0xff]
        %1627 = vrot.lane.b32.xlu0 %v1623, 2
        %v1628 = vpop.permute.xlu0 %1627
        %1629 = vrot.lane.b32.xlu0 %v1624, 2
        %v1630 = vpop.permute.xlu0 %1629
        %v1631 = vsel %vm984, %v1628, %v1630
        %1633 = vst [vmem:[#allocation3 + $0x90] sm:$0xff] %v1631
        %v1634 = vld [vmem:[#allocation2] sm:$0xff]
        %v1635 = vld [vmem:[#allocation2 + $0x8] sm:$0xff]
        %1638 = vrot.lane.b32.xlu0 %v1634, 1
        %v1639 = vpop.permute.xlu0 %1638
        %1640 = vrot.lane.b32.xlu0 %v1635, 1
        %v1641 = vpop.permute.xlu0 %1640
        %v1642 = vsel %vm996, %v1639, %v1641
        %1644 = vst [vmem:[#allocation3 + $0xa8] sm:$0xff] %v1642
        %v1645 = vld [vmem:[#allocation2 + $0x8] sm:$0xff]
        %1646 = vst [vmem:[#allocation3 + $0xc0] sm:$0xff] %v1645
        %v1647 = vld [vmem:[#allocation2 + $0x8] sm:$0xff]
        %v1648 = vld [vmem:[#allocation2 + $0x10] sm:$0xff]
        %1651 = vrot.lane.b32.xlu0 %v1647, 127
        %v1652 = vpop.permute.xlu0 %1651
        %1653 = vrot.lane.b32.xlu0 %v1648, 127
        %v1654 = vpop.permute.xlu0 %1653
        %v1655 = vsel %vm1010, %v1652, %v1654
        %1657 = vst [vmem:[#allocation3 + $0xd8] sm:$0xff] %v1655
        %v1658 = vld [vmem:[#allocation2 + $0x8] sm:$0xff]
        %v1659 = vld [vmem:[#allocation2 + $0x10] sm:$0xff]
        %1662 = vrot.lane.b32.xlu0 %v1658, 126
        %v1663 = vpop.permute.xlu0 %1662
        %1664 = vrot.lane.b32.xlu0 %v1659, 126
        %v1665 = vpop.permute.xlu0 %1664
        %v1666 = vsel %vm1022, %v1663, %v1665
        %1668 = vst [vmem:[#allocation3 + $0xf0] sm:$0xff] %v1666
        %v1669 = vld [vmem:[#allocation2 + $0x8] sm:$0xff]
        %v1670 = vld [vmem:[#allocation2 + $0x10] sm:$0xff]
        %1673 = vrot.lane.b32.xlu0 %v1669, 125
        %v1674 = vpop.permute.xlu0 %1673
        %1675 = vrot.lane.b32.xlu0 %v1670, 125
        %v1676 = vpop.permute.xlu0 %1675
        %v1677 = vsel %vm1034, %v1674, %v1676
        %1679 = vst [vmem:[#allocation3 + $0x108] sm:$0xff] %v1677
        %v1680 = vld [vmem:[#allocation2 + $0x8] sm:$0xff]
        %v1681 = vld [vmem:[#allocation2 + $0x10] sm:$0xff]
        %1684 = vrot.lane.b32.xlu0 %v1680, 124
        %v1685 = vpop.permute.xlu0 %1684
        %1686 = vrot.lane.b32.xlu0 %v1681, 124
        %v1687 = vpop.permute.xlu0 %1686
        %v1688 = vsel %vm1046, %v1685, %v1687
        %1690 = vst [vmem:[#allocation3 + $0x120] sm:$0xff] %v1688
        %v1691 = vld [vmem:[#allocation2 + $0x8] sm:$0xff]
        %v1692 = vld [vmem:[#allocation2 + $0x10] sm:$0xff]
        %1695 = vrot.lane.b32.xlu0 %v1691, 123
        %v1696 = vpop.permute.xlu0 %1695
        %1697 = vrot.lane.b32.xlu0 %v1692, 123
        %v1698 = vpop.permute.xlu0 %1697
        %v1699 = vsel %vm1058, %v1696, %v1698
        %1701 = vst [vmem:[#allocation3 + $0x138] sm:$0xff] %v1699
        %v1702 = vld [vmem:[#allocation2 + $0x8] sm:$0xff]
        %v1703 = vld [vmem:[#allocation2 + $0x10] sm:$0xff]
        %1706 = vrot.lane.b32.xlu0 %v1702, 122
        %v1707 = vpop.permute.xlu0 %1706
        %1708 = vrot.lane.b32.xlu0 %v1703, 122
        %v1709 = vpop.permute.xlu0 %1708
        %v1710 = vsel %vm1070, %v1707, %v1709
        %1712 = vst [vmem:[#allocation3 + $0x150] sm:$0xff] %v1710
        %v1713 = vld [vmem:[#allocation2 + $0x8] sm:$0xff]
        %v1714 = vld [vmem:[#allocation2 + $0x10] sm:$0xff]
        %1717 = vrot.lane.b32.xlu0 %v1713, 121
        %v1718 = vpop.permute.xlu0 %1717
        %1719 = vrot.lane.b32.xlu0 %v1714, 121
        %v1720 = vpop.permute.xlu0 %1719
        %v1721 = vsel %vm1082, %v1718, %v1720
        %1723 = vst [vmem:[#allocation3 + $0x168] sm:$0xff] %v1721
        %v1724 = vld [vmem:[#allocation2 + $0x8] sm:$0xff]
        %v1725 = vld [vmem:[#allocation2 + $0x10] sm:$0xff]
        %1728 = vrot.lane.b32.xlu0 %v1724, 120
        %v1729 = vpop.permute.xlu0 %1728
        %1730 = vrot.lane.b32.xlu0 %v1725, 120
        %v1731 = vpop.permute.xlu0 %1730
        %v1732 = vsel %vm1094, %v1729, %v1731
        %1734 = vst [vmem:[#allocation3 + $0x180] sm:$0xff] %v1732
        %v1735 = vld [vmem:[%s15] sm:$0xff]
        %v1736 = vld [vmem:[%s15 + $0x8] sm:$0xff]
        %v1737 = vld [vmem:[#allocation3] sm:$0xff]
        %v1738 = vld [vmem:[#allocation3 + $0x18] sm:$0xff]
        %v1739 = vld [vmem:[#allocation3 + $0x30] sm:$0xff]
        %v1740 = vld [vmem:[#allocation3 + $0x48] sm:$0xff]
        %v1741 = vld [vmem:[#allocation3 + $0x60] sm:$0xff]
        %v1742 = vld [vmem:[#allocation3 + $0x78] sm:$0xff]
        %v1743 = vld [vmem:[#allocation3 + $0x90] sm:$0xff]
        %v1744 = vld [vmem:[#allocation3 + $0xa8] sm:$0xff]
        %v1745 = vld [vmem:[#allocation3 + $0xc0] sm:$0xff]
        %v1746 = vld [vmem:[#allocation3 + $0xd8] sm:$0xff]
        %v1747 = vld [vmem:[#allocation3 + $0xf0] sm:$0xff]
        %v1748 = vld [vmem:[#allocation3 + $0x108] sm:$0xff]
        %v1749 = vld [vmem:[#allocation3 + $0x120] sm:$0xff]
        %v1750 = vld [vmem:[#allocation3 + $0x138] sm:$0xff]
        %v1751 = vld [vmem:[#allocation3 + $0x150] sm:$0xff]
        %v1752 = vld [vmem:[#allocation3 + $0x168] sm:$0xff]
        %v1753 = vld [vmem:[#allocation3 + $0x180] sm:$0xff]
        %v1754 = vld [vmem:[%s17] sm:$0xff]
        %1756 = vset.pattern.permute.xlu0 0
        %1757 = vperm.xlu0 %1756, %v1754
        %v1758 = vpop.permute.xlu0 %1757
        %v1761 = vsel %vm912, %v1736, 0
        %1763 = vmatprep.subr.mxu0 0.0
        %1764 = vmatpush1.msra.mxu0 %v1737
        %1765 = vmatprep.subr.mxu0 0.0
        %1766 = vmatpush1.msra.mxu0 %v1738
        %1767 = vmatprep.subr.mxu0 0.0
        %1768 = vmatpush1.msra.mxu0 %v1739
        %1769 = vmatprep.subr.mxu0 0.0
        %1770 = vmatpush1.msra.mxu0 %v1740
        %1771 = vmatprep.subr.mxu0 0.0
        %1772 = vmatpush1.msra.mxu0 %v1741
        %1773 = vmatprep.subr.mxu0 0.0
        %1774 = vmatpush1.msra.mxu0 %v1742
        %1775 = vmatprep.subr.mxu0 0.0
        %1776 = vmatpush1.msra.mxu0 %v1743
        %1777 = vmatprep.subr.mxu0 0.0
        %1778 = vmatpush1.msra.mxu0 %v1744
        %1779 = vmatprep.subr.mxu0 0.0
        %1780 = vmatpush1.msra.mxu0 %v1745
        %1781 = vmatprep.subr.mxu0 0.0
        %1782 = vmatpush1.msra.mxu0 %v1746
        %1783 = vmatprep.subr.mxu0 0.0
        %1784 = vmatpush1.msra.mxu0 %v1747
        %1785 = vmatprep.subr.mxu0 0.0
        %1786 = vmatpush1.msra.mxu0 %v1748
        %1787 = vmatprep.subr.mxu0 0.0
        %1788 = vmatpush1.msra.mxu0 %v1749
        %1789 = vmatprep.subr.mxu0 0.0
        %1790 = vmatpush1.msra.mxu0 %v1750
        %1791 = vmatprep.subr.mxu0 0.0
        %1792 = vmatpush1.msra.mxu0 %v1751
        %1793 = vmatprep.subr.mxu0 0.0
        %1794 = vmatpush1.msra.mxu0 %v1752
        %1795 = vmatprep.subr.mxu0 0.0
        %1796 = vmatpush1.msra.mxu0 %v1753
        %1797 = vmatprep.subr.mxu0 0.0
        %1798 = vmatpush1.msra.mxu0 0.0
        %1799 = vmatprep.subr.mxu0 0.0
        %1800 = vmatpush1.msra.mxu0 0.0
        %1801 = vmatprep.subr.mxu0 0.0
        %1802 = vmatpush1.msra.mxu0 0.0
        %1803 = vmatprep.subr.mxu0 0.0
        %1804 = vmatpush1.msra.mxu0 0.0
        %1805 = vmatprep.subr.mxu0 0.0
        %1806 = vmatpush1.msra.mxu0 0.0
        %1807 = vmatprep.subr.mxu0 0.0
        %1808 = vmatpush1.msra.mxu0 0.0
        %1809 = vmatprep.subr.mxu0 0.0
        %1810 = vmatpush1.msra.mxu0 0.0
        %1811 = vmatprep.subr.mxu0 0.0
        %1812 = vmatpush1.msra.mxu0 0.0
        %1813 = vmatprep.subr.mxu0 0.0
        %1814 = vmatpush1.msra.mxu0 0.0
        %1815 = vmatprep.subr.mxu0 0.0
        %1816 = vmatpush1.msra.mxu0 0.0
        %1817 = vmatprep.subr.mxu0 0.0
        %1818 = vmatpush1.msra.mxu0 0.0
        %1819 = vmatprep.subr.mxu0 0.0
        %1820 = vmatpush1.msra.mxu0 0.0
        %1821 = vmatprep.subr.mxu0 0.0
        %1822 = vmatpush1.msra.mxu0 0.0
        %1823 = vmatprep.subr.mxu0 0.0
        %1824 = vmatpush1.msra.mxu0 0.0
        %1825 = vmatprep.subr.mxu0 0.0
        %1826 = vmatpush1.msra.mxu0 0.0
        %1827 = vmatprep.mubr.f32.mxu0 %v1761
        %1828 = vmatmul.mubr.f32.gmra.mrb[0].mxu0 %v1735
        %v1829 = vpop.f32.mrb[0].mxu0
        %v1830 = vadd.f32 %v1758, %v1829
        %v1831 = vpop.f32.mrb[0].mxu0
        %1832 = vdwg.mxu0
        %v1833 = vmul.f32 %v1830, 0.70710677
        %vm1834 = vcmp.ge.f32.partialorder %v1833, 0.0
        %v1835 = vsel %vm1834, 1.0, -1.0
        %v1836 = vand.u32 2147483647, %v1833
        %v1837 = vmul.f32 %v1836, 0.3275911
        %v1838 = vadd.f32 %v1837, 1.0
        %v1839 = vrcp.pop %v1838
        %v1840 = vmul.f32 1.0, %v1839
        %v1841 = vmul.f32 %v1840, 1.0614054
        %v1842 = vadd.f32 %v1841, -1.4531521
        %v1843 = vmul.f32 %v1842, %v1840
        %v1844 = vadd.f32 %v1843, 1.4214138
        %v1845 = vmul.f32 %v1844, %v1840
        %v1846 = vadd.f32 %v1845, -0.28449672
        %v1847 = vmul.f32 %v1846, %v1840
        %v1848 = vadd.f32 %v1847, 0.2548296
        %v1849 = vmul.f32 %v1848, %v1840
        %v1850 = vsub.f32 0.0, %v1836
        %v1851 = vmul.f32 %v1850, %v1836
        %v1852 = vmul.f32 %v1851, 1.442695
        %v1853 = vpow.pop %v1852
        %v1854 = vmul.f32 %v1849, %v1853
        %v1855 = vsub.f32 1.0, %v1854
        %v1856 = vmul.f32 %v1835, %v1855
        %v1857 = vmul.f32 %v1830, 0.5
        %v1858 = vadd.f32 %v1856, 1.0
        %v1859 = vmul.f32 %v1857, %v1858
        %1860 = vadd.xlane.f32.xlu0 %v1859
        %v1861 = vpop.xlane.xlu0 %1860
        %v1862 = vrot.slane %v1861, 4
        %v1863 = vadd.f32 %v1861, %v1862
        %v1864 = vrot.slane %v1863, 2
        %v1865 = vadd.f32 %v1863, %v1864
        %v1866 = vrot.slane %v1865, 1
        %v1867 = vadd.f32 %v1865, %v1866
        %v1868 = vmul.f32 %v1859, %v1859
        %1869 = vadd.xlane.f32.xlu0 %v1868
        %v1870 = vpop.xlane.xlu0 %1869
        %v1871 = vrot.slane %v1870, 4
        %v1872 = vadd.f32 %v1870, %v1871
        %v1873 = vrot.slane %v1872, 2
        %v1874 = vadd.f32 %v1872, %v1873
        %v1875 = vrot.slane %v1874, 1
        %v1876 = vadd.f32 %v1874, %v1875
        %v1877 = vmul.f32 %v1867, 0.0009765625
        %v1878 = vmul.f32 %v1876, 0.0009765625
        %v1879 = vmul.f32 %v1877, %v1877
        %v1880 = vsub.f32 %v1878, %v1879
        %v1881 = vsub.f32 %v1859, %v1877
        %v1882 = vadd.f32 %v1880, 1e-05
        %v1883 = vrsqrt.pop %v1882
        %v1884 = vmul.f32 %v1881, %v1883
        %v1885 = vld [vmem:[%s19] sm:$0xff]
        %v1886 = vmul.f32 %v1884, %v1885
        %v1887 = vld [vmem:[%s21] sm:$0xff]
        %v1888 = vadd.f32 %v1886, %v1887
        %v1889 = vld [vmem:[%s35] sm:$0xff]
        %v1890 = vld [vmem:[%s35 + $0x8] sm:$0xff]
        %v1891 = vld [vmem:[%s35 + $0x10] sm:$0xff]
        %v1892 = vld [vmem:[%s35 + $0x18] sm:$0xff]
        %v1893 = vld [vmem:[%s35 + $0x20] sm:$0xff]
        %v1894 = vld [vmem:[%s35 + $0x28] sm:$0xff]
        %v1895 = vld [vmem:[%s35 + $0x30] sm:$0xff]
        %v1896 = vld [vmem:[%s35 + $0x38] sm:$0xff]
        %v1897 = vld [vmem:[%s35 + $0x40] sm:$0xff]
        %v1898 = vld [vmem:[%s35 + $0x48] sm:$0xff]
        %v1899 = vld [vmem:[%s35 + $0x50] sm:$0xff]
        %v1900 = vld [vmem:[%s35 + $0x58] sm:$0xff]
        %v1901 = vld [vmem:[%s35 + $0x60] sm:$0xff]
        %v1902 = vld [vmem:[%s35 + $0x68] sm:$0xff]
        %v1903 = vld [vmem:[%s35 + $0x70] sm:$0xff]
        %v1904 = vld [vmem:[%s35 + $0x78] sm:$0xff]
        %v1905 = vld [vmem:[%s35 + $0x80] sm:$0xff]
        %v1906 = vld [vmem:[%s35 + $0x88] sm:$0xff]
        %v1907 = vld [vmem:[%s35 + $0x90] sm:$0xff]
        %v1908 = vld [vmem:[%s35 + $0x98] sm:$0xff]
        %v1909 = vld [vmem:[%s35 + $0xa0] sm:$0xff]
        %v1910 = vld [vmem:[%s35 + $0xa8] sm:$0xff]
        %v1911 = vld [vmem:[%s35 + $0xb0] sm:$0xff]
        %v1912 = vld [vmem:[%s35 + $0xb8] sm:$0xff]
        %v1913 = vld [vmem:[%s35 + $0xc0] sm:$0xff]
        %v1914 = vld [vmem:[%s35 + $0xc8] sm:$0xff]
        %v1915 = vld [vmem:[%s35 + $0xd0] sm:$0xff]
        %v1916 = vld [vmem:[%s35 + $0xd8] sm:$0xff]
        %v1917 = vld [vmem:[%s35 + $0xe0] sm:$0xff]
        %v1918 = vld [vmem:[%s35 + $0xe8] sm:$0xff]
        %v1919 = vld [vmem:[%s35 + $0xf0] sm:$0xff]
        %v1920 = vld [vmem:[%s35 + $0xf8] sm:$0xff]
        %v1921 = vld [vmem:[%s35 + $0x100] sm:$0xff]
        %v1922 = vld [vmem:[%s35 + $0x108] sm:$0xff]
        %v1923 = vld [vmem:[%s35 + $0x110] sm:$0xff]
        %v1924 = vld [vmem:[%s35 + $0x118] sm:$0xff]
        %v1925 = vld [vmem:[%s35 + $0x120] sm:$0xff]
        %v1926 = vld [vmem:[%s35 + $0x128] sm:$0xff]
        %v1927 = vld [vmem:[%s35 + $0x130] sm:$0xff]
        %v1928 = vld [vmem:[%s35 + $0x138] sm:$0xff]
        %v1929 = vld [vmem:[%s35 + $0x140] sm:$0xff]
        %v1930 = vld [vmem:[%s35 + $0x148] sm:$0xff]
        %v1931 = vld [vmem:[%s35 + $0x150] sm:$0xff]
        %v1932 = vld [vmem:[%s35 + $0x158] sm:$0xff]
        %v1933 = vld [vmem:[%s35 + $0x160] sm:$0xff]
        %v1934 = vld [vmem:[%s35 + $0x168] sm:$0xff]
        %v1935 = vld [vmem:[%s35 + $0x170] sm:$0xff]
        %v1936 = vld [vmem:[%s35 + $0x178] sm:$0xff]
        %v1937 = vld [vmem:[%s35 + $0x180] sm:$0xff]
        %v1938 = vld [vmem:[%s35 + $0x188] sm:$0xff]
        %v1939 = vld [vmem:[%s35 + $0x190] sm:$0xff]
        %v1940 = vld [vmem:[%s35 + $0x198] sm:$0xff]
        %v1941 = vld [vmem:[%s35 + $0x1a0] sm:$0xff]
        %v1942 = vld [vmem:[%s35 + $0x1a8] sm:$0xff]
        %v1943 = vld [vmem:[%s35 + $0x1b0] sm:$0xff]
        %v1944 = vld [vmem:[%s35 + $0x1b8] sm:$0xff]
        %v1945 = vld [vmem:[%s35 + $0x1c0] sm:$0xff]
        %v1946 = vld [vmem:[%s35 + $0x1c8] sm:$0xff]
        %v1947 = vld [vmem:[%s35 + $0x1d0] sm:$0xff]
        %v1948 = vld [vmem:[%s35 + $0x1d8] sm:$0xff]
        %v1949 = vld [vmem:[%s35 + $0x1e0] sm:$0xff]
        %v1950 = vld [vmem:[%s35 + $0x1e8] sm:$0xff]
        %v1951 = vld [vmem:[%s35 + $0x1f0] sm:$0xff]
        %v1952 = vld [vmem:[%s35 + $0x1f8] sm:$0xff]
        %1953 = vmatprep.subr.mxu0 %v1890
        %1954 = vmatpush1.msra.mxu0 %v1889
        %1955 = vmatprep.subr.mxu0 %v1894
        %1956 = vmatpush1.msra.mxu0 %v1893
        %1957 = vmatprep.subr.mxu0 %v1898
        %1958 = vmatpush1.msra.mxu0 %v1897
        %1959 = vmatprep.subr.mxu0 %v1902
        %1960 = vmatpush1.msra.mxu0 %v1901
        %1961 = vmatprep.subr.mxu0 %v1906
        %1962 = vmatpush1.msra.mxu0 %v1905
        %1963 = vmatprep.subr.mxu0 %v1910
        %1964 = vmatpush1.msra.mxu0 %v1909
        %1965 = vmatprep.subr.mxu0 %v1914
        %1966 = vmatpush1.msra.mxu0 %v1913
        %1967 = vmatprep.subr.mxu0 %v1918
        %1968 = vmatpush1.msra.mxu0 %v1917
        %1969 = vmatprep.subr.mxu0 %v1922
        %1970 = vmatpush1.msra.mxu0 %v1921
        %1971 = vmatprep.subr.mxu0 %v1926
        %1972 = vmatpush1.msra.mxu0 %v1925
        %1973 = vmatprep.subr.mxu0 %v1930
        %1974 = vmatpush1.msra.mxu0 %v1929
        %1975 = vmatprep.subr.mxu0 %v1934
        %1976 = vmatpush1.msra.mxu0 %v1933
        %1977 = vmatprep.subr.mxu0 %v1938
        %1978 = vmatpush1.msra.mxu0 %v1937
        %1979 = vmatprep.subr.mxu0 %v1942
        %1980 = vmatpush1.msra.mxu0 %v1941
        %1981 = vmatprep.subr.mxu0 %v1946
        %1982 = vmatpush1.msra.mxu0 %v1945
        %1983 = vmatprep.subr.mxu0 %v1950
        %1984 = vmatpush1.msra.mxu0 %v1949
        %1985 = vmatprep.subr.mxu0 0.0
        %1986 = vmatpush1.msra.mxu0 0.0
        %1987 = vmatprep.subr.mxu0 0.0
        %1988 = vmatpush1.msra.mxu0 0.0
        %1989 = vmatprep.subr.mxu0 0.0
        %1990 = vmatpush1.msra.mxu0 0.0
        %1991 = vmatprep.subr.mxu0 0.0
        %1992 = vmatpush1.msra.mxu0 0.0
        %1993 = vmatprep.subr.mxu0 0.0
        %1994 = vmatpush1.msra.mxu0 0.0
        %1995 = vmatprep.subr.mxu0 0.0
        %1996 = vmatpush1.msra.mxu0 0.0
        %1997 = vmatprep.subr.mxu0 0.0
        %1998 = vmatpush1.msra.mxu0 0.0
        %1999 = vmatprep.subr.mxu0 0.0
        %2000 = vmatpush1.msra.mxu0 0.0
        %2001 = vmatprep.subr.mxu0 0.0
        %2002 = vmatpush1.msra.mxu0 0.0
        %2003 = vmatprep.subr.mxu0 0.0
        %2004 = vmatpush1.msra.mxu0 0.0
        %2005 = vmatprep.subr.mxu0 0.0
        %2006 = vmatpush1.msra.mxu0 0.0
        %2007 = vmatprep.subr.mxu0 0.0
        %2008 = vmatpush1.msra.mxu0 0.0
        %2009 = vmatprep.subr.mxu0 0.0
        %2010 = vmatpush1.msra.mxu0 0.0
        %2011 = vmatprep.subr.mxu0 0.0
        %2012 = vmatpush1.msra.mxu0 0.0
        %2013 = vmatprep.subr.mxu0 0.0
        %2014 = vmatpush1.msra.mxu0 0.0
        %2015 = vmatprep.subr.mxu0 0.0
        %2016 = vmatpush1.msra.mxu0 0.0
        %2017 = vmatprep.mubr.f32.mxu0 0.0
        %2018 = vmatmul.mubr.f32.gmra.mrb[0].mxu0 %v1888
        %v2019 = vpop.f32.mrb[0].mxu0
        %v2020 = vadd.f32 0.0, %v2019
        %v2021 = vpop.f32.mrb[0].mxu0
        %v2022 = vadd.f32 0.0, %v2021
        %2023 = vdwg.mxu0
        %2024 = vmatprep.subr.mxu0 %v1892
        %2025 = vmatpush1.msra.mxu0 %v1891
        %2026 = vmatprep.subr.mxu0 %v1896
        %2027 = vmatpush1.msra.mxu0 %v1895
        %2028 = vmatprep.subr.mxu0 %v1900
        %2029 = vmatpush1.msra.mxu0 %v1899
        %2030 = vmatprep.subr.mxu0 %v1904
        %2031 = vmatpush1.msra.mxu0 %v1903
        %2032 = vmatprep.subr.mxu0 %v1908
        %2033 = vmatpush1.msra.mxu0 %v1907
        %2034 = vmatprep.subr.mxu0 %v1912
        %2035 = vmatpush1.msra.mxu0 %v1911
        %2036 = vmatprep.subr.mxu0 %v1916
        %2037 = vmatpush1.msra.mxu0 %v1915
        %2038 = vmatprep.subr.mxu0 %v1920
        %2039 = vmatpush1.msra.mxu0 %v1919
        %2040 = vmatprep.subr.mxu0 %v1924
        %2041 = vmatpush1.msra.mxu0 %v1923
        %2042 = vmatprep.subr.mxu0 %v1928
        %2043 = vmatpush1.msra.mxu0 %v1927
        %2044 = vmatprep.subr.mxu0 %v1932
        %2045 = vmatpush1.msra.mxu0 %v1931
        %2046 = vmatprep.subr.mxu0 %v1936
        %2047 = vmatpush1.msra.mxu0 %v1935
        %2048 = vmatprep.subr.mxu0 %v1940
        %2049 = vmatpush1.msra.mxu0 %v1939
        %2050 = vmatprep.subr.mxu0 %v1944
        %2051 = vmatpush1.msra.mxu0 %v1943
        %2052 = vmatprep.subr.mxu0 %v1948
        %2053 = vmatpush1.msra.mxu0 %v1947
        %2054 = vmatprep.subr.mxu0 %v1952
        %2055 = vmatpush1.msra.mxu0 %v1951
        %2056 = vmatprep.subr.mxu0 0.0
        %2057 = vmatpush1.msra.mxu0 0.0
        %2058 = vmatprep.subr.mxu0 0.0
        %2059 = vmatpush1.msra.mxu0 0.0
        %2060 = vmatprep.subr.mxu0 0.0
        %2061 = vmatpush1.msra.mxu0 0.0
        %2062 = vmatprep.subr.mxu0 0.0
        %2063 = vmatpush1.msra.mxu0 0.0
        %2064 = vmatprep.subr.mxu0 0.0
        %2065 = vmatpush1.msra.mxu0 0.0
        %2066 = vmatprep.subr.mxu0 0.0
        %2067 = vmatpush1.msra.mxu0 0.0
        %2068 = vmatprep.subr.mxu0 0.0
        %2069 = vmatpush1.msra.mxu0 0.0
        %2070 = vmatprep.subr.mxu0 0.0
        %2071 = vmatpush1.msra.mxu0 0.0
        %2072 = vmatprep.subr.mxu0 0.0
        %2073 = vmatpush1.msra.mxu0 0.0
        %2074 = vmatprep.subr.mxu0 0.0
        %2075 = vmatpush1.msra.mxu0 0.0
        %2076 = vmatprep.subr.mxu0 0.0
        %2077 = vmatpush1.msra.mxu0 0.0
        %2078 = vmatprep.subr.mxu0 0.0
        %2079 = vmatpush1.msra.mxu0 0.0
        %2080 = vmatprep.subr.mxu0 0.0
        %2081 = vmatpush1.msra.mxu0 0.0
        %2082 = vmatprep.subr.mxu0 0.0
        %2083 = vmatpush1.msra.mxu0 0.0
        %2084 = vmatprep.subr.mxu0 0.0
        %2085 = vmatpush1.msra.mxu0 0.0
        %2086 = vmatprep.subr.mxu0 0.0
        %2087 = vmatpush1.msra.mxu0 0.0
        %2088 = vmatprep.mubr.f32.mxu0 0.0
        %2089 = vmatmul.mubr.f32.gmra.mrb[0].mxu0 %v1888
        %v2090 = vpop.f32.mrb[0].mxu0
        %v2091 = vadd.f32 0.0, %v2090
        %v2092 = vpop.f32.mrb[0].mxu0
        %v2093 = vadd.f32 0.0, %v2092
        %2094 = vdwg.mxu0
        %2095 = vst [vmem:[#allocation2] sm:$0xff] %v2020
        %2096 = vst [vmem:[#allocation2 + $0x8] sm:$0xff] %v2022
        %2097 = vst [vmem:[#allocation2 + $0x10] sm:$0xff] %v2091
        %2098 = vst [vmem:[#allocation2 + $0x18] sm:$0xff] %v2093
        %v2099 = vld [vmem:[#allocation2] sm:$0xff]
        %v2100 = vld [vmem:[#allocation2 + $0x8] sm:$0xff]
        %v2101 = vld [vmem:[#allocation2 + $0x10] sm:$0xff]
        %2102 = vst [vmem:[#allocation3] sm:$0xff] %v2099
        %2103 = vst [vmem:[#allocation3 + $0x8] sm:$0xff] %v2100
        %2104 = vst [vmem:[#allocation3 + $0x10] sm:$0xff] %v2101
        %v2105 = vld [vmem:[#allocation2] sm:$0xff]
        %v2106 = vld [vmem:[#allocation2 + $0x8] sm:$0xff]
        %v2107 = vld [vmem:[#allocation2 + $0x10] sm:$0xff]
        %v2108 = vld [vmem:[#allocation2 + $0x18] sm:$0xff]
        %2113 = vrot.lane.b32.xlu0 %v2105, 127
        %v2114 = vpop.permute.xlu0 %2113
        %2115 = vrot.lane.b32.xlu0 %v2106, 127
        %v2116 = vpop.permute.xlu0 %2115
        %2117 = vrot.lane.b32.xlu0 %v2107, 127
        %v2118 = vpop.permute.xlu0 %2117
        %2119 = vrot.lane.b32.xlu0 %v2108, 127
        %v2120 = vpop.permute.xlu0 %2119
        %v2121 = vsel %vm1010, %v2114, %v2116
        %v2122 = vsel %vm1010, %v2116, %v2118
        %v2123 = vsel %vm1010, %v2118, %v2120
        %2127 = vst [vmem:[#allocation3 + $0x18] sm:$0xff] %v2121
        %2128 = vst [vmem:[#allocation3 + $0x20] sm:$0xff] %v2122
        %2129 = vst [vmem:[#allocation3 + $0x28] sm:$0xff] %v2123
        %v2130 = vld [vmem:[#allocation2] sm:$0xff]
        %v2131 = vld [vmem:[#allocation2 + $0x8] sm:$0xff]
        %v2132 = vld [vmem:[#allocation2 + $0x10] sm:$0xff]
        %v2133 = vld [vmem:[#allocation2 + $0x18] sm:$0xff]
        %2138 = vrot.lane.b32.xlu0 %v2130, 126
        %v2139 = vpop.permute.xlu0 %2138
        %2140 = vrot.lane.b32.xlu0 %v2131, 126
        %v2141 = vpop.permute.xlu0 %2140
        %2142 = vrot.lane.b32.xlu0 %v2132, 126
        %v2143 = vpop.permute.xlu0 %2142
        %2144 = vrot.lane.b32.xlu0 %v2133, 126
        %v2145 = vpop.permute.xlu0 %2144
        %v2146 = vsel %vm1022, %v2139, %v2141
        %v2147 = vsel %vm1022, %v2141, %v2143
        %v2148 = vsel %vm1022, %v2143, %v2145
        %2152 = vst [vmem:[#allocation3 + $0x30] sm:$0xff] %v2146
        %2153 = vst [vmem:[#allocation3 + $0x38] sm:$0xff] %v2147
        %2154 = vst [vmem:[#allocation3 + $0x40] sm:$0xff] %v2148
        %v2155 = vld [vmem:[#allocation2] sm:$0xff]
        %v2156 = vld [vmem:[#allocation2 + $0x8] sm:$0xff]
        %v2157 = vld [vmem:[#allocation2 + $0x10] sm:$0xff]
        %v2158 = vld [vmem:[#allocation2 + $0x18] sm:$0xff]
        %2163 = vrot.lane.b32.xlu0 %v2155, 125
        %v2164 = vpop.permute.xlu0 %2163
        %2165 = vrot.lane.b32.xlu0 %v2156, 125
        %v2166 = vpop.permute.xlu0 %2165
        %2167 = vrot.lane.b32.xlu0 %v2157, 125
        %v2168 = vpop.permute.xlu0 %2167
        %2169 = vrot.lane.b32.xlu0 %v2158, 125
        %v2170 = vpop.permute.xlu0 %2169
        %v2171 = vsel %vm1034, %v2164, %v2166
        %v2172 = vsel %vm1034, %v2166, %v2168
        %v2173 = vsel %vm1034, %v2168, %v2170
        %2177 = vst [vmem:[#allocation3 + $0x48] sm:$0xff] %v2171
        %2178 = vst [vmem:[#allocation3 + $0x50] sm:$0xff] %v2172
        %2179 = vst [vmem:[#allocation3 + $0x58] sm:$0xff] %v2173
        %v2180 = vld [vmem:[#allocation2] sm:$0xff]
        %v2181 = vld [vmem:[#allocation2 + $0x8] sm:$0xff]
        %v2182 = vld [vmem:[#allocation2 + $0x10] sm:$0xff]
        %v2183 = vld [vmem:[#allocation2 + $0x18] sm:$0xff]
        %2188 = vrot.lane.b32.xlu0 %v2180, 124
        %v2189 = vpop.permute.xlu0 %2188
        %2190 = vrot.lane.b32.xlu0 %v2181, 124
        %v2191 = vpop.permute.xlu0 %2190
        %2192 = vrot.lane.b32.xlu0 %v2182, 124
        %v2193 = vpop.permute.xlu0 %2192
        %2194 = vrot.lane.b32.xlu0 %v2183, 124
        %v2195 = vpop.permute.xlu0 %2194
        %v2196 = vsel %vm1046, %v2189, %v2191
        %v2197 = vsel %vm1046, %v2191, %v2193
        %v2198 = vsel %vm1046, %v2193, %v2195
        %2202 = vst [vmem:[#allocation3 + $0x60] sm:$0xff] %v2196
        %2203 = vst [vmem:[#allocation3 + $0x68] sm:$0xff] %v2197
        %2204 = vst [vmem:[#allocation3 + $0x70] sm:$0xff] %v2198
        %v2205 = vld [vmem:[#allocation2] sm:$0xff]
        %v2206 = vld [vmem:[#allocation2 + $0x8] sm:$0xff]
        %v2207 = vld [vmem:[#allocation2 + $0x10] sm:$0xff]
        %v2208 = vld [vmem:[#allocation2 + $0x18] sm:$0xff]
        %2213 = vrot.lane.b32.xlu0 %v2205, 123
        %v2214 = vpop.permute.xlu0 %2213
        %2215 = vrot.lane.b32.xlu0 %v2206, 123
        %v2216 = vpop.permute.xlu0 %2215
        %2217 = vrot.lane.b32.xlu0 %v2207, 123
        %v2218 = vpop.permute.xlu0 %2217
        %2219 = vrot.lane.b32.xlu0 %v2208, 123
        %v2220 = vpop.permute.xlu0 %2219
        %v2221 = vsel %vm1058, %v2214, %v2216
        %v2222 = vsel %vm1058, %v2216, %v2218
        %v2223 = vsel %vm1058, %v2218, %v2220
        %2227 = vst [vmem:[#allocation3 + $0x78] sm:$0xff] %v2221
        %2228 = vst [vmem:[#allocation3 + $0x80] sm:$0xff] %v2222
        %2229 = vst [vmem:[#allocation3 + $0x88] sm:$0xff] %v2223
        %v2230 = vld [vmem:[#allocation2] sm:$0xff]
        %v2231 = vld [vmem:[#allocation2 + $0x8] sm:$0xff]
        %v2232 = vld [vmem:[#allocation2 + $0x10] sm:$0xff]
        %v2233 = vld [vmem:[#allocation2 + $0x18] sm:$0xff]
        %2238 = vrot.lane.b32.xlu0 %v2230, 122
        %v2239 = vpop.permute.xlu0 %2238
        %2240 = vrot.lane.b32.xlu0 %v2231, 122
        %v2241 = vpop.permute.xlu0 %2240
        %2242 = vrot.lane.b32.xlu0 %v2232, 122
        %v2243 = vpop.permute.xlu0 %2242
        %2244 = vrot.lane.b32.xlu0 %v2233, 122
        %v2245 = vpop.permute.xlu0 %2244
        %v2246 = vsel %vm1070, %v2239, %v2241
        %v2247 = vsel %vm1070, %v2241, %v2243
        %v2248 = vsel %vm1070, %v2243, %v2245
        %2252 = vst [vmem:[#allocation3 + $0x90] sm:$0xff] %v2246
        %2253 = vst [vmem:[#allocation3 + $0x98] sm:$0xff] %v2247
        %2254 = vst [vmem:[#allocation3 + $0xa0] sm:$0xff] %v2248
        %v2255 = vld [vmem:[#allocation2] sm:$0xff]
        %v2256 = vld [vmem:[#allocation2 + $0x8] sm:$0xff]
        %v2257 = vld [vmem:[#allocation2 + $0x10] sm:$0xff]
        %v2258 = vld [vmem:[#allocation2 + $0x18] sm:$0xff]
        %2263 = vrot.lane.b32.xlu0 %v2255, 121
        %v2264 = vpop.permute.xlu0 %2263
        %2265 = vrot.lane.b32.xlu0 %v2256, 121
        %v2266 = vpop.permute.xlu0 %2265
        %2267 = vrot.lane.b32.xlu0 %v2257, 121
        %v2268 = vpop.permute.xlu0 %2267
        %2269 = vrot.lane.b32.xlu0 %v2258, 121
        %v2270 = vpop.permute.xlu0 %2269
        %v2271 = vsel %vm1082, %v2264, %v2266
        %v2272 = vsel %vm1082, %v2266, %v2268
        %v2273 = vsel %vm1082, %v2268, %v2270
        %2277 = vst [vmem:[#allocation3 + $0xa8] sm:$0xff] %v2271
        %2278 = vst [vmem:[#allocation3 + $0xb0] sm:$0xff] %v2272
        %2279 = vst [vmem:[#allocation3 + $0xb8] sm:$0xff] %v2273
        %v2280 = vld [vmem:[#allocation2] sm:$0xff]
        %v2281 = vld [vmem:[#allocation2 + $0x8] sm:$0xff]
        %v2282 = vld [vmem:[#allocation2 + $0x10] sm:$0xff]
        %v2283 = vld [vmem:[#allocation2 + $0x18] sm:$0xff]
        %2288 = vrot.lane.b32.xlu0 %v2280, 120
        %v2289 = vpop.permute.xlu0 %2288
        %2290 = vrot.lane.b32.xlu0 %v2281, 120
        %v2291 = vpop.permute.xlu0 %2290
        %2292 = vrot.lane.b32.xlu0 %v2282, 120
        %v2293 = vpop.permute.xlu0 %2292
        %2294 = vrot.lane.b32.xlu0 %v2283, 120
        %v2295 = vpop.permute.xlu0 %2294
        %v2296 = vsel %vm1094, %v2289, %v2291
        %v2297 = vsel %vm1094, %v2291, %v2293
        %v2298 = vsel %vm1094, %v2293, %v2295
        %2302 = vst [vmem:[#allocation3 + $0xc0] sm:$0xff] %v2296
        %2303 = vst [vmem:[#allocation3 + $0xc8] sm:$0xff] %v2297
        %2304 = vst [vmem:[#allocation3 + $0xd0] sm:$0xff] %v2298
        %v2305 = vld [vmem:[#allocation2] sm:$0xff]
        %v2306 = vld [vmem:[#allocation2 + $0x8] sm:$0xff]
        %v2307 = vld [vmem:[#allocation2 + $0x10] sm:$0xff]
        %v2308 = vld [vmem:[#allocation2 + $0x18] sm:$0xff]
        %2313 = vrot.lane.b32.xlu0 %v2305, 119
        %v2314 = vpop.permute.xlu0 %2313
        %2315 = vrot.lane.b32.xlu0 %v2306, 119
        %v2316 = vpop.permute.xlu0 %2315
        %2317 = vrot.lane.b32.xlu0 %v2307, 119
        %v2318 = vpop.permute.xlu0 %2317
        %2319 = vrot.lane.b32.xlu0 %v2308, 119
        %v2320 = vpop.permute.xlu0 %2319
        %vm2321 = vcmask 973824
        %v2322 = vsel %vm2321, %v2314, %v2316
        %v2323 = vsel %vm2321, %v2316, %v2318
        %v2324 = vsel %vm2321, %v2318, %v2320
        %2328 = vst [vmem:[#allocation3 + $0xd8] sm:$0xff] %v2322
        %2329 = vst [vmem:[#allocation3 + $0xe0] sm:$0xff] %v2323
        %2330 = vst [vmem:[#allocation3 + $0xe8] sm:$0xff] %v2324
        %v2331 = vld [vmem:[#allocation2] sm:$0xff]
        %v2332 = vld [vmem:[#allocation2 + $0x8] sm:$0xff]
        %v2333 = vld [vmem:[#allocation2 + $0x10] sm:$0xff]
        %v2334 = vld [vmem:[#allocation2 + $0x18] sm:$0xff]
        %2339 = vrot.lane.b32.xlu0 %v2331, 118
        %v2340 = vpop.permute.xlu0 %2339
        %2341 = vrot.lane.b32.xlu0 %v2332, 118
        %v2342 = vpop.permute.xlu0 %2341
        %2343 = vrot.lane.b32.xlu0 %v2333, 118
        %v2344 = vpop.permute.xlu0 %2343
        %2345 = vrot.lane.b32.xlu0 %v2334, 118
        %v2346 = vpop.permute.xlu0 %2345
        %vm2347 = vcmask 965632
        %v2348 = vsel %vm2347, %v2340, %v2342
        %v2349 = vsel %vm2347, %v2342, %v2344
        %v2350 = vsel %vm2347, %v2344, %v2346
        %2354 = vst [vmem:[#allocation3 + $0xf0] sm:$0xff] %v2348
        %2355 = vst [vmem:[#allocation3 + $0xf8] sm:$0xff] %v2349
        %2356 = vst [vmem:[#allocation3 + $0x100] sm:$0xff] %v2350
        %v2357 = vld [vmem:[#allocation2] sm:$0xff]
        %v2358 = vld [vmem:[#allocation2 + $0x8] sm:$0xff]
        %v2359 = vld [vmem:[#allocation2 + $0x10] sm:$0xff]
        %v2360 = vld [vmem:[#allocation2 + $0x18] sm:$0xff]
        %2365 = vrot.lane.b32.xlu0 %v2357, 117
        %v2366 = vpop.permute.xlu0 %2365
        %2367 = vrot.lane.b32.xlu0 %v2358, 117
        %v2368 = vpop.permute.xlu0 %2367
        %2369 = vrot.lane.b32.xlu0 %v2359, 117
        %v2370 = vpop.permute.xlu0 %2369
        %2371 = vrot.lane.b32.xlu0 %v2360, 117
        %v2372 = vpop.permute.xlu0 %2371
        %vm2373 = vcmask 957440
        %v2374 = vsel %vm2373, %v2366, %v2368
        %v2375 = vsel %vm2373, %v2368, %v2370
        %v2376 = vsel %vm2373, %v2370, %v2372
        %2380 = vst [vmem:[#allocation3 + $0x108] sm:$0xff] %v2374
        %2381 = vst [vmem:[#allocation3 + $0x110] sm:$0xff] %v2375
        %2382 = vst [vmem:[#allocation3 + $0x118] sm:$0xff] %v2376
        %v2383 = vld [vmem:[#allocation2] sm:$0xff]
        %v2384 = vld [vmem:[#allocation2 + $0x8] sm:$0xff]
        %v2385 = vld [vmem:[#allocation2 + $0x10] sm:$0xff]
        %v2386 = vld [vmem:[#allocation2 + $0x18] sm:$0xff]
        %2391 = vrot.lane.b32.xlu0 %v2383, 116
        %v2392 = vpop.permute.xlu0 %2391
        %2393 = vrot.lane.b32.xlu0 %v2384, 116
        %v2394 = vpop.permute.xlu0 %2393
        %2395 = vrot.lane.b32.xlu0 %v2385, 116
        %v2396 = vpop.permute.xlu0 %2395
        %2397 = vrot.lane.b32.xlu0 %v2386, 116
        %v2398 = vpop.permute.xlu0 %2397
        %vm2399 = vcmask 949248
        %v2400 = vsel %vm2399, %v2392, %v2394
        %v2401 = vsel %vm2399, %v2394, %v2396
        %v2402 = vsel %vm2399, %v2396, %v2398
        %2406 = vst [vmem:[#allocation3 + $0x120] sm:$0xff] %v2400
        %2407 = vst [vmem:[#allocation3 + $0x128] sm:$0xff] %v2401
        %2408 = vst [vmem:[#allocation3 + $0x130] sm:$0xff] %v2402
        %v2409 = vld [vmem:[#allocation2] sm:$0xff]
        %v2410 = vld [vmem:[#allocation2 + $0x8] sm:$0xff]
        %v2411 = vld [vmem:[#allocation2 + $0x10] sm:$0xff]
        %v2412 = vld [vmem:[#allocation2 + $0x18] sm:$0xff]
        %2417 = vrot.lane.b32.xlu0 %v2409, 115
        %v2418 = vpop.permute.xlu0 %2417
        %2419 = vrot.lane.b32.xlu0 %v2410, 115
        %v2420 = vpop.permute.xlu0 %2419
        %2421 = vrot.lane.b32.xlu0 %v2411, 115
        %v2422 = vpop.permute.xlu0 %2421
        %2423 = vrot.lane.b32.xlu0 %v2412, 115
        %v2424 = vpop.permute.xlu0 %2423
        %vm2425 = vcmask 941056
        %v2426 = vsel %vm2425, %v2418, %v2420
        %v2427 = vsel %vm2425, %v2420, %v2422
        %v2428 = vsel %vm2425, %v2422, %v2424
        %2432 = vst [vmem:[#allocation3 + $0x138] sm:$0xff] %v2426
        %2433 = vst [vmem:[#allocation3 + $0x140] sm:$0xff] %v2427
        %2434 = vst [vmem:[#allocation3 + $0x148] sm:$0xff] %v2428
        %v2435 = vld [vmem:[#allocation2] sm:$0xff]
        %v2436 = vld [vmem:[#allocation2 + $0x8] sm:$0xff]
        %v2437 = vld [vmem:[#allocation2 + $0x10] sm:$0xff]
        %v2438 = vld [vmem:[#allocation2 + $0x18] sm:$0xff]
        %2443 = vrot.lane.b32.xlu0 %v2435, 114
        %v2444 = vpop.permute.xlu0 %2443
        %2445 = vrot.lane.b32.xlu0 %v2436, 114
        %v2446 = vpop.permute.xlu0 %2445
        %2447 = vrot.lane.b32.xlu0 %v2437, 114
        %v2448 = vpop.permute.xlu0 %2447
        %2449 = vrot.lane.b32.xlu0 %v2438, 114
        %v2450 = vpop.permute.xlu0 %2449
        %vm2451 = vcmask 932864
        %v2452 = vsel %vm2451, %v2444, %v2446
        %v2453 = vsel %vm2451, %v2446, %v2448
        %v2454 = vsel %vm2451, %v2448, %v2450
        %2458 = vst [vmem:[#allocation3 + $0x150] sm:$0xff] %v2452
        %2459 = vst [vmem:[#allocation3 + $0x158] sm:$0xff] %v2453
        %2460 = vst [vmem:[#allocation3 + $0x160] sm:$0xff] %v2454
        %v2461 = vld [vmem:[#allocation2] sm:$0xff]
        %v2462 = vld [vmem:[#allocation2 + $0x8] sm:$0xff]
        %v2463 = vld [vmem:[#allocation2 + $0x10] sm:$0xff]
        %v2464 = vld [vmem:[#allocation2 + $0x18] sm:$0xff]
        %2469 = vrot.lane.b32.xlu0 %v2461, 113
        %v2470 = vpop.permute.xlu0 %2469
        %2471 = vrot.lane.b32.xlu0 %v2462, 113
        %v2472 = vpop.permute.xlu0 %2471
        %2473 = vrot.lane.b32.xlu0 %v2463, 113
        %v2474 = vpop.permute.xlu0 %2473
        %2475 = vrot.lane.b32.xlu0 %v2464, 113
        %v2476 = vpop.permute.xlu0 %2475
        %vm2477 = vcmask 924672
        %v2478 = vsel %vm2477, %v2470, %v2472
        %v2479 = vsel %vm2477, %v2472, %v2474
        %v2480 = vsel %vm2477, %v2474, %v2476
        %2484 = vst [vmem:[#allocation3 + $0x168] sm:$0xff] %v2478
        %2485 = vst [vmem:[#allocation3 + $0x170] sm:$0xff] %v2479
        %2486 = vst [vmem:[#allocation3 + $0x178] sm:$0xff] %v2480
        %v2487 = vld [vmem:[#allocation2] sm:$0xff]
        %v2488 = vld [vmem:[#allocation2 + $0x8] sm:$0xff]
        %v2489 = vld [vmem:[#allocation2 + $0x10] sm:$0xff]
        %v2490 = vld [vmem:[#allocation2 + $0x18] sm:$0xff]
        %2495 = vrot.lane.b32.xlu0 %v2487, 112
        %v2496 = vpop.permute.xlu0 %2495
        %2497 = vrot.lane.b32.xlu0 %v2488, 112
        %v2498 = vpop.permute.xlu0 %2497
        %2499 = vrot.lane.b32.xlu0 %v2489, 112
        %v2500 = vpop.permute.xlu0 %2499
        %2501 = vrot.lane.b32.xlu0 %v2490, 112
        %v2502 = vpop.permute.xlu0 %2501
        %vm2503 = vcmask 916480
        %v2504 = vsel %vm2503, %v2496, %v2498
        %v2505 = vsel %vm2503, %v2498, %v2500
        %v2506 = vsel %vm2503, %v2500, %v2502
        %2510 = vst [vmem:[#allocation3 + $0x180] sm:$0xff] %v2504
        %2511 = vst [vmem:[#allocation3 + $0x188] sm:$0xff] %v2505
        %2512 = vst [vmem:[#allocation3 + $0x190] sm:$0xff] %v2506
        %v2513 = vld [vmem:[%s23] sm:$0xff]
        %v2514 = vld [vmem:[%s23 + $0x8] sm:$0xff]
        %v2515 = vld [vmem:[#allocation3] sm:$0xff]
        %v2516 = vld [vmem:[#allocation3 + $0x8] sm:$0xff]
        %v2517 = vld [vmem:[#allocation3 + $0x10] sm:$0xff]
        %v2518 = vld [vmem:[#allocation3 + $0x18] sm:$0xff]
        %v2519 = vld [vmem:[#allocation3 + $0x20] sm:$0xff]
        %v2520 = vld [vmem:[#allocation3 + $0x28] sm:$0xff]
        %v2521 = vld [vmem:[#allocation3 + $0x30] sm:$0xff]
        %v2522 = vld [vmem:[#allocation3 + $0x38] sm:$0xff]
        %v2523 = vld [vmem:[#allocation3 + $0x40] sm:$0xff]
        %v2524 = vld [vmem:[#allocation3 + $0x48] sm:$0xff]
        %v2525 = vld [vmem:[#allocation3 + $0x50] sm:$0xff]
        %v2526 = vld [vmem:[#allocation3 + $0x58] sm:$0xff]
        %v2527 = vld [vmem:[#allocation3 + $0x60] sm:$0xff]
        %v2528 = vld [vmem:[#allocation3 + $0x68] sm:$0xff]
        %v2529 = vld [vmem:[#allocation3 + $0x70] sm:$0xff]
        %v2530 = vld [vmem:[#allocation3 + $0x78] sm:$0xff]
        %v2531 = vld [vmem:[#allocation3 + $0x80] sm:$0xff]
        %v2532 = vld [vmem:[#allocation3 + $0x88] sm:$0xff]
        %v2533 = vld [vmem:[#allocation3 + $0x90] sm:$0xff]
        %v2534 = vld [vmem:[#allocation3 + $0x98] sm:$0xff]
        %v2535 = vld [vmem:[#allocation3 + $0xa0] sm:$0xff]
        %v2536 = vld [vmem:[#allocation3 + $0xa8] sm:$0xff]
        %v2537 = vld [vmem:[#allocation3 + $0xb0] sm:$0xff]
        %v2538 = vld [vmem:[#allocation3 + $0xb8] sm:$0xff]
        %v2539 = vld [vmem:[#allocation3 + $0xc0] sm:$0xff]
        %v2540 = vld [vmem:[#allocation3 + $0xc8] sm:$0xff]
        %v2541 = vld [vmem:[#allocation3 + $0xd0] sm:$0xff]
        %v2542 = vld [vmem:[#allocation3 + $0xd8] sm:$0xff]
        %v2543 = vld [vmem:[#allocation3 + $0xe0] sm:$0xff]
        %v2544 = vld [vmem:[#allocation3 + $0xe8] sm:$0xff]
        %v2545 = vld [vmem:[#allocation3 + $0xf0] sm:$0xff]
        %v2546 = vld [vmem:[#allocation3 + $0xf8] sm:$0xff]
        %v2547 = vld [vmem:[#allocation3 + $0x100] sm:$0xff]
        %v2548 = vld [vmem:[#allocation3 + $0x108] sm:$0xff]
        %v2549 = vld [vmem:[#allocation3 + $0x110] sm:$0xff]
        %v2550 = vld [vmem:[#allocation3 + $0x118] sm:$0xff]
        %v2551 = vld [vmem:[#allocation3 + $0x120] sm:$0xff]
        %v2552 = vld [vmem:[#allocation3 + $0x128] sm:$0xff]
        %v2553 = vld [vmem:[#allocation3 + $0x130] sm:$0xff]
        %v2554 = vld [vmem:[#allocation3 + $0x138] sm:$0xff]
        %v2555 = vld [vmem:[#allocation3 + $0x140] sm:$0xff]
        %v2556 = vld [vmem:[#allocation3 + $0x148] sm:$0xff]
        %v2557 = vld [vmem:[#allocation3 + $0x150] sm:$0xff]
        %v2558 = vld [vmem:[#allocation3 + $0x158] sm:$0xff]
        %v2559 = vld [vmem:[#allocation3 + $0x160] sm:$0xff]
        %v2560 = vld [vmem:[#allocation3 + $0x168] sm:$0xff]
        %v2561 = vld [vmem:[#allocation3 + $0x170] sm:$0xff]
        %v2562 = vld [vmem:[#allocation3 + $0x178] sm:$0xff]
        %v2563 = vld [vmem:[#allocation3 + $0x180] sm:$0xff]
        %v2564 = vld [vmem:[#allocation3 + $0x188] sm:$0xff]
        %v2565 = vld [vmem:[#allocation3 + $0x190] sm:$0xff]
        %v2566 = vld [vmem:[%s25] sm:$0xff]
        %2568 = vset.pattern.permute.xlu0 0
        %2569 = vperm.xlu0 %2568, %v2566
        %v2570 = vpop.permute.xlu0 %2569
        %v2573 = vsel %vm912, %v2514, 0
        %2575 = vmatprep.subr.mxu0 %v2516
        %2576 = vmatpush1.msra.mxu0 %v2515
        %2577 = vmatprep.subr.mxu0 %v2519
        %2578 = vmatpush1.msra.mxu0 %v2518
        %2579 = vmatprep.subr.mxu0 %v2522
        %2580 = vmatpush1.msra.mxu0 %v2521
        %2581 = vmatprep.subr.mxu0 %v2525
        %2582 = vmatpush1.msra.mxu0 %v2524
        %2583 = vmatprep.subr.mxu0 %v2528
        %2584 = vmatpush1.msra.mxu0 %v2527
        %2585 = vmatprep.subr.mxu0 %v2531
        %2586 = vmatpush1.msra.mxu0 %v2530
        %2587 = vmatprep.subr.mxu0 %v2534
        %2588 = vmatpush1.msra.mxu0 %v2533
        %2589 = vmatprep.subr.mxu0 %v2537
        %2590 = vmatpush1.msra.mxu0 %v2536
        %2591 = vmatprep.subr.mxu0 %v2540
        %2592 = vmatpush1.msra.mxu0 %v2539
        %2593 = vmatprep.subr.mxu0 %v2543
        %2594 = vmatpush1.msra.mxu0 %v2542
        %2595 = vmatprep.subr.mxu0 %v2546
        %2596 = vmatpush1.msra.mxu0 %v2545
        %2597 = vmatprep.subr.mxu0 %v2549
        %2598 = vmatpush1.msra.mxu0 %v2548
        %2599 = vmatprep.subr.mxu0 %v2552
        %2600 = vmatpush1.msra.mxu0 %v2551
        %2601 = vmatprep.subr.mxu0 %v2555
        %2602 = vmatpush1.msra.mxu0 %v2554
        %2603 = vmatprep.subr.mxu0 %v2558
        %2604 = vmatpush1.msra.mxu0 %v2557
        %2605 = vmatprep.subr.mxu0 %v2561
        %2606 = vmatpush1.msra.mxu0 %v2560
        %2607 = vmatprep.subr.mxu0 %v2564
        %2608 = vmatpush1.msra.mxu0 %v2563
        %2609 = vmatprep.subr.mxu0 0.0
        %2610 = vmatpush1.msra.mxu0 0.0
        %2611 = vmatprep.subr.mxu0 0.0
        %2612 = vmatpush1.msra.mxu0 0.0
        %2613 = vmatprep.subr.mxu0 0.0
        %2614 = vmatpush1.msra.mxu0 0.0
        %2615 = vmatprep.subr.mxu0 0.0
        %2616 = vmatpush1.msra.mxu0 0.0
        %2617 = vmatprep.subr.mxu0 0.0
        %2618 = vmatpush1.msra.mxu0 0.0
        %2619 = vmatprep.subr.mxu0 0.0
        %2620 = vmatpush1.msra.mxu0 0.0
        %2621 = vmatprep.subr.mxu0 0.0
        %2622 = vmatpush1.msra.mxu0 0.0
        %2623 = vmatprep.subr.mxu0 0.0
        %2624 = vmatpush1.msra.mxu0 0.0
        %2625 = vmatprep.subr.mxu0 0.0
        %2626 = vmatpush1.msra.mxu0 0.0
        %2627 = vmatprep.subr.mxu0 0.0
        %2628 = vmatpush1.msra.mxu0 0.0
        %2629 = vmatprep.subr.mxu0 0.0
        %2630 = vmatpush1.msra.mxu0 0.0
        %2631 = vmatprep.subr.mxu0 0.0
        %2632 = vmatpush1.msra.mxu0 0.0
        %2633 = vmatprep.subr.mxu0 0.0
        %2634 = vmatpush1.msra.mxu0 0.0
        %2635 = vmatprep.subr.mxu0 0.0
        %2636 = vmatpush1.msra.mxu0 0.0
        %2637 = vmatprep.subr.mxu0 0.0
        %2638 = vmatpush1.msra.mxu0 0.0
        %2639 = vmatprep.mubr.f32.mxu0 %v2573
        %2640 = vmatmul.mubr.f32.gmra.mrb[0].mxu0 %v2513
        %v2641 = vpop.f32.mrb[0].mxu0
        %v2642 = vadd.f32 %v2570, %v2641
        %v2643 = vpop.f32.mrb[0].mxu0
        %v2644 = vadd.f32 %v2570, %v2643
        %2645 = vdwg.mxu0
        %2646 = vmatprep.subr.mxu0 0.0
        %2647 = vmatpush1.msra.mxu0 %v2517
        %2648 = vmatprep.subr.mxu0 0.0
        %2649 = vmatpush1.msra.mxu0 %v2520
        %2650 = vmatprep.subr.mxu0 0.0
        %2651 = vmatpush1.msra.mxu0 %v2523
        %2652 = vmatprep.subr.mxu0 0.0
        %2653 = vmatpush1.msra.mxu0 %v2526
        %2654 = vmatprep.subr.mxu0 0.0
        %2655 = vmatpush1.msra.mxu0 %v2529
        %2656 = vmatprep.subr.mxu0 0.0
        %2657 = vmatpush1.msra.mxu0 %v2532
        %2658 = vmatprep.subr.mxu0 0.0
        %2659 = vmatpush1.msra.mxu0 %v2535
        %2660 = vmatprep.subr.mxu0 0.0
        %2661 = vmatpush1.msra.mxu0 %v2538
        %2662 = vmatprep.subr.mxu0 0.0
        %2663 = vmatpush1.msra.mxu0 %v2541
        %2664 = vmatprep.subr.mxu0 0.0
        %2665 = vmatpush1.msra.mxu0 %v2544
        %2666 = vmatprep.subr.mxu0 0.0
        %2667 = vmatpush1.msra.mxu0 %v2547
        %2668 = vmatprep.subr.mxu0 0.0
        %2669 = vmatpush1.msra.mxu0 %v2550
        %2670 = vmatprep.subr.mxu0 0.0
        %2671 = vmatpush1.msra.mxu0 %v2553
        %2672 = vmatprep.subr.mxu0 0.0
        %2673 = vmatpush1.msra.mxu0 %v2556
        %2674 = vmatprep.subr.mxu0 0.0
        %2675 = vmatpush1.msra.mxu0 %v2559
        %2676 = vmatprep.subr.mxu0 0.0
        %2677 = vmatpush1.msra.mxu0 %v2562
        %2678 = vmatprep.subr.mxu0 0.0
        %2679 = vmatpush1.msra.mxu0 %v2565
        %2680 = vmatprep.subr.mxu0 0.0
        %2681 = vmatpush1.msra.mxu0 0.0
        %2682 = vmatprep.subr.mxu0 0.0
        %2683 = vmatpush1.msra.mxu0 0.0
        %2684 = vmatprep.subr.mxu0 0.0
        %2685 = vmatpush1.msra.mxu0 0.0
        %2686 = vmatprep.subr.mxu0 0.0
        %2687 = vmatpush1.msra.mxu0 0.0
        %2688 = vmatprep.subr.mxu0 0.0
        %2689 = vmatpush1.msra.mxu0 0.0
        %2690 = vmatprep.subr.mxu0 0.0
        %2691 = vmatpush1.msra.mxu0 0.0
        %2692 = vmatprep.subr.mxu0 0.0
        %2693 = vmatpush1.msra.mxu0 0.0
        %2694 = vmatprep.subr.mxu0 0.0
        %2695 = vmatpush1.msra.mxu0 0.0
        %2696 = vmatprep.subr.mxu0 0.0
        %2697 = vmatpush1.msra.mxu0 0.0
        %2698 = vmatprep.subr.mxu0 0.0
        %2699 = vmatpush1.msra.mxu0 0.0
        %2700 = vmatprep.subr.mxu0 0.0
        %2701 = vmatpush1.msra.mxu0 0.0
        %2702 = vmatprep.subr.mxu0 0.0
        %2703 = vmatpush1.msra.mxu0 0.0
        %2704 = vmatprep.subr.mxu0 0.0
        %2705 = vmatpush1.msra.mxu0 0.0
        %2706 = vmatprep.subr.mxu0 0.0
        %2707 = vmatpush1.msra.mxu0 0.0
        %2708 = vmatprep.subr.mxu0 0.0
        %2709 = vmatpush1.msra.mxu0 0.0
        %2710 = vmatprep.mubr.f32.mxu0 %v2573
        %2711 = vmatmul.mubr.f32.gmra.mrb[0].mxu0 %v2513
        %v2712 = vpop.f32.mrb[0].mxu0
        %v2713 = vadd.f32 %v2570, %v2712
        %v2714 = vpop.f32.mrb[0].mxu0
        %2715 = vdwg.mxu0
        %v2716 = vmul.f32 %v2642, 0.70710677
        %v2717 = vmul.f32 %v2644, 0.70710677
        %v2718 = vmul.f32 %v2713, 0.70710677
        %vm2719 = vcmp.ge.f32.partialorder %v2716, 0.0
        %vm2720 = vcmp.ge.f32.partialorder %v2717, 0.0
        %vm2721 = vcmp.ge.f32.partialorder %v2718, 0.0
        %v2722 = vsel %vm2719, 1.0, -1.0
        %v2723 = vsel %vm2720, 1.0, -1.0
        %v2724 = vsel %vm2721, 1.0, -1.0
        %v2725 = vand.u32 2147483647, %v2716
        %v2726 = vand.u32 2147483647, %v2717
        %v2727 = vand.u32 2147483647, %v2718
        %v2728 = vmul.f32 %v2725, 0.3275911
        %v2729 = vmul.f32 %v2726, 0.3275911
        %v2730 = vmul.f32 %v2727, 0.3275911
        %v2731 = vadd.f32 %v2728, 1.0
        %v2732 = vadd.f32 %v2729, 1.0
        %v2733 = vadd.f32 %v2730, 1.0
        %v2734 = vrcp.pop %v2731
        %v2735 = vmul.f32 1.0, %v2734
        %v2736 = vrcp.pop %v2732
        %v2737 = vmul.f32 1.0, %v2736
        %v2738 = vrcp.pop %v2733
        %v2739 = vmul.f32 1.0, %v2738
        %v2740 = vmul.f32 %v2735, 1.0614054
        %v2741 = vmul.f32 %v2737, 1.0614054
        %v2742 = vmul.f32 %v2739, 1.0614054
        %v2743 = vadd.f32 %v2740, -1.4531521
        %v2744 = vadd.f32 %v2741, -1.4531521
        %v2745 = vadd.f32 %v2742, -1.4531521
        %v2746 = vmul.f32 %v2743, %v2735
        %v2747 = vmul.f32 %v2744, %v2737
        %v2748 = vmul.f32 %v2745, %v2739
        %v2749 = vadd.f32 %v2746, 1.4214138
        %v2750 = vadd.f32 %v2747, 1.4214138
        %v2751 = vadd.f32 %v2748, 1.4214138
        %v2752 = vmul.f32 %v2749, %v2735
        %v2753 = vmul.f32 %v2750, %v2737
        %v2754 = vmul.f32 %v2751, %v2739
        %v2755 = vadd.f32 %v2752, -0.28449672
        %v2756 = vadd.f32 %v2753, -0.28449672
        %v2757 = vadd.f32 %v2754, -0.28449672
        %v2758 = vmul.f32 %v2755, %v2735
        %v2759 = vmul.f32 %v2756, %v2737
        %v2760 = vmul.f32 %v2757, %v2739
        %v2761 = vadd.f32 %v2758, 0.2548296
        %v2762 = vadd.f32 %v2759, 0.2548296
        %v2763 = vadd.f32 %v2760, 0.2548296
        %v2764 = vmul.f32 %v2761, %v2735
        %v2765 = vmul.f32 %v2762, %v2737
        %v2766 = vmul.f32 %v2763, %v2739
        %v2767 = vsub.f32 0.0, %v2725
        %v2768 = vsub.f32 0.0, %v2726
        %v2769 = vsub.f32 0.0, %v2727
        %v2770 = vmul.f32 %v2767, %v2725
        %v2771 = vmul.f32 %v2768, %v2726
        %v2772 = vmul.f32 %v2769, %v2727
        %v2773 = vmul.f32 %v2770, 1.442695
        %v2774 = vpow.pop %v2773
        %v2775 = vmul.f32 %v2771, 1.442695
        %v2776 = vpow.pop %v2775
        %v2777 = vmul.f32 %v2772, 1.442695
        %v2778 = vpow.pop %v2777
        %v2779 = vmul.f32 %v2764, %v2774
        %v2780 = vmul.f32 %v2765, %v2776
        %v2781 = vmul.f32 %v2766, %v2778
        %v2782 = vsub.f32 1.0, %v2779
        %v2783 = vsub.f32 1.0, %v2780
        %v2784 = vsub.f32 1.0, %v2781
        %v2785 = vmul.f32 %v2722, %v2782
        %v2786 = vmul.f32 %v2723, %v2783
        %v2787 = vmul.f32 %v2724, %v2784
        %v2788 = vmul.f32 %v2642, 0.5
        %v2789 = vmul.f32 %v2644, 0.5
        %v2790 = vmul.f32 %v2713, 0.5
        %v2791 = vadd.f32 %v2785, 1.0
        %v2792 = vadd.f32 %v2786, 1.0
        %v2793 = vadd.f32 %v2787, 1.0
        %v2794 = vmul.f32 %v2788, %v2791
        %v2795 = vmul.f32 %v2789, %v2792
        %v2796 = vmul.f32 %v2790, %v2793
        %v2797 = vadd.f32 %v2794, %v2795
        %v2798 = vadd.f32 %v2797, %v2796
        %2799 = vadd.xlane.f32.xlu0 %v2798
        %v2800 = vpop.xlane.xlu0 %2799
        %v2801 = vrot.slane %v2800, 4
        %v2802 = vadd.f32 %v2800, %v2801
        %v2803 = vrot.slane %v2802, 2
        %v2804 = vadd.f32 %v2802, %v2803
        %v2805 = vrot.slane %v2804, 1
        %v2806 = vadd.f32 %v2804, %v2805
        %v2807 = vmul.f32 %v2794, %v2794
        %v2808 = vmul.f32 %v2795, %v2795
        %v2809 = vmul.f32 %v2796, %v2796
        %v2810 = vadd.f32 %v2807, %v2808
        %v2811 = vadd.f32 %v2810, %v2809
        %2812 = vadd.xlane.f32.xlu0 %v2811
        %v2813 = vpop.xlane.xlu0 %2812
        %v2814 = vrot.slane %v2813, 4
        %v2815 = vadd.f32 %v2813, %v2814
        %v2816 = vrot.slane %v2815, 2
        %v2817 = vadd.f32 %v2815, %v2816
        %v2818 = vrot.slane %v2817, 1
        %v2819 = vadd.f32 %v2817, %v2818
        %v2820 = vmul.f32 %v2806, 0.00032552084
        %v2821 = vmul.f32 %v2819, 0.00032552084
        %v2822 = vmul.f32 %v2820, %v2820
        %v2823 = vsub.f32 %v2821, %v2822
        %v2824 = vsub.f32 %v2794, %v2820
        %v2825 = vsub.f32 %v2795, %v2820
        %v2826 = vsub.f32 %v2796, %v2820
        %v2827 = vadd.f32 %v2823, 1e-05
        %v2828 = vrsqrt.pop %v2827
        %v2829 = vmul.f32 %v2824, %v2828
        %v2830 = vmul.f32 %v2825, %v2828
        %v2831 = vmul.f32 %v2826, %v2828
        %v2832 = vld [vmem:[%s27] sm:$0xff]
        %v2833 = vld [vmem:[%s27 + $0x8] sm:$0xff]
        %v2834 = vld [vmem:[%s27 + $0x10] sm:$0xff]
        %v2835 = vmul.f32 %v2829, %v2832
        %v2836 = vmul.f32 %v2830, %v2833
        %v2837 = vmul.f32 %v2831, %v2834
        %v2838 = vld [vmem:[%s29] sm:$0xff]
        %v2839 = vld [vmem:[%s29 + $0x8] sm:$0xff]
        %v2840 = vld [vmem:[%s29 + $0x10] sm:$0xff]
        %v2841 = vadd.f32 %v2835, %v2838
        %v2842 = vadd.f32 %v2836, %v2839
        %v2843 = vadd.f32 %v2837, %v2840
        %v2844 = vmul.f32 %v2841, 0.70710677
        %v2845 = vmul.f32 %v2842, 0.70710677
        %v2846 = vmul.f32 %v2843, 0.70710677
        %vm2847 = vcmp.ge.f32.partialorder %v2844, 0.0
        %vm2848 = vcmp.ge.f32.partialorder %v2845, 0.0
        %vm2849 = vcmp.ge.f32.partialorder %v2846, 0.0
        %v2850 = vsel %vm2847, 1.0, -1.0
        %v2851 = vsel %vm2848, 1.0, -1.0
        %v2852 = vsel %vm2849, 1.0, -1.0
        %v2853 = vand.u32 2147483647, %v2844
        %v2854 = vand.u32 2147483647, %v2845
        %v2855 = vand.u32 2147483647, %v2846
        %v2856 = vmul.f32 %v2853, 0.3275911
        %v2857 = vmul.f32 %v2854, 0.3275911
        %v2858 = vmul.f32 %v2855, 0.3275911
        %v2859 = vadd.f32 %v2856, 1.0
        %v2860 = vadd.f32 %v2857, 1.0
        %v2861 = vadd.f32 %v2858, 1.0
        %v2862 = vrcp.pop %v2859
        %v2863 = vmul.f32 1.0, %v2862
        %v2864 = vrcp.pop %v2860
        %v2865 = vmul.f32 1.0, %v2864
        %v2866 = vrcp.pop %v2861
        %v2867 = vmul.f32 1.0, %v2866
        %v2868 = vmul.f32 %v2863, 1.0614054
        %v2869 = vmul.f32 %v2865, 1.0614054
        %v2870 = vmul.f32 %v2867, 1.0614054
        %v2871 = vadd.f32 %v2868, -1.4531521
        %v2872 = vadd.f32 %v2869, -1.4531521
        %v2873 = vadd.f32 %v2870, -1.4531521
        %v2874 = vmul.f32 %v2871, %v2863
        %v2875 = vmul.f32 %v2872, %v2865
        %v2876 = vmul.f32 %v2873, %v2867
        %v2877 = vadd.f32 %v2874, 1.4214138
        %v2878 = vadd.f32 %v2875, 1.4214138
        %v2879 = vadd.f32 %v2876, 1.4214138
        %v2880 = vmul.f32 %v2877, %v2863
        %v2881 = vmul.f32 %v2878, %v2865
        %v2882 = vmul.f32 %v2879, %v2867
        %v2883 = vadd.f32 %v2880, -0.28449672
        %v2884 = vadd.f32 %v2881, -0.28449672
        %v2885 = vadd.f32 %v2882, -0.28449672
        %v2886 = vmul.f32 %v2883, %v2863
        %v2887 = vmul.f32 %v2884, %v2865
        %v2888 = vmul.f32 %v2885, %v2867
        %v2889 = vadd.f32 %v2886, 0.2548296
        %v2890 = vadd.f32 %v2887, 0.2548296
        %v2891 = vadd.f32 %v2888, 0.2548296
        %v2892 = vmul.f32 %v2889, %v2863
        %v2893 = vmul.f32 %v2890, %v2865
        %v2894 = vmul.f32 %v2891, %v2867
        %v2895 = vsub.f32 0.0, %v2853
        %v2896 = vsub.f32 0.0, %v2854
        %v2897 = vsub.f32 0.0, %v2855
        %v2898 = vmul.f32 %v2895, %v2853
        %v2899 = vmul.f32 %v2896, %v2854
        %v2900 = vmul.f32 %v2897, %v2855
        %v2901 = vmul.f32 %v2898, 1.442695
        %v2902 = vpow.pop %v2901
        %v2903 = vmul.f32 %v2899, 1.442695
        %v2904 = vpow.pop %v2903
        %v2905 = vmul.f32 %v2900, 1.442695
        %v2906 = vpow.pop %v2905
        %v2907 = vmul.f32 %v2892, %v2902
        %v2908 = vmul.f32 %v2893, %v2904
        %v2909 = vmul.f32 %v2894, %v2906
        %v2910 = vsub.f32 1.0, %v2907
        %v2911 = vsub.f32 1.0, %v2908
        %v2912 = vsub.f32 1.0, %v2909
        %v2913 = vmul.f32 %v2850, %v2910
        %v2914 = vmul.f32 %v2851, %v2911
        %v2915 = vmul.f32 %v2852, %v2912
        %v2916 = vmul.f32 %v2841, 0.5
        %v2917 = vmul.f32 %v2842, 0.5
        %v2918 = vmul.f32 %v2843, 0.5
        %v2919 = vadd.f32 %v2913, 1.0
        %v2920 = vadd.f32 %v2914, 1.0
        %v2921 = vadd.f32 %v2915, 1.0
        %v2922 = vmul.f32 %v2916, %v2919
        %v2923 = vmul.f32 %v2917, %v2920
        %v2924 = vmul.f32 %v2918, %v2921
        %2928 = vrot.lane.b32.xlu0 %v2922, 7
        %v2929 = vpop.permute.xlu0 %2928
        %2930 = vrot.lane.b32.xlu0 %v2923, 7
        %v2931 = vpop.permute.xlu0 %2930
        %2932 = vrot.lane.b32.xlu0 %v2924, 7
        %v2933 = vpop.permute.xlu0 %2932
        %v2934 = vsel %vm924, %v2929, %v2931
        %v2935 = vsel %vm924, %v2931, %v2933
        %vm2940 = vcmask 1047608
        %2941 = vst.msk [vmem:[#allocation2] sm:$0xff] %vm2940, %v2929
        %2942 = vst [vmem:[#allocation2 + $0x8] sm:$0xff] %v2934
        %2943 = vst [vmem:[#allocation2 + $0x10] sm:$0xff] %v2935
        %2944 = vst.msk [vmem:[#allocation2 + $0x18] sm:$0xff] %vm924, %v2933
        %v2945 = vld [vmem:[#allocation2] sm:$0xff]
        %v2946 = vld [vmem:[#allocation2 + $0x8] sm:$0xff]
        %v2947 = vld [vmem:[#allocation2 + $0x10] sm:$0xff]
        %2948 = vst [vmem:[#allocation3] sm:$0xff] %v2945
        %2949 = vst [vmem:[#allocation3 + $0x8] sm:$0xff] %v2946
        %2950 = vst [vmem:[#allocation3 + $0x10] sm:$0xff] %v2947
        %v2951 = vld [vmem:[#allocation2] sm:$0xff]
        %v2952 = vld [vmem:[#allocation2 + $0x8] sm:$0xff]
        %v2953 = vld [vmem:[#allocation2 + $0x10] sm:$0xff]
        %v2954 = vld [vmem:[#allocation2 + $0x18] sm:$0xff]
        %2959 = vrot.lane.b32.xlu0 %v2951, 127
        %v2960 = vpop.permute.xlu0 %2959
        %2961 = vrot.lane.b32.xlu0 %v2952, 127
        %v2962 = vpop.permute.xlu0 %2961
        %2963 = vrot.lane.b32.xlu0 %v2953, 127
        %v2964 = vpop.permute.xlu0 %2963
        %2965 = vrot.lane.b32.xlu0 %v2954, 127
        %v2966 = vpop.permute.xlu0 %2965
        %v2967 = vsel %vm1010, %v2960, %v2962
        %v2968 = vsel %vm1010, %v2962, %v2964
        %v2969 = vsel %vm1010, %v2964, %v2966
        %2973 = vst [vmem:[#allocation3 + $0x18] sm:$0xff] %v2967
        %2974 = vst [vmem:[#allocation3 + $0x20] sm:$0xff] %v2968
        %2975 = vst [vmem:[#allocation3 + $0x28] sm:$0xff] %v2969
        %v2976 = vld [vmem:[#allocation2] sm:$0xff]
        %v2977 = vld [vmem:[#allocation2 + $0x8] sm:$0xff]
        %v2978 = vld [vmem:[#allocation2 + $0x10] sm:$0xff]
        %v2979 = vld [vmem:[#allocation2 + $0x18] sm:$0xff]
        %2984 = vrot.lane.b32.xlu0 %v2976, 126
        %v2985 = vpop.permute.xlu0 %2984
        %2986 = vrot.lane.b32.xlu0 %v2977, 126
        %v2987 = vpop.permute.xlu0 %2986
        %2988 = vrot.lane.b32.xlu0 %v2978, 126
        %v2989 = vpop.permute.xlu0 %2988
        %2990 = vrot.lane.b32.xlu0 %v2979, 126
        %v2991 = vpop.permute.xlu0 %2990
        %v2992 = vsel %vm1022, %v2985, %v2987
        %v2993 = vsel %vm1022, %v2987, %v2989
        %v2994 = vsel %vm1022, %v2989, %v2991
        %2998 = vst [vmem:[#allocation3 + $0x30] sm:$0xff] %v2992
        %2999 = vst [vmem:[#allocation3 + $0x38] sm:$0xff] %v2993
        %3000 = vst [vmem:[#allocation3 + $0x40] sm:$0xff] %v2994
        %v3001 = vld [vmem:[#allocation2] sm:$0xff]
        %v3002 = vld [vmem:[#allocation2 + $0x8] sm:$0xff]
        %v3003 = vld [vmem:[#allocation2 + $0x10] sm:$0xff]
        %v3004 = vld [vmem:[#allocation2 + $0x18] sm:$0xff]
        %3009 = vrot.lane.b32.xlu0 %v3001, 125
        %v3010 = vpop.permute.xlu0 %3009
        %3011 = vrot.lane.b32.xlu0 %v3002, 125
        %v3012 = vpop.permute.xlu0 %3011
        %3013 = vrot.lane.b32.xlu0 %v3003, 125
        %v3014 = vpop.permute.xlu0 %3013
        %3015 = vrot.lane.b32.xlu0 %v3004, 125
        %v3016 = vpop.permute.xlu0 %3015
        %v3017 = vsel %vm1034, %v3010, %v3012
        %v3018 = vsel %vm1034, %v3012, %v3014
        %v3019 = vsel %vm1034, %v3014, %v3016
        %3023 = vst [vmem:[#allocation3 + $0x48] sm:$0xff] %v3017
        %3024 = vst [vmem:[#allocation3 + $0x50] sm:$0xff] %v3018
        %3025 = vst [vmem:[#allocation3 + $0x58] sm:$0xff] %v3019
        %v3026 = vld [vmem:[#allocation2] sm:$0xff]
        %v3027 = vld [vmem:[#allocation2 + $0x8] sm:$0xff]
        %v3028 = vld [vmem:[#allocation2 + $0x10] sm:$0xff]
        %v3029 = vld [vmem:[#allocation2 + $0x18] sm:$0xff]
        %3034 = vrot.lane.b32.xlu0 %v3026, 124
        %v3035 = vpop.permute.xlu0 %3034
        %3036 = vrot.lane.b32.xlu0 %v3027, 124
        %v3037 = vpop.permute.xlu0 %3036
        %3038 = vrot.lane.b32.xlu0 %v3028, 124
        %v3039 = vpop.permute.xlu0 %3038
        %3040 = vrot.lane.b32.xlu0 %v3029, 124
        %v3041 = vpop.permute.xlu0 %3040
        %v3042 = vsel %vm1046, %v3035, %v3037
        %v3043 = vsel %vm1046, %v3037, %v3039
        %v3044 = vsel %vm1046, %v3039, %v3041
        %3048 = vst [vmem:[#allocation3 + $0x60] sm:$0xff] %v3042
        %3049 = vst [vmem:[#allocation3 + $0x68] sm:$0xff] %v3043
        %3050 = vst [vmem:[#allocation3 + $0x70] sm:$0xff] %v3044
        %v3051 = vld [vmem:[#allocation2] sm:$0xff]
        %v3052 = vld [vmem:[#allocation2 + $0x8] sm:$0xff]
        %v3053 = vld [vmem:[#allocation2 + $0x10] sm:$0xff]
        %v3054 = vld [vmem:[#allocation2 + $0x18] sm:$0xff]
        %3059 = vrot.lane.b32.xlu0 %v3051, 123
        %v3060 = vpop.permute.xlu0 %3059
        %3061 = vrot.lane.b32.xlu0 %v3052, 123
        %v3062 = vpop.permute.xlu0 %3061
        %3063 = vrot.lane.b32.xlu0 %v3053, 123
        %v3064 = vpop.permute.xlu0 %3063
        %3065 = vrot.lane.b32.xlu0 %v3054, 123
        %v3066 = vpop.permute.xlu0 %3065
        %v3067 = vsel %vm1058, %v3060, %v3062
        %v3068 = vsel %vm1058, %v3062, %v3064
        %v3069 = vsel %vm1058, %v3064, %v3066
        %3073 = vst [vmem:[#allocation3 + $0x78] sm:$0xff] %v3067
        %3074 = vst [vmem:[#allocation3 + $0x80] sm:$0xff] %v3068
        %3075 = vst [vmem:[#allocation3 + $0x88] sm:$0xff] %v3069
        %v3076 = vld [vmem:[#allocation2] sm:$0xff]
        %v3077 = vld [vmem:[#allocation2 + $0x8] sm:$0xff]
        %v3078 = vld [vmem:[#allocation2 + $0x10] sm:$0xff]
        %v3079 = vld [vmem:[#allocation2 + $0x18] sm:$0xff]
        %3084 = vrot.lane.b32.xlu0 %v3076, 122
        %v3085 = vpop.permute.xlu0 %3084
        %3086 = vrot.lane.b32.xlu0 %v3077, 122
        %v3087 = vpop.permute.xlu0 %3086
        %3088 = vrot.lane.b32.xlu0 %v3078, 122
        %v3089 = vpop.permute.xlu0 %3088
        %3090 = vrot.lane.b32.xlu0 %v3079, 122
        %v3091 = vpop.permute.xlu0 %3090
        %v3092 = vsel %vm1070, %v3085, %v3087
        %v3093 = vsel %vm1070, %v3087, %v3089
        %v3094 = vsel %vm1070, %v3089, %v3091
        %3098 = vst [vmem:[#allocation3 + $0x90] sm:$0xff] %v3092
        %3099 = vst [vmem:[#allocation3 + $0x98] sm:$0xff] %v3093
        %3100 = vst [vmem:[#allocation3 + $0xa0] sm:$0xff] %v3094
        %v3101 = vld [vmem:[#allocation2] sm:$0xff]
        %v3102 = vld [vmem:[#allocation2 + $0x8] sm:$0xff]
        %v3103 = vld [vmem:[#allocation2 + $0x10] sm:$0xff]
        %v3104 = vld [vmem:[#allocation2 + $0x18] sm:$0xff]
        %3109 = vrot.lane.b32.xlu0 %v3101, 121
        %v3110 = vpop.permute.xlu0 %3109
        %3111 = vrot.lane.b32.xlu0 %v3102, 121
        %v3112 = vpop.permute.xlu0 %3111
        %3113 = vrot.lane.b32.xlu0 %v3103, 121
        %v3114 = vpop.permute.xlu0 %3113
        %3115 = vrot.lane.b32.xlu0 %v3104, 121
        %v3116 = vpop.permute.xlu0 %3115
        %v3117 = vsel %vm1082, %v3110, %v3112
        %v3118 = vsel %vm1082, %v3112, %v3114
        %v3119 = vsel %vm1082, %v3114, %v3116
        %3123 = vst [vmem:[#allocation3 + $0xa8] sm:$0xff] %v3117
        %3124 = vst [vmem:[#allocation3 + $0xb0] sm:$0xff] %v3118
        %3125 = vst [vmem:[#allocation3 + $0xb8] sm:$0xff] %v3119
        %v3126 = vld [vmem:[#allocation2] sm:$0xff]
        %v3127 = vld [vmem:[#allocation2 + $0x8] sm:$0xff]
        %v3128 = vld [vmem:[#allocation2 + $0x10] sm:$0xff]
        %v3129 = vld [vmem:[#allocation2 + $0x18] sm:$0xff]
        %3134 = vrot.lane.b32.xlu0 %v3126, 120
        %v3135 = vpop.permute.xlu0 %3134
        %3136 = vrot.lane.b32.xlu0 %v3127, 120
        %v3137 = vpop.permute.xlu0 %3136
        %3138 = vrot.lane.b32.xlu0 %v3128, 120
        %v3139 = vpop.permute.xlu0 %3138
        %3140 = vrot.lane.b32.xlu0 %v3129, 120
        %v3141 = vpop.permute.xlu0 %3140
        %v3142 = vsel %vm1094, %v3135, %v3137
        %v3143 = vsel %vm1094, %v3137, %v3139
        %v3144 = vsel %vm1094, %v3139, %v3141
        %3148 = vst [vmem:[#allocation3 + $0xc0] sm:$0xff] %v3142
        %3149 = vst [vmem:[#allocation3 + $0xc8] sm:$0xff] %v3143
        %3150 = vst [vmem:[#allocation3 + $0xd0] sm:$0xff] %v3144
        %v3151 = vld [vmem:[#allocation2] sm:$0xff]
        %v3152 = vld [vmem:[#allocation2 + $0x8] sm:$0xff]
        %v3153 = vld [vmem:[#allocation2 + $0x10] sm:$0xff]
        %v3154 = vld [vmem:[#allocation2 + $0x18] sm:$0xff]
        %3159 = vrot.lane.b32.xlu0 %v3151, 119
        %v3160 = vpop.permute.xlu0 %3159
        %3161 = vrot.lane.b32.xlu0 %v3152, 119
        %v3162 = vpop.permute.xlu0 %3161
        %3163 = vrot.lane.b32.xlu0 %v3153, 119
        %v3164 = vpop.permute.xlu0 %3163
        %3165 = vrot.lane.b32.xlu0 %v3154, 119
        %v3166 = vpop.permute.xlu0 %3165
        %v3167 = vsel %vm2321, %v3160, %v3162
        %v3168 = vsel %vm2321, %v3162, %v3164
        %v3169 = vsel %vm2321, %v3164, %v3166
        %3173 = vst [vmem:[#allocation3 + $0xd8] sm:$0xff] %v3167
        %3174 = vst [vmem:[#allocation3 + $0xe0] sm:$0xff] %v3168
        %3175 = vst [vmem:[#allocation3 + $0xe8] sm:$0xff] %v3169
        %v3176 = vld [vmem:[#allocation2] sm:$0xff]
        %v3177 = vld [vmem:[#allocation2 + $0x8] sm:$0xff]
        %v3178 = vld [vmem:[#allocation2 + $0x10] sm:$0xff]
        %v3179 = vld [vmem:[#allocation2 + $0x18] sm:$0xff]
        %3184 = vrot.lane.b32.xlu0 %v3176, 118
        %v3185 = vpop.permute.xlu0 %3184
        %3186 = vrot.lane.b32.xlu0 %v3177, 118
        %v3187 = vpop.permute.xlu0 %3186
        %3188 = vrot.lane.b32.xlu0 %v3178, 118
        %v3189 = vpop.permute.xlu0 %3188
        %3190 = vrot.lane.b32.xlu0 %v3179, 118
        %v3191 = vpop.permute.xlu0 %3190
        %v3192 = vsel %vm2347, %v3185, %v3187
        %v3193 = vsel %vm2347, %v3187, %v3189
        %v3194 = vsel %vm2347, %v3189, %v3191
        %3198 = vst [vmem:[#allocation3 + $0xf0] sm:$0xff] %v3192
        %3199 = vst [vmem:[#allocation3 + $0xf8] sm:$0xff] %v3193
        %3200 = vst [vmem:[#allocation3 + $0x100] sm:$0xff] %v3194
        %v3201 = vld [vmem:[#allocation2] sm:$0xff]
        %v3202 = vld [vmem:[#allocation2 + $0x8] sm:$0xff]
        %v3203 = vld [vmem:[#allocation2 + $0x10] sm:$0xff]
        %v3204 = vld [vmem:[#allocation2 + $0x18] sm:$0xff]
        %3209 = vrot.lane.b32.xlu0 %v3201, 117
        %v3210 = vpop.permute.xlu0 %3209
        %3211 = vrot.lane.b32.xlu0 %v3202, 117
        %v3212 = vpop.permute.xlu0 %3211
        %3213 = vrot.lane.b32.xlu0 %v3203, 117
        %v3214 = vpop.permute.xlu0 %3213
        %3215 = vrot.lane.b32.xlu0 %v3204, 117
        %v3216 = vpop.permute.xlu0 %3215
        %v3217 = vsel %vm2373, %v3210, %v3212
        %v3218 = vsel %vm2373, %v3212, %v3214
        %v3219 = vsel %vm2373, %v3214, %v3216
        %3223 = vst [vmem:[#allocation3 + $0x108] sm:$0xff] %v3217
        %3224 = vst [vmem:[#allocation3 + $0x110] sm:$0xff] %v3218
        %3225 = vst [vmem:[#allocation3 + $0x118] sm:$0xff] %v3219
        %v3226 = vld [vmem:[#allocation2] sm:$0xff]
        %v3227 = vld [vmem:[#allocation2 + $0x8] sm:$0xff]
        %v3228 = vld [vmem:[#allocation2 + $0x10] sm:$0xff]
        %v3229 = vld [vmem:[#allocation2 + $0x18] sm:$0xff]
        %3234 = vrot.lane.b32.xlu0 %v3226, 116
        %v3235 = vpop.permute.xlu0 %3234
        %3236 = vrot.lane.b32.xlu0 %v3227, 116
        %v3237 = vpop.permute.xlu0 %3236
        %3238 = vrot.lane.b32.xlu0 %v3228, 116
        %v3239 = vpop.permute.xlu0 %3238
        %3240 = vrot.lane.b32.xlu0 %v3229, 116
        %v3241 = vpop.permute.xlu0 %3240
        %v3242 = vsel %vm2399, %v3235, %v3237
        %v3243 = vsel %vm2399, %v3237, %v3239
        %v3244 = vsel %vm2399, %v3239, %v3241
        %3248 = vst [vmem:[#allocation3 + $0x120] sm:$0xff] %v3242
        %3249 = vst [vmem:[#allocation3 + $0x128] sm:$0xff] %v3243
        %3250 = vst [vmem:[#allocation3 + $0x130] sm:$0xff] %v3244
        %v3251 = vld [vmem:[#allocation2] sm:$0xff]
        %v3252 = vld [vmem:[#allocation2 + $0x8] sm:$0xff]
        %v3253 = vld [vmem:[#allocation2 + $0x10] sm:$0xff]
        %v3254 = vld [vmem:[#allocation2 + $0x18] sm:$0xff]
        %3259 = vrot.lane.b32.xlu0 %v3251, 115
        %v3260 = vpop.permute.xlu0 %3259
        %3261 = vrot.lane.b32.xlu0 %v3252, 115
        %v3262 = vpop.permute.xlu0 %3261
        %3263 = vrot.lane.b32.xlu0 %v3253, 115
        %v3264 = vpop.permute.xlu0 %3263
        %3265 = vrot.lane.b32.xlu0 %v3254, 115
        %v3266 = vpop.permute.xlu0 %3265
        %v3267 = vsel %vm2425, %v3260, %v3262
        %v3268 = vsel %vm2425, %v3262, %v3264
        %v3269 = vsel %vm2425, %v3264, %v3266
        %3273 = vst [vmem:[#allocation3 + $0x138] sm:$0xff] %v3267
        %3274 = vst [vmem:[#allocation3 + $0x140] sm:$0xff] %v3268
        %3275 = vst [vmem:[#allocation3 + $0x148] sm:$0xff] %v3269
        %v3276 = vld [vmem:[#allocation2] sm:$0xff]
        %v3277 = vld [vmem:[#allocation2 + $0x8] sm:$0xff]
        %v3278 = vld [vmem:[#allocation2 + $0x10] sm:$0xff]
        %v3279 = vld [vmem:[#allocation2 + $0x18] sm:$0xff]
        %3284 = vrot.lane.b32.xlu0 %v3276, 114
        %v3285 = vpop.permute.xlu0 %3284
        %3286 = vrot.lane.b32.xlu0 %v3277, 114
        %v3287 = vpop.permute.xlu0 %3286
        %3288 = vrot.lane.b32.xlu0 %v3278, 114
        %v3289 = vpop.permute.xlu0 %3288
        %3290 = vrot.lane.b32.xlu0 %v3279, 114
        %v3291 = vpop.permute.xlu0 %3290
        %v3292 = vsel %vm2451, %v3285, %v3287
        %v3293 = vsel %vm2451, %v3287, %v3289
        %v3294 = vsel %vm2451, %v3289, %v3291
        %3298 = vst [vmem:[#allocation3 + $0x150] sm:$0xff] %v3292
        %3299 = vst [vmem:[#allocation3 + $0x158] sm:$0xff] %v3293
        %3300 = vst [vmem:[#allocation3 + $0x160] sm:$0xff] %v3294
        %v3301 = vld [vmem:[#allocation2] sm:$0xff]
        %v3302 = vld [vmem:[#allocation2 + $0x8] sm:$0xff]
        %v3303 = vld [vmem:[#allocation2 + $0x10] sm:$0xff]
        %v3304 = vld [vmem:[#allocation2 + $0x18] sm:$0xff]
        %3309 = vrot.lane.b32.xlu0 %v3301, 113
        %v3310 = vpop.permute.xlu0 %3309
        %3311 = vrot.lane.b32.xlu0 %v3302, 113
        %v3312 = vpop.permute.xlu0 %3311
        %3313 = vrot.lane.b32.xlu0 %v3303, 113
        %v3314 = vpop.permute.xlu0 %3313
        %3315 = vrot.lane.b32.xlu0 %v3304, 113
        %v3316 = vpop.permute.xlu0 %3315
        %v3317 = vsel %vm2477, %v3310, %v3312
        %v3318 = vsel %vm2477, %v3312, %v3314
        %v3319 = vsel %vm2477, %v3314, %v3316
        %3323 = vst [vmem:[#allocation3 + $0x168] sm:$0xff] %v3317
        %3324 = vst [vmem:[#allocation3 + $0x170] sm:$0xff] %v3318
        %3325 = vst [vmem:[#allocation3 + $0x178] sm:$0xff] %v3319
        %v3326 = vld [vmem:[#allocation2] sm:$0xff]
        %v3327 = vld [vmem:[#allocation2 + $0x8] sm:$0xff]
        %v3328 = vld [vmem:[#allocation2 + $0x10] sm:$0xff]
        %v3329 = vld [vmem:[#allocation2 + $0x18] sm:$0xff]
        %3334 = vrot.lane.b32.xlu0 %v3326, 112
        %v3335 = vpop.permute.xlu0 %3334
        %3336 = vrot.lane.b32.xlu0 %v3327, 112
        %v3337 = vpop.permute.xlu0 %3336
        %3338 = vrot.lane.b32.xlu0 %v3328, 112
        %v3339 = vpop.permute.xlu0 %3338
        %3340 = vrot.lane.b32.xlu0 %v3329, 112
        %v3341 = vpop.permute.xlu0 %3340
        %v3342 = vsel %vm2503, %v3335, %v3337
        %v3343 = vsel %vm2503, %v3337, %v3339
        %v3344 = vsel %vm2503, %v3339, %v3341
        %3348 = vst [vmem:[#allocation3 + $0x180] sm:$0xff] %v3342
        %3349 = vst [vmem:[#allocation3 + $0x188] sm:$0xff] %v3343
        %3350 = vst [vmem:[#allocation3 + $0x190] sm:$0xff] %v3344
        %v3351 = vld [vmem:[%s31] sm:$0xff]
        %v3352 = vld [vmem:[%s31 + $0x8] sm:$0xff]
        %v3353 = vld [vmem:[#allocation3] sm:$0xff]
        %v3354 = vld [vmem:[#allocation3 + $0x8] sm:$0xff]
        %v3355 = vld [vmem:[#allocation3 + $0x10] sm:$0xff]
        %v3356 = vld [vmem:[#allocation3 + $0x18] sm:$0xff]
        %v3357 = vld [vmem:[#allocation3 + $0x20] sm:$0xff]
        %v3358 = vld [vmem:[#allocation3 + $0x28] sm:$0xff]
        %v3359 = vld [vmem:[#allocation3 + $0x30] sm:$0xff]
        %v3360 = vld [vmem:[#allocation3 + $0x38] sm:$0xff]
        %v3361 = vld [vmem:[#allocation3 + $0x40] sm:$0xff]
        %v3362 = vld [vmem:[#allocation3 + $0x48] sm:$0xff]
        %v3363 = vld [vmem:[#allocation3 + $0x50] sm:$0xff]
        %v3364 = vld [vmem:[#allocation3 + $0x58] sm:$0xff]
        %v3365 = vld [vmem:[#allocation3 + $0x60] sm:$0xff]
        %v3366 = vld [vmem:[#allocation3 + $0x68] sm:$0xff]
        %v3367 = vld [vmem:[#allocation3 + $0x70] sm:$0xff]
        %v3368 = vld [vmem:[#allocation3 + $0x78] sm:$0xff]
        %v3369 = vld [vmem:[#allocation3 + $0x80] sm:$0xff]
        %v3370 = vld [vmem:[#allocation3 + $0x88] sm:$0xff]
        %v3371 = vld [vmem:[#allocation3 + $0x90] sm:$0xff]
        %v3372 = vld [vmem:[#allocation3 + $0x98] sm:$0xff]
        %v3373 = vld [vmem:[#allocation3 + $0xa0] sm:$0xff]
        %v3374 = vld [vmem:[#allocation3 + $0xa8] sm:$0xff]
        %v3375 = vld [vmem:[#allocation3 + $0xb0] sm:$0xff]
        %v3376 = vld [vmem:[#allocation3 + $0xb8] sm:$0xff]
        %v3377 = vld [vmem:[#allocation3 + $0xc0] sm:$0xff]
        %v3378 = vld [vmem:[#allocation3 + $0xc8] sm:$0xff]
        %v3379 = vld [vmem:[#allocation3 + $0xd0] sm:$0xff]
        %v3380 = vld [vmem:[#allocation3 + $0xd8] sm:$0xff]
        %v3381 = vld [vmem:[#allocation3 + $0xe0] sm:$0xff]
        %v3382 = vld [vmem:[#allocation3 + $0xe8] sm:$0xff]
        %v3383 = vld [vmem:[#allocation3 + $0xf0] sm:$0xff]
        %v3384 = vld [vmem:[#allocation3 + $0xf8] sm:$0xff]
        %v3385 = vld [vmem:[#allocation3 + $0x100] sm:$0xff]
        %v3386 = vld [vmem:[#allocation3 + $0x108] sm:$0xff]
        %v3387 = vld [vmem:[#allocation3 + $0x110] sm:$0xff]
        %v3388 = vld [vmem:[#allocation3 + $0x118] sm:$0xff]
        %v3389 = vld [vmem:[#allocation3 + $0x120] sm:$0xff]
        %v3390 = vld [vmem:[#allocation3 + $0x128] sm:$0xff]
        %v3391 = vld [vmem:[#allocation3 + $0x130] sm:$0xff]
        %v3392 = vld [vmem:[#allocation3 + $0x138] sm:$0xff]
        %v3393 = vld [vmem:[#allocation3 + $0x140] sm:$0xff]
        %v3394 = vld [vmem:[#allocation3 + $0x148] sm:$0xff]
        %v3395 = vld [vmem:[#allocation3 + $0x150] sm:$0xff]
        %v3396 = vld [vmem:[#allocation3 + $0x158] sm:$0xff]
        %v3397 = vld [vmem:[#allocation3 + $0x160] sm:$0xff]
        %v3398 = vld [vmem:[#allocation3 + $0x168] sm:$0xff]
        %v3399 = vld [vmem:[#allocation3 + $0x170] sm:$0xff]
        %v3400 = vld [vmem:[#allocation3 + $0x178] sm:$0xff]
        %v3401 = vld [vmem:[#allocation3 + $0x180] sm:$0xff]
        %v3402 = vld [vmem:[#allocation3 + $0x188] sm:$0xff]
        %v3403 = vld [vmem:[#allocation3 + $0x190] sm:$0xff]
        %v3404 = vld [vmem:[%s33] sm:$0xff]
        %3406 = vset.pattern.permute.xlu0 0
        %3407 = vperm.xlu0 %3406, %v3404
        %v3408 = vpop.permute.xlu0 %3407
        %v3411 = vsel %vm912, %v3352, 0
        %3413 = vmatprep.subr.mxu0 %v3354
        %3414 = vmatpush1.msra.mxu0 %v3353
        %3415 = vmatprep.subr.mxu0 %v3357
        %3416 = vmatpush1.msra.mxu0 %v3356
        %3417 = vmatprep.subr.mxu0 %v3360
        %3418 = vmatpush1.msra.mxu0 %v3359
        %3419 = vmatprep.subr.mxu0 %v3363
        %3420 = vmatpush1.msra.mxu0 %v3362
        %3421 = vmatprep.subr.mxu0 %v3366
        %3422 = vmatpush1.msra.mxu0 %v3365
        %3423 = vmatprep.subr.mxu0 %v3369
        %3424 = vmatpush1.msra.mxu0 %v3368
        %3425 = vmatprep.subr.mxu0 %v3372
        %3426 = vmatpush1.msra.mxu0 %v3371
        %3427 = vmatprep.subr.mxu0 %v3375
        %3428 = vmatpush1.msra.mxu0 %v3374
        %3429 = vmatprep.subr.mxu0 %v3378
        %3430 = vmatpush1.msra.mxu0 %v3377
        %3431 = vmatprep.subr.mxu0 %v3381
        %3432 = vmatpush1.msra.mxu0 %v3380
        %3433 = vmatprep.subr.mxu0 %v3384
        %3434 = vmatpush1.msra.mxu0 %v3383
        %3435 = vmatprep.subr.mxu0 %v3387
        %3436 = vmatpush1.msra.mxu0 %v3386
        %3437 = vmatprep.subr.mxu0 %v3390
        %3438 = vmatpush1.msra.mxu0 %v3389
        %3439 = vmatprep.subr.mxu0 %v3393
        %3440 = vmatpush1.msra.mxu0 %v3392
        %3441 = vmatprep.subr.mxu0 %v3396
        %3442 = vmatpush1.msra.mxu0 %v3395
        %3443 = vmatprep.subr.mxu0 %v3399
        %3444 = vmatpush1.msra.mxu0 %v3398
        %3445 = vmatprep.subr.mxu0 %v3402
        %3446 = vmatpush1.msra.mxu0 %v3401
        %3447 = vmatprep.subr.mxu0 0.0
        %3448 = vmatpush1.msra.mxu0 0.0
        %3449 = vmatprep.subr.mxu0 0.0
        %3450 = vmatpush1.msra.mxu0 0.0
        %3451 = vmatprep.subr.mxu0 0.0
        %3452 = vmatpush1.msra.mxu0 0.0
        %3453 = vmatprep.subr.mxu0 0.0
        %3454 = vmatpush1.msra.mxu0 0.0
        %3455 = vmatprep.subr.mxu0 0.0
        %3456 = vmatpush1.msra.mxu0 0.0
        %3457 = vmatprep.subr.mxu0 0.0
        %3458 = vmatpush1.msra.mxu0 0.0
        %3459 = vmatprep.subr.mxu0 0.0
        %3460 = vmatpush1.msra.mxu0 0.0
        %3461 = vmatprep.subr.mxu0 0.0
        %3462 = vmatpush1.msra.mxu0 0.0
        %3463 = vmatprep.subr.mxu0 0.0
        %3464 = vmatpush1.msra.mxu0 0.0
        %3465 = vmatprep.subr.mxu0 0.0
        %3466 = vmatpush1.msra.mxu0 0.0
        %3467 = vmatprep.subr.mxu0 0.0
        %3468 = vmatpush1.msra.mxu0 0.0
        %3469 = vmatprep.subr.mxu0 0.0
        %3470 = vmatpush1.msra.mxu0 0.0
        %3471 = vmatprep.subr.mxu0 0.0
        %3472 = vmatpush1.msra.mxu0 0.0
        %3473 = vmatprep.subr.mxu0 0.0
        %3474 = vmatpush1.msra.mxu0 0.0
        %3475 = vmatprep.subr.mxu0 0.0
        %3476 = vmatpush1.msra.mxu0 0.0
        %3477 = vmatprep.mubr.f32.mxu0 %v3411
        %3478 = vmatmul.mubr.f32.gmra.mrb[0].mxu0 %v3351
        %v3479 = vpop.f32.mrb[0].mxu0
        %v3480 = vadd.f32 %v3408, %v3479
        %v3481 = vpop.f32.mrb[0].mxu0
        %v3482 = vadd.f32 %v3408, %v3481
        %3483 = vdwg.mxu0
        %3484 = vmatprep.subr.mxu0 0.0
        %3485 = vmatpush1.msra.mxu0 %v3355
        %3486 = vmatprep.subr.mxu0 0.0
        %3487 = vmatpush1.msra.mxu0 %v3358
        %3488 = vmatprep.subr.mxu0 0.0
        %3489 = vmatpush1.msra.mxu0 %v3361
        %3490 = vmatprep.subr.mxu0 0.0
        %3491 = vmatpush1.msra.mxu0 %v3364
        %3492 = vmatprep.subr.mxu0 0.0
        %3493 = vmatpush1.msra.mxu0 %v3367
        %3494 = vmatprep.subr.mxu0 0.0
        %3495 = vmatpush1.msra.mxu0 %v3370
        %3496 = vmatprep.subr.mxu0 0.0
        %3497 = vmatpush1.msra.mxu0 %v3373
        %3498 = vmatprep.subr.mxu0 0.0
        %3499 = vmatpush1.msra.mxu0 %v3376
        %3500 = vmatprep.subr.mxu0 0.0
        %3501 = vmatpush1.msra.mxu0 %v3379
        %3502 = vmatprep.subr.mxu0 0.0
        %3503 = vmatpush1.msra.mxu0 %v3382
        %3504 = vmatprep.subr.mxu0 0.0
        %3505 = vmatpush1.msra.mxu0 %v3385
        %3506 = vmatprep.subr.mxu0 0.0
        %3507 = vmatpush1.msra.mxu0 %v3388
        %3508 = vmatprep.subr.mxu0 0.0
        %3509 = vmatpush1.msra.mxu0 %v3391
        %3510 = vmatprep.subr.mxu0 0.0
        %3511 = vmatpush1.msra.mxu0 %v3394
        %3512 = vmatprep.subr.mxu0 0.0
        %3513 = vmatpush1.msra.mxu0 %v3397
        %3514 = vmatprep.subr.mxu0 0.0
        %3515 = vmatpush1.msra.mxu0 %v3400
        %3516 = vmatprep.subr.mxu0 0.0
        %3517 = vmatpush1.msra.mxu0 %v3403
        %3518 = vmatprep.subr.mxu0 0.0
        %3519 = vmatpush1.msra.mxu0 0.0
        %3520 = vmatprep.subr.mxu0 0.0
        %3521 = vmatpush1.msra.mxu0 0.0
        %3522 = vmatprep.subr.mxu0 0.0
        %3523 = vmatpush1.msra.mxu0 0.0
        %3524 = vmatprep.subr.mxu0 0.0
        %3525 = vmatpush1.msra.mxu0 0.0
        %3526 = vmatprep.subr.mxu0 0.0
        %3527 = vmatpush1.msra.mxu0 0.0
        %3528 = vmatprep.subr.mxu0 0.0
        %3529 = vmatpush1.msra.mxu0 0.0
        %3530 = vmatprep.subr.mxu0 0.0
        %3531 = vmatpush1.msra.mxu0 0.0
        %3532 = vmatprep.subr.mxu0 0.0
        %3533 = vmatpush1.msra.mxu0 0.0
        %3534 = vmatprep.subr.mxu0 0.0
        %3535 = vmatpush1.msra.mxu0 0.0
        %3536 = vmatprep.subr.mxu0 0.0
        %3537 = vmatpush1.msra.mxu0 0.0
        %3538 = vmatprep.subr.mxu0 0.0
        %3539 = vmatpush1.msra.mxu0 0.0
        %3540 = vmatprep.subr.mxu0 0.0
        %3541 = vmatpush1.msra.mxu0 0.0
        %3542 = vmatprep.subr.mxu0 0.0
        %3543 = vmatpush1.msra.mxu0 0.0
        %3544 = vmatprep.subr.mxu0 0.0
        %3545 = vmatpush1.msra.mxu0 0.0
        %3546 = vmatprep.subr.mxu0 0.0
        %3547 = vmatpush1.msra.mxu0 0.0
        %3548 = vmatprep.mubr.f32.mxu0 %v3411
        %3549 = vmatmul.mubr.f32.gmra.mrb[0].mxu0 %v3351
        %v3550 = vpop.f32.mrb[0].mxu0
        %v3551 = vadd.f32 %v3408, %v3550
        %v3552 = vpop.f32.mrb[0].mxu0
        %3553 = vdwg.mxu0
        %v3554 = vld [vmem:[%s37] sm:$0xff]
        %v3555 = vld [vmem:[%s37 + $0x8] sm:$0xff]
        %v3556 = vld [vmem:[%s37 + $0x10] sm:$0xff]
        %v3557 = vld [vmem:[%s37 + $0x18] sm:$0xff]
        %v3558 = vld [vmem:[%s37 + $0x20] sm:$0xff]
        %v3559 = vld [vmem:[%s37 + $0x28] sm:$0xff]
        %v3560 = vld [vmem:[%s37 + $0x30] sm:$0xff]
        %v3561 = vld [vmem:[%s37 + $0x38] sm:$0xff]
        %v3562 = vld [vmem:[%s37 + $0x40] sm:$0xff]
        %v3563 = vld [vmem:[%s37 + $0x48] sm:$0xff]
        %v3564 = vld [vmem:[%s37 + $0x50] sm:$0xff]
        %v3565 = vld [vmem:[%s37 + $0x58] sm:$0xff]
        %v3566 = vld [vmem:[%s37 + $0x60] sm:$0xff]
        %v3567 = vld [vmem:[%s37 + $0x68] sm:$0xff]
        %v3568 = vld [vmem:[%s37 + $0x70] sm:$0xff]
        %v3569 = vld [vmem:[%s37 + $0x78] sm:$0xff]
        %v3570 = vld [vmem:[%s37 + $0x80] sm:$0xff]
        %v3571 = vld [vmem:[%s37 + $0x88] sm:$0xff]
        %v3572 = vld [vmem:[%s37 + $0x90] sm:$0xff]
        %v3573 = vld [vmem:[%s37 + $0x98] sm:$0xff]
        %v3574 = vld [vmem:[%s37 + $0xa0] sm:$0xff]
        %v3575 = vld [vmem:[%s37 + $0xa8] sm:$0xff]
        %v3576 = vld [vmem:[%s37 + $0xb0] sm:$0xff]
        %v3577 = vld [vmem:[%s37 + $0xb8] sm:$0xff]
        %v3578 = vld [vmem:[%s37 + $0xc0] sm:$0xff]
        %v3579 = vld [vmem:[%s37 + $0xc8] sm:$0xff]
        %v3580 = vld [vmem:[%s37 + $0xd0] sm:$0xff]
        %v3581 = vld [vmem:[%s37 + $0xd8] sm:$0xff]
        %v3582 = vld [vmem:[%s37 + $0xe0] sm:$0xff]
        %v3583 = vld [vmem:[%s37 + $0xe8] sm:$0xff]
        %v3584 = vld [vmem:[%s37 + $0xf0] sm:$0xff]
        %v3585 = vld [vmem:[%s37 + $0xf8] sm:$0xff]
        %v3586 = vld [vmem:[%s37 + $0x100] sm:$0xff]
        %v3587 = vld [vmem:[%s37 + $0x108] sm:$0xff]
        %v3588 = vld [vmem:[%s37 + $0x110] sm:$0xff]
        %v3589 = vld [vmem:[%s37 + $0x118] sm:$0xff]
        %v3590 = vld [vmem:[%s37 + $0x120] sm:$0xff]
        %v3591 = vld [vmem:[%s37 + $0x128] sm:$0xff]
        %v3592 = vld [vmem:[%s37 + $0x130] sm:$0xff]
        %v3593 = vld [vmem:[%s37 + $0x138] sm:$0xff]
        %v3594 = vld [vmem:[%s37 + $0x140] sm:$0xff]
        %v3595 = vld [vmem:[%s37 + $0x148] sm:$0xff]
        %v3596 = vld [vmem:[%s37 + $0x150] sm:$0xff]
        %v3597 = vld [vmem:[%s37 + $0x158] sm:$0xff]
        %v3598 = vld [vmem:[%s37 + $0x160] sm:$0xff]
        %v3599 = vld [vmem:[%s37 + $0x168] sm:$0xff]
        %v3600 = vld [vmem:[%s37 + $0x170] sm:$0xff]
        %v3601 = vld [vmem:[%s37 + $0x178] sm:$0xff]
        %3602 = vmatprep.subr.mxu0 0.0
        %3603 = vmatpush1.msra.mxu0 %v3554
        %3604 = vmatprep.subr.mxu0 0.0
        %3605 = vmatpush1.msra.mxu0 %v3555
        %3606 = vmatprep.subr.mxu0 0.0
        %3607 = vmatpush1.msra.mxu0 %v3556
        %3608 = vmatprep.subr.mxu0 0.0
        %3609 = vmatpush1.msra.mxu0 %v3557
        %3610 = vmatprep.subr.mxu0 0.0
        %3611 = vmatpush1.msra.mxu0 %v3558
        %3612 = vmatprep.subr.mxu0 0.0
        %3613 = vmatpush1.msra.mxu0 %v3559
        %3614 = vmatprep.subr.mxu0 0.0
        %3615 = vmatpush1.msra.mxu0 %v3560
        %3616 = vmatprep.subr.mxu0 0.0
        %3617 = vmatpush1.msra.mxu0 %v3561
        %3618 = vmatprep.subr.mxu0 0.0
        %3619 = vmatpush1.msra.mxu0 %v3562
        %3620 = vmatprep.subr.mxu0 0.0
        %3621 = vmatpush1.msra.mxu0 %v3563
        %3622 = vmatprep.subr.mxu0 0.0
        %3623 = vmatpush1.msra.mxu0 %v3564
        %3624 = vmatprep.subr.mxu0 0.0
        %3625 = vmatpush1.msra.mxu0 %v3565
        %3626 = vmatprep.subr.mxu0 0.0
        %3627 = vmatpush1.msra.mxu0 %v3566
        %3628 = vmatprep.subr.mxu0 0.0
        %3629 = vmatpush1.msra.mxu0 %v3567
        %3630 = vmatprep.subr.mxu0 0.0
        %3631 = vmatpush1.msra.mxu0 %v3568
        %3632 = vmatprep.subr.mxu0 0.0
        %3633 = vmatpush1.msra.mxu0 %v3569
        %3634 = vmatprep.subr.mxu0 0.0
        %3635 = vmatpush1.msra.mxu0 %v3570
        %3636 = vmatprep.subr.mxu0 0.0
        %3637 = vmatpush1.msra.mxu0 %v3571
        %3638 = vmatprep.subr.mxu0 0.0
        %3639 = vmatpush1.msra.mxu0 %v3572
        %3640 = vmatprep.subr.mxu0 0.0
        %3641 = vmatpush1.msra.mxu0 %v3573
        %3642 = vmatprep.subr.mxu0 0.0
        %3643 = vmatpush1.msra.mxu0 %v3574
        %3644 = vmatprep.subr.mxu0 0.0
        %3645 = vmatpush1.msra.mxu0 %v3575
        %3646 = vmatprep.subr.mxu0 0.0
        %3647 = vmatpush1.msra.mxu0 %v3576
        %3648 = vmatprep.subr.mxu0 0.0
        %3649 = vmatpush1.msra.mxu0 %v3577
        %3650 = vmatprep.subr.mxu0 0.0
        %3651 = vmatpush1.msra.mxu0 %v3578
        %3652 = vmatprep.subr.mxu0 0.0
        %3653 = vmatpush1.msra.mxu0 %v3579
        %3654 = vmatprep.subr.mxu0 0.0
        %3655 = vmatpush1.msra.mxu0 %v3580
        %3656 = vmatprep.subr.mxu0 0.0
        %3657 = vmatpush1.msra.mxu0 %v3581
        %3658 = vmatprep.subr.mxu0 0.0
        %3659 = vmatpush1.msra.mxu0 %v3582
        %3660 = vmatprep.subr.mxu0 0.0
        %3661 = vmatpush1.msra.mxu0 %v3583
        %3662 = vmatprep.subr.mxu0 0.0
        %3663 = vmatpush1.msra.mxu0 %v3584
        %3664 = vmatprep.subr.mxu0 0.0
        %3665 = vmatpush1.msra.mxu0 %v3585
        %3666 = vmatprep.mubr.f32.mxu0 %v3482
        %3667 = vmatmul.mubr.f32.gmra.mrb[0].mxu0 %v3480
        %v3668 = vpop.f32.mrb[0].mxu0
        %v3669 = vadd.f32 0.0, %v3668
        %v3670 = vpop.f32.mrb[0].mxu0
        %3671 = vdwg.mxu0
        %3672 = vmatprep.subr.mxu0 0.0
        %3673 = vmatpush1.msra.mxu0 %v3586
        %3674 = vmatprep.subr.mxu0 0.0
        %3675 = vmatpush1.msra.mxu0 %v3587
        %3676 = vmatprep.subr.mxu0 0.0
        %3677 = vmatpush1.msra.mxu0 %v3588
        %3678 = vmatprep.subr.mxu0 0.0
        %3679 = vmatpush1.msra.mxu0 %v3589
        %3680 = vmatprep.subr.mxu0 0.0
        %3681 = vmatpush1.msra.mxu0 %v3590
        %3682 = vmatprep.subr.mxu0 0.0
        %3683 = vmatpush1.msra.mxu0 %v3591
        %3684 = vmatprep.subr.mxu0 0.0
        %3685 = vmatpush1.msra.mxu0 %v3592
        %3686 = vmatprep.subr.mxu0 0.0
        %3687 = vmatpush1.msra.mxu0 %v3593
        %3688 = vmatprep.subr.mxu0 0.0
        %3689 = vmatpush1.msra.mxu0 %v3594
        %3690 = vmatprep.subr.mxu0 0.0
        %3691 = vmatpush1.msra.mxu0 %v3595
        %3692 = vmatprep.subr.mxu0 0.0
        %3693 = vmatpush1.msra.mxu0 %v3596
        %3694 = vmatprep.subr.mxu0 0.0
        %3695 = vmatpush1.msra.mxu0 %v3597
        %3696 = vmatprep.subr.mxu0 0.0
        %3697 = vmatpush1.msra.mxu0 %v3598
        %3698 = vmatprep.subr.mxu0 0.0
        %3699 = vmatpush1.msra.mxu0 %v3599
        %3700 = vmatprep.subr.mxu0 0.0
        %3701 = vmatpush1.msra.mxu0 %v3600
        %3702 = vmatprep.subr.mxu0 0.0
        %3703 = vmatpush1.msra.mxu0 %v3601
        %3704 = vmatprep.subr.mxu0 0.0
        %3705 = vmatpush1.msra.mxu0 0.0
        %3706 = vmatprep.subr.mxu0 0.0
        %3707 = vmatpush1.msra.mxu0 0.0
        %3708 = vmatprep.subr.mxu0 0.0
        %3709 = vmatpush1.msra.mxu0 0.0
        %3710 = vmatprep.subr.mxu0 0.0
        %3711 = vmatpush1.msra.mxu0 0.0
        %3712 = vmatprep.subr.mxu0 0.0
        %3713 = vmatpush1.msra.mxu0 0.0
        %3714 = vmatprep.subr.mxu0 0.0
        %3715 = vmatpush1.msra.mxu0 0.0
        %3716 = vmatprep.subr.mxu0 0.0
        %3717 = vmatpush1.msra.mxu0 0.0
        %3718 = vmatprep.subr.mxu0 0.0
        %3719 = vmatpush1.msra.mxu0 0.0
        %3720 = vmatprep.subr.mxu0 0.0
        %3721 = vmatpush1.msra.mxu0 0.0
        %3722 = vmatprep.subr.mxu0 0.0
        %3723 = vmatpush1.msra.mxu0 0.0
        %3724 = vmatprep.subr.mxu0 0.0
        %3725 = vmatpush1.msra.mxu0 0.0
        %3726 = vmatprep.subr.mxu0 0.0
        %3727 = vmatpush1.msra.mxu0 0.0
        %3728 = vmatprep.subr.mxu0 0.0
        %3729 = vmatpush1.msra.mxu0 0.0
        %3730 = vmatprep.subr.mxu0 0.0
        %3731 = vmatpush1.msra.mxu0 0.0
        %3732 = vmatprep.subr.mxu0 0.0
        %3733 = vmatpush1.msra.mxu0 0.0
        %3734 = vmatprep.subr.mxu0 0.0
        %3735 = vmatpush1.msra.mxu0 0.0
        %3736 = vmatprep.mubr.f32.mxu0 0.0
        %3737 = vmatmul.mubr.f32.gmra.mrb[0].mxu0 %v3551
        %v3738 = vpop.f32.mrb[0].mxu0
        %v3739 = vadd.f32 %v3669, %v3738
        %v3740 = vpop.f32.mrb[0].mxu0
        %3741 = vdwg.mxu0
        %v3742 = vld [vmem:[%s39] sm:$0xff]
        %v3743 = vld [vmem:[%s39 + $0x8] sm:$0xff]
        %v3744 = vld [vmem:[%s39 + $0x10] sm:$0xff]
        %v3745 = vld [vmem:[%s39 + $0x18] sm:$0xff]
        %v3746 = vld [vmem:[%s39 + $0x20] sm:$0xff]
        %v3747 = vld [vmem:[%s39 + $0x28] sm:$0xff]
        %v3748 = vld [vmem:[%s39 + $0x30] sm:$0xff]
        %v3749 = vld [vmem:[%s39 + $0x38] sm:$0xff]
        %v3750 = vld [vmem:[%s39 + $0x40] sm:$0xff]
        %v3751 = vld [vmem:[%s39 + $0x48] sm:$0xff]
        %v3752 = vld [vmem:[%s39 + $0x50] sm:$0xff]
        %v3753 = vld [vmem:[%s39 + $0x58] sm:$0xff]
        %v3754 = vld [vmem:[%s39 + $0x60] sm:$0xff]
        %v3755 = vld [vmem:[%s39 + $0x68] sm:$0xff]
        %v3756 = vld [vmem:[%s39 + $0x70] sm:$0xff]
        %v3757 = vld [vmem:[%s39 + $0x78] sm:$0xff]
        %3758 = vmatprep.subr.mxu0 0.0
        %3759 = vmatpush1.msra.mxu0 %v3742
        %3760 = vmatprep.subr.mxu0 0.0
        %3761 = vmatpush1.msra.mxu0 %v3743
        %3762 = vmatprep.subr.mxu0 0.0
        %3763 = vmatpush1.msra.mxu0 %v3744
        %3764 = vmatprep.subr.mxu0 0.0
        %3765 = vmatpush1.msra.mxu0 %v3745
        %3766 = vmatprep.subr.mxu0 0.0
        %3767 = vmatpush1.msra.mxu0 %v3746
        %3768 = vmatprep.subr.mxu0 0.0
        %3769 = vmatpush1.msra.mxu0 %v3747
        %3770 = vmatprep.subr.mxu0 0.0
        %3771 = vmatpush1.msra.mxu0 %v3748
        %3772 = vmatprep.subr.mxu0 0.0
        %3773 = vmatpush1.msra.mxu0 %v3749
        %3774 = vmatprep.subr.mxu0 0.0
        %3775 = vmatpush1.msra.mxu0 %v3750
        %3776 = vmatprep.subr.mxu0 0.0
        %3777 = vmatpush1.msra.mxu0 %v3751
        %3778 = vmatprep.subr.mxu0 0.0
        %3779 = vmatpush1.msra.mxu0 %v3752
        %3780 = vmatprep.subr.mxu0 0.0
        %3781 = vmatpush1.msra.mxu0 %v3753
        %3782 = vmatprep.subr.mxu0 0.0
        %3783 = vmatpush1.msra.mxu0 %v3754
        %3784 = vmatprep.subr.mxu0 0.0
        %3785 = vmatpush1.msra.mxu0 %v3755
        %3786 = vmatprep.subr.mxu0 0.0
        %3787 = vmatpush1.msra.mxu0 %v3756
        %3788 = vmatprep.subr.mxu0 0.0
        %3789 = vmatpush1.msra.mxu0 %v3757
        %3790 = vmatprep.subr.mxu0 0.0
        %3791 = vmatpush1.msra.mxu0 0.0
        %3792 = vmatprep.subr.mxu0 0.0
        %3793 = vmatpush1.msra.mxu0 0.0
        %3794 = vmatprep.subr.mxu0 0.0
        %3795 = vmatpush1.msra.mxu0 0.0
        %3796 = vmatprep.subr.mxu0 0.0
        %3797 = vmatpush1.msra.mxu0 0.0
        %3798 = vmatprep.subr.mxu0 0.0
        %3799 = vmatpush1.msra.mxu0 0.0
        %3800 = vmatprep.subr.mxu0 0.0
        %3801 = vmatpush1.msra.mxu0 0.0
        %3802 = vmatprep.subr.mxu0 0.0
        %3803 = vmatpush1.msra.mxu0 0.0
        %3804 = vmatprep.subr.mxu0 0.0
        %3805 = vmatpush1.msra.mxu0 0.0
        %3806 = vmatprep.subr.mxu0 0.0
        %3807 = vmatpush1.msra.mxu0 0.0
        %3808 = vmatprep.subr.mxu0 0.0
        %3809 = vmatpush1.msra.mxu0 0.0
        %3810 = vmatprep.subr.mxu0 0.0
        %3811 = vmatpush1.msra.mxu0 0.0
        %3812 = vmatprep.subr.mxu0 0.0
        %3813 = vmatpush1.msra.mxu0 0.0
        %3814 = vmatprep.subr.mxu0 0.0
        %3815 = vmatpush1.msra.mxu0 0.0
        %3816 = vmatprep.subr.mxu0 0.0
        %3817 = vmatpush1.msra.mxu0 0.0
        %3818 = vmatprep.subr.mxu0 0.0
        %3819 = vmatpush1.msra.mxu0 0.0
        %3820 = vmatprep.subr.mxu0 0.0
        %3821 = vmatpush1.msra.mxu0 0.0
        %3822 = vmatprep.mubr.f32.mxu0 0.0
        %3823 = vmatmul.mubr.f32.gmra.mrb[0].mxu0 %v3739
        %v3824 = vpop.f32.mrb[0].mxu0
        %v3825 = vadd.f32 0.0, %v3824
        %v3826 = vpop.f32.mrb[0].mxu0
        %3827 = vdwg.mxu0
        %v3828 = vld [vmem:[%s43] sm:$0xff]
        %v3829 = vld [vmem:[%s43 + $0x8] sm:$0xff]
        %v3830 = vld [vmem:[%s43 + $0x10] sm:$0xff]
        %v3831 = vld [vmem:[%s43 + $0x18] sm:$0xff]
        %v3833 = vsel %vm912, %v3828, 0
        %v3836 = vsel %vm912, %v3829, 0
        %v3839 = vsel %vm912, %v3830, 0
        %v3842 = vsel %vm912, %v3831, 0
        %3844 = vmatprep.subr.mxu0 0.0
        %3845 = vmatpush1.msra.mxu0 %v3825
        %3846 = vmatprep.subr.mxu0 0.0
        %3847 = vmatpush1.msra.mxu0 0.0
        %3848 = vmatprep.subr.mxu0 0.0
        %3849 = vmatpush1.msra.mxu0 0.0
        %3850 = vmatprep.subr.mxu0 0.0
        %3851 = vmatpush1.msra.mxu0 0.0
        %3852 = vmatprep.subr.mxu0 0.0
        %3853 = vmatpush1.msra.mxu0 0.0
        %3854 = vmatprep.subr.mxu0 0.0
        %3855 = vmatpush1.msra.mxu0 0.0
        %3856 = vmatprep.subr.mxu0 0.0
        %3857 = vmatpush1.msra.mxu0 0.0
        %3858 = vmatprep.subr.mxu0 0.0
        %3859 = vmatpush1.msra.mxu0 0.0
        %3860 = vmatprep.subr.mxu0 0.0
        %3861 = vmatpush1.msra.mxu0 0.0
        %3862 = vmatprep.subr.mxu0 0.0
        %3863 = vmatpush1.msra.mxu0 0.0
        %3864 = vmatprep.subr.mxu0 0.0
        %3865 = vmatpush1.msra.mxu0 0.0
        %3866 = vmatprep.subr.mxu0 0.0
        %3867 = vmatpush1.msra.mxu0 0.0
        %3868 = vmatprep.subr.mxu0 0.0
        %3869 = vmatpush1.msra.mxu0 0.0
        %3870 = vmatprep.subr.mxu0 0.0
        %3871 = vmatpush1.msra.mxu0 0.0
        %3872 = vmatprep.subr.mxu0 0.0
        %3873 = vmatpush1.msra.mxu0 0.0
        %3874 = vmatprep.subr.mxu0 0.0
        %3875 = vmatpush1.msra.mxu0 0.0
        %3876 = vmatprep.subr.mxu0 0.0
        %3877 = vmatpush1.msra.mxu0 0.0
        %3878 = vmatprep.subr.mxu0 0.0
        %3879 = vmatpush1.msra.mxu0 0.0
        %3880 = vmatprep.subr.mxu0 0.0
        %3881 = vmatpush1.msra.mxu0 0.0
        %3882 = vmatprep.subr.mxu0 0.0
        %3883 = vmatpush1.msra.mxu0 0.0
        %3884 = vmatprep.subr.mxu0 0.0
        %3885 = vmatpush1.msra.mxu0 0.0
        %3886 = vmatprep.subr.mxu0 0.0
        %3887 = vmatpush1.msra.mxu0 0.0
        %3888 = vmatprep.subr.mxu0 0.0
        %3889 = vmatpush1.msra.mxu0 0.0
        %3890 = vmatprep.subr.mxu0 0.0
        %3891 = vmatpush1.msra.mxu0 0.0
        %3892 = vmatprep.subr.mxu0 0.0
        %3893 = vmatpush1.msra.mxu0 0.0
        %3894 = vmatprep.subr.mxu0 0.0
        %3895 = vmatpush1.msra.mxu0 0.0
        %3896 = vmatprep.subr.mxu0 0.0
        %3897 = vmatpush1.msra.mxu0 0.0
        %3898 = vmatprep.subr.mxu0 0.0
        %3899 = vmatpush1.msra.mxu0 0.0
        %3900 = vmatprep.subr.mxu0 0.0
        %3901 = vmatpush1.msra.mxu0 0.0
        %3902 = vmatprep.subr.mxu0 0.0
        %3903 = vmatpush1.msra.mxu0 0.0
        %3904 = vmatprep.subr.mxu0 0.0
        %3905 = vmatpush1.msra.mxu0 0.0
        %3906 = vmatprep.subr.mxu0 0.0
        %3907 = vmatpush1.msra.mxu0 0.0
        %3908 = vmatprep.mubr.f32.mxu0 0.0
        %3909 = vmatmul.mubr.f32.gmra.mrb[0].mxu0 %v3833
        %v3910 = vpop.f32.mrb[0].mxu0
        %v3911 = vadd.f32 0.0, %v3910
        %v3912 = vpop.f32.mrb[0].mxu0
        %3913 = vmatprep.mubr.f32.mxu0 0.0
        %3914 = vmatmul.mubr.f32.gmra.mrb[0].mxu0 %v3836
        %v3915 = vpop.f32.mrb[0].mxu0
        %v3916 = vadd.f32 0.0, %v3915
        %v3917 = vpop.f32.mrb[0].mxu0
        %3918 = vmatprep.mubr.f32.mxu0 0.0
        %3919 = vmatmul.mubr.f32.gmra.mrb[0].mxu0 %v3839
        %v3920 = vpop.f32.mrb[0].mxu0
        %v3921 = vadd.f32 0.0, %v3920
        %v3922 = vpop.f32.mrb[0].mxu0
        %3923 = vmatprep.mubr.f32.mxu0 0.0
        %3924 = vmatmul.mubr.f32.gmra.mrb[0].mxu0 %v3842
        %v3925 = vpop.f32.mrb[0].mxu0
        %v3926 = vadd.f32 0.0, %v3925
        %v3927 = vpop.f32.mrb[0].mxu0
        %3928 = vdwg.mxu0
        %v3929 = vld [vmem:[%s41] sm:$0xff]
        %v3930 = vld [vmem:[%s41 + $0x8] sm:$0xff]
        %v3931 = vld [vmem:[%s41 + $0x10] sm:$0xff]
        %v3932 = vld [vmem:[%s41 + $0x18] sm:$0xff]
        %v3933 = vmul.f32 %v3911, %v3929
        %v3934 = vmul.f32 %v3916, %v3930
        %v3935 = vmul.f32 %v3921, %v3931
        %v3936 = vmul.f32 %v3926, %v3932
        %v3937 = vmul.f32 %v3933, 0.35355338
        %v3938 = vmul.f32 %v3934, 0.35355338
        %v3939 = vmul.f32 %v3935, 0.35355338
        %v3940 = vmul.f32 %v3936, 0.35355338
        %3942 = vrot.lane.b32.xlu0 %v3825, 96
        %v3943 = vpop.permute.xlu0 %3942
        %vm3944 = vcmask 261120
        %v3946 = vsel %vm3944, %v3937, 0
        %v3949 = vsel %vm3944, %v3938, 0
        %v3952 = vsel %vm3944, %v3939, 0
        %v3955 = vsel %vm3944, %v3940, 0
        %v3957 = vsel %vm3944, %v3943, 0
        %3959 = vmatprep.subr.mxu0 0.0
        %3960 = vmatpush1.xpose.msra.mxu0 %v3957
        %3961 = vmatprep.subr.mxu0 0.0
        %3962 = vmatpush1.xpose.msra.mxu0 0.0
        %3963 = vmatprep.subr.mxu0 0.0
        %3964 = vmatpush1.xpose.msra.mxu0 0.0
        %3965 = vmatprep.subr.mxu0 0.0
        %3966 = vmatpush1.xpose.msra.mxu0 0.0
        %3967 = vmatprep.subr.mxu0 0.0
        %3968 = vmatpush1.xpose.msra.mxu0 0.0
        %3969 = vmatprep.subr.mxu0 0.0
        %3970 = vmatpush1.xpose.msra.mxu0 0.0
        %3971 = vmatprep.subr.mxu0 0.0
        %3972 = vmatpush1.xpose.msra.mxu0 0.0
        %3973 = vmatprep.subr.mxu0 0.0
        %3974 = vmatpush1.xpose.msra.mxu0 0.0
        %3975 = vmatprep.subr.mxu0 0.0
        %3976 = vmatpush1.xpose.msra.mxu0 0.0
        %3977 = vmatprep.subr.mxu0 0.0
        %3978 = vmatpush1.xpose.msra.mxu0 0.0
        %3979 = vmatprep.subr.mxu0 0.0
        %3980 = vmatpush1.xpose.msra.mxu0 0.0
        %3981 = vmatprep.subr.mxu0 0.0
        %3982 = vmatpush1.xpose.msra.mxu0 0.0
        %3983 = vmatprep.subr.mxu0 0.0
        %3984 = vmatpush1.xpose.msra.mxu0 0.0
        %3985 = vmatprep.subr.mxu0 0.0
        %3986 = vmatpush1.xpose.msra.mxu0 0.0
        %3987 = vmatprep.subr.mxu0 0.0
        %3988 = vmatpush1.xpose.msra.mxu0 0.0
        %3989 = vmatprep.subr.mxu0 0.0
        %3990 = vmatpush1.xpose.msra.mxu0 0.0
        %3991 = vmatprep.subr.mxu0 0.0
        %3992 = vmatpush1.xpose.msra.mxu0 0.0
        %3993 = vmatprep.subr.mxu0 0.0
        %3994 = vmatpush1.xpose.msra.mxu0 0.0
        %3995 = vmatprep.subr.mxu0 0.0
        %3996 = vmatpush1.xpose.msra.mxu0 0.0
        %3997 = vmatprep.subr.mxu0 0.0
        %3998 = vmatpush1.xpose.msra.mxu0 0.0
        %3999 = vmatprep.subr.mxu0 0.0
        %4000 = vmatpush1.xpose.msra.mxu0 0.0
        %4001 = vmatprep.subr.mxu0 0.0
        %4002 = vmatpush1.xpose.msra.mxu0 0.0
        %4003 = vmatprep.subr.mxu0 0.0
        %4004 = vmatpush1.xpose.msra.mxu0 0.0
        %4005 = vmatprep.subr.mxu0 0.0
        %4006 = vmatpush1.xpose.msra.mxu0 0.0
        %4007 = vmatprep.subr.mxu0 0.0
        %4008 = vmatpush1.xpose.msra.mxu0 0.0
        %4009 = vmatprep.subr.mxu0 0.0
        %4010 = vmatpush1.xpose.msra.mxu0 0.0
        %4011 = vmatprep.subr.mxu0 0.0
        %4012 = vmatpush1.xpose.msra.mxu0 0.0
        %4013 = vmatprep.subr.mxu0 0.0
        %4014 = vmatpush1.xpose.msra.mxu0 0.0
        %4015 = vmatprep.subr.mxu0 0.0
        %4016 = vmatpush1.xpose.msra.mxu0 0.0
        %4017 = vmatprep.subr.mxu0 0.0
        %4018 = vmatpush1.xpose.msra.mxu0 0.0
        %4019 = vmatprep.subr.mxu0 0.0
        %4020 = vmatpush1.xpose.msra.mxu0 0.0
        %4021 = vmatprep.subr.mxu0 0.0
        %4022 = vmatpush1.xpose.msra.mxu0 0.0
        %4023 = vmatprep.mubr.f32.mxu0 0.0
        %4024 = vmatmul.mubr.f32.gmra.mrb[0].mxu0 %v3946
        %v4025 = vpop.f32.mrb[0].mxu0
        %v4026 = vadd.f32 0.0, %v4025
        %v4027 = vpop.f32.mrb[0].mxu0
        %4028 = vmatprep.mubr.f32.mxu0 0.0
        %4029 = vmatmul.mubr.f32.gmra.mrb[0].mxu0 %v3949
        %v4030 = vpop.f32.mrb[0].mxu0
        %v4031 = vadd.f32 0.0, %v4030
        %v4032 = vpop.f32.mrb[0].mxu0
        %4033 = vmatprep.mubr.f32.mxu0 0.0
        %4034 = vmatmul.mubr.f32.gmra.mrb[0].mxu0 %v3952
        %v4035 = vpop.f32.mrb[0].mxu0
        %v4036 = vadd.f32 0.0, %v4035
        %v4037 = vpop.f32.mrb[0].mxu0
        %4038 = vmatprep.mubr.f32.mxu0 0.0
        %4039 = vmatmul.mubr.f32.gmra.mrb[0].mxu0 %v3955
        %v4040 = vpop.f32.mrb[0].mxu0
        %v4041 = vadd.f32 0.0, %v4040
        %v4042 = vpop.f32.mrb[0].mxu0
        %4043 = vdwg.mxu0
        %v4044 = vsel %vm912, %v4026, -inf
        %4045 = vmax.xlane.f32.xlu0 %v4044
        %v4046 = vpop.xlane.xlu0 %4045
        %v4047 = vsel %vm912, %v4031, -inf
        %4048 = vmax.xlane.f32.xlu0 %v4047
        %v4049 = vpop.xlane.xlu0 %4048
        %v4050 = vsel %vm912, %v4036, -inf
        %4051 = vmax.xlane.f32.xlu0 %v4050
        %v4052 = vpop.xlane.xlu0 %4051
        %v4053 = vsel %vm912, %v4041, -inf
        %4054 = vmax.xlane.f32.xlu0 %v4053
        %v4055 = vpop.xlane.xlu0 %4054
        %v4056 = vsub.f32 %v4026, %v4046
        %v4057 = vsub.f32 %v4031, %v4049
        %v4058 = vsub.f32 %v4036, %v4052
        %v4059 = vsub.f32 %v4041, %v4055
        %v4060 = vmul.f32 %v4056, 1.442695
        %v4061 = vpow.pop %v4060
        %v4062 = vmul.f32 %v4057, 1.442695
        %v4063 = vpow.pop %v4062
        %v4064 = vmul.f32 %v4058, 1.442695
        %v4065 = vpow.pop %v4064
        %v4066 = vmul.f32 %v4059, 1.442695
        %v4067 = vpow.pop %v4066
        %v4068 = vsel %vm912, %v4061, 0.0
        %4069 = vadd.xlane.f32.xlu0 %v4068
        %v4070 = vpop.xlane.xlu0 %4069
        %v4071 = vsel %vm912, %v4063, 0.0
        %4072 = vadd.xlane.f32.xlu0 %v4071
        %v4073 = vpop.xlane.xlu0 %4072
        %v4074 = vsel %vm912, %v4065, 0.0
        %4075 = vadd.xlane.f32.xlu0 %v4074
        %v4076 = vpop.xlane.xlu0 %4075
        %v4077 = vsel %vm912, %v4067, 0.0
        %4078 = vadd.xlane.f32.xlu0 %v4077
        %v4079 = vpop.xlane.xlu0 %4078
        %v4080 = vrcp.pop %v4070
        %v4081 = vmul.f32 1.0, %v4080
        %v4082 = vrcp.pop %v4073
        %v4083 = vmul.f32 1.0, %v4082
        %v4084 = vrcp.pop %v4076
        %v4085 = vmul.f32 1.0, %v4084
        %v4086 = vrcp.pop %v4079
        %v4087 = vmul.f32 1.0, %v4086
        %v4088 = vmul.f32 %v4061, %v4081
        %v4089 = vmul.f32 %v4063, %v4083
        %v4090 = vmul.f32 %v4065, %v4085
        %v4091 = vmul.f32 %v4067, %v4087
        %4092 = vrot.lane.b32.xlu0 %v3825, 64
        %v4093 = vpop.permute.xlu0 %4092
        %v4096 = vsel %vm912, %v4088, 0
        %v4099 = vsel %vm912, %v4089, 0
        %v4102 = vsel %vm912, %v4090, 0
        %v4105 = vsel %vm912, %v4091, 0
        %4107 = vmatprep.subr.mxu0 0.0
        %4108 = vmatpush1.msra.mxu0 %v4093
        %4109 = vmatprep.subr.mxu0 0.0
        %4110 = vmatpush1.msra.mxu0 0.0
        %4111 = vmatprep.subr.mxu0 0.0
        %4112 = vmatpush1.msra.mxu0 0.0
        %4113 = vmatprep.subr.mxu0 0.0
        %4114 = vmatpush1.msra.mxu0 0.0
        %4115 = vmatprep.subr.mxu0 0.0
        %4116 = vmatpush1.msra.mxu0 0.0
        %4117 = vmatprep.subr.mxu0 0.0
        %4118 = vmatpush1.msra.mxu0 0.0
        %4119 = vmatprep.subr.mxu0 0.0
        %4120 = vmatpush1.msra.mxu0 0.0
        %4121 = vmatprep.subr.mxu0 0.0
        %4122 = vmatpush1.msra.mxu0 0.0
        %4123 = vmatprep.subr.mxu0 0.0
        %4124 = vmatpush1.msra.mxu0 0.0
        %4125 = vmatprep.subr.mxu0 0.0
        %4126 = vmatpush1.msra.mxu0 0.0
        %4127 = vmatprep.subr.mxu0 0.0
        %4128 = vmatpush1.msra.mxu0 0.0
        %4129 = vmatprep.subr.mxu0 0.0
        %4130 = vmatpush1.msra.mxu0 0.0
        %4131 = vmatprep.subr.mxu0 0.0
        %4132 = vmatpush1.msra.mxu0 0.0
        %4133 = vmatprep.subr.mxu0 0.0
        %4134 = vmatpush1.msra.mxu0 0.0
        %4135 = vmatprep.subr.mxu0 0.0
        %4136 = vmatpush1.msra.mxu0 0.0
        %4137 = vmatprep.subr.mxu0 0.0
        %4138 = vmatpush1.msra.mxu0 0.0
        %4139 = vmatprep.subr.mxu0 0.0
        %4140 = vmatpush1.msra.mxu0 0.0
        %4141 = vmatprep.subr.mxu0 0.0
        %4142 = vmatpush1.msra.mxu0 0.0
        %4143 = vmatprep.subr.mxu0 0.0
        %4144 = vmatpush1.msra.mxu0 0.0
        %4145 = vmatprep.subr.mxu0 0.0
        %4146 = vmatpush1.msra.mxu0 0.0
        %4147 = vmatprep.subr.mxu0 0.0
        %4148 = vmatpush1.msra.mxu0 0.0
        %4149 = vmatprep.subr.mxu0 0.0
        %4150 = vmatpush1.msra.mxu0 0.0
        %4151 = vmatprep.subr.mxu0 0.0
        %4152 = vmatpush1.msra.mxu0 0.0
        %4153 = vmatprep.subr.mxu0 0.0
        %4154 = vmatpush1.msra.mxu0 0.0
        %4155 = vmatprep.subr.mxu0 0.0
        %4156 = vmatpush1.msra.mxu0 0.0
        %4157 = vmatprep.subr.mxu0 0.0
        %4158 = vmatpush1.msra.mxu0 0.0
        %4159 = vmatprep.subr.mxu0 0.0
        %4160 = vmatpush1.msra.mxu0 0.0
        %4161 = vmatprep.subr.mxu0 0.0
        %4162 = vmatpush1.msra.mxu0 0.0
        %4163 = vmatprep.subr.mxu0 0.0
        %4164 = vmatpush1.msra.mxu0 0.0
        %4165 = vmatprep.subr.mxu0 0.0
        %4166 = vmatpush1.msra.mxu0 0.0
        %4167 = vmatprep.subr.mxu0 0.0
        %4168 = vmatpush1.msra.mxu0 0.0
        %4169 = vmatprep.subr.mxu0 0.0
        %4170 = vmatpush1.msra.mxu0 0.0
        %4171 = vmatprep.mubr.f32.mxu0 0.0
        %4172 = vmatmul.mubr.f32.gmra.mrb[0].mxu0 %v4096
        %v4173 = vpop.f32.mrb[0].mxu0
        %v4174 = vadd.f32 0.0, %v4173
        %v4175 = vpop.f32.mrb[0].mxu0
        %4176 = vmatprep.mubr.f32.mxu0 0.0
        %4177 = vmatmul.mubr.f32.gmra.mrb[0].mxu0 %v4099
        %v4178 = vpop.f32.mrb[0].mxu0
        %v4179 = vadd.f32 0.0, %v4178
        %v4180 = vpop.f32.mrb[0].mxu0
        %4181 = vmatprep.mubr.f32.mxu0 0.0
        %4182 = vmatmul.mubr.f32.gmra.mrb[0].mxu0 %v4102
        %v4183 = vpop.f32.mrb[0].mxu0
        %v4184 = vadd.f32 0.0, %v4183
        %v4185 = vpop.f32.mrb[0].mxu0
        %4186 = vmatprep.mubr.f32.mxu0 0.0
        %4187 = vmatmul.mubr.f32.gmra.mrb[0].mxu0 %v4105
        %v4188 = vpop.f32.mrb[0].mxu0
        %v4189 = vadd.f32 0.0, %v4188
        %v4190 = vpop.f32.mrb[0].mxu0
        %4191 = vdwg.mxu0
        %v4192 = vmul.f32 %v4174, %v3929
        %v4193 = vmul.f32 %v4179, %v3930
        %v4194 = vmul.f32 %v4184, %v3931
        %v4195 = vmul.f32 %v4189, %v3932
        %v4196 = vld [vmem:[%s45] sm:$0xff]
        %v4198 = vsel %vm3944, %v4196, 0
        %4200 = vmatprep.subr.mxu0 0.0
        %4201 = vmatpush1.msra.mxu0 %v4192
        %4202 = vmatprep.subr.mxu0 0.0
        %4203 = vmatpush1.msra.mxu0 %v4193
        %4204 = vmatprep.subr.mxu0 0.0
        %4205 = vmatpush1.msra.mxu0 %v4194
        %4206 = vmatprep.subr.mxu0 0.0
        %4207 = vmatpush1.msra.mxu0 %v4195
        %4208 = vmatprep.subr.mxu0 0.0
        %4209 = vmatpush1.msra.mxu0 0.0
        %4210 = vmatprep.subr.mxu0 0.0
        %4211 = vmatpush1.msra.mxu0 0.0
        %4212 = vmatprep.subr.mxu0 0.0
        %4213 = vmatpush1.msra.mxu0 0.0
        %4214 = vmatprep.subr.mxu0 0.0
        %4215 = vmatpush1.msra.mxu0 0.0
        %4216 = vmatprep.subr.mxu0 0.0
        %4217 = vmatpush1.msra.mxu0 0.0
        %4218 = vmatprep.subr.mxu0 0.0
        %4219 = vmatpush1.msra.mxu0 0.0
        %4220 = vmatprep.subr.mxu0 0.0
        %4221 = vmatpush1.msra.mxu0 0.0
        %4222 = vmatprep.subr.mxu0 0.0
        %4223 = vmatpush1.msra.mxu0 0.0
        %4224 = vmatprep.subr.mxu0 0.0
        %4225 = vmatpush1.msra.mxu0 0.0
        %4226 = vmatprep.subr.mxu0 0.0
        %4227 = vmatpush1.msra.mxu0 0.0
        %4228 = vmatprep.subr.mxu0 0.0
        %4229 = vmatpush1.msra.mxu0 0.0
        %4230 = vmatprep.subr.mxu0 0.0
        %4231 = vmatpush1.msra.mxu0 0.0
        %4232 = vmatprep.subr.mxu0 0.0
        %4233 = vmatpush1.msra.mxu0 0.0
        %4234 = vmatprep.subr.mxu0 0.0
        %4235 = vmatpush1.msra.mxu0 0.0
        %4236 = vmatprep.subr.mxu0 0.0
        %4237 = vmatpush1.msra.mxu0 0.0
        %4238 = vmatprep.subr.mxu0 0.0
        %4239 = vmatpush1.msra.mxu0 0.0
        %4240 = vmatprep.subr.mxu0 0.0
        %4241 = vmatpush1.msra.mxu0 0.0
        %4242 = vmatprep.subr.mxu0 0.0
        %4243 = vmatpush1.msra.mxu0 0.0
        %4244 = vmatprep.subr.mxu0 0.0
        %4245 = vmatpush1.msra.mxu0 0.0
        %4246 = vmatprep.subr.mxu0 0.0
        %4247 = vmatpush1.msra.mxu0 0.0
        %4248 = vmatprep.subr.mxu0 0.0
        %4249 = vmatpush1.msra.mxu0 0.0
        %4250 = vmatprep.subr.mxu0 0.0
        %4251 = vmatpush1.msra.mxu0 0.0
        %4252 = vmatprep.subr.mxu0 0.0
        %4253 = vmatpush1.msra.mxu0 0.0
        %4254 = vmatprep.subr.mxu0 0.0
        %4255 = vmatpush1.msra.mxu0 0.0
        %4256 = vmatprep.subr.mxu0 0.0
        %4257 = vmatpush1.msra.mxu0 0.0
        %4258 = vmatprep.subr.mxu0 0.0
        %4259 = vmatpush1.msra.mxu0 0.0
        %4260 = vmatprep.subr.mxu0 0.0
        %4261 = vmatpush1.msra.mxu0 0.0
        %4262 = vmatprep.subr.mxu0 0.0
        %4263 = vmatpush1.msra.mxu0 0.0
        %4264 = vmatprep.mubr.f32.mxu0 0.0
        %4265 = vmatmul.mubr.f32.gmra.mrb[0].mxu0 %v4198
        %v4266 = vpop.f32.mrb[0].mxu0
        %v4267 = vadd.f32 0.0, %v4266
        %v4268 = vpop.f32.mrb[0].mxu0
        %4269 = vdwg.mxu0
        %v4270 = vld [vmem:[%s47] sm:$0xff]
        %v4271 = vld [vmem:[%s47 + $0x8] sm:$0xff]
        %v4272 = vld [vmem:[%s47 + $0x10] sm:$0xff]
        %v4273 = vld [vmem:[%s47 + $0x18] sm:$0xff]
        %v4274 = vld [vmem:[%s49] sm:$0x1]
        %v4276 = vlaneseq
        %v4277 = vshrl.u32 %v4276, 7
        %v4278 = vsub.s32 0, %v4277
        %v4279 = vrot.slane %v4274, %v4278
        %v4282 = vsel %vm3944, %v4267, 0
        %4284 = vmatprep.subr.mxu0 0.0
        %4285 = vmatpush1.msra.mxu0 %v4270
        %4286 = vmatprep.subr.mxu0 0.0
        %4287 = vmatpush1.msra.mxu0 %v4271
        %4288 = vmatprep.subr.mxu0 0.0
        %4289 = vmatpush1.msra.mxu0 %v4272
        %4290 = vmatprep.subr.mxu0 0.0
        %4291 = vmatpush1.msra.mxu0 %v4273
        %4292 = vmatprep.subr.mxu0 0.0
        %4293 = vmatpush1.msra.mxu0 0.0
        %4294 = vmatprep.subr.mxu0 0.0
        %4295 = vmatpush1.msra.mxu0 0.0
        %4296 = vmatprep.subr.mxu0 0.0
        %4297 = vmatpush1.msra.mxu0 0.0
        %4298 = vmatprep.subr.mxu0 0.0
        %4299 = vmatpush1.msra.mxu0 0.0
        %4300 = vmatprep.subr.mxu0 0.0
        %4301 = vmatpush1.msra.mxu0 0.0
        %4302 = vmatprep.subr.mxu0 0.0
        %4303 = vmatpush1.msra.mxu0 0.0
        %4304 = vmatprep.subr.mxu0 0.0
        %4305 = vmatpush1.msra.mxu0 0.0
        %4306 = vmatprep.subr.mxu0 0.0
        %4307 = vmatpush1.msra.mxu0 0.0
        %4308 = vmatprep.subr.mxu0 0.0
        %4309 = vmatpush1.msra.mxu0 0.0
        %4310 = vmatprep.subr.mxu0 0.0
        %4311 = vmatpush1.msra.mxu0 0.0
        %4312 = vmatprep.subr.mxu0 0.0
        %4313 = vmatpush1.msra.mxu0 0.0
        %4314 = vmatprep.subr.mxu0 0.0
        %4315 = vmatpush1.msra.mxu0 0.0
        %4316 = vmatprep.subr.mxu0 0.0
        %4317 = vmatpush1.msra.mxu0 0.0
        %4318 = vmatprep.subr.mxu0 0.0
        %4319 = vmatpush1.msra.mxu0 0.0
        %4320 = vmatprep.subr.mxu0 0.0
        %4321 = vmatpush1.msra.mxu0 0.0
        %4322 = vmatprep.subr.mxu0 0.0
        %4323 = vmatpush1.msra.mxu0 0.0
        %4324 = vmatprep.subr.mxu0 0.0
        %4325 = vmatpush1.msra.mxu0 0.0
        %4326 = vmatprep.subr.mxu0 0.0
        %4327 = vmatpush1.msra.mxu0 0.0
        %4328 = vmatprep.subr.mxu0 0.0
        %4329 = vmatpush1.msra.mxu0 0.0
        %4330 = vmatprep.subr.mxu0 0.0
        %4331 = vmatpush1.msra.mxu0 0.0
        %4332 = vmatprep.subr.mxu0 0.0
        %4333 = vmatpush1.msra.mxu0 0.0
        %4334 = vmatprep.subr.mxu0 0.0
        %4335 = vmatpush1.msra.mxu0 0.0
        %4336 = vmatprep.subr.mxu0 0.0
        %4337 = vmatpush1.msra.mxu0 0.0
        %4338 = vmatprep.subr.mxu0 0.0
        %4339 = vmatpush1.msra.mxu0 0.0
        %4340 = vmatprep.subr.mxu0 0.0
        %4341 = vmatpush1.msra.mxu0 0.0
        %4342 = vmatprep.subr.mxu0 0.0
        %4343 = vmatpush1.msra.mxu0 0.0
        %4344 = vmatprep.subr.mxu0 0.0
        %4345 = vmatpush1.msra.mxu0 0.0
        %4346 = vmatprep.subr.mxu0 0.0
        %4347 = vmatpush1.msra.mxu0 0.0
        %4348 = vmatprep.mubr.f32.mxu0 0.0
        %4349 = vmatmul.mubr.f32.gmra.mrb[0].mxu0 %v4282
        %v4350 = vpop.f32.mrb[0].mxu0
        %v4351 = vadd.f32 %v4279, %v4350
        %v4352 = vpop.f32.mrb[0].mxu0
        %4353 = vdwg.mxu0
        %v4354 = vmul.f32 %v4351, 0.70710677
        %vm4355 = vcmp.ge.f32.partialorder %v4354, 0.0
        %v4356 = vsel %vm4355, 1.0, -1.0
        %v4357 = vand.u32 2147483647, %v4354
        %v4358 = vmul.f32 %v4357, 0.3275911
        %v4359 = vadd.f32 %v4358, 1.0
        %v4360 = vrcp.pop %v4359
        %v4361 = vmul.f32 1.0, %v4360
        %v4362 = vmul.f32 %v4361, 1.0614054
        %v4363 = vadd.f32 %v4362, -1.4531521
        %v4364 = vmul.f32 %v4363, %v4361
        %v4365 = vadd.f32 %v4364, 1.4214138
        %v4366 = vmul.f32 %v4365, %v4361
        %v4367 = vadd.f32 %v4366, -0.28449672
        %v4368 = vmul.f32 %v4367, %v4361
        %v4369 = vadd.f32 %v4368, 0.2548296
        %v4370 = vmul.f32 %v4369, %v4361
        %v4371 = vsub.f32 0.0, %v4357
        %v4372 = vmul.f32 %v4371, %v4357
        %v4373 = vmul.f32 %v4372, 1.442695
        %v4374 = vpow.pop %v4373
        %v4375 = vmul.f32 %v4370, %v4374
        %v4376 = vsub.f32 1.0, %v4375
        %v4377 = vmul.f32 %v4356, %v4376
        %v4378 = vmul.f32 %v4351, 0.5
        %v4379 = vadd.f32 %v4377, 1.0
        %v4380 = vmul.f32 %v4378, %v4379
        %v4381 = vld [vmem:[%s51] sm:$0xff]
        %v4382 = vld [vmem:[%s51 + $0x8] sm:$0xff]
        %v4383 = vld [vmem:[%s51 + $0x10] sm:$0xff]
        %v4384 = vld [vmem:[%s51 + $0x18] sm:$0xff]
        %v4385 = vld [vmem:[%s53] sm:$0x1]
        %v4387 = vlaneseq
        %v4388 = vshrl.u32 %v4387, 7
        %v4389 = vsub.s32 0, %v4388
        %v4390 = vrot.slane %v4385, %v4389
        %v4393 = vsel %vm3944, %v4380, 0
        %4395 = vmatprep.subr.mxu0 0.0
        %4396 = vmatpush1.msra.mxu0 %v4381
        %4397 = vmatprep.subr.mxu0 0.0
        %4398 = vmatpush1.msra.mxu0 %v4382
        %4399 = vmatprep.subr.mxu0 0.0
        %4400 = vmatpush1.msra.mxu0 %v4383
        %4401 = vmatprep.subr.mxu0 0.0
        %4402 = vmatpush1.msra.mxu0 %v4384
        %4403 = vmatprep.subr.mxu0 0.0
        %4404 = vmatpush1.msra.mxu0 0.0
        %4405 = vmatprep.subr.mxu0 0.0
        %4406 = vmatpush1.msra.mxu0 0.0
        %4407 = vmatprep.subr.mxu0 0.0
        %4408 = vmatpush1.msra.mxu0 0.0
        %4409 = vmatprep.subr.mxu0 0.0
        %4410 = vmatpush1.msra.mxu0 0.0
        %4411 = vmatprep.subr.mxu0 0.0
        %4412 = vmatpush1.msra.mxu0 0.0
        %4413 = vmatprep.subr.mxu0 0.0
        %4414 = vmatpush1.msra.mxu0 0.0
        %4415 = vmatprep.subr.mxu0 0.0
        %4416 = vmatpush1.msra.mxu0 0.0
        %4417 = vmatprep.subr.mxu0 0.0
        %4418 = vmatpush1.msra.mxu0 0.0
        %4419 = vmatprep.subr.mxu0 0.0
        %4420 = vmatpush1.msra.mxu0 0.0
        %4421 = vmatprep.subr.mxu0 0.0
        %4422 = vmatpush1.msra.mxu0 0.0
        %4423 = vmatprep.subr.mxu0 0.0
        %4424 = vmatpush1.msra.mxu0 0.0
        %4425 = vmatprep.subr.mxu0 0.0
        %4426 = vmatpush1.msra.mxu0 0.0
        %4427 = vmatprep.subr.mxu0 0.0
        %4428 = vmatpush1.msra.mxu0 0.0
        %4429 = vmatprep.subr.mxu0 0.0
        %4430 = vmatpush1.msra.mxu0 0.0
        %4431 = vmatprep.subr.mxu0 0.0
        %4432 = vmatpush1.msra.mxu0 0.0
        %4433 = vmatprep.subr.mxu0 0.0
        %4434 = vmatpush1.msra.mxu0 0.0
        %4435 = vmatprep.subr.mxu0 0.0
        %4436 = vmatpush1.msra.mxu0 0.0
        %4437 = vmatprep.subr.mxu0 0.0
        %4438 = vmatpush1.msra.mxu0 0.0
        %4439 = vmatprep.subr.mxu0 0.0
        %4440 = vmatpush1.msra.mxu0 0.0
        %4441 = vmatprep.subr.mxu0 0.0
        %4442 = vmatpush1.msra.mxu0 0.0
        %4443 = vmatprep.subr.mxu0 0.0
        %4444 = vmatpush1.msra.mxu0 0.0
        %4445 = vmatprep.subr.mxu0 0.0
        %4446 = vmatpush1.msra.mxu0 0.0
        %4447 = vmatprep.subr.mxu0 0.0
        %4448 = vmatpush1.msra.mxu0 0.0
        %4449 = vmatprep.subr.mxu0 0.0
        %4450 = vmatpush1.msra.mxu0 0.0
        %4451 = vmatprep.subr.mxu0 0.0
        %4452 = vmatpush1.msra.mxu0 0.0
        %4453 = vmatprep.subr.mxu0 0.0
        %4454 = vmatpush1.msra.mxu0 0.0
        %4455 = vmatprep.subr.mxu0 0.0
        %4456 = vmatpush1.msra.mxu0 0.0
        %4457 = vmatprep.subr.mxu0 0.0
        %4458 = vmatpush1.msra.mxu0 0.0
        %4459 = vmatprep.mubr.f32.mxu0 0.0
        %4460 = vmatmul.mubr.f32.gmra.mrb[0].mxu0 %v4393
        %v4461 = vpop.f32.mrb[0].mxu0
        %v4462 = vadd.f32 %v4390, %v4461
        %v4463 = vpop.f32.mrb[0].mxu0
        %4464 = vdwg.mxu0
        %v4465 = vadd.f32 %v4462, %v3739
        %v4466 = vld [vmem:[%s55] sm:$0xff]
        %v4467 = vld [vmem:[%s55 + $0x8] sm:$0xff]
        %v4468 = vld [vmem:[%s55 + $0x10] sm:$0xff]
        %v4469 = vld [vmem:[%s55 + $0x18] sm:$0xff]
        %v4470 = vld [vmem:[%s55 + $0x20] sm:$0xff]
        %v4471 = vld [vmem:[%s55 + $0x28] sm:$0xff]
        %v4472 = vld [vmem:[%s55 + $0x30] sm:$0xff]
        %v4473 = vld [vmem:[%s55 + $0x38] sm:$0xff]
        %v4474 = vld [vmem:[%s55 + $0x40] sm:$0xff]
        %v4475 = vld [vmem:[%s55 + $0x48] sm:$0xff]
        %v4476 = vld [vmem:[%s55 + $0x50] sm:$0xff]
        %v4477 = vld [vmem:[%s55 + $0x58] sm:$0xff]
        %v4478 = vld [vmem:[%s55 + $0x60] sm:$0xff]
        %v4479 = vld [vmem:[%s55 + $0x68] sm:$0xff]
        %v4480 = vld [vmem:[%s55 + $0x70] sm:$0xff]
        %v4481 = vld [vmem:[%s55 + $0x78] sm:$0xff]
        %v4482 = vld [vmem:[%s57] sm:$0x1]
        %v4484 = vlaneseq
        %v4485 = vshrl.u32 %v4484, 7
        %v4486 = vsub.s32 0, %v4485
        %v4487 = vrot.slane %v4482, %v4486
        %4489 = vmatprep.subr.mxu0 0.0
        %4490 = vmatpush1.msra.mxu0 %v4466
        %4491 = vmatprep.subr.mxu0 0.0
        %4492 = vmatpush1.msra.mxu0 %v4467
        %4493 = vmatprep.subr.mxu0 0.0
        %4494 = vmatpush1.msra.mxu0 %v4468
        %4495 = vmatprep.subr.mxu0 0.0
        %4496 = vmatpush1.msra.mxu0 %v4469
        %4497 = vmatprep.subr.mxu0 0.0
        %4498 = vmatpush1.msra.mxu0 %v4470
        %4499 = vmatprep.subr.mxu0 0.0
        %4500 = vmatpush1.msra.mxu0 %v4471
        %4501 = vmatprep.subr.mxu0 0.0
        %4502 = vmatpush1.msra.mxu0 %v4472
        %4503 = vmatprep.subr.mxu0 0.0
        %4504 = vmatpush1.msra.mxu0 %v4473
        %4505 = vmatprep.subr.mxu0 0.0
        %4506 = vmatpush1.msra.mxu0 %v4474
        %4507 = vmatprep.subr.mxu0 0.0
        %4508 = vmatpush1.msra.mxu0 %v4475
        %4509 = vmatprep.subr.mxu0 0.0
        %4510 = vmatpush1.msra.mxu0 %v4476
        %4511 = vmatprep.subr.mxu0 0.0
        %4512 = vmatpush1.msra.mxu0 %v4477
        %4513 = vmatprep.subr.mxu0 0.0
        %4514 = vmatpush1.msra.mxu0 %v4478
        %4515 = vmatprep.subr.mxu0 0.0
        %4516 = vmatpush1.msra.mxu0 %v4479
        %4517 = vmatprep.subr.mxu0 0.0
        %4518 = vmatpush1.msra.mxu0 %v4480
        %4519 = vmatprep.subr.mxu0 0.0
        %4520 = vmatpush1.msra.mxu0 %v4481
        %4521 = vmatprep.subr.mxu0 0.0
        %4522 = vmatpush1.msra.mxu0 0.0
        %4523 = vmatprep.subr.mxu0 0.0
        %4524 = vmatpush1.msra.mxu0 0.0
        %4525 = vmatprep.subr.mxu0 0.0
        %4526 = vmatpush1.msra.mxu0 0.0
        %4527 = vmatprep.subr.mxu0 0.0
        %4528 = vmatpush1.msra.mxu0 0.0
        %4529 = vmatprep.subr.mxu0 0.0
        %4530 = vmatpush1.msra.mxu0 0.0
        %4531 = vmatprep.subr.mxu0 0.0
        %4532 = vmatpush1.msra.mxu0 0.0
        %4533 = vmatprep.subr.mxu0 0.0
        %4534 = vmatpush1.msra.mxu0 0.0
        %4535 = vmatprep.subr.mxu0 0.0
        %4536 = vmatpush1.msra.mxu0 0.0
        %4537 = vmatprep.subr.mxu0 0.0
        %4538 = vmatpush1.msra.mxu0 0.0
        %4539 = vmatprep.subr.mxu0 0.0
        %4540 = vmatpush1.msra.mxu0 0.0
        %4541 = vmatprep.subr.mxu0 0.0
        %4542 = vmatpush1.msra.mxu0 0.0
        %4543 = vmatprep.subr.mxu0 0.0
        %4544 = vmatpush1.msra.mxu0 0.0
        %4545 = vmatprep.subr.mxu0 0.0
        %4546 = vmatpush1.msra.mxu0 0.0
        %4547 = vmatprep.subr.mxu0 0.0
        %4548 = vmatpush1.msra.mxu0 0.0
        %4549 = vmatprep.subr.mxu0 0.0
        %4550 = vmatpush1.msra.mxu0 0.0
        %4551 = vmatprep.subr.mxu0 0.0
        %4552 = vmatpush1.msra.mxu0 0.0
        %4553 = vmatprep.mubr.f32.mxu0 0.0
        %4554 = vmatmul.mubr.f32.gmra.mrb[0].mxu0 %v4465
        %v4555 = vpop.f32.mrb[0].mxu0
        %v4556 = vadd.f32 %v4487, %v4555
        %v4557 = vpop.f32.mrb[0].mxu0
        %4558 = vdwg.mxu0
        %4559 = vst [vmem:[%s893] sm:$0xff] %v4556
        %s4560 = sand.u32 %s695, 1
        %s4561 = scalar_lea.sflag [#allocation5], %s4560
        %s4562 = sand.u32 %s695, 1
        %s4563 = smul.addr %s4562, 8
        %s4564 = scalar_lea.vmem [#allocation4], %s4563
        // Predicated region
        $region137: #{adapter_forward.1} parent=135 // pred_check
          %p4565 = pneg %p705
        $region138: #{adapter_forward.1} parent=135 // pred_check_branch
          %4567 = sbr.rel (%p4565) target = $region140
        $region139: #{adapter_forward.1} parent=135 // pred_region
          %s4569 = ssub.s32 128, 128
          %4570 = vsyncadd %s4561, %s4569
          %s4571 = smul.addr %s73, 128
          %s4572 = scalar_lea.hbm %s59, %s4571
          %s4574 = sshll.u32 %s4564, 4
          %s4575 = int_to_ptr.vmem [resolvable:$true] %s4574
          %4577 = dma.vmem_to_hbm [thread:$0]  %s4575, 128, %s4572, %s4561
        $region140: #{adapter_forward.1} parent=135 // pred_fallthru
          _
      $region136: #{adapter_forward.1} parent=5 // pred_fallthru
        _
      %p4578 = scmp.le.s32.totalorder 2, %s68
      // Predicated region
      $region141: #{adapter_forward.1} parent=5 // pred_check
        %p4579 = pneg %p4578
      $region142: #{adapter_forward.1} parent=5 // pred_check_branch
        %4581 = sbr.rel (%p4579) target = $region144
      $region143: #{adapter_forward.1} parent=5 // pred_region
        %s4582 = ssub.s32 %s68, 2
        // Predicated region
        $region145: #{adapter_forward.1} parent=143 // pred_check
          %p4583 = pneg %p711
        $region146: #{adapter_forward.1} parent=143 // pred_check_branch
          %4585 = sbr.rel (%p4583) target = $region148
        $region147: #{adapter_forward.1} parent=143 // pred_region
          %s4586 = sand.u32 %s696, 1
          %s4587 = scalar_lea.sflag [#allocation5], %s4586
          %s4588 = sand.u32 %s696, 1
          %s4589 = smul.addr %s4588, 8
          %s4590 = scalar_lea.vmem [#allocation4], %s4589
          %4591 = dma.done %s4587, 128
        $region148: #{adapter_forward.1} parent=143 // pred_fallthru
          _
      $region144: #{adapter_forward.1} parent=5 // pred_fallthru
        _
    $region6: #{adapter_forward.1} parent=1 // loop_footer
      %s72 = sadd.s32 1, %s68
    $region7: #{adapter_forward.1} parent=1 // loop_footer_branch
      %67 = sbr.rel target = $region3
    $region8: #{adapter_forward.1} parent=1 // loop_exit
      _
    %4592 = vsyncpa [#allocation5], 1
    %s4593 = scalar_lea.sflag [#allocation5], 1
    %4594 = vsyncpa %s4593, 1

</llo_original>
